<compile_context>
chip_gen: v6e
topology: v6e:2x2x1
jax: 0.10.0
libtpu: 0.0.40
codegen_flags: <defaults>
</compile_context>

<pallas_src>
import math
import numpy as np
import jax
import jax.numpy as jnp
from jax import lax
from jax.experimental import pallas as pl
from jax.experimental.pallas import tpu as pltpu


# ---------------------------------------------------------------------------
# align_corners=True 1-D bilinear resize as a (out, in) row-stochastic matrix.
# ---------------------------------------------------------------------------
def _interp_matrix(out_size, in_size):
    A = np.zeros((out_size, in_size), dtype=np.float32)
    if out_size == 1:
        A[0, 0] = 1.0
        return jnp.asarray(A)
    scale = (in_size - 1) / (out_size - 1)
    for i in range(out_size):
        src = i * scale
        i0 = min(max(int(math.floor(src)), 0), in_size - 1)
        i1 = min(i0 + 1, in_size - 1)
        frac = src - i0
        A[i, i0] += 1.0 - frac
        A[i, i1] += frac
    return jnp.asarray(A)


# ---------------------------------------------------------------------------
# Fused FPN kernel: conv1 -> upsample+add -> conv2 -> upsample+add.
# One batch element per grid step.
# ---------------------------------------------------------------------------
def _fpn_fused_kernel(f3_ref, f2_ref, f1_ref,
                      w1_ref, b1_ref, w2_ref, b2_ref,
                      ah1_ref, aw1_ref, ah2_ref, aw2_ref,
                      o2_ref, o1_ref,
                      pad1_ref, patch1_ref, pad2_ref, patch2_ref):
    H3, W3, C3 = pad1_ref.shape[0] - 2, pad1_ref.shape[1] - 2, pad1_ref.shape[2]
    H2, W2, C2 = pad2_ref.shape[0] - 2, pad2_ref.shape[1] - 2, pad2_ref.shape[2]
    C1 = w2_ref.shape[1]

    def conv3x3(x_hwc, pad_ref, patch_ref, w_ref, b_ref):
        # 3x3 / stride 1 / pad 1 conv as a single im2col MXU matmul.
        H, W, Cin = x_hwc.shape
        pad_ref[...] = jnp.zeros_like(pad_ref)            # zero halo (VMEM, no HBM pad)
        pad_ref[1:H + 1, 1:W + 1, :] = x_hwc
        for dh in range(3):                               # build (H*W, 9, Cin) patches
            for dw in range(3):
                t = dh * 3 + dw
                patch_ref[:, t, :] = pad_ref[dh:dh + H, dw:dw + W, :].reshape(H * W, Cin)
        patches = patch_ref[...].reshape(H * W, 9 * Cin)  # K = 9*Cin, one MXU pass
        out = jnp.dot(patches, w_ref[...], preferred_element_type=jnp.float32)
        return out + b_ref[0]                             # (H*W, Cout)

    def upsample_add(y2d, Hi, Wi, Cc, ah_ref, aw_ref, base2d):
        # Exact separable bilinear (align_corners=True); kron-free, transpose-free.
        Ho, Wo = ah_ref.shape[0], aw_ref.shape[0]
        y3 = y2d.reshape(Hi, Wi, Cc)
        aw_b = jnp.broadcast_to(aw_ref[...], (Hi, Wo, Wi))
        z = jnp.einsum('hpw,hwc->hpc', aw_b, y3,
                       preferred_element_type=jnp.float32)        # (Hi, Wo, Cc)
        u = jnp.dot(ah_ref[...], z.reshape(Hi, Wo * Cc),
                    preferred_element_type=jnp.float32)           # (Ho, Wo*Cc)
        return base2d + u

    # level 1: new_f2 = f2 + up(conv1(f3))
    x3 = f3_ref[0].reshape(H3, W3, C3)
    y1 = conv3x3(x3, pad1_ref, patch1_ref, w1_ref, b1_ref)        # (H3*W3, C2)
    new_f2 = upsample_add(y1, H3, W3, C2, ah1_ref, aw1_ref, f2_ref[0])
    o2_ref[0] = new_f2                                            # lane-dense (H2, W2*C2)

    # level 2: new_f1 = f1 + up(conv2(new_f2))  (new_f2 never leaves VMEM)
    x2 = new_f2.reshape(H2, W2, C2)
    y2 = conv3x3(x2, pad2_ref, patch2_ref, w2_ref, b2_ref)        # (H2*W2, C1)
    o1_ref[0] = upsample_add(y2, H2, W2, C1, ah2_ref, aw2_ref, f1_ref[0])


# ---------------------------------------------------------------------------
# Layout helpers: NCHW  <->  lane-dense (N, H, W*C)
# ---------------------------------------------------------------------------
def _to_flat(nchw):
    n, c, h, w = nchw.shape
    return jnp.transpose(nchw, (0, 2, 3, 1)).reshape(n, h, w * c)


def _from_flat(flat, c):
    n, h, wc = flat.shape
    return jnp.transpose(flat.reshape(n, h, wc // c, c), (0, 3, 1, 2))


# ---------------------------------------------------------------------------
# FPN forward (public API: NCHW dict, like the PyTorch module).
# ---------------------------------------------------------------------------
def fpn_forward(x, params):
    f1, f2, f3 = x["feature_1"], x["feature_2"], x["feature_3"]     # NCHW
    N, C1, H1, W1 = f1.shape
    _, C2, H2, W2 = f2.shape
    _, C3, H3, W3 = f3.shape

    # lane-dense (N, H, W*C) slabs for the kernel
    f1f, f2f, f3f = _to_flat(f1), _to_flat(f2), _to_flat(f3)

    # im2col weight matrices (9*Cin, Cout); biases as (1, Cout)
    w1_mat = params["w1"].reshape(9 * C3, C2)
    w2_mat = params["w2"].reshape(9 * C2, C1)
    b1 = params["b1"].reshape(1, C2)
    b2 = params["b2"].reshape(1, C1)

    # static align_corners=True interpolation matrices
    ah1, aw1 = _interp_matrix(H2, H3), _interp_matrix(W2, W3)
    ah2, aw2 = _interp_matrix(H1, H2), _interp_matrix(W1, W2)

    new_f2_flat, new_f1_flat = pl.pallas_call(
        _fpn_fused_kernel,
        out_shape=(jax.ShapeDtypeStruct((N, H2, W2 * C2), jnp.float32),
                   jax.ShapeDtypeStruct((N, H1, W1 * C1), jnp.float32)),
        grid=(N,),
        in_specs=[
            pl.BlockSpec((1, H3, W3 * C3), lambda n: (n, 0, 0)),    # feature_3 (flat)
            pl.BlockSpec((1, H2, W2 * C2), lambda n: (n, 0, 0)),    # feature_2 (flat)
            pl.BlockSpec((1, H1, W1 * C1), lambda n: (n, 0, 0)),    # feature_1 (flat)
            pl.BlockSpec((9 * C3, C2), lambda n: (0, 0)),           # conv1 im2col weights
            pl.BlockSpec((1, C2), lambda n: (0, 0)),                # conv1 bias
            pl.BlockSpec((9 * C2, C1), lambda n: (0, 0)),           # conv2 im2col weights
            pl.BlockSpec((1, C1), lambda n: (0, 0)),                # conv2 bias
            pl.BlockSpec((H2, H3), lambda n: (0, 0)),               # ah1
            pl.BlockSpec((W2, W3), lambda n: (0, 0)),               # aw1
            pl.BlockSpec((H1, H2), lambda n: (0, 0)),               # ah2
            pl.BlockSpec((W1, W2), lambda n: (0, 0)),               # aw2
        ],
        out_specs=(pl.BlockSpec((1, H2, W2 * C2), lambda n: (n, 0, 0)),
                   pl.BlockSpec((1, H1, W1 * C1), lambda n: (n, 0, 0))),
        scratch_shapes=[
            pltpu.VMEM((H3 + 2, W3 + 2, C3), jnp.float32),   # padded conv1 input
            pltpu.VMEM((H3 * W3, 9, C3), jnp.float32),       # conv1 im2col patches
            pltpu.VMEM((H2 + 2, W2 + 2, C2), jnp.float32),   # padded conv2 input
            pltpu.VMEM((H2 * W2, 9, C2), jnp.float32),       # conv2 im2col patches
        ],
        compiler_params=pltpu.CompilerParams(dimension_semantics=("parallel",)),
    )(f3f, f2f, f1f, w1_mat, b1, w2_mat, b2, ah1, aw1, ah2, aw2)

    return {
        "feature_1": _from_flat(new_f1_flat, C1),
        "feature_2": _from_flat(new_f2_flat, C2),
        "feature_3": f3,
    }


# ---------------------------------------------------------------------------
# Parameters (deterministic, mimicking PyTorch Conv2d default init bounds).
# ---------------------------------------------------------------------------
def init_params(in_channels, key):
    k1, k2, k3, k4 = jax.random.split(key, 4)
    c1_out, c2_out = in_channels // 2, in_channels // 4
    b1 = 1.0 / math.sqrt(in_channels * 9)
    b2 = 1.0 / math.sqrt(c1_out * 9)
    # PyTorch layout OIHW, converted to HWIO for the NHWC kernels.
    w1_oihw = jax.random.uniform(k1, (c1_out, in_channels, 3, 3), jnp.float32, -b1, b1)
    bias1 = jax.random.uniform(k2, (c1_out,), jnp.float32, -b1, b1)
    w2_oihw = jax.random.uniform(k3, (c2_out, c1_out, 3, 3), jnp.float32, -b2, b2)
    bias2 = jax.random.uniform(k4, (c2_out,), jnp.float32, -b2, b2)
    return {
        "w1": jnp.transpose(w1_oihw, (2, 3, 1, 0)),   # HWIO
        "b1": bias1,
        "w2": jnp.transpose(w2_oihw, (2, 3, 1, 0)),   # HWIO
        "b2": bias2,
    }


# ---------------------------------------------------------------------------
# Pure-JAX reference (NHWC) for a correctness check.
# ---------------------------------------------------------------------------
def _ref_conv3x3(x_nhwc, w_hwio, bias):
    out = lax.conv_general_dilated(
        x_nhwc, w_hwio, window_strides=(1, 1), padding="SAME",
        dimension_numbers=("NHWC", "HWIO", "NHWC"))
    return out + bias[None, None, None, :]


def _ref_upsample_add(y_nhwc, base_nhwc):
    _, Hi, Wi, _ = y_nhwc.shape
    _, Ho, Wo, _ = base_nhwc.shape
    ah = _interp_matrix(Ho, Hi)
    aw = _interp_matrix(Wo, Wi)
    up = jnp.einsum("oh,nhwc,pw->nopc", ah, y_nhwc, aw)
    return base_nhwc + up


def _ref_forward(x, params):
    f1 = jnp.transpose(x["feature_1"], (0, 2, 3, 1))
    f2 = jnp.transpose(x["feature_2"], (0, 2, 3, 1))
    f3 = jnp.transpose(x["feature_3"], (0, 2, 3, 1))
    new_f2 = _ref_upsample_add(_ref_conv3x3(f3, params["w1"], params["b1"]), f2)
    new_f1 = _ref_upsample_add(_ref_conv3x3(new_f2, params["w2"], params["b2"]), f1)
    return {
        "feature_1": jnp.transpose(new_f1, (0, 3, 1, 2)),
        "feature_2": jnp.transpose(new_f2, (0, 3, 1, 2)),
        "feature_3": x["feature_3"],
    }


if __name__ == "__main__":
    B, C = 2, 8                      # in_channels = 8 -> conv1: 8->4, conv2: 4->2
    key = jax.random.PRNGKey(0)
    kp, k1, k2, k3 = jax.random.split(key, 4)

    params = init_params(C, kp)
    x = {
        "feature_1": jax.random.normal(k1, (B, C // 4, 16, 16), jnp.float32),
        "feature_2": jax.random.normal(k2, (B, C // 2, 8, 8), jnp.float32),
        "feature_3": jax.random.normal(k3, (B, C, 4, 4), jnp.float32),
    }

    out = jax.block_until_ready(fpn_forward(x, params))
    ref = jax.block_until_ready(_ref_forward(x, params))

    for k in ("feature_1", "feature_2", "feature_3"):
        np.testing.assert_allclose(np.asarray(out[k]), np.asarray(ref[k]),
                                   rtol=1e-4, atol=1e-4)

    print("KERNEL_OK")
</pallas_src>

<mosaic_0001>
module attributes {stable_mosaic.version = 11 : i64} {
  func.func @_fpn_fused_kernel(%arg0: i32, %arg1: memref<1x4x32xf32, #tpu.memory_space<vmem>>, %arg2: memref<1x8x32xf32, #tpu.memory_space<vmem>>, %arg3: memref<1x16x32xf32, #tpu.memory_space<vmem>>, %arg4: memref<72x4xf32, #tpu.memory_space<vmem>>, %arg5: memref<1x4xf32, #tpu.memory_space<vmem>>, %arg6: memref<36x2xf32, #tpu.memory_space<vmem>>, %arg7: memref<1x2xf32, #tpu.memory_space<vmem>>, %arg8: memref<8x4xf32, #tpu.memory_space<vmem>>, %arg9: memref<8x4xf32, #tpu.memory_space<vmem>>, %arg10: memref<16x8xf32, #tpu.memory_space<vmem>>, %arg11: memref<16x8xf32, #tpu.memory_space<vmem>>, %arg12: memref<1x8x32xf32, #tpu.memory_space<vmem>>, %arg13: memref<1x16x32xf32, #tpu.memory_space<vmem>>, %arg14: memref<6x6x8xf32, #tpu.memory_space<vmem>>, %arg15: memref<16x9x8xf32, #tpu.memory_space<vmem>>, %arg16: memref<10x10x4xf32, #tpu.memory_space<vmem>>, %arg17: memref<64x9x4xf32, #tpu.memory_space<vmem>>) attributes {dimension_semantics = [#tpu.dimension_semantics<parallel>], iteration_bounds = array<i64: 2>, scalar_prefetch = 0 : i64, scratch_operands = 4 : i64, tpu.core_type = #tpu.core_type<tc>, window_params = [{transform_indices = @transform_0, window_bounds = array<i64: 1, 4, 32>}, {transform_indices = @transform_1, window_bounds = array<i64: 1, 8, 32>}, {transform_indices = @transform_2, window_bounds = array<i64: 1, 16, 32>}, {pipeline_mode = #tpu.pipeline_mode<synchronous>, transform_indices = @transform_3, window_bounds = array<i64: 72, 4>}, {pipeline_mode = #tpu.pipeline_mode<synchronous>, transform_indices = @transform_4, window_bounds = array<i64: 1, 4>}, {pipeline_mode = #tpu.pipeline_mode<synchronous>, transform_indices = @transform_5, window_bounds = array<i64: 36, 2>}, {pipeline_mode = #tpu.pipeline_mode<synchronous>, transform_indices = @transform_6, window_bounds = array<i64: 1, 2>}, {pipeline_mode = #tpu.pipeline_mode<synchronous>, transform_indices = @transform_7, window_bounds = array<i64: 8, 4>}, {pipeline_mode = #tpu.pipeline_mode<synchronous>, transform_indices = @transform_8, window_bounds = array<i64: 8, 4>}, {pipeline_mode = #tpu.pipeline_mode<synchronous>, transform_indices = @transform_9, window_bounds = array<i64: 16, 8>}, {pipeline_mode = #tpu.pipeline_mode<synchronous>, transform_indices = @transform_10, window_bounds = array<i64: 16, 8>}, {transform_indices = @transform_11, window_bounds = array<i64: 1, 8, 32>}, {transform_indices = @transform_12, window_bounds = array<i64: 1, 16, 32>}]} {
    %c0 = arith.constant 0 : index
    %c0_0 = arith.constant 0 : index
    %c0_1 = arith.constant 0 : index
    %0 = vector.load %arg1[%c0, %c0_0, %c0_1] : memref<1x4x32xf32, #tpu.memory_space<vmem>>, vector<1x4x32xf32>
    %1 = vector.shape_cast %0 : vector<1x4x32xf32> to vector<4x32xf32>
    %2 = vector.shape_cast %1 : vector<4x32xf32> to vector<4x4x8xf32>
    %cst = arith.constant 0.000000e+00 : f32
    %3 = vector.broadcast %cst : f32 to vector<6x6x8xf32>
    %c0_2 = arith.constant 0 : index
    %c0_3 = arith.constant 0 : index
    %c0_4 = arith.constant 0 : index
    %4 = vector.load %arg14[%c0_2, %c0_3, %c0_4] : memref<6x6x8xf32, #tpu.memory_space<vmem>>, vector<6x6x8xf32>
    tpu.vector_store %arg14[%c0_2, %c0_3, %c0_4], %3 {strides = array<i32>} : memref<6x6x8xf32, #tpu.memory_space<vmem>>, vector<6x6x8xf32>,
    %c1 = arith.constant 1 : index
    %c1_5 = arith.constant 1 : index
    %c0_6 = arith.constant 0 : index
    %5 = vector.load %arg14[%c1, %c1_5, %c0_6] : memref<6x6x8xf32, #tpu.memory_space<vmem>>, vector<4x4x8xf32>
    tpu.vector_store %arg14[%c1, %c1_5, %c0_6], %2 {strides = array<i32>} : memref<6x6x8xf32, #tpu.memory_space<vmem>>, vector<4x4x8xf32>,
    %c0_7 = arith.constant 0 : index
    %c0_8 = arith.constant 0 : index
    %c0_9 = arith.constant 0 : index
    %6 = vector.load %arg14[%c0_7, %c0_8, %c0_9] : memref<6x6x8xf32, #tpu.memory_space<vmem>>, vector<4x4x8xf32>
    %7 = vector.shape_cast %6 : vector<4x4x8xf32> to vector<16x8xf32>
    %c0_10 = arith.constant 0 : index
    %c0_11 = arith.constant 0 : index
    %c0_12 = arith.constant 0 : index
    %8 = vector.load %arg15[%c0_10, %c0_11, %c0_12] : memref<16x9x8xf32, #tpu.memory_space<vmem>>, vector<16x1x8xf32>
    %9 = vector.shape_cast %8 : vector<16x1x8xf32> to vector<16x8xf32>
    %10 = vector.shape_cast %7 : vector<16x8xf32> to vector<16x1x8xf32>
    tpu.vector_store %arg15[%c0_10, %c0_11, %c0_12], %10 {strides = array<i32>} : memref<16x9x8xf32, #tpu.memory_space<vmem>>, vector<16x1x8xf32>,
    %c0_13 = arith.constant 0 : index
    %c1_14 = arith.constant 1 : index
    %c0_15 = arith.constant 0 : index
    %11 = vector.load %arg14[%c0_13, %c1_14, %c0_15] : memref<6x6x8xf32, #tpu.memory_space<vmem>>, vector<4x4x8xf32>
    %12 = vector.shape_cast %11 : vector<4x4x8xf32> to vector<16x8xf32>
    %c0_16 = arith.constant 0 : index
    %c1_17 = arith.constant 1 : index
    %c0_18 = arith.constant 0 : index
    %13 = vector.load %arg15[%c0_16, %c1_17, %c0_18] : memref<16x9x8xf32, #tpu.memory_space<vmem>>, vector<16x1x8xf32>
    %14 = vector.shape_cast %13 : vector<16x1x8xf32> to vector<16x8xf32>
    %15 = vector.shape_cast %12 : vector<16x8xf32> to vector<16x1x8xf32>
    tpu.vector_store %arg15[%c0_16, %c1_17, %c0_18], %15 {strides = array<i32>} : memref<16x9x8xf32, #tpu.memory_space<vmem>>, vector<16x1x8xf32>,
    %c0_19 = arith.constant 0 : index
    %c2 = arith.constant 2 : index
    %c0_20 = arith.constant 0 : index
    %16 = vector.load %arg14[%c0_19, %c2, %c0_20] : memref<6x6x8xf32, #tpu.memory_space<vmem>>, vector<4x4x8xf32>
    %17 = vector.shape_cast %16 : vector<4x4x8xf32> to vector<16x8xf32>
    %c0_21 = arith.constant 0 : index
    %c2_22 = arith.constant 2 : index
    %c0_23 = arith.constant 0 : index
    %18 = vector.load %arg15[%c0_21, %c2_22, %c0_23] : memref<16x9x8xf32, #tpu.memory_space<vmem>>, vector<16x1x8xf32>
    %19 = vector.shape_cast %18 : vector<16x1x8xf32> to vector<16x8xf32>
    %20 = vector.shape_cast %17 : vector<16x8xf32> to vector<16x1x8xf32>
    tpu.vector_store %arg15[%c0_21, %c2_22, %c0_23], %20 {strides = array<i32>} : memref<16x9x8xf32, #tpu.memory_space<vmem>>, vector<16x1x8xf32>,
    %c1_24 = arith.constant 1 : index
    %c0_25 = arith.constant 0 : index
    %c0_26 = arith.constant 0 : index
    %21 = vector.load %arg14[%c1_24, %c0_25, %c0_26] : memref<6x6x8xf32, #tpu.memory_space<vmem>>, vector<4x4x8xf32>
    %22 = vector.shape_cast %21 : vector<4x4x8xf32> to vector<16x8xf32>
    %c0_27 = arith.constant 0 : index
    %c3 = arith.constant 3 : index
    %c0_28 = arith.constant 0 : index
    %23 = vector.load %arg15[%c0_27, %c3, %c0_28] : memref<16x9x8xf32, #tpu.memory_space<vmem>>, vector<16x1x8xf32>
    %24 = vector.shape_cast %23 : vector<16x1x8xf32> to vector<16x8xf32>
    %25 = vector.shape_cast %22 : vector<16x8xf32> to vector<16x1x8xf32>
    tpu.vector_store %arg15[%c0_27, %c3, %c0_28], %25 {strides = array<i32>} : memref<16x9x8xf32, #tpu.memory_space<vmem>>, vector<16x1x8xf32>,
    %c1_29 = arith.constant 1 : index
    %c1_30 = arith.constant 1 : index
    %c0_31 = arith.constant 0 : index
    %26 = vector.load %arg14[%c1_29, %c1_30, %c0_31] : memref<6x6x8xf32, #tpu.memory_space<vmem>>, vector<4x4x8xf32>
    %27 = vector.shape_cast %26 : vector<4x4x8xf32> to vector<16x8xf32>
    %c0_32 = arith.constant 0 : index
    %c4 = arith.constant 4 : index
    %c0_33 = arith.constant 0 : index
    %28 = vector.load %arg15[%c0_32, %c4, %c0_33] : memref<16x9x8xf32, #tpu.memory_space<vmem>>, vector<16x1x8xf32>
    %29 = vector.shape_cast %28 : vector<16x1x8xf32> to vector<16x8xf32>
    %30 = vector.shape_cast %27 : vector<16x8xf32> to vector<16x1x8xf32>
    tpu.vector_store %arg15[%c0_32, %c4, %c0_33], %30 {strides = array<i32>} : memref<16x9x8xf32, #tpu.memory_space<vmem>>, vector<16x1x8xf32>,
    %c1_34 = arith.constant 1 : index
    %c2_35 = arith.constant 2 : index
    %c0_36 = arith.constant 0 : index
    %31 = vector.load %arg14[%c1_34, %c2_35, %c0_36] : memref<6x6x8xf32, #tpu.memory_space<vmem>>, vector<4x4x8xf32>
    %32 = vector.shape_cast %31 : vector<4x4x8xf32> to vector<16x8xf32>
    %c0_37 = arith.constant 0 : index
    %c5 = arith.constant 5 : index
    %c0_38 = arith.constant 0 : index
    %33 = vector.load %arg15[%c0_37, %c5, %c0_38] : memref<16x9x8xf32, #tpu.memory_space<vmem>>, vector<16x1x8xf32>
    %34 = vector.shape_cast %33 : vector<16x1x8xf32> to vector<16x8xf32>
    %35 = vector.shape_cast %32 : vector<16x8xf32> to vector<16x1x8xf32>
    tpu.vector_store %arg15[%c0_37, %c5, %c0_38], %35 {strides = array<i32>} : memref<16x9x8xf32, #tpu.memory_space<vmem>>, vector<16x1x8xf32>,
    %c2_39 = arith.constant 2 : index
    %c0_40 = arith.constant 0 : index
    %c0_41 = arith.constant 0 : index
    %36 = vector.load %arg14[%c2_39, %c0_40, %c0_41] : memref<6x6x8xf32, #tpu.memory_space<vmem>>, vector<4x4x8xf32>
    %37 = vector.shape_cast %36 : vector<4x4x8xf32> to vector<16x8xf32>
    %c0_42 = arith.constant 0 : index
    %c6 = arith.constant 6 : index
    %c0_43 = arith.constant 0 : index
    %38 = vector.load %arg15[%c0_42, %c6, %c0_43] : memref<16x9x8xf32, #tpu.memory_space<vmem>>, vector<16x1x8xf32>
    %39 = vector.shape_cast %38 : vector<16x1x8xf32> to vector<16x8xf32>
    %40 = vector.shape_cast %37 : vector<16x8xf32> to vector<16x1x8xf32>
    tpu.vector_store %arg15[%c0_42, %c6, %c0_43], %40 {strides = array<i32>} : memref<16x9x8xf32, #tpu.memory_space<vmem>>, vector<16x1x8xf32>,
    %c2_44 = arith.constant 2 : index
    %c1_45 = arith.constant 1 : index
    %c0_46 = arith.constant 0 : index
    %41 = vector.load %arg14[%c2_44, %c1_45, %c0_46] : memref<6x6x8xf32, #tpu.memory_space<vmem>>, vector<4x4x8xf32>
    %42 = vector.shape_cast %41 : vector<4x4x8xf32> to vector<16x8xf32>
    %c0_47 = arith.constant 0 : index
    %c7 = arith.constant 7 : index
    %c0_48 = arith.constant 0 : index
    %43 = vector.load %arg15[%c0_47, %c7, %c0_48] : memref<16x9x8xf32, #tpu.memory_space<vmem>>, vector<16x1x8xf32>
    %44 = vector.shape_cast %43 : vector<16x1x8xf32> to vector<16x8xf32>
    %45 = vector.shape_cast %42 : vector<16x8xf32> to vector<16x1x8xf32>
    tpu.vector_store %arg15[%c0_47, %c7, %c0_48], %45 {strides = array<i32>} : memref<16x9x8xf32, #tpu.memory_space<vmem>>, vector<16x1x8xf32>,
    %c2_49 = arith.constant 2 : index
    %c2_50 = arith.constant 2 : index
    %c0_51 = arith.constant 0 : index
    %46 = vector.load %arg14[%c2_49, %c2_50, %c0_51] : memref<6x6x8xf32, #tpu.memory_space<vmem>>, vector<4x4x8xf32>
    %47 = vector.shape_cast %46 : vector<4x4x8xf32> to vector<16x8xf32>
    %c0_52 = arith.constant 0 : index
    %c8 = arith.constant 8 : index
    %c0_53 = arith.constant 0 : index
    %48 = vector.load %arg15[%c0_52, %c8, %c0_53] : memref<16x9x8xf32, #tpu.memory_space<vmem>>, vector<16x1x8xf32>
    %49 = vector.shape_cast %48 : vector<16x1x8xf32> to vector<16x8xf32>
    %50 = vector.shape_cast %47 : vector<16x8xf32> to vector<16x1x8xf32>
    tpu.vector_store %arg15[%c0_52, %c8, %c0_53], %50 {strides = array<i32>} : memref<16x9x8xf32, #tpu.memory_space<vmem>>, vector<16x1x8xf32>,
    %c0_54 = arith.constant 0 : index
    %c0_55 = arith.constant 0 : index
    %c0_56 = arith.constant 0 : index
    %51 = vector.load %arg15[%c0_54, %c0_55, %c0_56] : memref<16x9x8xf32, #tpu.memory_space<vmem>>, vector<16x9x8xf32>
    %52 = vector.shape_cast %51 : vector<16x9x8xf32> to vector<16x72xf32>
    %c0_57 = arith.constant 0 : index
    %c0_58 = arith.constant 0 : index
    %53 = vector.load %arg4[%c0_57, %c0_58] : memref<72x4xf32, #tpu.memory_space<vmem>>, vector<72x4xf32>
    %cst_59 = arith.constant dense<0.000000e+00> : vector<16x4xf32>
    %54 = tpu.matmul %52, %53, %cst_59 {dimension_numbers = #tpu.dot_dimension_numbers<[1], [0], [0], [1], [0, 0, 1, 1], [], []>} : vector<16x72xf32>, vector<72x4xf32>, vector<16x4xf32> -> vector<16x4xf32>
    %c0_60 = arith.constant 0 : index
    %c0_61 = arith.constant 0 : index
    %55 = vector.load %arg5[%c0_60, %c0_61] : memref<1x4xf32, #tpu.memory_space<vmem>>, vector<1x4xf32>
    %56 = vector.shape_cast %55 : vector<1x4xf32> to vector<4xf32>
    %57 = vector.shape_cast %56 : vector<4xf32> to vector<1x4xf32>
    %58 = vector.broadcast %57 : vector<1x4xf32> to vector<16x4xf32>
    %59 = arith.addf %54, %58 : vector<16x4xf32>
    %c0_62 = arith.constant 0 : index
    %c0_63 = arith.constant 0 : index
    %c0_64 = arith.constant 0 : index
    %60 = vector.load %arg2[%c0_62, %c0_63, %c0_64] : memref<1x8x32xf32, #tpu.memory_space<vmem>>, vector<1x8x32xf32>
    %61 = vector.shape_cast %60 : vector<1x8x32xf32> to vector<8x32xf32>
    %62 = vector.shape_cast %59 : vector<16x4xf32> to vector<4x4x4xf32>
    %c0_65 = arith.constant 0 : index
    %c0_66 = arith.constant 0 : index
    %63 = vector.load %arg9[%c0_65, %c0_66] : memref<8x4xf32, #tpu.memory_space<vmem>>, vector<8x4xf32>
    %64 = vector.shape_cast %63 : vector<8x4xf32> to vector<1x8x4xf32>
    %65 = vector.broadcast %64 : vector<1x8x4xf32> to vector<4x8x4xf32>
    "tpu.trace_start"() <{level = 10 : i32, message = "hpw,hwc->hpc"}> : () -> ()
    %cst_67 = arith.constant dense<0.000000e+00> : vector<4x8x4xf32>
    %66 = tpu.matmul %65, %62, %cst_67 {dimension_numbers = #tpu.dot_dimension_numbers<[2], [1], [1], [2], [0, 0, 0, 1, 1, 2], [0], [0]>} : vector<4x8x4xf32>, vector<4x4x4xf32>, vector<4x8x4xf32> -> vector<4x8x4xf32>
    "tpu.trace_stop"() : () -> ()
    %c0_68 = arith.constant 0 : index
    %c0_69 = arith.constant 0 : index
    %67 = vector.load %arg8[%c0_68, %c0_69] : memref<8x4xf32, #tpu.memory_space<vmem>>, vector<8x4xf32>
    %68 = vector.shape_cast %66 : vector<4x8x4xf32> to vector<4x32xf32>
    %cst_70 = arith.constant dense<0.000000e+00> : vector<8x32xf32>
    %69 = tpu.matmul %67, %68, %cst_70 {dimension_numbers = #tpu.dot_dimension_numbers<[1], [0], [0], [1], [0, 0, 1, 1], [], []>} : vector<8x4xf32>, vector<4x32xf32>, vector<8x32xf32> -> vector<8x32xf32>
    %70 = arith.addf %61, %69 : vector<8x32xf32>
    %c0_71 = arith.constant 0 : index
    %c0_72 = arith.constant 0 : index
    %c0_73 = arith.constant 0 : index
    %71 = vector.load %arg12[%c0_71, %c0_72, %c0_73] : memref<1x8x32xf32, #tpu.memory_space<vmem>>, vector<1x8x32xf32>
    %72 = vector.shape_cast %71 : vector<1x8x32xf32> to vector<8x32xf32>
    %73 = vector.shape_cast %70 : vector<8x32xf32> to vector<1x8x32xf32>
    tpu.vector_store %arg12[%c0_71, %c0_72, %c0_73], %73 {strides = array<i32>} : memref<1x8x32xf32, #tpu.memory_space<vmem>>, vector<1x8x32xf32>,
    %74 = vector.shape_cast %70 : vector<8x32xf32> to vector<8x8x4xf32>
    %cst_74 = arith.constant 0.000000e+00 : f32
    %75 = vector.broadcast %cst_74 : f32 to vector<10x10x4xf32>
    %c0_75 = arith.constant 0 : index
    %c0_76 = arith.constant 0 : index
    %c0_77 = arith.constant 0 : index
    %76 = vector.load %arg16[%c0_75, %c0_76, %c0_77] : memref<10x10x4xf32, #tpu.memory_space<vmem>>, vector<10x10x4xf32>
    tpu.vector_store %arg16[%c0_75, %c0_76, %c0_77], %75 {strides = array<i32>} : memref<10x10x4xf32, #tpu.memory_space<vmem>>, vector<10x10x4xf32>,
    %c1_78 = arith.constant 1 : index
    %c1_79 = arith.constant 1 : index
    %c0_80 = arith.constant 0 : index
    %77 = vector.load %arg16[%c1_78, %c1_79, %c0_80] : memref<10x10x4xf32, #tpu.memory_space<vmem>>, vector<8x8x4xf32>
    tpu.vector_store %arg16[%c1_78, %c1_79, %c0_80], %74 {strides = array<i32>} : memref<10x10x4xf32, #tpu.memory_space<vmem>>, vector<8x8x4xf32>,
    %c0_81 = arith.constant 0 : index
    %c0_82 = arith.constant 0 : index
    %c0_83 = arith.constant 0 : index
    %78 = vector.load %arg16[%c0_81, %c0_82, %c0_83] : memref<10x10x4xf32, #tpu.memory_space<vmem>>, vector<8x8x4xf32>
    %79 = vector.shape_cast %78 : vector<8x8x4xf32> to vector<64x4xf32>
    %c0_84 = arith.constant 0 : index
    %c0_85 = arith.constant 0 : index
    %c0_86 = arith.constant 0 : index
    %80 = vector.load %arg17[%c0_84, %c0_85, %c0_86] : memref<64x9x4xf32, #tpu.memory_space<vmem>>, vector<64x1x4xf32>
    %81 = vector.shape_cast %80 : vector<64x1x4xf32> to vector<64x4xf32>
    %82 = vector.shape_cast %79 : vector<64x4xf32> to vector<64x1x4xf32>
    tpu.vector_store %arg17[%c0_84, %c0_85, %c0_86], %82 {strides = array<i32>} : memref<64x9x4xf32, #tpu.memory_space<vmem>>, vector<64x1x4xf32>,
    %c0_87 = arith.constant 0 : index
    %c1_88 = arith.constant 1 : index
    %c0_89 = arith.constant 0 : index
    %83 = vector.load %arg16[%c0_87, %c1_88, %c0_89] : memref<10x10x4xf32, #tpu.memory_space<vmem>>, vector<8x8x4xf32>
    %84 = vector.shape_cast %83 : vector<8x8x4xf32> to vector<64x4xf32>
    %c0_90 = arith.constant 0 : index
    %c1_91 = arith.constant 1 : index
    %c0_92 = arith.constant 0 : index
    %85 = vector.load %arg17[%c0_90, %c1_91, %c0_92] : memref<64x9x4xf32, #tpu.memory_space<vmem>>, vector<64x1x4xf32>
    %86 = vector.shape_cast %85 : vector<64x1x4xf32> to vector<64x4xf32>
    %87 = vector.shape_cast %84 : vector<64x4xf32> to vector<64x1x4xf32>
    tpu.vector_store %arg17[%c0_90, %c1_91, %c0_92], %87 {strides = array<i32>} : memref<64x9x4xf32, #tpu.memory_space<vmem>>, vector<64x1x4xf32>,
    %c0_93 = arith.constant 0 : index
    %c2_94 = arith.constant 2 : index
    %c0_95 = arith.constant 0 : index
    %88 = vector.load %arg16[%c0_93, %c2_94, %c0_95] : memref<10x10x4xf32, #tpu.memory_space<vmem>>, vector<8x8x4xf32>
    %89 = vector.shape_cast %88 : vector<8x8x4xf32> to vector<64x4xf32>
    %c0_96 = arith.constant 0 : index
    %c2_97 = arith.constant 2 : index
    %c0_98 = arith.constant 0 : index
    %90 = vector.load %arg17[%c0_96, %c2_97, %c0_98] : memref<64x9x4xf32, #tpu.memory_space<vmem>>, vector<64x1x4xf32>
    %91 = vector.shape_cast %90 : vector<64x1x4xf32> to vector<64x4xf32>
    %92 = vector.shape_cast %89 : vector<64x4xf32> to vector<64x1x4xf32>
    tpu.vector_store %arg17[%c0_96, %c2_97, %c0_98], %92 {strides = array<i32>} : memref<64x9x4xf32, #tpu.memory_space<vmem>>, vector<64x1x4xf32>,
    %c1_99 = arith.constant 1 : index
    %c0_100 = arith.constant 0 : index
    %c0_101 = arith.constant 0 : index
    %93 = vector.load %arg16[%c1_99, %c0_100, %c0_101] : memref<10x10x4xf32, #tpu.memory_space<vmem>>, vector<8x8x4xf32>
    %94 = vector.shape_cast %93 : vector<8x8x4xf32> to vector<64x4xf32>
    %c0_102 = arith.constant 0 : index
    %c3_103 = arith.constant 3 : index
    %c0_104 = arith.constant 0 : index
    %95 = vector.load %arg17[%c0_102, %c3_103, %c0_104] : memref<64x9x4xf32, #tpu.memory_space<vmem>>, vector<64x1x4xf32>
    %96 = vector.shape_cast %95 : vector<64x1x4xf32> to vector<64x4xf32>
    %97 = vector.shape_cast %94 : vector<64x4xf32> to vector<64x1x4xf32>
    tpu.vector_store %arg17[%c0_102, %c3_103, %c0_104], %97 {strides = array<i32>} : memref<64x9x4xf32, #tpu.memory_space<vmem>>, vector<64x1x4xf32>,
    %c1_105 = arith.constant 1 : index
    %c1_106 = arith.constant 1 : index
    %c0_107 = arith.constant 0 : index
    %98 = vector.load %arg16[%c1_105, %c1_106, %c0_107] : memref<10x10x4xf32, #tpu.memory_space<vmem>>, vector<8x8x4xf32>
    %99 = vector.shape_cast %98 : vector<8x8x4xf32> to vector<64x4xf32>
    %c0_108 = arith.constant 0 : index
    %c4_109 = arith.constant 4 : index
    %c0_110 = arith.constant 0 : index
    %100 = vector.load %arg17[%c0_108, %c4_109, %c0_110] : memref<64x9x4xf32, #tpu.memory_space<vmem>>, vector<64x1x4xf32>
    %101 = vector.shape_cast %100 : vector<64x1x4xf32> to vector<64x4xf32>
    %102 = vector.shape_cast %99 : vector<64x4xf32> to vector<64x1x4xf32>
    tpu.vector_store %arg17[%c0_108, %c4_109, %c0_110], %102 {strides = array<i32>} : memref<64x9x4xf32, #tpu.memory_space<vmem>>, vector<64x1x4xf32>,
    %c1_111 = arith.constant 1 : index
    %c2_112 = arith.constant 2 : index
    %c0_113 = arith.constant 0 : index
    %103 = vector.load %arg16[%c1_111, %c2_112, %c0_113] : memref<10x10x4xf32, #tpu.memory_space<vmem>>, vector<8x8x4xf32>
    %104 = vector.shape_cast %103 : vector<8x8x4xf32> to vector<64x4xf32>
    %c0_114 = arith.constant 0 : index
    %c5_115 = arith.constant 5 : index
    %c0_116 = arith.constant 0 : index
    %105 = vector.load %arg17[%c0_114, %c5_115, %c0_116] : memref<64x9x4xf32, #tpu.memory_space<vmem>>, vector<64x1x4xf32>
    %106 = vector.shape_cast %105 : vector<64x1x4xf32> to vector<64x4xf32>
    %107 = vector.shape_cast %104 : vector<64x4xf32> to vector<64x1x4xf32>
    tpu.vector_store %arg17[%c0_114, %c5_115, %c0_116], %107 {strides = array<i32>} : memref<64x9x4xf32, #tpu.memory_space<vmem>>, vector<64x1x4xf32>,
    %c2_117 = arith.constant 2 : index
    %c0_118 = arith.constant 0 : index
    %c0_119 = arith.constant 0 : index
    %108 = vector.load %arg16[%c2_117, %c0_118, %c0_119] : memref<10x10x4xf32, #tpu.memory_space<vmem>>, vector<8x8x4xf32>
    %109 = vector.shape_cast %108 : vector<8x8x4xf32> to vector<64x4xf32>
    %c0_120 = arith.constant 0 : index
    %c6_121 = arith.constant 6 : index
    %c0_122 = arith.constant 0 : index
    %110 = vector.load %arg17[%c0_120, %c6_121, %c0_122] : memref<64x9x4xf32, #tpu.memory_space<vmem>>, vector<64x1x4xf32>
    %111 = vector.shape_cast %110 : vector<64x1x4xf32> to vector<64x4xf32>
    %112 = vector.shape_cast %109 : vector<64x4xf32> to vector<64x1x4xf32>
    tpu.vector_store %arg17[%c0_120, %c6_121, %c0_122], %112 {strides = array<i32>} : memref<64x9x4xf32, #tpu.memory_space<vmem>>, vector<64x1x4xf32>,
    %c2_123 = arith.constant 2 : index
    %c1_124 = arith.constant 1 : index
    %c0_125 = arith.constant 0 : index
    %113 = vector.load %arg16[%c2_123, %c1_124, %c0_125] : memref<10x10x4xf32, #tpu.memory_space<vmem>>, vector<8x8x4xf32>
    %114 = vector.shape_cast %113 : vector<8x8x4xf32> to vector<64x4xf32>
    %c0_126 = arith.constant 0 : index
    %c7_127 = arith.constant 7 : index
    %c0_128 = arith.constant 0 : index
    %115 = vector.load %arg17[%c0_126, %c7_127, %c0_128] : memref<64x9x4xf32, #tpu.memory_space<vmem>>, vector<64x1x4xf32>
    %116 = vector.shape_cast %115 : vector<64x1x4xf32> to vector<64x4xf32>
    %117 = vector.shape_cast %114 : vector<64x4xf32> to vector<64x1x4xf32>
    tpu.vector_store %arg17[%c0_126, %c7_127, %c0_128], %117 {strides = array<i32>} : memref<64x9x4xf32, #tpu.memory_space<vmem>>, vector<64x1x4xf32>,
    %c2_129 = arith.constant 2 : index
    %c2_130 = arith.constant 2 : index
    %c0_131 = arith.constant 0 : index
    %118 = vector.load %arg16[%c2_129, %c2_130, %c0_131] : memref<10x10x4xf32, #tpu.memory_space<vmem>>, vector<8x8x4xf32>
    %119 = vector.shape_cast %118 : vector<8x8x4xf32> to vector<64x4xf32>
    %c0_132 = arith.constant 0 : index
    %c8_133 = arith.constant 8 : index
    %c0_134 = arith.constant 0 : index
    %120 = vector.load %arg17[%c0_132, %c8_133, %c0_134] : memref<64x9x4xf32, #tpu.memory_space<vmem>>, vector<64x1x4xf32>
    %121 = vector.shape_cast %120 : vector<64x1x4xf32> to vector<64x4xf32>
    %122 = vector.shape_cast %119 : vector<64x4xf32> to vector<64x1x4xf32>
    tpu.vector_store %arg17[%c0_132, %c8_133, %c0_134], %122 {strides = array<i32>} : memref<64x9x4xf32, #tpu.memory_space<vmem>>, vector<64x1x4xf32>,
    %c0_135 = arith.constant 0 : index
    %c0_136 = arith.constant 0 : index
    %c0_137 = arith.constant 0 : index
    %123 = vector.load %arg17[%c0_135, %c0_136, %c0_137] : memref<64x9x4xf32, #tpu.memory_space<vmem>>, vector<64x9x4xf32>
    %124 = vector.shape_cast %123 : vector<64x9x4xf32> to vector<64x36xf32>
    %c0_138 = arith.constant 0 : index
    %c0_139 = arith.constant 0 : index
    %125 = vector.load %arg6[%c0_138, %c0_139] : memref<36x2xf32, #tpu.memory_space<vmem>>, vector<36x2xf32>
    %cst_140 = arith.constant dense<0.000000e+00> : vector<64x2xf32>
    %126 = tpu.matmul %124, %125, %cst_140 {dimension_numbers = #tpu.dot_dimension_numbers<[1], [0], [0], [1], [0, 0, 1, 1], [], []>} : vector<64x36xf32>, vector<36x2xf32>, vector<64x2xf32> -> vector<64x2xf32>
    %c0_141 = arith.constant 0 : index
    %c0_142 = arith.constant 0 : index
    %127 = vector.load %arg7[%c0_141, %c0_142] : memref<1x2xf32, #tpu.memory_space<vmem>>, vector<1x2xf32>
    %128 = vector.shape_cast %127 : vector<1x2xf32> to vector<2xf32>
    %129 = vector.shape_cast %128 : vector<2xf32> to vector<1x2xf32>
    %130 = vector.broadcast %129 : vector<1x2xf32> to vector<64x2xf32>
    %131 = arith.addf %126, %130 : vector<64x2xf32>
    %c0_143 = arith.constant 0 : index
    %c0_144 = arith.constant 0 : index
    %c0_145 = arith.constant 0 : index
    %132 = vector.load %arg3[%c0_143, %c0_144, %c0_145] : memref<1x16x32xf32, #tpu.memory_space<vmem>>, vector<1x16x32xf32>
    %133 = vector.shape_cast %132 : vector<1x16x32xf32> to vector<16x32xf32>
    %134 = vector.shape_cast %131 : vector<64x2xf32> to vector<8x8x2xf32>
    %c0_146 = arith.constant 0 : index
    %c0_147 = arith.constant 0 : index
    %135 = vector.load %arg11[%c0_146, %c0_147] : memref<16x8xf32, #tpu.memory_space<vmem>>, vector<16x8xf32>
    %136 = vector.shape_cast %135 : vector<16x8xf32> to vector<1x16x8xf32>
    %137 = vector.broadcast %136 : vector<1x16x8xf32> to vector<8x16x8xf32>
    "tpu.trace_start"() <{level = 10 : i32, message = "hpw,hwc->hpc"}> : () -> ()
    %cst_148 = arith.constant dense<0.000000e+00> : vector<8x16x2xf32>
    %138 = tpu.matmul %137, %134, %cst_148 {dimension_numbers = #tpu.dot_dimension_numbers<[2], [1], [1], [2], [0, 0, 0, 1, 1, 2], [0], [0]>} : vector<8x16x8xf32>, vector<8x8x2xf32>, vector<8x16x2xf32> -> vector<8x16x2xf32>
    "tpu.trace_stop"() : () -> ()
    %c0_149 = arith.constant 0 : index
    %c0_150 = arith.constant 0 : index
    %139 = vector.load %arg10[%c0_149, %c0_150] : memref<16x8xf32, #tpu.memory_space<vmem>>, vector<16x8xf32>
    %140 = vector.shape_cast %138 : vector<8x16x2xf32> to vector<8x32xf32>
    %cst_151 = arith.constant dense<0.000000e+00> : vector<16x32xf32>
    %141 = tpu.matmul %139, %140, %cst_151 {dimension_numbers = #tpu.dot_dimension_numbers<[1], [0], [0], [1], [0, 0, 1, 1], [], []>} : vector<16x8xf32>, vector<8x32xf32>, vector<16x32xf32> -> vector<16x32xf32>
    %142 = arith.addf %133, %141 : vector<16x32xf32>
    %c0_152 = arith.constant 0 : index
    %c0_153 = arith.constant 0 : index
    %c0_154 = arith.constant 0 : index
    %143 = vector.load %arg13[%c0_152, %c0_153, %c0_154] : memref<1x16x32xf32, #tpu.memory_space<vmem>>, vector<1x16x32xf32>
    %144 = vector.shape_cast %143 : vector<1x16x32xf32> to vector<16x32xf32>
    %145 = vector.shape_cast %142 : vector<16x32xf32> to vector<1x16x32xf32>
    tpu.vector_store %arg13[%c0_152, %c0_153, %c0_154], %145 {strides = array<i32>} : memref<1x16x32xf32, #tpu.memory_space<vmem>>, vector<1x16x32xf32>,
    return
  }
  func.func @transform_0(%arg0: i32) -> (i32, i32, i32) {
    %c0_i32 = arith.constant 0 : i32
    %c0_i32_0 = arith.constant 0 : i32
    %c0_i32_1 = arith.constant 0 : i32
    return %arg0, %c0_i32, %c0_i32_0 : i32, i32, i32
  }
  func.func @transform_1(%arg0: i32) -> (i32, i32, i32) {
    %c0_i32 = arith.constant 0 : i32
    %c0_i32_0 = arith.constant 0 : i32
    %c0_i32_1 = arith.constant 0 : i32
    return %arg0, %c0_i32, %c0_i32_0 : i32, i32, i32
  }
  func.func @transform_2(%arg0: i32) -> (i32, i32, i32) {
    %c0_i32 = arith.constant 0 : i32
    %c0_i32_0 = arith.constant 0 : i32
    %c0_i32_1 = arith.constant 0 : i32
    return %arg0, %c0_i32, %c0_i32_0 : i32, i32, i32
  }
  func.func @transform_3(%arg0: i32) -> (i32, i32) {
    %c0_i32 = arith.constant 0 : i32
    %c0_i32_0 = arith.constant 0 : i32
    %c0_i32_1 = arith.constant 0 : i32
    return %c0_i32, %c0_i32_0 : i32, i32
  }
  func.func @transform_4(%arg0: i32) -> (i32, i32) {
    %c0_i32 = arith.constant 0 : i32
    %c0_i32_0 = arith.constant 0 : i32
    %c0_i32_1 = arith.constant 0 : i32
    return %c0_i32, %c0_i32_0 : i32, i32
  }
  func.func @transform_5(%arg0: i32) -> (i32, i32) {
    %c0_i32 = arith.constant 0 : i32
    %c0_i32_0 = arith.constant 0 : i32
    %c0_i32_1 = arith.constant 0 : i32
    return %c0_i32, %c0_i32_0 : i32, i32
  }
  func.func @transform_6(%arg0: i32) -> (i32, i32) {
    %c0_i32 = arith.constant 0 : i32
    %c0_i32_0 = arith.constant 0 : i32
    %c0_i32_1 = arith.constant 0 : i32
    return %c0_i32, %c0_i32_0 : i32, i32
  }
  func.func @transform_7(%arg0: i32) -> (i32, i32) {
    %c0_i32 = arith.constant 0 : i32
    %c0_i32_0 = arith.constant 0 : i32
    %c0_i32_1 = arith.constant 0 : i32
    return %c0_i32, %c0_i32_0 : i32, i32
  }
  func.func @transform_8(%arg0: i32) -> (i32, i32) {
    %c0_i32 = arith.constant 0 : i32
    %c0_i32_0 = arith.constant 0 : i32
    %c0_i32_1 = arith.constant 0 : i32
    return %c0_i32, %c0_i32_0 : i32, i32
  }
  func.func @transform_9(%arg0: i32) -> (i32, i32) {
    %c0_i32 = arith.constant 0 : i32
    %c0_i32_0 = arith.constant 0 : i32
    %c0_i32_1 = arith.constant 0 : i32
    return %c0_i32, %c0_i32_0 : i32, i32
  }
  func.func @transform_10(%arg0: i32) -> (i32, i32) {
    %c0_i32 = arith.constant 0 : i32
    %c0_i32_0 = arith.constant 0 : i32
    %c0_i32_1 = arith.constant 0 : i32
    return %c0_i32, %c0_i32_0 : i32, i32
  }
  func.func @transform_11(%arg0: i32) -> (i32, i32, i32) {
    %c0_i32 = arith.constant 0 : i32
    %c0_i32_0 = arith.constant 0 : i32
    %c0_i32_1 = arith.constant 0 : i32
    return %arg0, %c0_i32, %c0_i32_0 : i32, i32, i32
  }
  func.func @transform_12(%arg0: i32) -> (i32, i32, i32) {
    %c0_i32 = arith.constant 0 : i32
    %c0_i32_0 = arith.constant 0 : i32
    %c0_i32_1 = arith.constant 0 : i32
    return %arg0, %c0_i32, %c0_i32_0 : i32, i32, i32
  }
}

</mosaic_0001>

<llo_original>
// kernel: tpu_custom_call.1
$region0: #{tpu_custom_call.1}
  #allocation0 [shape = 'u32[]', space=smem, size = 0x4, offset = 0x4, fixed_abs, tag = 'smem constant byte address 0x4 - core index']
  #allocation1 [shape = 'u32[144,128]{1,0:T(1,128)}', space=vmem, size = 0x12000, scoped, tag = 'internal scratch']
  #allocation2 [shape = 'f32[6,6,8]{2,1,0:T(8,128)}', space=vmem, size = 0x6000, scoped, tag = 'scratch operand']
  #allocation3 [shape = 'f32[16,9,8]{2,1,0:T(8,128)}', space=vmem, size = 0x20000, scoped, tag = 'scratch operand']
  #allocation4 [shape = 'f32[10,10,4]{2,1,0:T(8,128)}', space=vmem, size = 0x14000, scoped, tag = 'scratch operand']
  #allocation5 [shape = 'f32[64,9,4]{2,1,0:T(8,128)}', space=vmem, size = 0x80000, scoped, tag = 'scratch operand']
  %s0 = inlined_call_operand.vmem [shape: f32[2,4,32], index: 0, kind: input, shape index: {}]
  %s1 = inlined_call_operand.vmem [shape: f32[2,8,32], index: 1, kind: input, shape index: {}]
  %s2 = inlined_call_operand.vmem [shape: f32[2,16,32], index: 2, kind: input, shape index: {}]
  %s3 = inlined_call_operand.vmem [shape: f32[72,4], index: 3, kind: input, shape index: {}]
  %s4 = inlined_call_operand.vmem [shape: f32[1,4], index: 4, kind: input, shape index: {}]
  %s5 = inlined_call_operand.vmem [shape: f32[36,2], index: 5, kind: input, shape index: {}]
  %s6 = inlined_call_operand.vmem [shape: f32[1,2], index: 6, kind: input, shape index: {}]
  %s7 = inlined_call_operand.vmem [shape: f32[8,4], index: 7, kind: input, shape index: {}]
  %s8 = inlined_call_operand.vmem [shape: f32[8,4], index: 8, kind: input, shape index: {}]
  %s9 = inlined_call_operand.vmem [shape: f32[16,8], index: 9, kind: input, shape index: {}]
  %s10 = inlined_call_operand.vmem [shape: f32[16,8], index: 10, kind: input, shape index: {}]
  %s11 = inlined_call_operand.hbm [shape: f32[2,8,32], index: 11, kind: output, shape index: {0}]
  %s12 = inlined_call_operand.hbm [shape: f32[2,16,32], index: 12, kind: output, shape index: {1}]
  %13 = xla_tuple %s11, %s12
  %s14 = sld [smem:[#allocation0]]
  $region85: #{tpu_custom_call.1} parent=0
    _
  %s16 = ssub.s32 1, %s14
  %s17 = scalar_select 0, %s16, %s14
  $region1: #{tpu_custom_call.1} parent=0
    #allocation6 [shape = 'u8[8192]{0}', space=vmem, size = 0x2000, scoped, tag = 'output window, operand 0']
    #allocation7 [shape = 's32[2]{0}', space=sflag, size = 0x8, scoped, tag = 'scoped memory for tpu_custom_call.1']
    #allocation8 [shape = 'u8[16384]{0}', space=vmem, size = 0x4000, scoped, tag = 'output window, operand 1']
    #allocation9 [shape = 's32[2]{0}', space=sflag, size = 0x8, scoped, tag = 'scoped memory for tpu_custom_call.1']
    %18 = vsyncpa [#allocation7], 0
    %s19 = scalar_lea.sflag [#allocation7], 1
    %20 = vsyncpa %s19, 0
    %21 = vsyncpa [#allocation9], 0
    %s22 = scalar_lea.sflag [#allocation9], 1
    %23 = vsyncpa %s22, 0
    loop: start=0, step=1, limit=4
    $region2: #{tpu_custom_call.1} parent=1 // loop_pre_header
      _
    $region3: #{tpu_custom_call.1} parent=1 // loop_header
      %s25 = sphi 0, %s29
      %p26 = scmp.ge.s32.totalorder %s25, 4
      %s35 = sphi 0, %s37
      %s38 = sphi 0, %s35
      %s39 = sphi 0, %s38
      %s55 = sphi 0, %s39
      %s61 = sphi 0, %s63
      %s64 = sphi 0, %s61
      %s65 = sphi 0, %s64
      %s81 = sphi 0, %s65
      %s87 = sphi 0, %s89
      %s90 = sphi 0, %s87
      %s91 = sphi 0, %s90
      %s107 = sphi 0, %s91
      %s111 = sphi 0, %s111
      %s113 = sphi 0, %s111
      %s114 = sphi 0, %s113
      %s128 = sphi 0, %s114
      %s132 = sphi 0, %s132
      %s134 = sphi 0, %s132
      %s135 = sphi 0, %s134
      %s149 = sphi 0, %s135
      %s153 = sphi 0, %s153
      %s155 = sphi 0, %s153
      %s156 = sphi 0, %s155
      %s170 = sphi 0, %s156
      %s174 = sphi 0, %s174
      %s176 = sphi 0, %s174
      %s177 = sphi 0, %s176
      %s191 = sphi 0, %s177
      %s195 = sphi 0, %s195
      %s197 = sphi 0, %s195
      %s198 = sphi 0, %s197
      %s212 = sphi 0, %s198
      %s216 = sphi 0, %s216
      %s218 = sphi 0, %s216
      %s219 = sphi 0, %s218
      %s233 = sphi 0, %s219
      %s237 = sphi 0, %s237
      %s239 = sphi 0, %s237
      %s240 = sphi 0, %s239
      %s254 = sphi 0, %s240
      %s258 = sphi 0, %s258
      %s260 = sphi 0, %s258
      %s261 = sphi 0, %s260
      %s275 = sphi 0, %s261
      %s281 = sphi 0, %s283
      %s284 = sphi 0, %s281
      %s285 = sphi 0, %s284
      %s301 = sphi 0, %s285
      %s307 = sphi 0, %s309
      %s310 = sphi 0, %s307
      %s311 = sphi 0, %s310
      %s327 = sphi 0, %s311
    $region4: #{tpu_custom_call.1} parent=1 // loop_header_branch
      %28 = sbr.rel (%p26) target = $region8
    $region5: #{tpu_custom_call.1} parent=1 // loop_body
      %s30 = ssub.s32 %s25, 1
      %s31 = ssub.s32 %s25, 2
      %s32 = sadd.s32 %s25, 1
      %s33 = ssub.s32 %s25, %s32
      %p34 = scmp.eq.s32.totalorder %s33, 0
      %s36 = sadd.s32 %s35, 1
      %s37 = scalar_select %p34, %s35, %s36
      %p40 = pneg %p34
      %p41 = scmp.eq.s32.totalorder %s25, 1
      %p42 = por %p40, %p41
      %p43 = scmp.ne.s32.totalorder %s35, %s38
      %p44 = scmp.eq.s32.totalorder %s25, 0
      %p45 = por %p43, %p44
      %p46 = scmp.ne.s32.totalorder %s35, %s38
      %p47 = scmp.eq.s32.totalorder %s30, 1
      %p48 = por %p46, %p47
      %p49 = scmp.ne.s32.totalorder %s38, %s39
      %p50 = scmp.eq.s32.totalorder %s30, 0
      %p51 = por %p49, %p50
      %p52 = scmp.ne.s32.totalorder %s38, %s39
      %p53 = scmp.eq.s32.totalorder %s31, 1
      %p54 = por %p52, %p53
      %p56 = scmp.ne.s32.totalorder %s39, %s55
      %p57 = scmp.eq.s32.totalorder %s31, 0
      %p58 = por %p56, %p57
      %s59 = ssub.s32 %s25, %s32
      %p60 = scmp.eq.s32.totalorder %s59, 0
      %s62 = sadd.s32 %s61, 1
      %s63 = scalar_select %p60, %s61, %s62
      %p66 = pneg %p60
      %p67 = scmp.eq.s32.totalorder %s25, 1
      %p68 = por %p66, %p67
      %p69 = scmp.ne.s32.totalorder %s61, %s64
      %p70 = scmp.eq.s32.totalorder %s25, 0
      %p71 = por %p69, %p70
      %p72 = scmp.ne.s32.totalorder %s61, %s64
      %p73 = scmp.eq.s32.totalorder %s30, 1
      %p74 = por %p72, %p73
      %p75 = scmp.ne.s32.totalorder %s64, %s65
      %p76 = scmp.eq.s32.totalorder %s30, 0
      %p77 = por %p75, %p76
      %p78 = scmp.ne.s32.totalorder %s64, %s65
      %p79 = scmp.eq.s32.totalorder %s31, 1
      %p80 = por %p78, %p79
      %p82 = scmp.ne.s32.totalorder %s65, %s81
      %p83 = scmp.eq.s32.totalorder %s31, 0
      %p84 = por %p82, %p83
      %s85 = ssub.s32 %s25, %s32
      %p86 = scmp.eq.s32.totalorder %s85, 0
      %s88 = sadd.s32 %s87, 1
      %s89 = scalar_select %p86, %s87, %s88
      %p92 = pneg %p86
      %p93 = scmp.eq.s32.totalorder %s25, 1
      %p94 = por %p92, %p93
      %p95 = scmp.ne.s32.totalorder %s87, %s90
      %p96 = scmp.eq.s32.totalorder %s25, 0
      %p97 = por %p95, %p96
      %p98 = scmp.ne.s32.totalorder %s87, %s90
      %p99 = scmp.eq.s32.totalorder %s30, 1
      %p100 = por %p98, %p99
      %p101 = scmp.ne.s32.totalorder %s90, %s91
      %p102 = scmp.eq.s32.totalorder %s30, 0
      %p103 = por %p101, %p102
      %p104 = scmp.ne.s32.totalorder %s90, %s91
      %p105 = scmp.eq.s32.totalorder %s31, 1
      %p106 = por %p104, %p105
      %p108 = scmp.ne.s32.totalorder %s91, %s107
      %p109 = scmp.eq.s32.totalorder %s31, 0
      %p110 = por %p108, %p109
      %s112 = sadd.s32 %s111, 1
      %p115 = scmp.eq.s32.totalorder %s25, 1
      %p116 = scmp.ne.s32.totalorder %s111, %s113
      %p117 = scmp.eq.s32.totalorder %s25, 0
      %p118 = por %p116, %p117
      %p119 = scmp.ne.s32.totalorder %s111, %s113
      %p120 = scmp.eq.s32.totalorder %s30, 1
      %p121 = por %p119, %p120
      %p122 = scmp.ne.s32.totalorder %s113, %s114
      %p123 = scmp.eq.s32.totalorder %s30, 0
      %p124 = por %p122, %p123
      %p125 = scmp.ne.s32.totalorder %s113, %s114
      %p126 = scmp.eq.s32.totalorder %s31, 1
      %p127 = por %p125, %p126
      %p129 = scmp.ne.s32.totalorder %s114, %s128
      %p130 = scmp.eq.s32.totalorder %s31, 0
      %p131 = por %p129, %p130
      %s133 = sadd.s32 %s132, 1
      %p136 = scmp.eq.s32.totalorder %s25, 1
      %p137 = scmp.ne.s32.totalorder %s132, %s134
      %p138 = scmp.eq.s32.totalorder %s25, 0
      %p139 = por %p137, %p138
      %p140 = scmp.ne.s32.totalorder %s132, %s134
      %p141 = scmp.eq.s32.totalorder %s30, 1
      %p142 = por %p140, %p141
      %p143 = scmp.ne.s32.totalorder %s134, %s135
      %p144 = scmp.eq.s32.totalorder %s30, 0
      %p145 = por %p143, %p144
      %p146 = scmp.ne.s32.totalorder %s134, %s135
      %p147 = scmp.eq.s32.totalorder %s31, 1
      %p148 = por %p146, %p147
      %p150 = scmp.ne.s32.totalorder %s135, %s149
      %p151 = scmp.eq.s32.totalorder %s31, 0
      %p152 = por %p150, %p151
      %s154 = sadd.s32 %s153, 1
      %p157 = scmp.eq.s32.totalorder %s25, 1
      %p158 = scmp.ne.s32.totalorder %s153, %s155
      %p159 = scmp.eq.s32.totalorder %s25, 0
      %p160 = por %p158, %p159
      %p161 = scmp.ne.s32.totalorder %s153, %s155
      %p162 = scmp.eq.s32.totalorder %s30, 1
      %p163 = por %p161, %p162
      %p164 = scmp.ne.s32.totalorder %s155, %s156
      %p165 = scmp.eq.s32.totalorder %s30, 0
      %p166 = por %p164, %p165
      %p167 = scmp.ne.s32.totalorder %s155, %s156
      %p168 = scmp.eq.s32.totalorder %s31, 1
      %p169 = por %p167, %p168
      %p171 = scmp.ne.s32.totalorder %s156, %s170
      %p172 = scmp.eq.s32.totalorder %s31, 0
      %p173 = por %p171, %p172
      %s175 = sadd.s32 %s174, 1
      %p178 = scmp.eq.s32.totalorder %s25, 1
      %p179 = scmp.ne.s32.totalorder %s174, %s176
      %p180 = scmp.eq.s32.totalorder %s25, 0
      %p181 = por %p179, %p180
      %p182 = scmp.ne.s32.totalorder %s174, %s176
      %p183 = scmp.eq.s32.totalorder %s30, 1
      %p184 = por %p182, %p183
      %p185 = scmp.ne.s32.totalorder %s176, %s177
      %p186 = scmp.eq.s32.totalorder %s30, 0
      %p187 = por %p185, %p186
      %p188 = scmp.ne.s32.totalorder %s176, %s177
      %p189 = scmp.eq.s32.totalorder %s31, 1
      %p190 = por %p188, %p189
      %p192 = scmp.ne.s32.totalorder %s177, %s191
      %p193 = scmp.eq.s32.totalorder %s31, 0
      %p194 = por %p192, %p193
      %s196 = sadd.s32 %s195, 1
      %p199 = scmp.eq.s32.totalorder %s25, 1
      %p200 = scmp.ne.s32.totalorder %s195, %s197
      %p201 = scmp.eq.s32.totalorder %s25, 0
      %p202 = por %p200, %p201
      %p203 = scmp.ne.s32.totalorder %s195, %s197
      %p204 = scmp.eq.s32.totalorder %s30, 1
      %p205 = por %p203, %p204
      %p206 = scmp.ne.s32.totalorder %s197, %s198
      %p207 = scmp.eq.s32.totalorder %s30, 0
      %p208 = por %p206, %p207
      %p209 = scmp.ne.s32.totalorder %s197, %s198
      %p210 = scmp.eq.s32.totalorder %s31, 1
      %p211 = por %p209, %p210
      %p213 = scmp.ne.s32.totalorder %s198, %s212
      %p214 = scmp.eq.s32.totalorder %s31, 0
      %p215 = por %p213, %p214
      %s217 = sadd.s32 %s216, 1
      %p220 = scmp.eq.s32.totalorder %s25, 1
      %p221 = scmp.ne.s32.totalorder %s216, %s218
      %p222 = scmp.eq.s32.totalorder %s25, 0
      %p223 = por %p221, %p222
      %p224 = scmp.ne.s32.totalorder %s216, %s218
      %p225 = scmp.eq.s32.totalorder %s30, 1
      %p226 = por %p224, %p225
      %p227 = scmp.ne.s32.totalorder %s218, %s219
      %p228 = scmp.eq.s32.totalorder %s30, 0
      %p229 = por %p227, %p228
      %p230 = scmp.ne.s32.totalorder %s218, %s219
      %p231 = scmp.eq.s32.totalorder %s31, 1
      %p232 = por %p230, %p231
      %p234 = scmp.ne.s32.totalorder %s219, %s233
      %p235 = scmp.eq.s32.totalorder %s31, 0
      %p236 = por %p234, %p235
      %s238 = sadd.s32 %s237, 1
      %p241 = scmp.eq.s32.totalorder %s25, 1
      %p242 = scmp.ne.s32.totalorder %s237, %s239
      %p243 = scmp.eq.s32.totalorder %s25, 0
      %p244 = por %p242, %p243
      %p245 = scmp.ne.s32.totalorder %s237, %s239
      %p246 = scmp.eq.s32.totalorder %s30, 1
      %p247 = por %p245, %p246
      %p248 = scmp.ne.s32.totalorder %s239, %s240
      %p249 = scmp.eq.s32.totalorder %s30, 0
      %p250 = por %p248, %p249
      %p251 = scmp.ne.s32.totalorder %s239, %s240
      %p252 = scmp.eq.s32.totalorder %s31, 1
      %p253 = por %p251, %p252
      %p255 = scmp.ne.s32.totalorder %s240, %s254
      %p256 = scmp.eq.s32.totalorder %s31, 0
      %p257 = por %p255, %p256
      %s259 = sadd.s32 %s258, 1
      %p262 = scmp.eq.s32.totalorder %s25, 1
      %p263 = scmp.ne.s32.totalorder %s258, %s260
      %p264 = scmp.eq.s32.totalorder %s25, 0
      %p265 = por %p263, %p264
      %p266 = scmp.ne.s32.totalorder %s258, %s260
      %p267 = scmp.eq.s32.totalorder %s30, 1
      %p268 = por %p266, %p267
      %p269 = scmp.ne.s32.totalorder %s260, %s261
      %p270 = scmp.eq.s32.totalorder %s30, 0
      %p271 = por %p269, %p270
      %p272 = scmp.ne.s32.totalorder %s260, %s261
      %p273 = scmp.eq.s32.totalorder %s31, 1
      %p274 = por %p272, %p273
      %p276 = scmp.ne.s32.totalorder %s261, %s275
      %p277 = scmp.eq.s32.totalorder %s31, 0
      %p278 = por %p276, %p277
      %s279 = ssub.s32 %s25, %s32
      %p280 = scmp.eq.s32.totalorder %s279, 0
      %s282 = sadd.s32 %s281, 1
      %s283 = scalar_select %p280, %s281, %s282
      %p286 = pneg %p280
      %p287 = scmp.eq.s32.totalorder %s25, 1
      %p288 = por %p286, %p287
      %p289 = scmp.ne.s32.totalorder %s281, %s284
      %p290 = scmp.eq.s32.totalorder %s25, 0
      %p291 = por %p289, %p290
      %p292 = scmp.ne.s32.totalorder %s281, %s284
      %p293 = scmp.eq.s32.totalorder %s30, 1
      %p294 = por %p292, %p293
      %p295 = scmp.ne.s32.totalorder %s284, %s285
      %p296 = scmp.eq.s32.totalorder %s30, 0
      %p297 = por %p295, %p296
      %p298 = scmp.ne.s32.totalorder %s284, %s285
      %p299 = scmp.eq.s32.totalorder %s31, 1
      %p300 = por %p298, %p299
      %p302 = scmp.ne.s32.totalorder %s285, %s301
      %p303 = scmp.eq.s32.totalorder %s31, 0
      %p304 = por %p302, %p303
      %s305 = ssub.s32 %s25, %s32
      %p306 = scmp.eq.s32.totalorder %s305, 0
      %s308 = sadd.s32 %s307, 1
      %s309 = scalar_select %p306, %s307, %s308
      %p312 = pneg %p306
      %p313 = scmp.eq.s32.totalorder %s25, 1
      %p314 = por %p312, %p313
      %p315 = scmp.ne.s32.totalorder %s307, %s310
      %p316 = scmp.eq.s32.totalorder %s25, 0
      %p317 = por %p315, %p316
      %p318 = scmp.ne.s32.totalorder %s307, %s310
      %p319 = scmp.eq.s32.totalorder %s30, 1
      %p320 = por %p318, %p319
      %p321 = scmp.ne.s32.totalorder %s310, %s311
      %p322 = scmp.eq.s32.totalorder %s30, 0
      %p323 = por %p321, %p322
      %p324 = scmp.ne.s32.totalorder %s310, %s311
      %p325 = scmp.eq.s32.totalorder %s31, 1
      %p326 = por %p324, %p325
      %p328 = scmp.ne.s32.totalorder %s311, %s327
      %p329 = scmp.eq.s32.totalorder %s31, 0
      %p330 = por %p328, %p329
      %p331 = scmp.le.s32.totalorder 1, %s25
      %p332 = scmp.lt.s32.totalorder %s25, 3
      %p333 = pnand %p331, %p332
      %p334 = pneg %p333
      // Predicated region
      $region9: #{tpu_custom_call.1} parent=5 // pred_check
        _
      $region10: #{tpu_custom_call.1} parent=5 // pred_check_branch
        %336 = sbr.rel (%p333) target = $region12
      $region11: #{tpu_custom_call.1} parent=5 // pred_region
        %s337 = ssub.s32 %s25, 1
        // Predicated region
        $region13: #{tpu_custom_call.1} parent=11 // pred_check
          %p338 = pneg %p124
        $region14: #{tpu_custom_call.1} parent=11 // pred_check_branch
          %340 = sbr.rel (%p338) target = $region16
        $region15: #{tpu_custom_call.1} parent=11 // pred_region
          _
        $region16: #{tpu_custom_call.1} parent=11 // pred_fallthru
          _
        // Predicated region
        $region17: #{tpu_custom_call.1} parent=11 // pred_check
          %p341 = pneg %p145
        $region18: #{tpu_custom_call.1} parent=11 // pred_check_branch
          %343 = sbr.rel (%p341) target = $region20
        $region19: #{tpu_custom_call.1} parent=11 // pred_region
          _
        $region20: #{tpu_custom_call.1} parent=11 // pred_fallthru
          _
        // Predicated region
        $region21: #{tpu_custom_call.1} parent=11 // pred_check
          %p344 = pneg %p166
        $region22: #{tpu_custom_call.1} parent=11 // pred_check_branch
          %346 = sbr.rel (%p344) target = $region24
        $region23: #{tpu_custom_call.1} parent=11 // pred_region
          _
        $region24: #{tpu_custom_call.1} parent=11 // pred_fallthru
          _
        // Predicated region
        $region25: #{tpu_custom_call.1} parent=11 // pred_check
          %p347 = pneg %p187
        $region26: #{tpu_custom_call.1} parent=11 // pred_check_branch
          %349 = sbr.rel (%p347) target = $region28
        $region27: #{tpu_custom_call.1} parent=11 // pred_region
          _
        $region28: #{tpu_custom_call.1} parent=11 // pred_fallthru
          _
        // Predicated region
        $region29: #{tpu_custom_call.1} parent=11 // pred_check
          %p350 = pneg %p208
        $region30: #{tpu_custom_call.1} parent=11 // pred_check_branch
          %352 = sbr.rel (%p350) target = $region32
        $region31: #{tpu_custom_call.1} parent=11 // pred_region
          _
        $region32: #{tpu_custom_call.1} parent=11 // pred_fallthru
          _
        // Predicated region
        $region33: #{tpu_custom_call.1} parent=11 // pred_check
          %p353 = pneg %p229
        $region34: #{tpu_custom_call.1} parent=11 // pred_check_branch
          %355 = sbr.rel (%p353) target = $region36
        $region35: #{tpu_custom_call.1} parent=11 // pred_region
          _
        $region36: #{tpu_custom_call.1} parent=11 // pred_fallthru
          _
        // Predicated region
        $region37: #{tpu_custom_call.1} parent=11 // pred_check
          %p356 = pneg %p250
        $region38: #{tpu_custom_call.1} parent=11 // pred_check_branch
          %358 = sbr.rel (%p356) target = $region40
        $region39: #{tpu_custom_call.1} parent=11 // pred_region
          _
        $region40: #{tpu_custom_call.1} parent=11 // pred_fallthru
          _
        // Predicated region
        $region41: #{tpu_custom_call.1} parent=11 // pred_check
          %p359 = pneg %p271
        $region42: #{tpu_custom_call.1} parent=11 // pred_check_branch
          %361 = sbr.rel (%p359) target = $region44
        $region43: #{tpu_custom_call.1} parent=11 // pred_region
          _
        $region44: #{tpu_custom_call.1} parent=11 // pred_fallthru
          _
      $region12: #{tpu_custom_call.1} parent=5 // pred_fallthru
        _
      %p362 = scmp.lt.s32.totalorder %s25, 2
      // Predicated region
      $region45: #{tpu_custom_call.1} parent=5 // pred_check
        %p363 = pneg %p362
      $region46: #{tpu_custom_call.1} parent=5 // pred_check_branch
        %365 = sbr.rel (%p363) target = $region48
      $region47: #{tpu_custom_call.1} parent=5 // pred_region
        // Predicated region
        $region49: #{tpu_custom_call.1} parent=47 // pred_check
          %p366 = pneg %p45
        $region50: #{tpu_custom_call.1} parent=47 // pred_check_branch
          %368 = sbr.rel (%p366) target = $region52
        $region51: #{tpu_custom_call.1} parent=47 // pred_region
          %p369 = scmp.lt.s32.totalorder %s25, 1
          %s370 = scalar_select %p369, %s25, 1
          %s371 = smul.addr %s370, 4
          %s372 = scalar_lea.vmem %s0, %s371
        $region52: #{tpu_custom_call.1} parent=47 // pred_fallthru
          _
        // Predicated region
        $region53: #{tpu_custom_call.1} parent=47 // pred_check
          %p373 = pneg %p71
        $region54: #{tpu_custom_call.1} parent=47 // pred_check_branch
          %375 = sbr.rel (%p373) target = $region56
        $region55: #{tpu_custom_call.1} parent=47 // pred_region
          %p376 = scmp.lt.s32.totalorder %s25, 1
          %s377 = scalar_select %p376, %s25, 1
          %s378 = smul.addr %s377, 8
          %s379 = scalar_lea.vmem %s1, %s378
        $region56: #{tpu_custom_call.1} parent=47 // pred_fallthru
          _
        // Predicated region
        $region57: #{tpu_custom_call.1} parent=47 // pred_check
          %p380 = pneg %p97
        $region58: #{tpu_custom_call.1} parent=47 // pred_check_branch
          %382 = sbr.rel (%p380) target = $region60
        $region59: #{tpu_custom_call.1} parent=47 // pred_region
          %p383 = scmp.lt.s32.totalorder %s25, 1
          %s384 = scalar_select %p383, %s25, 1
          %s385 = smul.addr %s384, 2
          %s386 = smul.addr %s385, 8
          %s387 = scalar_lea.vmem %s2, %s386
        $region60: #{tpu_custom_call.1} parent=47 // pred_fallthru
          _
      $region48: #{tpu_custom_call.1} parent=5 // pred_fallthru
        _
      %p388 = scmp.le.s32.totalorder 1, %s25
      %p389 = scmp.lt.s32.totalorder %s25, 3
      %p390 = pnand %p388, %p389
      %p391 = pneg %p390
      // Predicated region
      $region61: #{tpu_custom_call.1} parent=5 // pred_check
        _
      $region62: #{tpu_custom_call.1} parent=5 // pred_check_branch
        %393 = sbr.rel (%p390) target = $region64
      $region63: #{tpu_custom_call.1} parent=5 // pred_region
        %s394 = ssub.s32 %s25, 1
        %p395 = scmp.lt.s32.totalorder %s30, 1
        %s396 = scalar_select %p395, %s30, 1
        %s397 = smul.addr %s396, 4
        %s398 = scalar_lea.vmem %s0, %s397
        %p399 = pneg %p51
        %p400 = pneg %p48
        %p401 = scmp.lt.s32.totalorder %s30, 1
        %s402 = scalar_select %p401, %s30, 1
        %s403 = smul.addr %s402, 8
        %s404 = scalar_lea.vmem %s1, %s403
        %p405 = pneg %p77
        %p406 = pneg %p74
        %p407 = scmp.lt.s32.totalorder %s30, 1
        %s408 = scalar_select %p407, %s30, 1
        %s409 = smul.addr %s408, 2
        %s410 = smul.addr %s409, 8
        %s411 = scalar_lea.vmem %s2, %s410
        %p412 = pneg %p103
        %p413 = pneg %p100
        %p414 = pneg %p124
        %p415 = pneg %p121
        %p416 = pneg %p145
        %p417 = pneg %p142
        %p418 = pneg %p166
        %p419 = pneg %p163
        %p420 = pneg %p187
        %p421 = pneg %p184
        %p422 = pneg %p208
        %p423 = pneg %p205
        %p424 = pneg %p229
        %p425 = pneg %p226
        %p426 = pneg %p250
        %p427 = pneg %p247
        %p428 = pneg %p271
        %p429 = pneg %p268
        %p430 = pneg %p297
        %p431 = pneg %p294
        %s432 = sand.u32 %s284, 1
        %s433 = scalar_lea.sflag [#allocation7], %s432
        %s434 = sand.u32 %s284, 1
        %s435 = smul.addr %s434, 8
        %s436 = scalar_lea.vmem [#allocation6], %s435
        %p437 = pneg %p323
        %p438 = pneg %p320
        %s439 = sand.u32 %s310, 1
        %s440 = scalar_lea.sflag [#allocation9], %s439
        %s441 = sand.u32 %s310, 1
        %s442 = smul.addr %s441, 16
        %s443 = scalar_lea.vmem [#allocation8], %s442
        %p444 = scmp.lt.s32.totalorder %s30, 1
        %s445 = scalar_select %p444, %s30, 1
        %s446 = smul.addr %s445, 4
        %s447 = scalar_lea.vmem %s0, %s446
        %p448 = scmp.lt.s32.totalorder %s30, 1
        %s449 = scalar_select %p448, %s30, 1
        %s450 = smul.addr %s449, 8
        %s451 = scalar_lea.vmem %s1, %s450
        %p452 = scmp.lt.s32.totalorder %s30, 1
        %s453 = scalar_select %p452, %s30, 1
        %s454 = smul.addr %s453, 2
        %s455 = smul.addr %s454, 8
        %s456 = scalar_lea.vmem %s2, %s455
        %v457 = vld [vmem:[%s447] sm:$0xf]
        %459 = vrot.lane.b32.xlu0 %v457, 120
        %v460 = vpop.permute.xlu0 %459
        %462 = vrot.lane.b32.xlu0 %v457, 112
        %v463 = vpop.permute.xlu0 %462
        %465 = vrot.lane.b32.xlu0 %v457, 104
        %v466 = vpop.permute.xlu0 %465
        %v468 = vcombine.low %v457, %v463
        %v470 = vunpack.c.l.s4 1983009808
        %v471 = vunpack.c.0.s8 %v470
        %v472 = vlaneseq
        %v473 = vshrl.u32 %v472, 7
        %v474 = vsub.s32 %v471, %v473
        %v475 = vrot.slane %v468, %v474
        %v476 = vcombine.low %v460, %v466
        %v478 = vunpack.c.l.s4 1983009808
        %v479 = vunpack.c.0.s8 %v478
        %v480 = vlaneseq
        %v481 = vshrl.u32 %v480, 7
        %v482 = vsub.s32 %v479, %v481
        %v483 = vrot.slane %v476, %v482
        %v484 = vcombine.low %v475, %v483
        %v485 = vcombine.high %v475, %v483
        %v487 = vunpack.c.l.s4 1934713408
        %v488 = vunpack.c.0.s8 %v487
        %v489 = vlaneseq
        %v490 = vshrl.u32 %v489, 7
        %v491 = vsub.s32 %v488, %v490
        %v492 = vrot.slane %v484, %v491
        %v494 = vunpack.c.l.s4 1934713408
        %v495 = vunpack.c.0.s8 %v494
        %v496 = vlaneseq
        %v497 = vshrl.u32 %v496, 7
        %v498 = vsub.s32 %v495, %v497
        %v499 = vrot.slane %v485, %v498
        %v500 = vcombine.high %v492, 0.0
        %v501 = vcombine.high %v499, 0.0
        %vm502 = vcmask 62464
        %503 = vst.msk [vmem:[#allocation2] sm:$0x3f] %vm502, 0.0
        %504 = vst.msk [vmem:[#allocation2 + $0x8] sm:$0x3f] %vm502, 0.0
        %505 = vst.msk [vmem:[#allocation2 + $0x10] sm:$0x3f] %vm502, 0.0
        %506 = vst.msk [vmem:[#allocation2 + $0x18] sm:$0x3f] %vm502, 0.0
        %507 = vst.msk [vmem:[#allocation2 + $0x20] sm:$0x3f] %vm502, 0.0
        %508 = vst.msk [vmem:[#allocation2 + $0x28] sm:$0x3f] %vm502, 0.0
        %s509 = scalar_lea.vmem [#allocation2], 8
        %vm510 = vcmask 60416
        %511 = vst.msk [vmem:[%s509 + $0x1] sm:$0xf] %vm510, %v492
        %512 = vst.msk [vmem:[%s509 + $0x9] sm:$0xf] %vm510, %v500
        %513 = vst.msk [vmem:[%s509 + $0x11] sm:$0xf] %vm510, %v499
        %514 = vst.msk [vmem:[%s509 + $0x19] sm:$0xf] %vm510, %v501
        %v515 = vld [vmem:[#allocation2] sm:$0xf]
        %v516 = vld [vmem:[#allocation2 + $0x8] sm:$0xf]
        %v517 = vld [vmem:[#allocation2 + $0x10] sm:$0xf]
        %v518 = vld [vmem:[#allocation2 + $0x18] sm:$0xf]
        %v524 = vunpack.c.l.s4 1966171168
        %v525 = vunpack.c.0.s8 %v524
        %v526 = vlaneseq
        %v527 = vshrl.u32 %v526, 7
        %v528 = vsub.s32 %v525, %v527
        %v529 = vrot.slane %v515, %v528
        %v530 = vcombine.high %v529, %v529
        %v532 = vunpack.c.l.s4 1966171168
        %v533 = vunpack.c.0.s8 %v532
        %v534 = vlaneseq
        %v535 = vshrl.u32 %v534, 7
        %v536 = vsub.s32 %v533, %v535
        %v537 = vrot.slane %v529, %v536
        %v539 = vunpack.c.l.s4 1966171168
        %v540 = vunpack.c.0.s8 %v539
        %v541 = vlaneseq
        %v542 = vshrl.u32 %v541, 7
        %v543 = vsub.s32 %v540, %v542
        %v544 = vrot.slane %v530, %v543
        %v545 = vcombine.high %v537, %v537
        %v546 = vcombine.high %v544, %v544
        %v548 = vunpack.c.l.s4 1966171168
        %v549 = vunpack.c.0.s8 %v548
        %v550 = vlaneseq
        %v551 = vshrl.u32 %v550, 7
        %v552 = vsub.s32 %v549, %v551
        %v553 = vrot.slane %v516, %v552
        %v554 = vcombine.high %v553, %v553
        %v556 = vunpack.c.l.s4 1966171168
        %v557 = vunpack.c.0.s8 %v556
        %v558 = vlaneseq
        %v559 = vshrl.u32 %v558, 7
        %v560 = vsub.s32 %v557, %v559
        %v561 = vrot.slane %v553, %v560
        %v563 = vunpack.c.l.s4 1966171168
        %v564 = vunpack.c.0.s8 %v563
        %v565 = vlaneseq
        %v566 = vshrl.u32 %v565, 7
        %v567 = vsub.s32 %v564, %v566
        %v568 = vrot.slane %v554, %v567
        %v569 = vcombine.high %v561, %v561
        %v570 = vcombine.high %v568, %v568
        %v572 = vunpack.c.l.s4 1966171168
        %v573 = vunpack.c.0.s8 %v572
        %v574 = vlaneseq
        %v575 = vshrl.u32 %v574, 7
        %v576 = vsub.s32 %v573, %v575
        %v577 = vrot.slane %v517, %v576
        %v578 = vcombine.high %v577, %v577
        %v580 = vunpack.c.l.s4 1966171168
        %v581 = vunpack.c.0.s8 %v580
        %v582 = vlaneseq
        %v583 = vshrl.u32 %v582, 7
        %v584 = vsub.s32 %v581, %v583
        %v585 = vrot.slane %v577, %v584
        %v587 = vunpack.c.l.s4 1966171168
        %v588 = vunpack.c.0.s8 %v587
        %v589 = vlaneseq
        %v590 = vshrl.u32 %v589, 7
        %v591 = vsub.s32 %v588, %v590
        %v592 = vrot.slane %v578, %v591
        %v593 = vcombine.high %v585, %v585
        %v594 = vcombine.high %v592, %v592
        %v596 = vunpack.c.l.s4 1966171168
        %v597 = vunpack.c.0.s8 %v596
        %v598 = vlaneseq
        %v599 = vshrl.u32 %v598, 7
        %v600 = vsub.s32 %v597, %v599
        %v601 = vrot.slane %v518, %v600
        %v602 = vcombine.high %v601, %v601
        %v604 = vunpack.c.l.s4 1966171168
        %v605 = vunpack.c.0.s8 %v604
        %v606 = vlaneseq
        %v607 = vshrl.u32 %v606, 7
        %v608 = vsub.s32 %v605, %v607
        %v609 = vrot.slane %v601, %v608
        %v611 = vunpack.c.l.s4 1966171168
        %v612 = vunpack.c.0.s8 %v611
        %v613 = vlaneseq
        %v614 = vshrl.u32 %v613, 7
        %v615 = vsub.s32 %v612, %v614
        %v616 = vrot.slane %v602, %v615
        %v617 = vcombine.high %v609, %v609
        %v618 = vcombine.high %v616, %v616
        %vm635 = vcmask 57344
        %636 = vst.msk [vmem:[#allocation3] sm:$0x1] %vm635, %v537
        %637 = vst.msk [vmem:[#allocation3 + $0x10] sm:$0x1] %vm635, %v544
        %638 = vst.msk [vmem:[#allocation3 + $0x20] sm:$0x1] %vm635, %v545
        %639 = vst.msk [vmem:[#allocation3 + $0x30] sm:$0x1] %vm635, %v546
        %640 = vst.msk [vmem:[#allocation3 + $0x40] sm:$0x1] %vm635, %v561
        %641 = vst.msk [vmem:[#allocation3 + $0x50] sm:$0x1] %vm635, %v568
        %642 = vst.msk [vmem:[#allocation3 + $0x60] sm:$0x1] %vm635, %v569
        %643 = vst.msk [vmem:[#allocation3 + $0x70] sm:$0x1] %vm635, %v570
        %644 = vst.msk [vmem:[#allocation3 + $0x80] sm:$0x1] %vm635, %v585
        %645 = vst.msk [vmem:[#allocation3 + $0x90] sm:$0x1] %vm635, %v592
        %646 = vst.msk [vmem:[#allocation3 + $0xa0] sm:$0x1] %vm635, %v593
        %647 = vst.msk [vmem:[#allocation3 + $0xb0] sm:$0x1] %vm635, %v594
        %648 = vst.msk [vmem:[#allocation3 + $0xc0] sm:$0x1] %vm635, %v609
        %649 = vst.msk [vmem:[#allocation3 + $0xd0] sm:$0x1] %vm635, %v616
        %650 = vst.msk [vmem:[#allocation3 + $0xe0] sm:$0x1] %vm635, %v617
        %651 = vst.msk [vmem:[#allocation3 + $0xf0] sm:$0x1] %vm635, %v618
        %v652 = vld [vmem:[#allocation2 + $0x1] sm:$0xf]
        %v653 = vld [vmem:[#allocation2 + $0x9] sm:$0xf]
        %v654 = vld [vmem:[#allocation2 + $0x11] sm:$0xf]
        %v655 = vld [vmem:[#allocation2 + $0x19] sm:$0xf]
        %v661 = vunpack.c.l.s4 1966171168
        %v662 = vunpack.c.0.s8 %v661
        %v663 = vlaneseq
        %v664 = vshrl.u32 %v663, 7
        %v665 = vsub.s32 %v662, %v664
        %v666 = vrot.slane %v652, %v665
        %v667 = vcombine.high %v666, %v666
        %v669 = vunpack.c.l.s4 1966171168
        %v670 = vunpack.c.0.s8 %v669
        %v671 = vlaneseq
        %v672 = vshrl.u32 %v671, 7
        %v673 = vsub.s32 %v670, %v672
        %v674 = vrot.slane %v666, %v673
        %v676 = vunpack.c.l.s4 1966171168
        %v677 = vunpack.c.0.s8 %v676
        %v678 = vlaneseq
        %v679 = vshrl.u32 %v678, 7
        %v680 = vsub.s32 %v677, %v679
        %v681 = vrot.slane %v667, %v680
        %v682 = vcombine.high %v674, %v674
        %v683 = vcombine.high %v681, %v681
        %v685 = vunpack.c.l.s4 1966171168
        %v686 = vunpack.c.0.s8 %v685
        %v687 = vlaneseq
        %v688 = vshrl.u32 %v687, 7
        %v689 = vsub.s32 %v686, %v688
        %v690 = vrot.slane %v653, %v689
        %v691 = vcombine.high %v690, %v690
        %v693 = vunpack.c.l.s4 1966171168
        %v694 = vunpack.c.0.s8 %v693
        %v695 = vlaneseq
        %v696 = vshrl.u32 %v695, 7
        %v697 = vsub.s32 %v694, %v696
        %v698 = vrot.slane %v690, %v697
        %v700 = vunpack.c.l.s4 1966171168
        %v701 = vunpack.c.0.s8 %v700
        %v702 = vlaneseq
        %v703 = vshrl.u32 %v702, 7
        %v704 = vsub.s32 %v701, %v703
        %v705 = vrot.slane %v691, %v704
        %v706 = vcombine.high %v698, %v698
        %v707 = vcombine.high %v705, %v705
        %v709 = vunpack.c.l.s4 1966171168
        %v710 = vunpack.c.0.s8 %v709
        %v711 = vlaneseq
        %v712 = vshrl.u32 %v711, 7
        %v713 = vsub.s32 %v710, %v712
        %v714 = vrot.slane %v654, %v713
        %v715 = vcombine.high %v714, %v714
        %v717 = vunpack.c.l.s4 1966171168
        %v718 = vunpack.c.0.s8 %v717
        %v719 = vlaneseq
        %v720 = vshrl.u32 %v719, 7
        %v721 = vsub.s32 %v718, %v720
        %v722 = vrot.slane %v714, %v721
        %v724 = vunpack.c.l.s4 1966171168
        %v725 = vunpack.c.0.s8 %v724
        %v726 = vlaneseq
        %v727 = vshrl.u32 %v726, 7
        %v728 = vsub.s32 %v725, %v727
        %v729 = vrot.slane %v715, %v728
        %v730 = vcombine.high %v722, %v722
        %v731 = vcombine.high %v729, %v729
        %v733 = vunpack.c.l.s4 1966171168
        %v734 = vunpack.c.0.s8 %v733
        %v735 = vlaneseq
        %v736 = vshrl.u32 %v735, 7
        %v737 = vsub.s32 %v734, %v736
        %v738 = vrot.slane %v655, %v737
        %v739 = vcombine.high %v738, %v738
        %v741 = vunpack.c.l.s4 1966171168
        %v742 = vunpack.c.0.s8 %v741
        %v743 = vlaneseq
        %v744 = vshrl.u32 %v743, 7
        %v745 = vsub.s32 %v742, %v744
        %v746 = vrot.slane %v738, %v745
        %v748 = vunpack.c.l.s4 1966171168
        %v749 = vunpack.c.0.s8 %v748
        %v750 = vlaneseq
        %v751 = vshrl.u32 %v750, 7
        %v752 = vsub.s32 %v749, %v751
        %v753 = vrot.slane %v739, %v752
        %v754 = vcombine.high %v746, %v746
        %v755 = vcombine.high %v753, %v753
        %772 = vst.msk [vmem:[#allocation3 + $0x1] sm:$0x1] %vm635, %v674
        %773 = vst.msk [vmem:[#allocation3 + $0x11] sm:$0x1] %vm635, %v681
        %774 = vst.msk [vmem:[#allocation3 + $0x21] sm:$0x1] %vm635, %v682
        %775 = vst.msk [vmem:[#allocation3 + $0x31] sm:$0x1] %vm635, %v683
        %776 = vst.msk [vmem:[#allocation3 + $0x41] sm:$0x1] %vm635, %v698
        %777 = vst.msk [vmem:[#allocation3 + $0x51] sm:$0x1] %vm635, %v705
        %778 = vst.msk [vmem:[#allocation3 + $0x61] sm:$0x1] %vm635, %v706
        %779 = vst.msk [vmem:[#allocation3 + $0x71] sm:$0x1] %vm635, %v707
        %780 = vst.msk [vmem:[#allocation3 + $0x81] sm:$0x1] %vm635, %v722
        %781 = vst.msk [vmem:[#allocation3 + $0x91] sm:$0x1] %vm635, %v729
        %782 = vst.msk [vmem:[#allocation3 + $0xa1] sm:$0x1] %vm635, %v730
        %783 = vst.msk [vmem:[#allocation3 + $0xb1] sm:$0x1] %vm635, %v731
        %784 = vst.msk [vmem:[#allocation3 + $0xc1] sm:$0x1] %vm635, %v746
        %785 = vst.msk [vmem:[#allocation3 + $0xd1] sm:$0x1] %vm635, %v753
        %786 = vst.msk [vmem:[#allocation3 + $0xe1] sm:$0x1] %vm635, %v754
        %787 = vst.msk [vmem:[#allocation3 + $0xf1] sm:$0x1] %vm635, %v755
        %v788 = vld [vmem:[#allocation2 + $0x2] sm:$0xf]
        %v789 = vld [vmem:[#allocation2 + $0xa] sm:$0xf]
        %v790 = vld [vmem:[#allocation2 + $0x12] sm:$0xf]
        %v791 = vld [vmem:[#allocation2 + $0x1a] sm:$0xf]
        %v797 = vunpack.c.l.s4 1966171168
        %v798 = vunpack.c.0.s8 %v797
        %v799 = vlaneseq
        %v800 = vshrl.u32 %v799, 7
        %v801 = vsub.s32 %v798, %v800
        %v802 = vrot.slane %v788, %v801
        %v803 = vcombine.high %v802, %v802
        %v805 = vunpack.c.l.s4 1966171168
        %v806 = vunpack.c.0.s8 %v805
        %v807 = vlaneseq
        %v808 = vshrl.u32 %v807, 7
        %v809 = vsub.s32 %v806, %v808
        %v810 = vrot.slane %v802, %v809
        %v812 = vunpack.c.l.s4 1966171168
        %v813 = vunpack.c.0.s8 %v812
        %v814 = vlaneseq
        %v815 = vshrl.u32 %v814, 7
        %v816 = vsub.s32 %v813, %v815
        %v817 = vrot.slane %v803, %v816
        %v818 = vcombine.high %v810, %v810
        %v819 = vcombine.high %v817, %v817
        %v821 = vunpack.c.l.s4 1966171168
        %v822 = vunpack.c.0.s8 %v821
        %v823 = vlaneseq
        %v824 = vshrl.u32 %v823, 7
        %v825 = vsub.s32 %v822, %v824
        %v826 = vrot.slane %v789, %v825
        %v827 = vcombine.high %v826, %v826
        %v829 = vunpack.c.l.s4 1966171168
        %v830 = vunpack.c.0.s8 %v829
        %v831 = vlaneseq
        %v832 = vshrl.u32 %v831, 7
        %v833 = vsub.s32 %v830, %v832
        %v834 = vrot.slane %v826, %v833
        %v836 = vunpack.c.l.s4 1966171168
        %v837 = vunpack.c.0.s8 %v836
        %v838 = vlaneseq
        %v839 = vshrl.u32 %v838, 7
        %v840 = vsub.s32 %v837, %v839
        %v841 = vrot.slane %v827, %v840
        %v842 = vcombine.high %v834, %v834
        %v843 = vcombine.high %v841, %v841
        %v845 = vunpack.c.l.s4 1966171168
        %v846 = vunpack.c.0.s8 %v845
        %v847 = vlaneseq
        %v848 = vshrl.u32 %v847, 7
        %v849 = vsub.s32 %v846, %v848
        %v850 = vrot.slane %v790, %v849
        %v851 = vcombine.high %v850, %v850
        %v853 = vunpack.c.l.s4 1966171168
        %v854 = vunpack.c.0.s8 %v853
        %v855 = vlaneseq
        %v856 = vshrl.u32 %v855, 7
        %v857 = vsub.s32 %v854, %v856
        %v858 = vrot.slane %v850, %v857
        %v860 = vunpack.c.l.s4 1966171168
        %v861 = vunpack.c.0.s8 %v860
        %v862 = vlaneseq
        %v863 = vshrl.u32 %v862, 7
        %v864 = vsub.s32 %v861, %v863
        %v865 = vrot.slane %v851, %v864
        %v866 = vcombine.high %v858, %v858
        %v867 = vcombine.high %v865, %v865
        %v869 = vunpack.c.l.s4 1966171168
        %v870 = vunpack.c.0.s8 %v869
        %v871 = vlaneseq
        %v872 = vshrl.u32 %v871, 7
        %v873 = vsub.s32 %v870, %v872
        %v874 = vrot.slane %v791, %v873
        %v875 = vcombine.high %v874, %v874
        %v877 = vunpack.c.l.s4 1966171168
        %v878 = vunpack.c.0.s8 %v877
        %v879 = vlaneseq
        %v880 = vshrl.u32 %v879, 7
        %v881 = vsub.s32 %v878, %v880
        %v882 = vrot.slane %v874, %v881
        %v884 = vunpack.c.l.s4 1966171168
        %v885 = vunpack.c.0.s8 %v884
        %v886 = vlaneseq
        %v887 = vshrl.u32 %v886, 7
        %v888 = vsub.s32 %v885, %v887
        %v889 = vrot.slane %v875, %v888
        %v890 = vcombine.high %v882, %v882
        %v891 = vcombine.high %v889, %v889
        %908 = vst.msk [vmem:[#allocation3 + $0x2] sm:$0x1] %vm635, %v810
        %909 = vst.msk [vmem:[#allocation3 + $0x12] sm:$0x1] %vm635, %v817
        %910 = vst.msk [vmem:[#allocation3 + $0x22] sm:$0x1] %vm635, %v818
        %911 = vst.msk [vmem:[#allocation3 + $0x32] sm:$0x1] %vm635, %v819
        %912 = vst.msk [vmem:[#allocation3 + $0x42] sm:$0x1] %vm635, %v834
        %913 = vst.msk [vmem:[#allocation3 + $0x52] sm:$0x1] %vm635, %v841
        %914 = vst.msk [vmem:[#allocation3 + $0x62] sm:$0x1] %vm635, %v842
        %915 = vst.msk [vmem:[#allocation3 + $0x72] sm:$0x1] %vm635, %v843
        %916 = vst.msk [vmem:[#allocation3 + $0x82] sm:$0x1] %vm635, %v858
        %917 = vst.msk [vmem:[#allocation3 + $0x92] sm:$0x1] %vm635, %v865
        %918 = vst.msk [vmem:[#allocation3 + $0xa2] sm:$0x1] %vm635, %v866
        %919 = vst.msk [vmem:[#allocation3 + $0xb2] sm:$0x1] %vm635, %v867
        %920 = vst.msk [vmem:[#allocation3 + $0xc2] sm:$0x1] %vm635, %v882
        %921 = vst.msk [vmem:[#allocation3 + $0xd2] sm:$0x1] %vm635, %v889
        %922 = vst.msk [vmem:[#allocation3 + $0xe2] sm:$0x1] %vm635, %v890
        %923 = vst.msk [vmem:[#allocation3 + $0xf2] sm:$0x1] %vm635, %v891
        %v924 = vld [vmem:[%s509] sm:$0xf]
        %v925 = vld [vmem:[%s509 + $0x8] sm:$0xf]
        %v926 = vld [vmem:[%s509 + $0x10] sm:$0xf]
        %v927 = vld [vmem:[%s509 + $0x18] sm:$0xf]
        %v933 = vunpack.c.l.s4 1966171168
        %v934 = vunpack.c.0.s8 %v933
        %v935 = vlaneseq
        %v936 = vshrl.u32 %v935, 7
        %v937 = vsub.s32 %v934, %v936
        %v938 = vrot.slane %v924, %v937
        %v939 = vcombine.high %v938, %v938
        %v941 = vunpack.c.l.s4 1966171168
        %v942 = vunpack.c.0.s8 %v941
        %v943 = vlaneseq
        %v944 = vshrl.u32 %v943, 7
        %v945 = vsub.s32 %v942, %v944
        %v946 = vrot.slane %v938, %v945
        %v948 = vunpack.c.l.s4 1966171168
        %v949 = vunpack.c.0.s8 %v948
        %v950 = vlaneseq
        %v951 = vshrl.u32 %v950, 7
        %v952 = vsub.s32 %v949, %v951
        %v953 = vrot.slane %v939, %v952
        %v954 = vcombine.high %v946, %v946
        %v955 = vcombine.high %v953, %v953
        %v957 = vunpack.c.l.s4 1966171168
        %v958 = vunpack.c.0.s8 %v957
        %v959 = vlaneseq
        %v960 = vshrl.u32 %v959, 7
        %v961 = vsub.s32 %v958, %v960
        %v962 = vrot.slane %v925, %v961
        %v963 = vcombine.high %v962, %v962
        %v965 = vunpack.c.l.s4 1966171168
        %v966 = vunpack.c.0.s8 %v965
        %v967 = vlaneseq
        %v968 = vshrl.u32 %v967, 7
        %v969 = vsub.s32 %v966, %v968
        %v970 = vrot.slane %v962, %v969
        %v972 = vunpack.c.l.s4 1966171168
        %v973 = vunpack.c.0.s8 %v972
        %v974 = vlaneseq
        %v975 = vshrl.u32 %v974, 7
        %v976 = vsub.s32 %v973, %v975
        %v977 = vrot.slane %v963, %v976
        %v978 = vcombine.high %v970, %v970
        %v979 = vcombine.high %v977, %v977
        %v981 = vunpack.c.l.s4 1966171168
        %v982 = vunpack.c.0.s8 %v981
        %v983 = vlaneseq
        %v984 = vshrl.u32 %v983, 7
        %v985 = vsub.s32 %v982, %v984
        %v986 = vrot.slane %v926, %v985
        %v987 = vcombine.high %v986, %v986
        %v989 = vunpack.c.l.s4 1966171168
        %v990 = vunpack.c.0.s8 %v989
        %v991 = vlaneseq
        %v992 = vshrl.u32 %v991, 7
        %v993 = vsub.s32 %v990, %v992
        %v994 = vrot.slane %v986, %v993
        %v996 = vunpack.c.l.s4 1966171168
        %v997 = vunpack.c.0.s8 %v996
        %v998 = vlaneseq
        %v999 = vshrl.u32 %v998, 7
        %v1000 = vsub.s32 %v997, %v999
        %v1001 = vrot.slane %v987, %v1000
        %v1002 = vcombine.high %v994, %v994
        %v1003 = vcombine.high %v1001, %v1001
        %v1005 = vunpack.c.l.s4 1966171168
        %v1006 = vunpack.c.0.s8 %v1005
        %v1007 = vlaneseq
        %v1008 = vshrl.u32 %v1007, 7
        %v1009 = vsub.s32 %v1006, %v1008
        %v1010 = vrot.slane %v927, %v1009
        %v1011 = vcombine.high %v1010, %v1010
        %v1013 = vunpack.c.l.s4 1966171168
        %v1014 = vunpack.c.0.s8 %v1013
        %v1015 = vlaneseq
        %v1016 = vshrl.u32 %v1015, 7
        %v1017 = vsub.s32 %v1014, %v1016
        %v1018 = vrot.slane %v1010, %v1017
        %v1020 = vunpack.c.l.s4 1966171168
        %v1021 = vunpack.c.0.s8 %v1020
        %v1022 = vlaneseq
        %v1023 = vshrl.u32 %v1022, 7
        %v1024 = vsub.s32 %v1021, %v1023
        %v1025 = vrot.slane %v1011, %v1024
        %v1026 = vcombine.high %v1018, %v1018
        %v1027 = vcombine.high %v1025, %v1025
        %1044 = vst.msk [vmem:[#allocation3 + $0x3] sm:$0x1] %vm635, %v946
        %1045 = vst.msk [vmem:[#allocation3 + $0x13] sm:$0x1] %vm635, %v953
        %1046 = vst.msk [vmem:[#allocation3 + $0x23] sm:$0x1] %vm635, %v954
        %1047 = vst.msk [vmem:[#allocation3 + $0x33] sm:$0x1] %vm635, %v955
        %1048 = vst.msk [vmem:[#allocation3 + $0x43] sm:$0x1] %vm635, %v970
        %1049 = vst.msk [vmem:[#allocation3 + $0x53] sm:$0x1] %vm635, %v977
        %1050 = vst.msk [vmem:[#allocation3 + $0x63] sm:$0x1] %vm635, %v978
        %1051 = vst.msk [vmem:[#allocation3 + $0x73] sm:$0x1] %vm635, %v979
        %1052 = vst.msk [vmem:[#allocation3 + $0x83] sm:$0x1] %vm635, %v994
        %1053 = vst.msk [vmem:[#allocation3 + $0x93] sm:$0x1] %vm635, %v1001
        %1054 = vst.msk [vmem:[#allocation3 + $0xa3] sm:$0x1] %vm635, %v1002
        %1055 = vst.msk [vmem:[#allocation3 + $0xb3] sm:$0x1] %vm635, %v1003
        %1056 = vst.msk [vmem:[#allocation3 + $0xc3] sm:$0x1] %vm635, %v1018
        %1057 = vst.msk [vmem:[#allocation3 + $0xd3] sm:$0x1] %vm635, %v1025
        %1058 = vst.msk [vmem:[#allocation3 + $0xe3] sm:$0x1] %vm635, %v1026
        %1059 = vst.msk [vmem:[#allocation3 + $0xf3] sm:$0x1] %vm635, %v1027
        %v1060 = vld [vmem:[%s509 + $0x1] sm:$0xf]
        %v1061 = vld [vmem:[%s509 + $0x9] sm:$0xf]
        %v1062 = vld [vmem:[%s509 + $0x11] sm:$0xf]
        %v1063 = vld [vmem:[%s509 + $0x19] sm:$0xf]
        %v1069 = vunpack.c.l.s4 1966171168
        %v1070 = vunpack.c.0.s8 %v1069
        %v1071 = vlaneseq
        %v1072 = vshrl.u32 %v1071, 7
        %v1073 = vsub.s32 %v1070, %v1072
        %v1074 = vrot.slane %v1060, %v1073
        %v1075 = vcombine.high %v1074, %v1074
        %v1077 = vunpack.c.l.s4 1966171168
        %v1078 = vunpack.c.0.s8 %v1077
        %v1079 = vlaneseq
        %v1080 = vshrl.u32 %v1079, 7
        %v1081 = vsub.s32 %v1078, %v1080
        %v1082 = vrot.slane %v1074, %v1081
        %v1084 = vunpack.c.l.s4 1966171168
        %v1085 = vunpack.c.0.s8 %v1084
        %v1086 = vlaneseq
        %v1087 = vshrl.u32 %v1086, 7
        %v1088 = vsub.s32 %v1085, %v1087
        %v1089 = vrot.slane %v1075, %v1088
        %v1090 = vcombine.high %v1082, %v1082
        %v1091 = vcombine.high %v1089, %v1089
        %v1093 = vunpack.c.l.s4 1966171168
        %v1094 = vunpack.c.0.s8 %v1093
        %v1095 = vlaneseq
        %v1096 = vshrl.u32 %v1095, 7
        %v1097 = vsub.s32 %v1094, %v1096
        %v1098 = vrot.slane %v1061, %v1097
        %v1099 = vcombine.high %v1098, %v1098
        %v1101 = vunpack.c.l.s4 1966171168
        %v1102 = vunpack.c.0.s8 %v1101
        %v1103 = vlaneseq
        %v1104 = vshrl.u32 %v1103, 7
        %v1105 = vsub.s32 %v1102, %v1104
        %v1106 = vrot.slane %v1098, %v1105
        %v1108 = vunpack.c.l.s4 1966171168
        %v1109 = vunpack.c.0.s8 %v1108
        %v1110 = vlaneseq
        %v1111 = vshrl.u32 %v1110, 7
        %v1112 = vsub.s32 %v1109, %v1111
        %v1113 = vrot.slane %v1099, %v1112
        %v1114 = vcombine.high %v1106, %v1106
        %v1115 = vcombine.high %v1113, %v1113
        %v1117 = vunpack.c.l.s4 1966171168
        %v1118 = vunpack.c.0.s8 %v1117
        %v1119 = vlaneseq
        %v1120 = vshrl.u32 %v1119, 7
        %v1121 = vsub.s32 %v1118, %v1120
        %v1122 = vrot.slane %v1062, %v1121
        %v1123 = vcombine.high %v1122, %v1122
        %v1125 = vunpack.c.l.s4 1966171168
        %v1126 = vunpack.c.0.s8 %v1125
        %v1127 = vlaneseq
        %v1128 = vshrl.u32 %v1127, 7
        %v1129 = vsub.s32 %v1126, %v1128
        %v1130 = vrot.slane %v1122, %v1129
        %v1132 = vunpack.c.l.s4 1966171168
        %v1133 = vunpack.c.0.s8 %v1132
        %v1134 = vlaneseq
        %v1135 = vshrl.u32 %v1134, 7
        %v1136 = vsub.s32 %v1133, %v1135
        %v1137 = vrot.slane %v1123, %v1136
        %v1138 = vcombine.high %v1130, %v1130
        %v1139 = vcombine.high %v1137, %v1137
        %v1141 = vunpack.c.l.s4 1966171168
        %v1142 = vunpack.c.0.s8 %v1141
        %v1143 = vlaneseq
        %v1144 = vshrl.u32 %v1143, 7
        %v1145 = vsub.s32 %v1142, %v1144
        %v1146 = vrot.slane %v1063, %v1145
        %v1147 = vcombine.high %v1146, %v1146
        %v1149 = vunpack.c.l.s4 1966171168
        %v1150 = vunpack.c.0.s8 %v1149
        %v1151 = vlaneseq
        %v1152 = vshrl.u32 %v1151, 7
        %v1153 = vsub.s32 %v1150, %v1152
        %v1154 = vrot.slane %v1146, %v1153
        %v1156 = vunpack.c.l.s4 1966171168
        %v1157 = vunpack.c.0.s8 %v1156
        %v1158 = vlaneseq
        %v1159 = vshrl.u32 %v1158, 7
        %v1160 = vsub.s32 %v1157, %v1159
        %v1161 = vrot.slane %v1147, %v1160
        %v1162 = vcombine.high %v1154, %v1154
        %v1163 = vcombine.high %v1161, %v1161
        %1180 = vst.msk [vmem:[#allocation3 + $0x4] sm:$0x1] %vm635, %v1082
        %1181 = vst.msk [vmem:[#allocation3 + $0x14] sm:$0x1] %vm635, %v1089
        %1182 = vst.msk [vmem:[#allocation3 + $0x24] sm:$0x1] %vm635, %v1090
        %1183 = vst.msk [vmem:[#allocation3 + $0x34] sm:$0x1] %vm635, %v1091
        %1184 = vst.msk [vmem:[#allocation3 + $0x44] sm:$0x1] %vm635, %v1106
        %1185 = vst.msk [vmem:[#allocation3 + $0x54] sm:$0x1] %vm635, %v1113
        %1186 = vst.msk [vmem:[#allocation3 + $0x64] sm:$0x1] %vm635, %v1114
        %1187 = vst.msk [vmem:[#allocation3 + $0x74] sm:$0x1] %vm635, %v1115
        %1188 = vst.msk [vmem:[#allocation3 + $0x84] sm:$0x1] %vm635, %v1130
        %1189 = vst.msk [vmem:[#allocation3 + $0x94] sm:$0x1] %vm635, %v1137
        %1190 = vst.msk [vmem:[#allocation3 + $0xa4] sm:$0x1] %vm635, %v1138
        %1191 = vst.msk [vmem:[#allocation3 + $0xb4] sm:$0x1] %vm635, %v1139
        %1192 = vst.msk [vmem:[#allocation3 + $0xc4] sm:$0x1] %vm635, %v1154
        %1193 = vst.msk [vmem:[#allocation3 + $0xd4] sm:$0x1] %vm635, %v1161
        %1194 = vst.msk [vmem:[#allocation3 + $0xe4] sm:$0x1] %vm635, %v1162
        %1195 = vst.msk [vmem:[#allocation3 + $0xf4] sm:$0x1] %vm635, %v1163
        %v1196 = vld [vmem:[%s509 + $0x2] sm:$0xf]
        %v1197 = vld [vmem:[%s509 + $0xa] sm:$0xf]
        %v1198 = vld [vmem:[%s509 + $0x12] sm:$0xf]
        %v1199 = vld [vmem:[%s509 + $0x1a] sm:$0xf]
        %v1205 = vunpack.c.l.s4 1966171168
        %v1206 = vunpack.c.0.s8 %v1205
        %v1207 = vlaneseq
        %v1208 = vshrl.u32 %v1207, 7
        %v1209 = vsub.s32 %v1206, %v1208
        %v1210 = vrot.slane %v1196, %v1209
        %v1211 = vcombine.high %v1210, %v1210
        %v1213 = vunpack.c.l.s4 1966171168
        %v1214 = vunpack.c.0.s8 %v1213
        %v1215 = vlaneseq
        %v1216 = vshrl.u32 %v1215, 7
        %v1217 = vsub.s32 %v1214, %v1216
        %v1218 = vrot.slane %v1210, %v1217
        %v1220 = vunpack.c.l.s4 1966171168
        %v1221 = vunpack.c.0.s8 %v1220
        %v1222 = vlaneseq
        %v1223 = vshrl.u32 %v1222, 7
        %v1224 = vsub.s32 %v1221, %v1223
        %v1225 = vrot.slane %v1211, %v1224
        %v1226 = vcombine.high %v1218, %v1218
        %v1227 = vcombine.high %v1225, %v1225
        %v1229 = vunpack.c.l.s4 1966171168
        %v1230 = vunpack.c.0.s8 %v1229
        %v1231 = vlaneseq
        %v1232 = vshrl.u32 %v1231, 7
        %v1233 = vsub.s32 %v1230, %v1232
        %v1234 = vrot.slane %v1197, %v1233
        %v1235 = vcombine.high %v1234, %v1234
        %v1237 = vunpack.c.l.s4 1966171168
        %v1238 = vunpack.c.0.s8 %v1237
        %v1239 = vlaneseq
        %v1240 = vshrl.u32 %v1239, 7
        %v1241 = vsub.s32 %v1238, %v1240
        %v1242 = vrot.slane %v1234, %v1241
        %v1244 = vunpack.c.l.s4 1966171168
        %v1245 = vunpack.c.0.s8 %v1244
        %v1246 = vlaneseq
        %v1247 = vshrl.u32 %v1246, 7
        %v1248 = vsub.s32 %v1245, %v1247
        %v1249 = vrot.slane %v1235, %v1248
        %v1250 = vcombine.high %v1242, %v1242
        %v1251 = vcombine.high %v1249, %v1249
        %v1253 = vunpack.c.l.s4 1966171168
        %v1254 = vunpack.c.0.s8 %v1253
        %v1255 = vlaneseq
        %v1256 = vshrl.u32 %v1255, 7
        %v1257 = vsub.s32 %v1254, %v1256
        %v1258 = vrot.slane %v1198, %v1257
        %v1259 = vcombine.high %v1258, %v1258
        %v1261 = vunpack.c.l.s4 1966171168
        %v1262 = vunpack.c.0.s8 %v1261
        %v1263 = vlaneseq
        %v1264 = vshrl.u32 %v1263, 7
        %v1265 = vsub.s32 %v1262, %v1264
        %v1266 = vrot.slane %v1258, %v1265
        %v1268 = vunpack.c.l.s4 1966171168
        %v1269 = vunpack.c.0.s8 %v1268
        %v1270 = vlaneseq
        %v1271 = vshrl.u32 %v1270, 7
        %v1272 = vsub.s32 %v1269, %v1271
        %v1273 = vrot.slane %v1259, %v1272
        %v1274 = vcombine.high %v1266, %v1266
        %v1275 = vcombine.high %v1273, %v1273
        %v1277 = vunpack.c.l.s4 1966171168
        %v1278 = vunpack.c.0.s8 %v1277
        %v1279 = vlaneseq
        %v1280 = vshrl.u32 %v1279, 7
        %v1281 = vsub.s32 %v1278, %v1280
        %v1282 = vrot.slane %v1199, %v1281
        %v1283 = vcombine.high %v1282, %v1282
        %v1285 = vunpack.c.l.s4 1966171168
        %v1286 = vunpack.c.0.s8 %v1285
        %v1287 = vlaneseq
        %v1288 = vshrl.u32 %v1287, 7
        %v1289 = vsub.s32 %v1286, %v1288
        %v1290 = vrot.slane %v1282, %v1289
        %v1292 = vunpack.c.l.s4 1966171168
        %v1293 = vunpack.c.0.s8 %v1292
        %v1294 = vlaneseq
        %v1295 = vshrl.u32 %v1294, 7
        %v1296 = vsub.s32 %v1293, %v1295
        %v1297 = vrot.slane %v1283, %v1296
        %v1298 = vcombine.high %v1290, %v1290
        %v1299 = vcombine.high %v1297, %v1297
        %1316 = vst.msk [vmem:[#allocation3 + $0x5] sm:$0x1] %vm635, %v1218
        %1317 = vst.msk [vmem:[#allocation3 + $0x15] sm:$0x1] %vm635, %v1225
        %1318 = vst.msk [vmem:[#allocation3 + $0x25] sm:$0x1] %vm635, %v1226
        %1319 = vst.msk [vmem:[#allocation3 + $0x35] sm:$0x1] %vm635, %v1227
        %1320 = vst.msk [vmem:[#allocation3 + $0x45] sm:$0x1] %vm635, %v1242
        %1321 = vst.msk [vmem:[#allocation3 + $0x55] sm:$0x1] %vm635, %v1249
        %1322 = vst.msk [vmem:[#allocation3 + $0x65] sm:$0x1] %vm635, %v1250
        %1323 = vst.msk [vmem:[#allocation3 + $0x75] sm:$0x1] %vm635, %v1251
        %1324 = vst.msk [vmem:[#allocation3 + $0x85] sm:$0x1] %vm635, %v1266
        %1325 = vst.msk [vmem:[#allocation3 + $0x95] sm:$0x1] %vm635, %v1273
        %1326 = vst.msk [vmem:[#allocation3 + $0xa5] sm:$0x1] %vm635, %v1274
        %1327 = vst.msk [vmem:[#allocation3 + $0xb5] sm:$0x1] %vm635, %v1275
        %1328 = vst.msk [vmem:[#allocation3 + $0xc5] sm:$0x1] %vm635, %v1290
        %1329 = vst.msk [vmem:[#allocation3 + $0xd5] sm:$0x1] %vm635, %v1297
        %1330 = vst.msk [vmem:[#allocation3 + $0xe5] sm:$0x1] %vm635, %v1298
        %1331 = vst.msk [vmem:[#allocation3 + $0xf5] sm:$0x1] %vm635, %v1299
        %s1332 = scalar_lea.vmem [#allocation2], 16
        %v1333 = vld [vmem:[%s1332] sm:$0xf]
        %v1334 = vld [vmem:[%s1332 + $0x8] sm:$0xf]
        %v1335 = vld [vmem:[%s1332 + $0x10] sm:$0xf]
        %v1336 = vld [vmem:[%s1332 + $0x18] sm:$0xf]
        %v1342 = vunpack.c.l.s4 1966171168
        %v1343 = vunpack.c.0.s8 %v1342
        %v1344 = vlaneseq
        %v1345 = vshrl.u32 %v1344, 7
        %v1346 = vsub.s32 %v1343, %v1345
        %v1347 = vrot.slane %v1333, %v1346
        %v1348 = vcombine.high %v1347, %v1347
        %v1350 = vunpack.c.l.s4 1966171168
        %v1351 = vunpack.c.0.s8 %v1350
        %v1352 = vlaneseq
        %v1353 = vshrl.u32 %v1352, 7
        %v1354 = vsub.s32 %v1351, %v1353
        %v1355 = vrot.slane %v1347, %v1354
        %v1357 = vunpack.c.l.s4 1966171168
        %v1358 = vunpack.c.0.s8 %v1357
        %v1359 = vlaneseq
        %v1360 = vshrl.u32 %v1359, 7
        %v1361 = vsub.s32 %v1358, %v1360
        %v1362 = vrot.slane %v1348, %v1361
        %v1363 = vcombine.high %v1355, %v1355
        %v1364 = vcombine.high %v1362, %v1362
        %v1366 = vunpack.c.l.s4 1966171168
        %v1367 = vunpack.c.0.s8 %v1366
        %v1368 = vlaneseq
        %v1369 = vshrl.u32 %v1368, 7
        %v1370 = vsub.s32 %v1367, %v1369
        %v1371 = vrot.slane %v1334, %v1370
        %v1372 = vcombine.high %v1371, %v1371
        %v1374 = vunpack.c.l.s4 1966171168
        %v1375 = vunpack.c.0.s8 %v1374
        %v1376 = vlaneseq
        %v1377 = vshrl.u32 %v1376, 7
        %v1378 = vsub.s32 %v1375, %v1377
        %v1379 = vrot.slane %v1371, %v1378
        %v1381 = vunpack.c.l.s4 1966171168
        %v1382 = vunpack.c.0.s8 %v1381
        %v1383 = vlaneseq
        %v1384 = vshrl.u32 %v1383, 7
        %v1385 = vsub.s32 %v1382, %v1384
        %v1386 = vrot.slane %v1372, %v1385
        %v1387 = vcombine.high %v1379, %v1379
        %v1388 = vcombine.high %v1386, %v1386
        %v1390 = vunpack.c.l.s4 1966171168
        %v1391 = vunpack.c.0.s8 %v1390
        %v1392 = vlaneseq
        %v1393 = vshrl.u32 %v1392, 7
        %v1394 = vsub.s32 %v1391, %v1393
        %v1395 = vrot.slane %v1335, %v1394
        %v1396 = vcombine.high %v1395, %v1395
        %v1398 = vunpack.c.l.s4 1966171168
        %v1399 = vunpack.c.0.s8 %v1398
        %v1400 = vlaneseq
        %v1401 = vshrl.u32 %v1400, 7
        %v1402 = vsub.s32 %v1399, %v1401
        %v1403 = vrot.slane %v1395, %v1402
        %v1405 = vunpack.c.l.s4 1966171168
        %v1406 = vunpack.c.0.s8 %v1405
        %v1407 = vlaneseq
        %v1408 = vshrl.u32 %v1407, 7
        %v1409 = vsub.s32 %v1406, %v1408
        %v1410 = vrot.slane %v1396, %v1409
        %v1411 = vcombine.high %v1403, %v1403
        %v1412 = vcombine.high %v1410, %v1410
        %v1414 = vunpack.c.l.s4 1966171168
        %v1415 = vunpack.c.0.s8 %v1414
        %v1416 = vlaneseq
        %v1417 = vshrl.u32 %v1416, 7
        %v1418 = vsub.s32 %v1415, %v1417
        %v1419 = vrot.slane %v1336, %v1418
        %v1420 = vcombine.high %v1419, %v1419
        %v1422 = vunpack.c.l.s4 1966171168
        %v1423 = vunpack.c.0.s8 %v1422
        %v1424 = vlaneseq
        %v1425 = vshrl.u32 %v1424, 7
        %v1426 = vsub.s32 %v1423, %v1425
        %v1427 = vrot.slane %v1419, %v1426
        %v1429 = vunpack.c.l.s4 1966171168
        %v1430 = vunpack.c.0.s8 %v1429
        %v1431 = vlaneseq
        %v1432 = vshrl.u32 %v1431, 7
        %v1433 = vsub.s32 %v1430, %v1432
        %v1434 = vrot.slane %v1420, %v1433
        %v1435 = vcombine.high %v1427, %v1427
        %v1436 = vcombine.high %v1434, %v1434
        %1453 = vst.msk [vmem:[#allocation3 + $0x6] sm:$0x1] %vm635, %v1355
        %1454 = vst.msk [vmem:[#allocation3 + $0x16] sm:$0x1] %vm635, %v1362
        %1455 = vst.msk [vmem:[#allocation3 + $0x26] sm:$0x1] %vm635, %v1363
        %1456 = vst.msk [vmem:[#allocation3 + $0x36] sm:$0x1] %vm635, %v1364
        %1457 = vst.msk [vmem:[#allocation3 + $0x46] sm:$0x1] %vm635, %v1379
        %1458 = vst.msk [vmem:[#allocation3 + $0x56] sm:$0x1] %vm635, %v1386
        %1459 = vst.msk [vmem:[#allocation3 + $0x66] sm:$0x1] %vm635, %v1387
        %1460 = vst.msk [vmem:[#allocation3 + $0x76] sm:$0x1] %vm635, %v1388
        %1461 = vst.msk [vmem:[#allocation3 + $0x86] sm:$0x1] %vm635, %v1403
        %1462 = vst.msk [vmem:[#allocation3 + $0x96] sm:$0x1] %vm635, %v1410
        %1463 = vst.msk [vmem:[#allocation3 + $0xa6] sm:$0x1] %vm635, %v1411
        %1464 = vst.msk [vmem:[#allocation3 + $0xb6] sm:$0x1] %vm635, %v1412
        %1465 = vst.msk [vmem:[#allocation3 + $0xc6] sm:$0x1] %vm635, %v1427
        %1466 = vst.msk [vmem:[#allocation3 + $0xd6] sm:$0x1] %vm635, %v1434
        %1467 = vst.msk [vmem:[#allocation3 + $0xe6] sm:$0x1] %vm635, %v1435
        %1468 = vst.msk [vmem:[#allocation3 + $0xf6] sm:$0x1] %vm635, %v1436
        %v1469 = vld [vmem:[%s1332 + $0x1] sm:$0xf]
        %v1470 = vld [vmem:[%s1332 + $0x9] sm:$0xf]
        %v1471 = vld [vmem:[%s1332 + $0x11] sm:$0xf]
        %v1472 = vld [vmem:[%s1332 + $0x19] sm:$0xf]
        %v1478 = vunpack.c.l.s4 1966171168
        %v1479 = vunpack.c.0.s8 %v1478
        %v1480 = vlaneseq
        %v1481 = vshrl.u32 %v1480, 7
        %v1482 = vsub.s32 %v1479, %v1481
        %v1483 = vrot.slane %v1469, %v1482
        %v1484 = vcombine.high %v1483, %v1483
        %v1486 = vunpack.c.l.s4 1966171168
        %v1487 = vunpack.c.0.s8 %v1486
        %v1488 = vlaneseq
        %v1489 = vshrl.u32 %v1488, 7
        %v1490 = vsub.s32 %v1487, %v1489
        %v1491 = vrot.slane %v1483, %v1490
        %v1493 = vunpack.c.l.s4 1966171168
        %v1494 = vunpack.c.0.s8 %v1493
        %v1495 = vlaneseq
        %v1496 = vshrl.u32 %v1495, 7
        %v1497 = vsub.s32 %v1494, %v1496
        %v1498 = vrot.slane %v1484, %v1497
        %v1499 = vcombine.high %v1491, %v1491
        %v1500 = vcombine.high %v1498, %v1498
        %v1502 = vunpack.c.l.s4 1966171168
        %v1503 = vunpack.c.0.s8 %v1502
        %v1504 = vlaneseq
        %v1505 = vshrl.u32 %v1504, 7
        %v1506 = vsub.s32 %v1503, %v1505
        %v1507 = vrot.slane %v1470, %v1506
        %v1508 = vcombine.high %v1507, %v1507
        %v1510 = vunpack.c.l.s4 1966171168
        %v1511 = vunpack.c.0.s8 %v1510
        %v1512 = vlaneseq
        %v1513 = vshrl.u32 %v1512, 7
        %v1514 = vsub.s32 %v1511, %v1513
        %v1515 = vrot.slane %v1507, %v1514
        %v1517 = vunpack.c.l.s4 1966171168
        %v1518 = vunpack.c.0.s8 %v1517
        %v1519 = vlaneseq
        %v1520 = vshrl.u32 %v1519, 7
        %v1521 = vsub.s32 %v1518, %v1520
        %v1522 = vrot.slane %v1508, %v1521
        %v1523 = vcombine.high %v1515, %v1515
        %v1524 = vcombine.high %v1522, %v1522
        %v1526 = vunpack.c.l.s4 1966171168
        %v1527 = vunpack.c.0.s8 %v1526
        %v1528 = vlaneseq
        %v1529 = vshrl.u32 %v1528, 7
        %v1530 = vsub.s32 %v1527, %v1529
        %v1531 = vrot.slane %v1471, %v1530
        %v1532 = vcombine.high %v1531, %v1531
        %v1534 = vunpack.c.l.s4 1966171168
        %v1535 = vunpack.c.0.s8 %v1534
        %v1536 = vlaneseq
        %v1537 = vshrl.u32 %v1536, 7
        %v1538 = vsub.s32 %v1535, %v1537
        %v1539 = vrot.slane %v1531, %v1538
        %v1541 = vunpack.c.l.s4 1966171168
        %v1542 = vunpack.c.0.s8 %v1541
        %v1543 = vlaneseq
        %v1544 = vshrl.u32 %v1543, 7
        %v1545 = vsub.s32 %v1542, %v1544
        %v1546 = vrot.slane %v1532, %v1545
        %v1547 = vcombine.high %v1539, %v1539
        %v1548 = vcombine.high %v1546, %v1546
        %v1550 = vunpack.c.l.s4 1966171168
        %v1551 = vunpack.c.0.s8 %v1550
        %v1552 = vlaneseq
        %v1553 = vshrl.u32 %v1552, 7
        %v1554 = vsub.s32 %v1551, %v1553
        %v1555 = vrot.slane %v1472, %v1554
        %v1556 = vcombine.high %v1555, %v1555
        %v1558 = vunpack.c.l.s4 1966171168
        %v1559 = vunpack.c.0.s8 %v1558
        %v1560 = vlaneseq
        %v1561 = vshrl.u32 %v1560, 7
        %v1562 = vsub.s32 %v1559, %v1561
        %v1563 = vrot.slane %v1555, %v1562
        %v1565 = vunpack.c.l.s4 1966171168
        %v1566 = vunpack.c.0.s8 %v1565
        %v1567 = vlaneseq
        %v1568 = vshrl.u32 %v1567, 7
        %v1569 = vsub.s32 %v1566, %v1568
        %v1570 = vrot.slane %v1556, %v1569
        %v1571 = vcombine.high %v1563, %v1563
        %v1572 = vcombine.high %v1570, %v1570
        %1589 = vst.msk [vmem:[#allocation3 + $0x7] sm:$0x1] %vm635, %v1491
        %1590 = vst.msk [vmem:[#allocation3 + $0x17] sm:$0x1] %vm635, %v1498
        %1591 = vst.msk [vmem:[#allocation3 + $0x27] sm:$0x1] %vm635, %v1499
        %1592 = vst.msk [vmem:[#allocation3 + $0x37] sm:$0x1] %vm635, %v1500
        %1593 = vst.msk [vmem:[#allocation3 + $0x47] sm:$0x1] %vm635, %v1515
        %1594 = vst.msk [vmem:[#allocation3 + $0x57] sm:$0x1] %vm635, %v1522
        %1595 = vst.msk [vmem:[#allocation3 + $0x67] sm:$0x1] %vm635, %v1523
        %1596 = vst.msk [vmem:[#allocation3 + $0x77] sm:$0x1] %vm635, %v1524
        %1597 = vst.msk [vmem:[#allocation3 + $0x87] sm:$0x1] %vm635, %v1539
        %1598 = vst.msk [vmem:[#allocation3 + $0x97] sm:$0x1] %vm635, %v1546
        %1599 = vst.msk [vmem:[#allocation3 + $0xa7] sm:$0x1] %vm635, %v1547
        %1600 = vst.msk [vmem:[#allocation3 + $0xb7] sm:$0x1] %vm635, %v1548
        %1601 = vst.msk [vmem:[#allocation3 + $0xc7] sm:$0x1] %vm635, %v1563
        %1602 = vst.msk [vmem:[#allocation3 + $0xd7] sm:$0x1] %vm635, %v1570
        %1603 = vst.msk [vmem:[#allocation3 + $0xe7] sm:$0x1] %vm635, %v1571
        %1604 = vst.msk [vmem:[#allocation3 + $0xf7] sm:$0x1] %vm635, %v1572
        %v1605 = vld [vmem:[%s1332 + $0x2] sm:$0xf]
        %v1606 = vld [vmem:[%s1332 + $0xa] sm:$0xf]
        %v1607 = vld [vmem:[%s1332 + $0x12] sm:$0xf]
        %v1608 = vld [vmem:[%s1332 + $0x1a] sm:$0xf]
        %v1614 = vunpack.c.l.s4 1966171168
        %v1615 = vunpack.c.0.s8 %v1614
        %v1616 = vlaneseq
        %v1617 = vshrl.u32 %v1616, 7
        %v1618 = vsub.s32 %v1615, %v1617
        %v1619 = vrot.slane %v1605, %v1618
        %v1620 = vcombine.high %v1619, %v1619
        %v1622 = vunpack.c.l.s4 1966171168
        %v1623 = vunpack.c.0.s8 %v1622
        %v1624 = vlaneseq
        %v1625 = vshrl.u32 %v1624, 7
        %v1626 = vsub.s32 %v1623, %v1625
        %v1627 = vrot.slane %v1619, %v1626
        %v1629 = vunpack.c.l.s4 1966171168
        %v1630 = vunpack.c.0.s8 %v1629
        %v1631 = vlaneseq
        %v1632 = vshrl.u32 %v1631, 7
        %v1633 = vsub.s32 %v1630, %v1632
        %v1634 = vrot.slane %v1620, %v1633
        %v1635 = vcombine.high %v1627, %v1627
        %v1636 = vcombine.high %v1634, %v1634
        %v1638 = vunpack.c.l.s4 1966171168
        %v1639 = vunpack.c.0.s8 %v1638
        %v1640 = vlaneseq
        %v1641 = vshrl.u32 %v1640, 7
        %v1642 = vsub.s32 %v1639, %v1641
        %v1643 = vrot.slane %v1606, %v1642
        %v1644 = vcombine.high %v1643, %v1643
        %v1646 = vunpack.c.l.s4 1966171168
        %v1647 = vunpack.c.0.s8 %v1646
        %v1648 = vlaneseq
        %v1649 = vshrl.u32 %v1648, 7
        %v1650 = vsub.s32 %v1647, %v1649
        %v1651 = vrot.slane %v1643, %v1650
        %v1653 = vunpack.c.l.s4 1966171168
        %v1654 = vunpack.c.0.s8 %v1653
        %v1655 = vlaneseq
        %v1656 = vshrl.u32 %v1655, 7
        %v1657 = vsub.s32 %v1654, %v1656
        %v1658 = vrot.slane %v1644, %v1657
        %v1659 = vcombine.high %v1651, %v1651
        %v1660 = vcombine.high %v1658, %v1658
        %v1662 = vunpack.c.l.s4 1966171168
        %v1663 = vunpack.c.0.s8 %v1662
        %v1664 = vlaneseq
        %v1665 = vshrl.u32 %v1664, 7
        %v1666 = vsub.s32 %v1663, %v1665
        %v1667 = vrot.slane %v1607, %v1666
        %v1668 = vcombine.high %v1667, %v1667
        %v1670 = vunpack.c.l.s4 1966171168
        %v1671 = vunpack.c.0.s8 %v1670
        %v1672 = vlaneseq
        %v1673 = vshrl.u32 %v1672, 7
        %v1674 = vsub.s32 %v1671, %v1673
        %v1675 = vrot.slane %v1667, %v1674
        %v1677 = vunpack.c.l.s4 1966171168
        %v1678 = vunpack.c.0.s8 %v1677
        %v1679 = vlaneseq
        %v1680 = vshrl.u32 %v1679, 7
        %v1681 = vsub.s32 %v1678, %v1680
        %v1682 = vrot.slane %v1668, %v1681
        %v1683 = vcombine.high %v1675, %v1675
        %v1684 = vcombine.high %v1682, %v1682
        %v1686 = vunpack.c.l.s4 1966171168
        %v1687 = vunpack.c.0.s8 %v1686
        %v1688 = vlaneseq
        %v1689 = vshrl.u32 %v1688, 7
        %v1690 = vsub.s32 %v1687, %v1689
        %v1691 = vrot.slane %v1608, %v1690
        %v1692 = vcombine.high %v1691, %v1691
        %v1694 = vunpack.c.l.s4 1966171168
        %v1695 = vunpack.c.0.s8 %v1694
        %v1696 = vlaneseq
        %v1697 = vshrl.u32 %v1696, 7
        %v1698 = vsub.s32 %v1695, %v1697
        %v1699 = vrot.slane %v1691, %v1698
        %v1701 = vunpack.c.l.s4 1966171168
        %v1702 = vunpack.c.0.s8 %v1701
        %v1703 = vlaneseq
        %v1704 = vshrl.u32 %v1703, 7
        %v1705 = vsub.s32 %v1702, %v1704
        %v1706 = vrot.slane %v1692, %v1705
        %v1707 = vcombine.high %v1699, %v1699
        %v1708 = vcombine.high %v1706, %v1706
        %1725 = vst.msk [vmem:[#allocation3 + $0x8] sm:$0x1] %vm635, %v1627
        %1726 = vst.msk [vmem:[#allocation3 + $0x18] sm:$0x1] %vm635, %v1634
        %1727 = vst.msk [vmem:[#allocation3 + $0x28] sm:$0x1] %vm635, %v1635
        %1728 = vst.msk [vmem:[#allocation3 + $0x38] sm:$0x1] %vm635, %v1636
        %1729 = vst.msk [vmem:[#allocation3 + $0x48] sm:$0x1] %vm635, %v1651
        %1730 = vst.msk [vmem:[#allocation3 + $0x58] sm:$0x1] %vm635, %v1658
        %1731 = vst.msk [vmem:[#allocation3 + $0x68] sm:$0x1] %vm635, %v1659
        %1732 = vst.msk [vmem:[#allocation3 + $0x78] sm:$0x1] %vm635, %v1660
        %1733 = vst.msk [vmem:[#allocation3 + $0x88] sm:$0x1] %vm635, %v1675
        %1734 = vst.msk [vmem:[#allocation3 + $0x98] sm:$0x1] %vm635, %v1682
        %1735 = vst.msk [vmem:[#allocation3 + $0xa8] sm:$0x1] %vm635, %v1683
        %1736 = vst.msk [vmem:[#allocation3 + $0xb8] sm:$0x1] %vm635, %v1684
        %1737 = vst.msk [vmem:[#allocation3 + $0xc8] sm:$0x1] %vm635, %v1699
        %1738 = vst.msk [vmem:[#allocation3 + $0xd8] sm:$0x1] %vm635, %v1706
        %1739 = vst.msk [vmem:[#allocation3 + $0xe8] sm:$0x1] %vm635, %v1707
        %1740 = vst.msk [vmem:[#allocation3 + $0xf8] sm:$0x1] %vm635, %v1708
        %v1741 = vld [vmem:[#allocation3] sm:$0xff]
        %v1742 = vld [vmem:[#allocation3 + $0x8] sm:$0x1]
        %v1743 = vld [vmem:[#allocation3 + $0x10] sm:$0xff]
        %v1744 = vld [vmem:[#allocation3 + $0x18] sm:$0x1]
        %v1745 = vld [vmem:[#allocation3 + $0x20] sm:$0xff]
        %v1746 = vld [vmem:[#allocation3 + $0x28] sm:$0x1]
        %v1747 = vld [vmem:[#allocation3 + $0x30] sm:$0xff]
        %v1748 = vld [vmem:[#allocation3 + $0x38] sm:$0x1]
        %v1749 = vld [vmem:[#allocation3 + $0x40] sm:$0xff]
        %v1750 = vld [vmem:[#allocation3 + $0x48] sm:$0x1]
        %v1751 = vld [vmem:[#allocation3 + $0x50] sm:$0xff]
        %v1752 = vld [vmem:[#allocation3 + $0x58] sm:$0x1]
        %v1753 = vld [vmem:[#allocation3 + $0x60] sm:$0xff]
        %v1754 = vld [vmem:[#allocation3 + $0x68] sm:$0x1]
        %v1755 = vld [vmem:[#allocation3 + $0x70] sm:$0xff]
        %v1756 = vld [vmem:[#allocation3 + $0x78] sm:$0x1]
        %v1757 = vld [vmem:[#allocation3 + $0x80] sm:$0xff]
        %v1758 = vld [vmem:[#allocation3 + $0x88] sm:$0x1]
        %v1759 = vld [vmem:[#allocation3 + $0x90] sm:$0xff]
        %v1760 = vld [vmem:[#allocation3 + $0x98] sm:$0x1]
        %v1761 = vld [vmem:[#allocation3 + $0xa0] sm:$0xff]
        %v1762 = vld [vmem:[#allocation3 + $0xa8] sm:$0x1]
        %v1763 = vld [vmem:[#allocation3 + $0xb0] sm:$0xff]
        %v1764 = vld [vmem:[#allocation3 + $0xb8] sm:$0x1]
        %v1765 = vld [vmem:[#allocation3 + $0xc0] sm:$0xff]
        %v1766 = vld [vmem:[#allocation3 + $0xc8] sm:$0x1]
        %v1767 = vld [vmem:[#allocation3 + $0xd0] sm:$0xff]
        %v1768 = vld [vmem:[#allocation3 + $0xd8] sm:$0x1]
        %v1769 = vld [vmem:[#allocation3 + $0xe0] sm:$0xff]
        %v1770 = vld [vmem:[#allocation3 + $0xe8] sm:$0x1]
        %v1771 = vld [vmem:[#allocation3 + $0xf0] sm:$0xff]
        %v1772 = vld [vmem:[#allocation3 + $0xf8] sm:$0x1]
        %v1773 = vcombine.low %v1741, %v1745
        %v1774 = vcombine.high %v1741, %v1745
        %v1776 = vunpack.c.l.s4 1983009808
        %v1777 = vunpack.c.0.s8 %v1776
        %v1778 = vlaneseq
        %v1779 = vshrl.u32 %v1778, 7
        %v1780 = vsub.s32 %v1777, %v1779
        %v1781 = vrot.slane %v1773, %v1780
        %v1783 = vunpack.c.l.s4 1983009808
        %v1784 = vunpack.c.0.s8 %v1783
        %v1785 = vlaneseq
        %v1786 = vshrl.u32 %v1785, 7
        %v1787 = vsub.s32 %v1784, %v1786
        %v1788 = vrot.slane %v1774, %v1787
        %v1789 = vcombine.low %v1743, %v1747
        %v1790 = vcombine.high %v1743, %v1747
        %v1792 = vunpack.c.l.s4 1983009808
        %v1793 = vunpack.c.0.s8 %v1792
        %v1794 = vlaneseq
        %v1795 = vshrl.u32 %v1794, 7
        %v1796 = vsub.s32 %v1793, %v1795
        %v1797 = vrot.slane %v1789, %v1796
        %v1799 = vunpack.c.l.s4 1983009808
        %v1800 = vunpack.c.0.s8 %v1799
        %v1801 = vlaneseq
        %v1802 = vshrl.u32 %v1801, 7
        %v1803 = vsub.s32 %v1800, %v1802
        %v1804 = vrot.slane %v1790, %v1803
        %v1805 = vcombine.low %v1749, %v1753
        %v1806 = vcombine.high %v1749, %v1753
        %v1808 = vunpack.c.l.s4 1983009808
        %v1809 = vunpack.c.0.s8 %v1808
        %v1810 = vlaneseq
        %v1811 = vshrl.u32 %v1810, 7
        %v1812 = vsub.s32 %v1809, %v1811
        %v1813 = vrot.slane %v1805, %v1812
        %v1815 = vunpack.c.l.s4 1983009808
        %v1816 = vunpack.c.0.s8 %v1815
        %v1817 = vlaneseq
        %v1818 = vshrl.u32 %v1817, 7
        %v1819 = vsub.s32 %v1816, %v1818
        %v1820 = vrot.slane %v1806, %v1819
        %v1821 = vcombine.low %v1751, %v1755
        %v1822 = vcombine.high %v1751, %v1755
        %v1824 = vunpack.c.l.s4 1983009808
        %v1825 = vunpack.c.0.s8 %v1824
        %v1826 = vlaneseq
        %v1827 = vshrl.u32 %v1826, 7
        %v1828 = vsub.s32 %v1825, %v1827
        %v1829 = vrot.slane %v1821, %v1828
        %v1831 = vunpack.c.l.s4 1983009808
        %v1832 = vunpack.c.0.s8 %v1831
        %v1833 = vlaneseq
        %v1834 = vshrl.u32 %v1833, 7
        %v1835 = vsub.s32 %v1832, %v1834
        %v1836 = vrot.slane %v1822, %v1835
        %v1837 = vcombine.low %v1781, %v1797
        %v1838 = vcombine.high %v1781, %v1797
        %v1840 = vunpack.c.l.s4 1934713408
        %v1841 = vunpack.c.0.s8 %v1840
        %v1842 = vlaneseq
        %v1843 = vshrl.u32 %v1842, 7
        %v1844 = vsub.s32 %v1841, %v1843
        %v1845 = vrot.slane %v1837, %v1844
        %v1847 = vunpack.c.l.s4 1934713408
        %v1848 = vunpack.c.0.s8 %v1847
        %v1849 = vlaneseq
        %v1850 = vshrl.u32 %v1849, 7
        %v1851 = vsub.s32 %v1848, %v1850
        %v1852 = vrot.slane %v1838, %v1851
        %v1853 = vcombine.low %v1788, %v1804
        %v1854 = vcombine.high %v1788, %v1804
        %v1856 = vunpack.c.l.s4 1934713408
        %v1857 = vunpack.c.0.s8 %v1856
        %v1858 = vlaneseq
        %v1859 = vshrl.u32 %v1858, 7
        %v1860 = vsub.s32 %v1857, %v1859
        %v1861 = vrot.slane %v1853, %v1860
        %v1863 = vunpack.c.l.s4 1934713408
        %v1864 = vunpack.c.0.s8 %v1863
        %v1865 = vlaneseq
        %v1866 = vshrl.u32 %v1865, 7
        %v1867 = vsub.s32 %v1864, %v1866
        %v1868 = vrot.slane %v1854, %v1867
        %v1869 = vcombine.low %v1813, %v1829
        %v1870 = vcombine.high %v1813, %v1829
        %v1872 = vunpack.c.l.s4 1934713408
        %v1873 = vunpack.c.0.s8 %v1872
        %v1874 = vlaneseq
        %v1875 = vshrl.u32 %v1874, 7
        %v1876 = vsub.s32 %v1873, %v1875
        %v1877 = vrot.slane %v1869, %v1876
        %v1879 = vunpack.c.l.s4 1934713408
        %v1880 = vunpack.c.0.s8 %v1879
        %v1881 = vlaneseq
        %v1882 = vshrl.u32 %v1881, 7
        %v1883 = vsub.s32 %v1880, %v1882
        %v1884 = vrot.slane %v1870, %v1883
        %v1885 = vcombine.low %v1820, %v1836
        %v1886 = vcombine.high %v1820, %v1836
        %v1888 = vunpack.c.l.s4 1934713408
        %v1889 = vunpack.c.0.s8 %v1888
        %v1890 = vlaneseq
        %v1891 = vshrl.u32 %v1890, 7
        %v1892 = vsub.s32 %v1889, %v1891
        %v1893 = vrot.slane %v1885, %v1892
        %v1895 = vunpack.c.l.s4 1934713408
        %v1896 = vunpack.c.0.s8 %v1895
        %v1897 = vlaneseq
        %v1898 = vshrl.u32 %v1897, 7
        %v1899 = vsub.s32 %v1896, %v1898
        %v1900 = vrot.slane %v1886, %v1899
        %v1901 = vcombine.low %v1845, %v1877
        %v1902 = vcombine.high %v1845, %v1877
        %v1903 = vcombine.low %v1852, %v1884
        %v1904 = vcombine.high %v1852, %v1884
        %v1905 = vcombine.low %v1861, %v1893
        %v1906 = vcombine.high %v1861, %v1893
        %v1907 = vcombine.low %v1868, %v1900
        %v1908 = vcombine.high %v1868, %v1900
        %v1909 = vcombine.low %v1757, %v1761
        %v1910 = vcombine.high %v1757, %v1761
        %v1912 = vunpack.c.l.s4 1983009808
        %v1913 = vunpack.c.0.s8 %v1912
        %v1914 = vlaneseq
        %v1915 = vshrl.u32 %v1914, 7
        %v1916 = vsub.s32 %v1913, %v1915
        %v1917 = vrot.slane %v1909, %v1916
        %v1919 = vunpack.c.l.s4 1983009808
        %v1920 = vunpack.c.0.s8 %v1919
        %v1921 = vlaneseq
        %v1922 = vshrl.u32 %v1921, 7
        %v1923 = vsub.s32 %v1920, %v1922
        %v1924 = vrot.slane %v1910, %v1923
        %v1925 = vcombine.low %v1759, %v1763
        %v1926 = vcombine.high %v1759, %v1763
        %v1928 = vunpack.c.l.s4 1983009808
        %v1929 = vunpack.c.0.s8 %v1928
        %v1930 = vlaneseq
        %v1931 = vshrl.u32 %v1930, 7
        %v1932 = vsub.s32 %v1929, %v1931
        %v1933 = vrot.slane %v1925, %v1932
        %v1935 = vunpack.c.l.s4 1983009808
        %v1936 = vunpack.c.0.s8 %v1935
        %v1937 = vlaneseq
        %v1938 = vshrl.u32 %v1937, 7
        %v1939 = vsub.s32 %v1936, %v1938
        %v1940 = vrot.slane %v1926, %v1939
        %v1941 = vcombine.low %v1765, %v1769
        %v1942 = vcombine.high %v1765, %v1769
        %v1944 = vunpack.c.l.s4 1983009808
        %v1945 = vunpack.c.0.s8 %v1944
        %v1946 = vlaneseq
        %v1947 = vshrl.u32 %v1946, 7
        %v1948 = vsub.s32 %v1945, %v1947
        %v1949 = vrot.slane %v1941, %v1948
        %v1951 = vunpack.c.l.s4 1983009808
        %v1952 = vunpack.c.0.s8 %v1951
        %v1953 = vlaneseq
        %v1954 = vshrl.u32 %v1953, 7
        %v1955 = vsub.s32 %v1952, %v1954
        %v1956 = vrot.slane %v1942, %v1955
        %v1957 = vcombine.low %v1767, %v1771
        %v1958 = vcombine.high %v1767, %v1771
        %v1960 = vunpack.c.l.s4 1983009808
        %v1961 = vunpack.c.0.s8 %v1960
        %v1962 = vlaneseq
        %v1963 = vshrl.u32 %v1962, 7
        %v1964 = vsub.s32 %v1961, %v1963
        %v1965 = vrot.slane %v1957, %v1964
        %v1967 = vunpack.c.l.s4 1983009808
        %v1968 = vunpack.c.0.s8 %v1967
        %v1969 = vlaneseq
        %v1970 = vshrl.u32 %v1969, 7
        %v1971 = vsub.s32 %v1968, %v1970
        %v1972 = vrot.slane %v1958, %v1971
        %v1973 = vcombine.low %v1917, %v1933
        %v1974 = vcombine.high %v1917, %v1933
        %v1976 = vunpack.c.l.s4 1934713408
        %v1977 = vunpack.c.0.s8 %v1976
        %v1978 = vlaneseq
        %v1979 = vshrl.u32 %v1978, 7
        %v1980 = vsub.s32 %v1977, %v1979
        %v1981 = vrot.slane %v1973, %v1980
        %v1983 = vunpack.c.l.s4 1934713408
        %v1984 = vunpack.c.0.s8 %v1983
        %v1985 = vlaneseq
        %v1986 = vshrl.u32 %v1985, 7
        %v1987 = vsub.s32 %v1984, %v1986
        %v1988 = vrot.slane %v1974, %v1987
        %v1989 = vcombine.low %v1924, %v1940
        %v1990 = vcombine.high %v1924, %v1940
        %v1992 = vunpack.c.l.s4 1934713408
        %v1993 = vunpack.c.0.s8 %v1992
        %v1994 = vlaneseq
        %v1995 = vshrl.u32 %v1994, 7
        %v1996 = vsub.s32 %v1993, %v1995
        %v1997 = vrot.slane %v1989, %v1996
        %v1999 = vunpack.c.l.s4 1934713408
        %v2000 = vunpack.c.0.s8 %v1999
        %v2001 = vlaneseq
        %v2002 = vshrl.u32 %v2001, 7
        %v2003 = vsub.s32 %v2000, %v2002
        %v2004 = vrot.slane %v1990, %v2003
        %v2005 = vcombine.low %v1949, %v1965
        %v2006 = vcombine.high %v1949, %v1965
        %v2008 = vunpack.c.l.s4 1934713408
        %v2009 = vunpack.c.0.s8 %v2008
        %v2010 = vlaneseq
        %v2011 = vshrl.u32 %v2010, 7
        %v2012 = vsub.s32 %v2009, %v2011
        %v2013 = vrot.slane %v2005, %v2012
        %v2015 = vunpack.c.l.s4 1934713408
        %v2016 = vunpack.c.0.s8 %v2015
        %v2017 = vlaneseq
        %v2018 = vshrl.u32 %v2017, 7
        %v2019 = vsub.s32 %v2016, %v2018
        %v2020 = vrot.slane %v2006, %v2019
        %v2021 = vcombine.low %v1956, %v1972
        %v2022 = vcombine.high %v1956, %v1972
        %v2024 = vunpack.c.l.s4 1934713408
        %v2025 = vunpack.c.0.s8 %v2024
        %v2026 = vlaneseq
        %v2027 = vshrl.u32 %v2026, 7
        %v2028 = vsub.s32 %v2025, %v2027
        %v2029 = vrot.slane %v2021, %v2028
        %v2031 = vunpack.c.l.s4 1934713408
        %v2032 = vunpack.c.0.s8 %v2031
        %v2033 = vlaneseq
        %v2034 = vshrl.u32 %v2033, 7
        %v2035 = vsub.s32 %v2032, %v2034
        %v2036 = vrot.slane %v2022, %v2035
        %v2037 = vcombine.low %v1981, %v2013
        %v2038 = vcombine.high %v1981, %v2013
        %v2039 = vcombine.low %v1988, %v2020
        %v2040 = vcombine.high %v1988, %v2020
        %v2041 = vcombine.low %v1997, %v2029
        %v2042 = vcombine.high %v1997, %v2029
        %v2043 = vcombine.low %v2004, %v2036
        %v2044 = vcombine.high %v2004, %v2036
        %v2045 = vcombine.low %v1742, %v1746
        %v2047 = vunpack.c.l.s4 1983009808
        %v2048 = vunpack.c.0.s8 %v2047
        %v2049 = vlaneseq
        %v2050 = vshrl.u32 %v2049, 7
        %v2051 = vsub.s32 %v2048, %v2050
        %v2052 = vrot.slane %v2045, %v2051
        %v2053 = vcombine.low %v1744, %v1748
        %v2055 = vunpack.c.l.s4 1983009808
        %v2056 = vunpack.c.0.s8 %v2055
        %v2057 = vlaneseq
        %v2058 = vshrl.u32 %v2057, 7
        %v2059 = vsub.s32 %v2056, %v2058
        %v2060 = vrot.slane %v2053, %v2059
        %v2061 = vcombine.low %v1750, %v1754
        %v2063 = vunpack.c.l.s4 1983009808
        %v2064 = vunpack.c.0.s8 %v2063
        %v2065 = vlaneseq
        %v2066 = vshrl.u32 %v2065, 7
        %v2067 = vsub.s32 %v2064, %v2066
        %v2068 = vrot.slane %v2061, %v2067
        %v2069 = vcombine.low %v1752, %v1756
        %v2071 = vunpack.c.l.s4 1983009808
        %v2072 = vunpack.c.0.s8 %v2071
        %v2073 = vlaneseq
        %v2074 = vshrl.u32 %v2073, 7
        %v2075 = vsub.s32 %v2072, %v2074
        %v2076 = vrot.slane %v2069, %v2075
        %v2077 = vcombine.low %v2052, %v2060
        %v2079 = vunpack.c.l.s4 1934713408
        %v2080 = vunpack.c.0.s8 %v2079
        %v2081 = vlaneseq
        %v2082 = vshrl.u32 %v2081, 7
        %v2083 = vsub.s32 %v2080, %v2082
        %v2084 = vrot.slane %v2077, %v2083
        %v2085 = vcombine.low %v2068, %v2076
        %v2087 = vunpack.c.l.s4 1934713408
        %v2088 = vunpack.c.0.s8 %v2087
        %v2089 = vlaneseq
        %v2090 = vshrl.u32 %v2089, 7
        %v2091 = vsub.s32 %v2088, %v2090
        %v2092 = vrot.slane %v2085, %v2091
        %v2093 = vcombine.low %v2084, %v2092
        %v2094 = vcombine.low %v1758, %v1762
        %v2096 = vunpack.c.l.s4 1983009808
        %v2097 = vunpack.c.0.s8 %v2096
        %v2098 = vlaneseq
        %v2099 = vshrl.u32 %v2098, 7
        %v2100 = vsub.s32 %v2097, %v2099
        %v2101 = vrot.slane %v2094, %v2100
        %v2102 = vcombine.low %v1760, %v1764
        %v2104 = vunpack.c.l.s4 1983009808
        %v2105 = vunpack.c.0.s8 %v2104
        %v2106 = vlaneseq
        %v2107 = vshrl.u32 %v2106, 7
        %v2108 = vsub.s32 %v2105, %v2107
        %v2109 = vrot.slane %v2102, %v2108
        %v2110 = vcombine.low %v1766, %v1770
        %v2112 = vunpack.c.l.s4 1983009808
        %v2113 = vunpack.c.0.s8 %v2112
        %v2114 = vlaneseq
        %v2115 = vshrl.u32 %v2114, 7
        %v2116 = vsub.s32 %v2113, %v2115
        %v2117 = vrot.slane %v2110, %v2116
        %v2118 = vcombine.low %v1768, %v1772
        %v2120 = vunpack.c.l.s4 1983009808
        %v2121 = vunpack.c.0.s8 %v2120
        %v2122 = vlaneseq
        %v2123 = vshrl.u32 %v2122, 7
        %v2124 = vsub.s32 %v2121, %v2123
        %v2125 = vrot.slane %v2118, %v2124
        %v2126 = vcombine.low %v2101, %v2109
        %v2128 = vunpack.c.l.s4 1934713408
        %v2129 = vunpack.c.0.s8 %v2128
        %v2130 = vlaneseq
        %v2131 = vshrl.u32 %v2130, 7
        %v2132 = vsub.s32 %v2129, %v2131
        %v2133 = vrot.slane %v2126, %v2132
        %v2134 = vcombine.low %v2117, %v2125
        %v2136 = vunpack.c.l.s4 1934713408
        %v2137 = vunpack.c.0.s8 %v2136
        %v2138 = vlaneseq
        %v2139 = vshrl.u32 %v2138, 7
        %v2140 = vsub.s32 %v2137, %v2139
        %v2141 = vrot.slane %v2134, %v2140
        %v2142 = vcombine.low %v2133, %v2141
        %2145 = vrot.lane.b32.xlu0 %v1902, 8
        %v2146 = vpop.permute.xlu0 %2145
        %2147 = vrot.lane.b32.xlu0 %v2038, 8
        %v2148 = vpop.permute.xlu0 %2147
        %2153 = vrot.lane.b32.xlu0 %v1903, 16
        %v2154 = vpop.permute.xlu0 %2153
        %2155 = vrot.lane.b32.xlu0 %v2039, 16
        %v2156 = vpop.permute.xlu0 %2155
        %2161 = vrot.lane.b32.xlu0 %v1904, 24
        %v2162 = vpop.permute.xlu0 %2161
        %2163 = vrot.lane.b32.xlu0 %v2040, 24
        %v2164 = vpop.permute.xlu0 %2163
        %2169 = vrot.lane.b32.xlu0 %v1905, 32
        %v2170 = vpop.permute.xlu0 %2169
        %2171 = vrot.lane.b32.xlu0 %v2041, 32
        %v2172 = vpop.permute.xlu0 %2171
        %2177 = vrot.lane.b32.xlu0 %v1906, 40
        %v2178 = vpop.permute.xlu0 %2177
        %2179 = vrot.lane.b32.xlu0 %v2042, 40
        %v2180 = vpop.permute.xlu0 %2179
        %2185 = vrot.lane.b32.xlu0 %v1907, 48
        %v2186 = vpop.permute.xlu0 %2185
        %2187 = vrot.lane.b32.xlu0 %v2043, 48
        %v2188 = vpop.permute.xlu0 %2187
        %2193 = vrot.lane.b32.xlu0 %v1908, 56
        %v2194 = vpop.permute.xlu0 %2193
        %2195 = vrot.lane.b32.xlu0 %v2044, 56
        %v2196 = vpop.permute.xlu0 %2195
        %2201 = vrot.lane.b32.xlu0 %v2093, 64
        %v2202 = vpop.permute.xlu0 %2201
        %2203 = vrot.lane.b32.xlu0 %v2142, 64
        %v2204 = vpop.permute.xlu0 %2203
        %vm2207 = vcmask 64512
        %v2208 = vsel %vm2207, %v1901, %v2146
        %v2209 = vsel %vm2207, %v2037, %v2148
        %vm2210 = vcmask 130048
        %v2211 = vsel %vm2210, %v2208, %v2154
        %v2212 = vsel %vm2210, %v2209, %v2156
        %vm2213 = vcmask 195584
        %v2214 = vsel %vm2213, %v2211, %v2162
        %v2215 = vsel %vm2213, %v2212, %v2164
        %vm2216 = vcmask 261120
        %v2217 = vsel %vm2216, %v2214, %v2170
        %v2218 = vsel %vm2216, %v2215, %v2172
        %vm2219 = vcmask 326656
        %v2220 = vsel %vm2219, %v2217, %v2178
        %v2221 = vsel %vm2219, %v2218, %v2180
        %vm2222 = vcmask 392192
        %v2223 = vsel %vm2222, %v2220, %v2186
        %v2224 = vsel %vm2222, %v2221, %v2188
        %vm2225 = vcmask 457728
        %v2226 = vsel %vm2225, %v2223, %v2194
        %v2227 = vsel %vm2225, %v2224, %v2196
        %vm2228 = vcmask 523264
        %v2229 = vsel %vm2228, %v2226, %v2202
        %v2230 = vsel %vm2228, %v2227, %v2204
        %v2231 = vld [vmem:[%s3] sm:$0xff]
        %v2232 = vld [vmem:[%s3 + $0x8] sm:$0xff]
        %v2233 = vld [vmem:[%s3 + $0x10] sm:$0xff]
        %v2234 = vld [vmem:[%s3 + $0x18] sm:$0xff]
        %v2235 = vld [vmem:[%s3 + $0x20] sm:$0xff]
        %v2236 = vld [vmem:[%s3 + $0x28] sm:$0xff]
        %v2237 = vld [vmem:[%s3 + $0x30] sm:$0xff]
        %v2238 = vld [vmem:[%s3 + $0x38] sm:$0xff]
        %v2239 = vld [vmem:[%s3 + $0x40] sm:$0xff]
        %v2240 = vld [vmem:[%s4] sm:$0x1]
        %v2242 = vlaneseq
        %v2243 = vshrl.u32 %v2242, 7
        %v2244 = vsub.s32 0, %v2243
        %v2245 = vrot.slane %v2240, %v2244
        %vm2247 = vcmask 588800
        %v2249 = vsel %vm2247, %v2229, 0
        %v2252 = vsel %vm2247, %v2230, 0
        %2254 = vmatprep.subr.mxu0 0.0
        %2255 = vmatpush1.msra.mxu0 0.0
        %2256 = vmatprep.subr.mxu0 0.0
        %2257 = vmatpush1.msra.mxu0 0.0
        %2258 = vmatprep.subr.mxu0 0.0
        %2259 = vmatpush1.msra.mxu0 0.0
        %2260 = vmatprep.subr.mxu0 0.0
        %2261 = vmatpush1.msra.mxu0 0.0
        %2262 = vmatprep.subr.mxu0 0.0
        %2263 = vmatpush1.msra.mxu0 0.0
        %2264 = vmatprep.subr.mxu0 0.0
        %2265 = vmatpush1.msra.mxu0 0.0
        %2266 = vmatprep.subr.mxu0 0.0
        %2267 = vmatpush1.msra.mxu0 0.0
        %2268 = vmatprep.subr.mxu0 0.0
        %2269 = vmatpush1.msra.mxu0 %v2239
        %2270 = vmatprep.subr.mxu0 0.0
        %2271 = vmatpush1.msra.mxu0 %v2238
        %2272 = vmatprep.subr.mxu0 0.0
        %2273 = vmatpush1.msra.mxu0 %v2237
        %2274 = vmatprep.subr.mxu0 0.0
        %2275 = vmatpush1.msra.mxu0 %v2236
        %2276 = vmatprep.subr.mxu0 0.0
        %2277 = vmatpush1.msra.mxu0 %v2235
        %2278 = vmatprep.subr.mxu0 0.0
        %2279 = vmatpush1.msra.mxu0 %v2234
        %2280 = vmatprep.subr.mxu0 0.0
        %2281 = vmatpush1.msra.mxu0 %v2233
        %2282 = vmatprep.subr.mxu0 0.0
        %2283 = vmatpush1.msra.mxu0 %v2232
        %2284 = vmatprep.subr.mxu0 0.0
        %2285 = vmatpush1.msra.mxu0 %v2231
        %2286 = vmatprep.subr.mxu0 0.0
        %2287 = vmatpush2.msra.mxu0 0.0
        %2288 = vmatprep.subr.mxu0 0.0
        %2289 = vmatpush2.msra.mxu0 0.0
        %2290 = vmatprep.subr.mxu0 0.0
        %2291 = vmatpush2.msra.mxu0 0.0
        %2292 = vmatprep.subr.mxu0 0.0
        %2293 = vmatpush2.msra.mxu0 0.0
        %2294 = vmatprep.subr.mxu0 0.0
        %2295 = vmatpush2.msra.mxu0 0.0
        %2296 = vmatprep.subr.mxu0 0.0
        %2297 = vmatpush2.msra.mxu0 0.0
        %2298 = vmatprep.subr.mxu0 0.0
        %2299 = vmatpush2.msra.mxu0 0.0
        %2300 = vmatprep.subr.mxu0 0.0
        %2301 = vmatpush2.msra.mxu0 0.0
        %2302 = vmatprep.subr.mxu0 0.0
        %2303 = vmatpush2.msra.mxu0 0.0
        %2304 = vmatprep.subr.mxu0 0.0
        %2305 = vmatpush2.msra.mxu0 0.0
        %2306 = vmatprep.subr.mxu0 0.0
        %2307 = vmatpush2.msra.mxu0 0.0
        %2308 = vmatprep.subr.mxu0 0.0
        %2309 = vmatpush2.msra.mxu0 0.0
        %2310 = vmatprep.subr.mxu0 0.0
        %2311 = vmatpush2.msra.mxu0 0.0
        %2312 = vmatprep.subr.mxu0 0.0
        %2313 = vmatpush2.msra.mxu0 0.0
        %2314 = vmatprep.subr.mxu0 0.0
        %2315 = vmatpush2.msra.mxu0 0.0
        %2316 = vmatprep.subr.mxu0 0.0
        %2317 = vmatpush2.msra.mxu0 0.0
        %2318 = vmatprep.mubr.f32.mxu0 0.0
        %2319 = vmatmul.mubr.f32.gmra.mxu0 %v2249
        %v2320 = vpop.f32.mrf.mxu0
        %v2321 = vadd.f32 %v2245, %v2320
        %v2322 = vpop.f32.mrf.mxu0
        %2323 = vmatprep.mubr.f32.mxu0 0.0
        %2324 = vmatmul.mubr.f32.gmra.mxu0 %v2252
        %v2325 = vpop.f32.mrf.mxu0
        %v2326 = vadd.f32 %v2245, %v2325
        %v2327 = vpop.f32.mrf.mxu0
        %2328 = vdwg.mxu0
        %v2329 = vld [vmem:[%s451] sm:$0xff]
        %v2332 = vcombine.high %v2321, %v2321
        %v2333 = vcombine.high %v2326, %v2326
        %v2334 = vld [vmem:[%s8] sm:$0xff]
        %vm2335 = vcmask 31744
        %v2337 = vsel %vm2335, %v2334, 0
        %vm2339 = vcmask 1043456
        %v2340 = vsel %vm2339, %v2321, 0
        %2342 = vmatprep.subr.mxu0 0.0
        %2343 = vmatpush1.msra.mxu0 0.0
        %2344 = vmatprep.subr.mxu0 0.0
        %2345 = vmatpush1.msra.mxu0 0.0
        %2346 = vmatprep.subr.mxu0 0.0
        %2347 = vmatpush1.msra.mxu0 0.0
        %2348 = vmatprep.subr.mxu0 0.0
        %2349 = vmatpush1.msra.mxu0 0.0
        %2350 = vmatprep.subr.mxu0 0.0
        %2351 = vmatpush1.msra.mxu0 0.0
        %2352 = vmatprep.subr.mxu0 0.0
        %2353 = vmatpush1.msra.mxu0 0.0
        %2354 = vmatprep.subr.mxu0 0.0
        %2355 = vmatpush1.msra.mxu0 0.0
        %2356 = vmatprep.subr.mxu0 0.0
        %2357 = vmatpush1.msra.mxu0 0.0
        %2358 = vmatprep.subr.mxu0 0.0
        %2359 = vmatpush1.msra.mxu0 0.0
        %2360 = vmatprep.subr.mxu0 0.0
        %2361 = vmatpush1.msra.mxu0 0.0
        %2362 = vmatprep.subr.mxu0 0.0
        %2363 = vmatpush1.msra.mxu0 0.0
        %2364 = vmatprep.subr.mxu0 0.0
        %2365 = vmatpush1.msra.mxu0 0.0
        %2366 = vmatprep.subr.mxu0 0.0
        %2367 = vmatpush1.msra.mxu0 0.0
        %2368 = vmatprep.subr.mxu0 0.0
        %2369 = vmatpush1.msra.mxu0 0.0
        %2370 = vmatprep.subr.mxu0 0.0
        %2371 = vmatpush1.msra.mxu0 0.0
        %2372 = vmatprep.subr.mxu0 0.0
        %2373 = vmatpush1.msra.mxu0 %v2340
        %2374 = vmatprep.subr.mxu0 0.0
        %2375 = vmatpush2.msra.mxu0 0.0
        %2376 = vmatprep.subr.mxu0 0.0
        %2377 = vmatpush2.msra.mxu0 0.0
        %2378 = vmatprep.subr.mxu0 0.0
        %2379 = vmatpush2.msra.mxu0 0.0
        %2380 = vmatprep.subr.mxu0 0.0
        %2381 = vmatpush2.msra.mxu0 0.0
        %2382 = vmatprep.subr.mxu0 0.0
        %2383 = vmatpush2.msra.mxu0 0.0
        %2384 = vmatprep.subr.mxu0 0.0
        %2385 = vmatpush2.msra.mxu0 0.0
        %2386 = vmatprep.subr.mxu0 0.0
        %2387 = vmatpush2.msra.mxu0 0.0
        %2388 = vmatprep.subr.mxu0 0.0
        %2389 = vmatpush2.msra.mxu0 0.0
        %2390 = vmatprep.subr.mxu0 0.0
        %2391 = vmatpush2.msra.mxu0 0.0
        %2392 = vmatprep.subr.mxu0 0.0
        %2393 = vmatpush2.msra.mxu0 0.0
        %2394 = vmatprep.subr.mxu0 0.0
        %2395 = vmatpush2.msra.mxu0 0.0
        %2396 = vmatprep.subr.mxu0 0.0
        %2397 = vmatpush2.msra.mxu0 0.0
        %2398 = vmatprep.subr.mxu0 0.0
        %2399 = vmatpush2.msra.mxu0 0.0
        %2400 = vmatprep.subr.mxu0 0.0
        %2401 = vmatpush2.msra.mxu0 0.0
        %2402 = vmatprep.subr.mxu0 0.0
        %2403 = vmatpush2.msra.mxu0 0.0
        %2404 = vmatprep.subr.mxu0 0.0
        %2405 = vmatpush2.msra.mxu0 0.0
        %2406 = vmatprep.mubr.f32.mxu0 0.0
        %2407 = vmatmul.mubr.f32.gmra.mxu0 %v2337
        %v2408 = vpop.f32.mrf.mxu0
        %v2409 = vadd.f32 0.0, %v2408
        %v2410 = vpop.f32.mrf.mxu0
        %2411 = vdwg.mxu0
        %v2412 = vsel %vm2339, %v2332, 0
        %2414 = vmatprep.subr.mxu0 0.0
        %2415 = vmatpush1.msra.mxu0 0.0
        %2416 = vmatprep.subr.mxu0 0.0
        %2417 = vmatpush1.msra.mxu0 0.0
        %2418 = vmatprep.subr.mxu0 0.0
        %2419 = vmatpush1.msra.mxu0 0.0
        %2420 = vmatprep.subr.mxu0 0.0
        %2421 = vmatpush1.msra.mxu0 0.0
        %2422 = vmatprep.subr.mxu0 0.0
        %2423 = vmatpush1.msra.mxu0 0.0
        %2424 = vmatprep.subr.mxu0 0.0
        %2425 = vmatpush1.msra.mxu0 0.0
        %2426 = vmatprep.subr.mxu0 0.0
        %2427 = vmatpush1.msra.mxu0 0.0
        %2428 = vmatprep.subr.mxu0 0.0
        %2429 = vmatpush1.msra.mxu0 0.0
        %2430 = vmatprep.subr.mxu0 0.0
        %2431 = vmatpush1.msra.mxu0 0.0
        %2432 = vmatprep.subr.mxu0 0.0
        %2433 = vmatpush1.msra.mxu0 0.0
        %2434 = vmatprep.subr.mxu0 0.0
        %2435 = vmatpush1.msra.mxu0 0.0
        %2436 = vmatprep.subr.mxu0 0.0
        %2437 = vmatpush1.msra.mxu0 0.0
        %2438 = vmatprep.subr.mxu0 0.0
        %2439 = vmatpush1.msra.mxu0 0.0
        %2440 = vmatprep.subr.mxu0 0.0
        %2441 = vmatpush1.msra.mxu0 0.0
        %2442 = vmatprep.subr.mxu0 0.0
        %2443 = vmatpush1.msra.mxu0 0.0
        %2444 = vmatprep.subr.mxu0 0.0
        %2445 = vmatpush1.msra.mxu0 %v2412
        %2446 = vmatprep.subr.mxu0 0.0
        %2447 = vmatpush2.msra.mxu0 0.0
        %2448 = vmatprep.subr.mxu0 0.0
        %2449 = vmatpush2.msra.mxu0 0.0
        %2450 = vmatprep.subr.mxu0 0.0
        %2451 = vmatpush2.msra.mxu0 0.0
        %2452 = vmatprep.subr.mxu0 0.0
        %2453 = vmatpush2.msra.mxu0 0.0
        %2454 = vmatprep.subr.mxu0 0.0
        %2455 = vmatpush2.msra.mxu0 0.0
        %2456 = vmatprep.subr.mxu0 0.0
        %2457 = vmatpush2.msra.mxu0 0.0
        %2458 = vmatprep.subr.mxu0 0.0
        %2459 = vmatpush2.msra.mxu0 0.0
        %2460 = vmatprep.subr.mxu0 0.0
        %2461 = vmatpush2.msra.mxu0 0.0
        %2462 = vmatprep.subr.mxu0 0.0
        %2463 = vmatpush2.msra.mxu0 0.0
        %2464 = vmatprep.subr.mxu0 0.0
        %2465 = vmatpush2.msra.mxu0 0.0
        %2466 = vmatprep.subr.mxu0 0.0
        %2467 = vmatpush2.msra.mxu0 0.0
        %2468 = vmatprep.subr.mxu0 0.0
        %2469 = vmatpush2.msra.mxu0 0.0
        %2470 = vmatprep.subr.mxu0 0.0
        %2471 = vmatpush2.msra.mxu0 0.0
        %2472 = vmatprep.subr.mxu0 0.0
        %2473 = vmatpush2.msra.mxu0 0.0
        %2474 = vmatprep.subr.mxu0 0.0
        %2475 = vmatpush2.msra.mxu0 0.0
        %2476 = vmatprep.subr.mxu0 0.0
        %2477 = vmatpush2.msra.mxu0 0.0
        %2478 = vmatprep.mubr.f32.mxu0 0.0
        %2479 = vmatmul.mubr.f32.gmra.mxu0 %v2337
        %v2480 = vpop.f32.mrf.mxu0
        %v2481 = vadd.f32 0.0, %v2480
        %v2482 = vpop.f32.mrf.mxu0
        %2483 = vdwg.mxu0
        %v2484 = vsel %vm2339, %v2326, 0
        %2486 = vmatprep.subr.mxu0 0.0
        %2487 = vmatpush1.msra.mxu0 0.0
        %2488 = vmatprep.subr.mxu0 0.0
        %2489 = vmatpush1.msra.mxu0 0.0
        %2490 = vmatprep.subr.mxu0 0.0
        %2491 = vmatpush1.msra.mxu0 0.0
        %2492 = vmatprep.subr.mxu0 0.0
        %2493 = vmatpush1.msra.mxu0 0.0
        %2494 = vmatprep.subr.mxu0 0.0
        %2495 = vmatpush1.msra.mxu0 0.0
        %2496 = vmatprep.subr.mxu0 0.0
        %2497 = vmatpush1.msra.mxu0 0.0
        %2498 = vmatprep.subr.mxu0 0.0
        %2499 = vmatpush1.msra.mxu0 0.0
        %2500 = vmatprep.subr.mxu0 0.0
        %2501 = vmatpush1.msra.mxu0 0.0
        %2502 = vmatprep.subr.mxu0 0.0
        %2503 = vmatpush1.msra.mxu0 0.0
        %2504 = vmatprep.subr.mxu0 0.0
        %2505 = vmatpush1.msra.mxu0 0.0
        %2506 = vmatprep.subr.mxu0 0.0
        %2507 = vmatpush1.msra.mxu0 0.0
        %2508 = vmatprep.subr.mxu0 0.0
        %2509 = vmatpush1.msra.mxu0 0.0
        %2510 = vmatprep.subr.mxu0 0.0
        %2511 = vmatpush1.msra.mxu0 0.0
        %2512 = vmatprep.subr.mxu0 0.0
        %2513 = vmatpush1.msra.mxu0 0.0
        %2514 = vmatprep.subr.mxu0 0.0
        %2515 = vmatpush1.msra.mxu0 0.0
        %2516 = vmatprep.subr.mxu0 0.0
        %2517 = vmatpush1.msra.mxu0 %v2484
        %2518 = vmatprep.subr.mxu0 0.0
        %2519 = vmatpush2.msra.mxu0 0.0
        %2520 = vmatprep.subr.mxu0 0.0
        %2521 = vmatpush2.msra.mxu0 0.0
        %2522 = vmatprep.subr.mxu0 0.0
        %2523 = vmatpush2.msra.mxu0 0.0
        %2524 = vmatprep.subr.mxu0 0.0
        %2525 = vmatpush2.msra.mxu0 0.0
        %2526 = vmatprep.subr.mxu0 0.0
        %2527 = vmatpush2.msra.mxu0 0.0
        %2528 = vmatprep.subr.mxu0 0.0
        %2529 = vmatpush2.msra.mxu0 0.0
        %2530 = vmatprep.subr.mxu0 0.0
        %2531 = vmatpush2.msra.mxu0 0.0
        %2532 = vmatprep.subr.mxu0 0.0
        %2533 = vmatpush2.msra.mxu0 0.0
        %2534 = vmatprep.subr.mxu0 0.0
        %2535 = vmatpush2.msra.mxu0 0.0
        %2536 = vmatprep.subr.mxu0 0.0
        %2537 = vmatpush2.msra.mxu0 0.0
        %2538 = vmatprep.subr.mxu0 0.0
        %2539 = vmatpush2.msra.mxu0 0.0
        %2540 = vmatprep.subr.mxu0 0.0
        %2541 = vmatpush2.msra.mxu0 0.0
        %2542 = vmatprep.subr.mxu0 0.0
        %2543 = vmatpush2.msra.mxu0 0.0
        %2544 = vmatprep.subr.mxu0 0.0
        %2545 = vmatpush2.msra.mxu0 0.0
        %2546 = vmatprep.subr.mxu0 0.0
        %2547 = vmatpush2.msra.mxu0 0.0
        %2548 = vmatprep.subr.mxu0 0.0
        %2549 = vmatpush2.msra.mxu0 0.0
        %2550 = vmatprep.mubr.f32.mxu0 0.0
        %2551 = vmatmul.mubr.f32.gmra.mxu0 %v2337
        %v2552 = vpop.f32.mrf.mxu0
        %v2553 = vadd.f32 0.0, %v2552
        %v2554 = vpop.f32.mrf.mxu0
        %2555 = vdwg.mxu0
        %v2556 = vsel %vm2339, %v2333, 0
        %2558 = vmatprep.subr.mxu0 0.0
        %2559 = vmatpush1.msra.mxu0 0.0
        %2560 = vmatprep.subr.mxu0 0.0
        %2561 = vmatpush1.msra.mxu0 0.0
        %2562 = vmatprep.subr.mxu0 0.0
        %2563 = vmatpush1.msra.mxu0 0.0
        %2564 = vmatprep.subr.mxu0 0.0
        %2565 = vmatpush1.msra.mxu0 0.0
        %2566 = vmatprep.subr.mxu0 0.0
        %2567 = vmatpush1.msra.mxu0 0.0
        %2568 = vmatprep.subr.mxu0 0.0
        %2569 = vmatpush1.msra.mxu0 0.0
        %2570 = vmatprep.subr.mxu0 0.0
        %2571 = vmatpush1.msra.mxu0 0.0
        %2572 = vmatprep.subr.mxu0 0.0
        %2573 = vmatpush1.msra.mxu0 0.0
        %2574 = vmatprep.subr.mxu0 0.0
        %2575 = vmatpush1.msra.mxu0 0.0
        %2576 = vmatprep.subr.mxu0 0.0
        %2577 = vmatpush1.msra.mxu0 0.0
        %2578 = vmatprep.subr.mxu0 0.0
        %2579 = vmatpush1.msra.mxu0 0.0
        %2580 = vmatprep.subr.mxu0 0.0
        %2581 = vmatpush1.msra.mxu0 0.0
        %2582 = vmatprep.subr.mxu0 0.0
        %2583 = vmatpush1.msra.mxu0 0.0
        %2584 = vmatprep.subr.mxu0 0.0
        %2585 = vmatpush1.msra.mxu0 0.0
        %2586 = vmatprep.subr.mxu0 0.0
        %2587 = vmatpush1.msra.mxu0 0.0
        %2588 = vmatprep.subr.mxu0 0.0
        %2589 = vmatpush1.msra.mxu0 %v2556
        %2590 = vmatprep.subr.mxu0 0.0
        %2591 = vmatpush2.msra.mxu0 0.0
        %2592 = vmatprep.subr.mxu0 0.0
        %2593 = vmatpush2.msra.mxu0 0.0
        %2594 = vmatprep.subr.mxu0 0.0
        %2595 = vmatpush2.msra.mxu0 0.0
        %2596 = vmatprep.subr.mxu0 0.0
        %2597 = vmatpush2.msra.mxu0 0.0
        %2598 = vmatprep.subr.mxu0 0.0
        %2599 = vmatpush2.msra.mxu0 0.0
        %2600 = vmatprep.subr.mxu0 0.0
        %2601 = vmatpush2.msra.mxu0 0.0
        %2602 = vmatprep.subr.mxu0 0.0
        %2603 = vmatpush2.msra.mxu0 0.0
        %2604 = vmatprep.subr.mxu0 0.0
        %2605 = vmatpush2.msra.mxu0 0.0
        %2606 = vmatprep.subr.mxu0 0.0
        %2607 = vmatpush2.msra.mxu0 0.0
        %2608 = vmatprep.subr.mxu0 0.0
        %2609 = vmatpush2.msra.mxu0 0.0
        %2610 = vmatprep.subr.mxu0 0.0
        %2611 = vmatpush2.msra.mxu0 0.0
        %2612 = vmatprep.subr.mxu0 0.0
        %2613 = vmatpush2.msra.mxu0 0.0
        %2614 = vmatprep.subr.mxu0 0.0
        %2615 = vmatpush2.msra.mxu0 0.0
        %2616 = vmatprep.subr.mxu0 0.0
        %2617 = vmatpush2.msra.mxu0 0.0
        %2618 = vmatprep.subr.mxu0 0.0
        %2619 = vmatpush2.msra.mxu0 0.0
        %2620 = vmatprep.subr.mxu0 0.0
        %2621 = vmatpush2.msra.mxu0 0.0
        %2622 = vmatprep.mubr.f32.mxu0 0.0
        %2623 = vmatmul.mubr.f32.gmra.mxu0 %v2337
        %v2624 = vpop.f32.mrf.mxu0
        %v2625 = vadd.f32 0.0, %v2624
        %v2626 = vpop.f32.mrf.mxu0
        %2627 = vdwg.mxu0
        %v2628 = vld [vmem:[%s7] sm:$0xff]
        %v2629 = vcombine.low %v2409, %v2553
        %v2630 = vcombine.high %v2409, %v2553
        %v2632 = vunpack.c.l.s4 1983009808
        %v2633 = vunpack.c.0.s8 %v2632
        %v2634 = vlaneseq
        %v2635 = vshrl.u32 %v2634, 7
        %v2636 = vsub.s32 %v2633, %v2635
        %v2637 = vrot.slane %v2629, %v2636
        %v2639 = vunpack.c.l.s4 1983009808
        %v2640 = vunpack.c.0.s8 %v2639
        %v2641 = vlaneseq
        %v2642 = vshrl.u32 %v2641, 7
        %v2643 = vsub.s32 %v2640, %v2642
        %v2644 = vrot.slane %v2630, %v2643
        %v2645 = vcombine.low %v2481, %v2625
        %v2646 = vcombine.high %v2481, %v2625
        %v2648 = vunpack.c.l.s4 1983009808
        %v2649 = vunpack.c.0.s8 %v2648
        %v2650 = vlaneseq
        %v2651 = vshrl.u32 %v2650, 7
        %v2652 = vsub.s32 %v2649, %v2651
        %v2653 = vrot.slane %v2645, %v2652
        %v2655 = vunpack.c.l.s4 1983009808
        %v2656 = vunpack.c.0.s8 %v2655
        %v2657 = vlaneseq
        %v2658 = vshrl.u32 %v2657, 7
        %v2659 = vsub.s32 %v2656, %v2658
        %v2660 = vrot.slane %v2646, %v2659
        %v2661 = vcombine.low %v2637, %v2653
        %v2662 = vcombine.high %v2637, %v2653
        %v2664 = vunpack.c.l.s4 1934713408
        %v2665 = vunpack.c.0.s8 %v2664
        %v2666 = vlaneseq
        %v2667 = vshrl.u32 %v2666, 7
        %v2668 = vsub.s32 %v2665, %v2667
        %v2669 = vrot.slane %v2661, %v2668
        %v2671 = vunpack.c.l.s4 1934713408
        %v2672 = vunpack.c.0.s8 %v2671
        %v2673 = vlaneseq
        %v2674 = vshrl.u32 %v2673, 7
        %v2675 = vsub.s32 %v2672, %v2674
        %v2676 = vrot.slane %v2662, %v2675
        %v2677 = vcombine.low %v2644, %v2660
        %v2678 = vcombine.high %v2644, %v2660
        %v2680 = vunpack.c.l.s4 1934713408
        %v2681 = vunpack.c.0.s8 %v2680
        %v2682 = vlaneseq
        %v2683 = vshrl.u32 %v2682, 7
        %v2684 = vsub.s32 %v2681, %v2683
        %v2685 = vrot.slane %v2677, %v2684
        %v2687 = vunpack.c.l.s4 1934713408
        %v2688 = vunpack.c.0.s8 %v2687
        %v2689 = vlaneseq
        %v2690 = vshrl.u32 %v2689, 7
        %v2691 = vsub.s32 %v2688, %v2690
        %v2692 = vrot.slane %v2678, %v2691
        %v2693 = vcombine.high %v2669, 0.0
        %v2694 = vcombine.high %v2676, 0.0
        %v2695 = vcombine.high %v2685, 0.0
        %v2696 = vcombine.high %v2692, 0.0
        %2698 = vrot.lane.b32.xlu0 %v2693, 4
        %v2699 = vpop.permute.xlu0 %2698
        %2702 = vrot.lane.b32.xlu0 %v2676, 8
        %v2703 = vpop.permute.xlu0 %2702
        %2706 = vrot.lane.b32.xlu0 %v2694, 12
        %v2707 = vpop.permute.xlu0 %2706
        %2710 = vrot.lane.b32.xlu0 %v2685, 16
        %v2711 = vpop.permute.xlu0 %2710
        %2714 = vrot.lane.b32.xlu0 %v2695, 20
        %v2715 = vpop.permute.xlu0 %2714
        %2718 = vrot.lane.b32.xlu0 %v2692, 24
        %v2719 = vpop.permute.xlu0 %2718
        %2722 = vrot.lane.b32.xlu0 %v2696, 28
        %v2723 = vpop.permute.xlu0 %2722
        %v2725 = vsel %vm2335, %v2669, %v2699
        %v2726 = vsel %vm2207, %v2725, %v2703
        %vm2727 = vcmask 97280
        %v2728 = vsel %vm2727, %v2726, %v2707
        %v2729 = vsel %vm2210, %v2728, %v2711
        %vm2730 = vcmask 162816
        %v2731 = vsel %vm2730, %v2729, %v2715
        %v2732 = vsel %vm2213, %v2731, %v2719
        %vm2733 = vcmask 228352
        %v2734 = vsel %vm2733, %v2732, %v2723
        %v2736 = vsel %vm2335, %v2628, 0
        %v2739 = vsel %vm2339, %v2734, 0
        %2741 = vmatprep.subr.mxu0 0.0
        %2742 = vmatpush1.msra.mxu0 0.0
        %2743 = vmatprep.subr.mxu0 0.0
        %2744 = vmatpush1.msra.mxu0 0.0
        %2745 = vmatprep.subr.mxu0 0.0
        %2746 = vmatpush1.msra.mxu0 0.0
        %2747 = vmatprep.subr.mxu0 0.0
        %2748 = vmatpush1.msra.mxu0 0.0
        %2749 = vmatprep.subr.mxu0 0.0
        %2750 = vmatpush1.msra.mxu0 0.0
        %2751 = vmatprep.subr.mxu0 0.0
        %2752 = vmatpush1.msra.mxu0 0.0
        %2753 = vmatprep.subr.mxu0 0.0
        %2754 = vmatpush1.msra.mxu0 0.0
        %2755 = vmatprep.subr.mxu0 0.0
        %2756 = vmatpush1.msra.mxu0 0.0
        %2757 = vmatprep.subr.mxu0 0.0
        %2758 = vmatpush1.msra.mxu0 0.0
        %2759 = vmatprep.subr.mxu0 0.0
        %2760 = vmatpush1.msra.mxu0 0.0
        %2761 = vmatprep.subr.mxu0 0.0
        %2762 = vmatpush1.msra.mxu0 0.0
        %2763 = vmatprep.subr.mxu0 0.0
        %2764 = vmatpush1.msra.mxu0 0.0
        %2765 = vmatprep.subr.mxu0 0.0
        %2766 = vmatpush1.msra.mxu0 0.0
        %2767 = vmatprep.subr.mxu0 0.0
        %2768 = vmatpush1.msra.mxu0 0.0
        %2769 = vmatprep.subr.mxu0 0.0
        %2770 = vmatpush1.msra.mxu0 0.0
        %2771 = vmatprep.subr.mxu0 0.0
        %2772 = vmatpush1.msra.mxu0 %v2739
        %2773 = vmatprep.subr.mxu0 0.0
        %2774 = vmatpush2.msra.mxu0 0.0
        %2775 = vmatprep.subr.mxu0 0.0
        %2776 = vmatpush2.msra.mxu0 0.0
        %2777 = vmatprep.subr.mxu0 0.0
        %2778 = vmatpush2.msra.mxu0 0.0
        %2779 = vmatprep.subr.mxu0 0.0
        %2780 = vmatpush2.msra.mxu0 0.0
        %2781 = vmatprep.subr.mxu0 0.0
        %2782 = vmatpush2.msra.mxu0 0.0
        %2783 = vmatprep.subr.mxu0 0.0
        %2784 = vmatpush2.msra.mxu0 0.0
        %2785 = vmatprep.subr.mxu0 0.0
        %2786 = vmatpush2.msra.mxu0 0.0
        %2787 = vmatprep.subr.mxu0 0.0
        %2788 = vmatpush2.msra.mxu0 0.0
        %2789 = vmatprep.subr.mxu0 0.0
        %2790 = vmatpush2.msra.mxu0 0.0
        %2791 = vmatprep.subr.mxu0 0.0
        %2792 = vmatpush2.msra.mxu0 0.0
        %2793 = vmatprep.subr.mxu0 0.0
        %2794 = vmatpush2.msra.mxu0 0.0
        %2795 = vmatprep.subr.mxu0 0.0
        %2796 = vmatpush2.msra.mxu0 0.0
        %2797 = vmatprep.subr.mxu0 0.0
        %2798 = vmatpush2.msra.mxu0 0.0
        %2799 = vmatprep.subr.mxu0 0.0
        %2800 = vmatpush2.msra.mxu0 0.0
        %2801 = vmatprep.subr.mxu0 0.0
        %2802 = vmatpush2.msra.mxu0 0.0
        %2803 = vmatprep.subr.mxu0 0.0
        %2804 = vmatpush2.msra.mxu0 0.0
        %2805 = vmatprep.mubr.f32.mxu0 0.0
        %2806 = vmatmul.mubr.f32.gmra.mxu0 %v2736
        %v2807 = vpop.f32.mrf.mxu0
        %v2808 = vadd.f32 0.0, %v2807
        %v2809 = vpop.f32.mrf.mxu0
        %2810 = vdwg.mxu0
        %v2811 = vadd.f32 %v2329, %v2808
        %2812 = vst.msk [vmem:[%s436] sm:$0xff] %vm2216, %v2811
        %2814 = vrot.lane.b32.xlu0 %v2811, 124
        %v2815 = vpop.permute.xlu0 %2814
        %2817 = vrot.lane.b32.xlu0 %v2811, 120
        %v2818 = vpop.permute.xlu0 %2817
        %2820 = vrot.lane.b32.xlu0 %v2811, 116
        %v2821 = vpop.permute.xlu0 %2820
        %2823 = vrot.lane.b32.xlu0 %v2811, 112
        %v2824 = vpop.permute.xlu0 %2823
        %2826 = vrot.lane.b32.xlu0 %v2811, 108
        %v2827 = vpop.permute.xlu0 %2826
        %2829 = vrot.lane.b32.xlu0 %v2811, 104
        %v2830 = vpop.permute.xlu0 %2829
        %2832 = vrot.lane.b32.xlu0 %v2811, 100
        %v2833 = vpop.permute.xlu0 %2832
        %v2835 = vcombine.low %v2811, %v2818
        %v2836 = vcombine.high %v2811, %v2818
        %v2838 = vunpack.c.l.s4 1983009808
        %v2839 = vunpack.c.0.s8 %v2838
        %v2840 = vlaneseq
        %v2841 = vshrl.u32 %v2840, 7
        %v2842 = vsub.s32 %v2839, %v2841
        %v2843 = vrot.slane %v2835, %v2842
        %v2845 = vunpack.c.l.s4 1983009808
        %v2846 = vunpack.c.0.s8 %v2845
        %v2847 = vlaneseq
        %v2848 = vshrl.u32 %v2847, 7
        %v2849 = vsub.s32 %v2846, %v2848
        %v2850 = vrot.slane %v2836, %v2849
        %v2851 = vcombine.low %v2815, %v2821
        %v2852 = vcombine.high %v2815, %v2821
        %v2854 = vunpack.c.l.s4 1983009808
        %v2855 = vunpack.c.0.s8 %v2854
        %v2856 = vlaneseq
        %v2857 = vshrl.u32 %v2856, 7
        %v2858 = vsub.s32 %v2855, %v2857
        %v2859 = vrot.slane %v2851, %v2858
        %v2861 = vunpack.c.l.s4 1983009808
        %v2862 = vunpack.c.0.s8 %v2861
        %v2863 = vlaneseq
        %v2864 = vshrl.u32 %v2863, 7
        %v2865 = vsub.s32 %v2862, %v2864
        %v2866 = vrot.slane %v2852, %v2865
        %v2867 = vcombine.low %v2824, %v2830
        %v2868 = vcombine.high %v2824, %v2830
        %v2870 = vunpack.c.l.s4 1983009808
        %v2871 = vunpack.c.0.s8 %v2870
        %v2872 = vlaneseq
        %v2873 = vshrl.u32 %v2872, 7
        %v2874 = vsub.s32 %v2871, %v2873
        %v2875 = vrot.slane %v2867, %v2874
        %v2877 = vunpack.c.l.s4 1983009808
        %v2878 = vunpack.c.0.s8 %v2877
        %v2879 = vlaneseq
        %v2880 = vshrl.u32 %v2879, 7
        %v2881 = vsub.s32 %v2878, %v2880
        %v2882 = vrot.slane %v2868, %v2881
        %v2883 = vcombine.low %v2827, %v2833
        %v2884 = vcombine.high %v2827, %v2833
        %v2886 = vunpack.c.l.s4 1983009808
        %v2887 = vunpack.c.0.s8 %v2886
        %v2888 = vlaneseq
        %v2889 = vshrl.u32 %v2888, 7
        %v2890 = vsub.s32 %v2887, %v2889
        %v2891 = vrot.slane %v2883, %v2890
        %v2893 = vunpack.c.l.s4 1983009808
        %v2894 = vunpack.c.0.s8 %v2893
        %v2895 = vlaneseq
        %v2896 = vshrl.u32 %v2895, 7
        %v2897 = vsub.s32 %v2894, %v2896
        %v2898 = vrot.slane %v2884, %v2897
        %v2899 = vcombine.low %v2843, %v2859
        %v2900 = vcombine.high %v2843, %v2859
        %v2902 = vunpack.c.l.s4 1934713408
        %v2903 = vunpack.c.0.s8 %v2902
        %v2904 = vlaneseq
        %v2905 = vshrl.u32 %v2904, 7
        %v2906 = vsub.s32 %v2903, %v2905
        %v2907 = vrot.slane %v2899, %v2906
        %v2909 = vunpack.c.l.s4 1934713408
        %v2910 = vunpack.c.0.s8 %v2909
        %v2911 = vlaneseq
        %v2912 = vshrl.u32 %v2911, 7
        %v2913 = vsub.s32 %v2910, %v2912
        %v2914 = vrot.slane %v2900, %v2913
        %v2915 = vcombine.low %v2850, %v2866
        %v2916 = vcombine.high %v2850, %v2866
        %v2918 = vunpack.c.l.s4 1934713408
        %v2919 = vunpack.c.0.s8 %v2918
        %v2920 = vlaneseq
        %v2921 = vshrl.u32 %v2920, 7
        %v2922 = vsub.s32 %v2919, %v2921
        %v2923 = vrot.slane %v2915, %v2922
        %v2925 = vunpack.c.l.s4 1934713408
        %v2926 = vunpack.c.0.s8 %v2925
        %v2927 = vlaneseq
        %v2928 = vshrl.u32 %v2927, 7
        %v2929 = vsub.s32 %v2926, %v2928
        %v2930 = vrot.slane %v2916, %v2929
        %v2931 = vcombine.low %v2875, %v2891
        %v2932 = vcombine.high %v2875, %v2891
        %v2934 = vunpack.c.l.s4 1934713408
        %v2935 = vunpack.c.0.s8 %v2934
        %v2936 = vlaneseq
        %v2937 = vshrl.u32 %v2936, 7
        %v2938 = vsub.s32 %v2935, %v2937
        %v2939 = vrot.slane %v2931, %v2938
        %v2941 = vunpack.c.l.s4 1934713408
        %v2942 = vunpack.c.0.s8 %v2941
        %v2943 = vlaneseq
        %v2944 = vshrl.u32 %v2943, 7
        %v2945 = vsub.s32 %v2942, %v2944
        %v2946 = vrot.slane %v2932, %v2945
        %v2947 = vcombine.low %v2882, %v2898
        %v2948 = vcombine.high %v2882, %v2898
        %v2950 = vunpack.c.l.s4 1934713408
        %v2951 = vunpack.c.0.s8 %v2950
        %v2952 = vlaneseq
        %v2953 = vshrl.u32 %v2952, 7
        %v2954 = vsub.s32 %v2951, %v2953
        %v2955 = vrot.slane %v2947, %v2954
        %v2957 = vunpack.c.l.s4 1934713408
        %v2958 = vunpack.c.0.s8 %v2957
        %v2959 = vlaneseq
        %v2960 = vshrl.u32 %v2959, 7
        %v2961 = vsub.s32 %v2958, %v2960
        %v2962 = vrot.slane %v2948, %v2961
        %v2963 = vcombine.low %v2907, %v2939
        %v2964 = vcombine.high %v2907, %v2939
        %v2965 = vcombine.low %v2914, %v2946
        %v2966 = vcombine.high %v2914, %v2946
        %v2967 = vcombine.low %v2923, %v2955
        %v2968 = vcombine.high %v2923, %v2955
        %v2969 = vcombine.low %v2930, %v2962
        %v2970 = vcombine.high %v2930, %v2962
        %2971 = vst.msk [vmem:[#allocation4] sm:$0xff] %vm2335, 0.0
        %vm2972 = vcmask 25600
        %2973 = vst.msk [vmem:[#allocation4 + $0x8] sm:$0x3] %vm2972, 0.0
        %2974 = vst.msk [vmem:[#allocation4 + $0x10] sm:$0xff] %vm2335, 0.0
        %2975 = vst.msk [vmem:[#allocation4 + $0x18] sm:$0x3] %vm2972, 0.0
        %2976 = vst.msk [vmem:[#allocation4 + $0x20] sm:$0xff] %vm2335, 0.0
        %2977 = vst.msk [vmem:[#allocation4 + $0x28] sm:$0x3] %vm2972, 0.0
        %2978 = vst.msk [vmem:[#allocation4 + $0x30] sm:$0xff] %vm2335, 0.0
        %2979 = vst.msk [vmem:[#allocation4 + $0x38] sm:$0x3] %vm2972, 0.0
        %2980 = vst.msk [vmem:[#allocation4 + $0x40] sm:$0xff] %vm2335, 0.0
        %2981 = vst.msk [vmem:[#allocation4 + $0x48] sm:$0x3] %vm2972, 0.0
        %2982 = vst.msk [vmem:[#allocation4 + $0x50] sm:$0xff] %vm2335, 0.0
        %2983 = vst.msk [vmem:[#allocation4 + $0x58] sm:$0x3] %vm2972, 0.0
        %2984 = vst.msk [vmem:[#allocation4 + $0x60] sm:$0xff] %vm2335, 0.0
        %2985 = vst.msk [vmem:[#allocation4 + $0x68] sm:$0x3] %vm2972, 0.0
        %2986 = vst.msk [vmem:[#allocation4 + $0x70] sm:$0xff] %vm2335, 0.0
        %2987 = vst.msk [vmem:[#allocation4 + $0x78] sm:$0x3] %vm2972, 0.0
        %2988 = vst.msk [vmem:[#allocation4 + $0x80] sm:$0xff] %vm2335, 0.0
        %2989 = vst.msk [vmem:[#allocation4 + $0x88] sm:$0x3] %vm2972, 0.0
        %2990 = vst.msk [vmem:[#allocation4 + $0x90] sm:$0xff] %vm2335, 0.0
        %2991 = vst.msk [vmem:[#allocation4 + $0x98] sm:$0x3] %vm2972, 0.0
        %s2992 = scalar_lea.vmem [#allocation4], 16
        %2993 = vst.msk [vmem:[%s2992 + $0x1] sm:$0xff] %vm2335, %v2963
        %2994 = vst.msk [vmem:[%s2992 + $0x11] sm:$0xff] %vm2335, %v2964
        %2995 = vst.msk [vmem:[%s2992 + $0x21] sm:$0xff] %vm2335, %v2965
        %2996 = vst.msk [vmem:[%s2992 + $0x31] sm:$0xff] %vm2335, %v2966
        %2997 = vst.msk [vmem:[%s2992 + $0x41] sm:$0xff] %vm2335, %v2967
        %2998 = vst.msk [vmem:[%s2992 + $0x51] sm:$0xff] %vm2335, %v2968
        %2999 = vst.msk [vmem:[%s2992 + $0x61] sm:$0xff] %vm2335, %v2969
        %3000 = vst.msk [vmem:[%s2992 + $0x71] sm:$0xff] %vm2335, %v2970
        %v3001 = vld [vmem:[#allocation4] sm:$0xff]
        %v3002 = vld [vmem:[#allocation4 + $0x10] sm:$0xff]
        %v3003 = vld [vmem:[#allocation4 + $0x20] sm:$0xff]
        %v3004 = vld [vmem:[#allocation4 + $0x30] sm:$0xff]
        %v3005 = vld [vmem:[#allocation4 + $0x40] sm:$0xff]
        %v3006 = vld [vmem:[#allocation4 + $0x50] sm:$0xff]
        %v3007 = vld [vmem:[#allocation4 + $0x60] sm:$0xff]
        %v3008 = vld [vmem:[#allocation4 + $0x70] sm:$0xff]
        %v3017 = vcombine.high %v3001, %v3001
        %v3019 = vunpack.c.l.s4 1966171168
        %v3020 = vunpack.c.0.s8 %v3019
        %v3021 = vlaneseq
        %v3022 = vshrl.u32 %v3021, 7
        %v3023 = vsub.s32 %v3020, %v3022
        %v3024 = vrot.slane %v3001, %v3023
        %v3026 = vunpack.c.l.s4 1966171168
        %v3027 = vunpack.c.0.s8 %v3026
        %v3028 = vlaneseq
        %v3029 = vshrl.u32 %v3028, 7
        %v3030 = vsub.s32 %v3027, %v3029
        %v3031 = vrot.slane %v3017, %v3030
        %v3032 = vcombine.high %v3024, %v3024
        %v3033 = vcombine.high %v3031, %v3031
        %v3035 = vunpack.c.l.s4 1966171168
        %v3036 = vunpack.c.0.s8 %v3035
        %v3037 = vlaneseq
        %v3038 = vshrl.u32 %v3037, 7
        %v3039 = vsub.s32 %v3036, %v3038
        %v3040 = vrot.slane %v3024, %v3039
        %v3042 = vunpack.c.l.s4 1966171168
        %v3043 = vunpack.c.0.s8 %v3042
        %v3044 = vlaneseq
        %v3045 = vshrl.u32 %v3044, 7
        %v3046 = vsub.s32 %v3043, %v3045
        %v3047 = vrot.slane %v3031, %v3046
        %v3049 = vunpack.c.l.s4 1966171168
        %v3050 = vunpack.c.0.s8 %v3049
        %v3051 = vlaneseq
        %v3052 = vshrl.u32 %v3051, 7
        %v3053 = vsub.s32 %v3050, %v3052
        %v3054 = vrot.slane %v3032, %v3053
        %v3056 = vunpack.c.l.s4 1966171168
        %v3057 = vunpack.c.0.s8 %v3056
        %v3058 = vlaneseq
        %v3059 = vshrl.u32 %v3058, 7
        %v3060 = vsub.s32 %v3057, %v3059
        %v3061 = vrot.slane %v3033, %v3060
        %v3062 = vcombine.high %v3040, %v3040
        %v3063 = vcombine.high %v3047, %v3047
        %v3064 = vcombine.high %v3054, %v3054
        %v3065 = vcombine.high %v3061, %v3061
        %v3066 = vcombine.high %v3002, %v3002
        %v3068 = vunpack.c.l.s4 1966171168
        %v3069 = vunpack.c.0.s8 %v3068
        %v3070 = vlaneseq
        %v3071 = vshrl.u32 %v3070, 7
        %v3072 = vsub.s32 %v3069, %v3071
        %v3073 = vrot.slane %v3002, %v3072
        %v3075 = vunpack.c.l.s4 1966171168
        %v3076 = vunpack.c.0.s8 %v3075
        %v3077 = vlaneseq
        %v3078 = vshrl.u32 %v3077, 7
        %v3079 = vsub.s32 %v3076, %v3078
        %v3080 = vrot.slane %v3066, %v3079
        %v3081 = vcombine.high %v3073, %v3073
        %v3082 = vcombine.high %v3080, %v3080
        %v3084 = vunpack.c.l.s4 1966171168
        %v3085 = vunpack.c.0.s8 %v3084
        %v3086 = vlaneseq
        %v3087 = vshrl.u32 %v3086, 7
        %v3088 = vsub.s32 %v3085, %v3087
        %v3089 = vrot.slane %v3073, %v3088
        %v3091 = vunpack.c.l.s4 1966171168
        %v3092 = vunpack.c.0.s8 %v3091
        %v3093 = vlaneseq
        %v3094 = vshrl.u32 %v3093, 7
        %v3095 = vsub.s32 %v3092, %v3094
        %v3096 = vrot.slane %v3080, %v3095
        %v3098 = vunpack.c.l.s4 1966171168
        %v3099 = vunpack.c.0.s8 %v3098
        %v3100 = vlaneseq
        %v3101 = vshrl.u32 %v3100, 7
        %v3102 = vsub.s32 %v3099, %v3101
        %v3103 = vrot.slane %v3081, %v3102
        %v3105 = vunpack.c.l.s4 1966171168
        %v3106 = vunpack.c.0.s8 %v3105
        %v3107 = vlaneseq
        %v3108 = vshrl.u32 %v3107, 7
        %v3109 = vsub.s32 %v3106, %v3108
        %v3110 = vrot.slane %v3082, %v3109
        %v3111 = vcombine.high %v3089, %v3089
        %v3112 = vcombine.high %v3096, %v3096
        %v3113 = vcombine.high %v3103, %v3103
        %v3114 = vcombine.high %v3110, %v3110
        %v3115 = vcombine.high %v3003, %v3003
        %v3117 = vunpack.c.l.s4 1966171168
        %v3118 = vunpack.c.0.s8 %v3117
        %v3119 = vlaneseq
        %v3120 = vshrl.u32 %v3119, 7
        %v3121 = vsub.s32 %v3118, %v3120
        %v3122 = vrot.slane %v3003, %v3121
        %v3124 = vunpack.c.l.s4 1966171168
        %v3125 = vunpack.c.0.s8 %v3124
        %v3126 = vlaneseq
        %v3127 = vshrl.u32 %v3126, 7
        %v3128 = vsub.s32 %v3125, %v3127
        %v3129 = vrot.slane %v3115, %v3128
        %v3130 = vcombine.high %v3122, %v3122
        %v3131 = vcombine.high %v3129, %v3129
        %v3133 = vunpack.c.l.s4 1966171168
        %v3134 = vunpack.c.0.s8 %v3133
        %v3135 = vlaneseq
        %v3136 = vshrl.u32 %v3135, 7
        %v3137 = vsub.s32 %v3134, %v3136
        %v3138 = vrot.slane %v3122, %v3137
        %v3140 = vunpack.c.l.s4 1966171168
        %v3141 = vunpack.c.0.s8 %v3140
        %v3142 = vlaneseq
        %v3143 = vshrl.u32 %v3142, 7
        %v3144 = vsub.s32 %v3141, %v3143
        %v3145 = vrot.slane %v3129, %v3144
        %v3147 = vunpack.c.l.s4 1966171168
        %v3148 = vunpack.c.0.s8 %v3147
        %v3149 = vlaneseq
        %v3150 = vshrl.u32 %v3149, 7
        %v3151 = vsub.s32 %v3148, %v3150
        %v3152 = vrot.slane %v3130, %v3151
        %v3154 = vunpack.c.l.s4 1966171168
        %v3155 = vunpack.c.0.s8 %v3154
        %v3156 = vlaneseq
        %v3157 = vshrl.u32 %v3156, 7
        %v3158 = vsub.s32 %v3155, %v3157
        %v3159 = vrot.slane %v3131, %v3158
        %v3160 = vcombine.high %v3138, %v3138
        %v3161 = vcombine.high %v3145, %v3145
        %v3162 = vcombine.high %v3152, %v3152
        %v3163 = vcombine.high %v3159, %v3159
        %v3164 = vcombine.high %v3004, %v3004
        %v3166 = vunpack.c.l.s4 1966171168
        %v3167 = vunpack.c.0.s8 %v3166
        %v3168 = vlaneseq
        %v3169 = vshrl.u32 %v3168, 7
        %v3170 = vsub.s32 %v3167, %v3169
        %v3171 = vrot.slane %v3004, %v3170
        %v3173 = vunpack.c.l.s4 1966171168
        %v3174 = vunpack.c.0.s8 %v3173
        %v3175 = vlaneseq
        %v3176 = vshrl.u32 %v3175, 7
        %v3177 = vsub.s32 %v3174, %v3176
        %v3178 = vrot.slane %v3164, %v3177
        %v3179 = vcombine.high %v3171, %v3171
        %v3180 = vcombine.high %v3178, %v3178
        %v3182 = vunpack.c.l.s4 1966171168
        %v3183 = vunpack.c.0.s8 %v3182
        %v3184 = vlaneseq
        %v3185 = vshrl.u32 %v3184, 7
        %v3186 = vsub.s32 %v3183, %v3185
        %v3187 = vrot.slane %v3171, %v3186
        %v3189 = vunpack.c.l.s4 1966171168
        %v3190 = vunpack.c.0.s8 %v3189
        %v3191 = vlaneseq
        %v3192 = vshrl.u32 %v3191, 7
        %v3193 = vsub.s32 %v3190, %v3192
        %v3194 = vrot.slane %v3178, %v3193
        %v3196 = vunpack.c.l.s4 1966171168
        %v3197 = vunpack.c.0.s8 %v3196
        %v3198 = vlaneseq
        %v3199 = vshrl.u32 %v3198, 7
        %v3200 = vsub.s32 %v3197, %v3199
        %v3201 = vrot.slane %v3179, %v3200
        %v3203 = vunpack.c.l.s4 1966171168
        %v3204 = vunpack.c.0.s8 %v3203
        %v3205 = vlaneseq
        %v3206 = vshrl.u32 %v3205, 7
        %v3207 = vsub.s32 %v3204, %v3206
        %v3208 = vrot.slane %v3180, %v3207
        %v3209 = vcombine.high %v3187, %v3187
        %v3210 = vcombine.high %v3194, %v3194
        %v3211 = vcombine.high %v3201, %v3201
        %v3212 = vcombine.high %v3208, %v3208
        %v3213 = vcombine.high %v3005, %v3005
        %v3215 = vunpack.c.l.s4 1966171168
        %v3216 = vunpack.c.0.s8 %v3215
        %v3217 = vlaneseq
        %v3218 = vshrl.u32 %v3217, 7
        %v3219 = vsub.s32 %v3216, %v3218
        %v3220 = vrot.slane %v3005, %v3219
        %v3222 = vunpack.c.l.s4 1966171168
        %v3223 = vunpack.c.0.s8 %v3222
        %v3224 = vlaneseq
        %v3225 = vshrl.u32 %v3224, 7
        %v3226 = vsub.s32 %v3223, %v3225
        %v3227 = vrot.slane %v3213, %v3226
        %v3228 = vcombine.high %v3220, %v3220
        %v3229 = vcombine.high %v3227, %v3227
        %v3231 = vunpack.c.l.s4 1966171168
        %v3232 = vunpack.c.0.s8 %v3231
        %v3233 = vlaneseq
        %v3234 = vshrl.u32 %v3233, 7
        %v3235 = vsub.s32 %v3232, %v3234
        %v3236 = vrot.slane %v3220, %v3235
        %v3238 = vunpack.c.l.s4 1966171168
        %v3239 = vunpack.c.0.s8 %v3238
        %v3240 = vlaneseq
        %v3241 = vshrl.u32 %v3240, 7
        %v3242 = vsub.s32 %v3239, %v3241
        %v3243 = vrot.slane %v3227, %v3242
        %v3245 = vunpack.c.l.s4 1966171168
        %v3246 = vunpack.c.0.s8 %v3245
        %v3247 = vlaneseq
        %v3248 = vshrl.u32 %v3247, 7
        %v3249 = vsub.s32 %v3246, %v3248
        %v3250 = vrot.slane %v3228, %v3249
        %v3252 = vunpack.c.l.s4 1966171168
        %v3253 = vunpack.c.0.s8 %v3252
        %v3254 = vlaneseq
        %v3255 = vshrl.u32 %v3254, 7
        %v3256 = vsub.s32 %v3253, %v3255
        %v3257 = vrot.slane %v3229, %v3256
        %v3258 = vcombine.high %v3236, %v3236
        %v3259 = vcombine.high %v3243, %v3243
        %v3260 = vcombine.high %v3250, %v3250
        %v3261 = vcombine.high %v3257, %v3257
        %v3262 = vcombine.high %v3006, %v3006
        %v3264 = vunpack.c.l.s4 1966171168
        %v3265 = vunpack.c.0.s8 %v3264
        %v3266 = vlaneseq
        %v3267 = vshrl.u32 %v3266, 7
        %v3268 = vsub.s32 %v3265, %v3267
        %v3269 = vrot.slane %v3006, %v3268
        %v3271 = vunpack.c.l.s4 1966171168
        %v3272 = vunpack.c.0.s8 %v3271
        %v3273 = vlaneseq
        %v3274 = vshrl.u32 %v3273, 7
        %v3275 = vsub.s32 %v3272, %v3274
        %v3276 = vrot.slane %v3262, %v3275
        %v3277 = vcombine.high %v3269, %v3269
        %v3278 = vcombine.high %v3276, %v3276
        %v3280 = vunpack.c.l.s4 1966171168
        %v3281 = vunpack.c.0.s8 %v3280
        %v3282 = vlaneseq
        %v3283 = vshrl.u32 %v3282, 7
        %v3284 = vsub.s32 %v3281, %v3283
        %v3285 = vrot.slane %v3269, %v3284
        %v3287 = vunpack.c.l.s4 1966171168
        %v3288 = vunpack.c.0.s8 %v3287
        %v3289 = vlaneseq
        %v3290 = vshrl.u32 %v3289, 7
        %v3291 = vsub.s32 %v3288, %v3290
        %v3292 = vrot.slane %v3276, %v3291
        %v3294 = vunpack.c.l.s4 1966171168
        %v3295 = vunpack.c.0.s8 %v3294
        %v3296 = vlaneseq
        %v3297 = vshrl.u32 %v3296, 7
        %v3298 = vsub.s32 %v3295, %v3297
        %v3299 = vrot.slane %v3277, %v3298
        %v3301 = vunpack.c.l.s4 1966171168
        %v3302 = vunpack.c.0.s8 %v3301
        %v3303 = vlaneseq
        %v3304 = vshrl.u32 %v3303, 7
        %v3305 = vsub.s32 %v3302, %v3304
        %v3306 = vrot.slane %v3278, %v3305
        %v3307 = vcombine.high %v3285, %v3285
        %v3308 = vcombine.high %v3292, %v3292
        %v3309 = vcombine.high %v3299, %v3299
        %v3310 = vcombine.high %v3306, %v3306
        %v3311 = vcombine.high %v3007, %v3007
        %v3313 = vunpack.c.l.s4 1966171168
        %v3314 = vunpack.c.0.s8 %v3313
        %v3315 = vlaneseq
        %v3316 = vshrl.u32 %v3315, 7
        %v3317 = vsub.s32 %v3314, %v3316
        %v3318 = vrot.slane %v3007, %v3317
        %v3320 = vunpack.c.l.s4 1966171168
        %v3321 = vunpack.c.0.s8 %v3320
        %v3322 = vlaneseq
        %v3323 = vshrl.u32 %v3322, 7
        %v3324 = vsub.s32 %v3321, %v3323
        %v3325 = vrot.slane %v3311, %v3324
        %v3326 = vcombine.high %v3318, %v3318
        %v3327 = vcombine.high %v3325, %v3325
        %v3329 = vunpack.c.l.s4 1966171168
        %v3330 = vunpack.c.0.s8 %v3329
        %v3331 = vlaneseq
        %v3332 = vshrl.u32 %v3331, 7
        %v3333 = vsub.s32 %v3330, %v3332
        %v3334 = vrot.slane %v3318, %v3333
        %v3336 = vunpack.c.l.s4 1966171168
        %v3337 = vunpack.c.0.s8 %v3336
        %v3338 = vlaneseq
        %v3339 = vshrl.u32 %v3338, 7
        %v3340 = vsub.s32 %v3337, %v3339
        %v3341 = vrot.slane %v3325, %v3340
        %v3343 = vunpack.c.l.s4 1966171168
        %v3344 = vunpack.c.0.s8 %v3343
        %v3345 = vlaneseq
        %v3346 = vshrl.u32 %v3345, 7
        %v3347 = vsub.s32 %v3344, %v3346
        %v3348 = vrot.slane %v3326, %v3347
        %v3350 = vunpack.c.l.s4 1966171168
        %v3351 = vunpack.c.0.s8 %v3350
        %v3352 = vlaneseq
        %v3353 = vshrl.u32 %v3352, 7
        %v3354 = vsub.s32 %v3351, %v3353
        %v3355 = vrot.slane %v3327, %v3354
        %v3356 = vcombine.high %v3334, %v3334
        %v3357 = vcombine.high %v3341, %v3341
        %v3358 = vcombine.high %v3348, %v3348
        %v3359 = vcombine.high %v3355, %v3355
        %v3360 = vcombine.high %v3008, %v3008
        %v3362 = vunpack.c.l.s4 1966171168
        %v3363 = vunpack.c.0.s8 %v3362
        %v3364 = vlaneseq
        %v3365 = vshrl.u32 %v3364, 7
        %v3366 = vsub.s32 %v3363, %v3365
        %v3367 = vrot.slane %v3008, %v3366
        %v3369 = vunpack.c.l.s4 1966171168
        %v3370 = vunpack.c.0.s8 %v3369
        %v3371 = vlaneseq
        %v3372 = vshrl.u32 %v3371, 7
        %v3373 = vsub.s32 %v3370, %v3372
        %v3374 = vrot.slane %v3360, %v3373
        %v3375 = vcombine.high %v3367, %v3367
        %v3376 = vcombine.high %v3374, %v3374
        %v3378 = vunpack.c.l.s4 1966171168
        %v3379 = vunpack.c.0.s8 %v3378
        %v3380 = vlaneseq
        %v3381 = vshrl.u32 %v3380, 7
        %v3382 = vsub.s32 %v3379, %v3381
        %v3383 = vrot.slane %v3367, %v3382
        %v3385 = vunpack.c.l.s4 1966171168
        %v3386 = vunpack.c.0.s8 %v3385
        %v3387 = vlaneseq
        %v3388 = vshrl.u32 %v3387, 7
        %v3389 = vsub.s32 %v3386, %v3388
        %v3390 = vrot.slane %v3374, %v3389
        %v3392 = vunpack.c.l.s4 1966171168
        %v3393 = vunpack.c.0.s8 %v3392
        %v3394 = vlaneseq
        %v3395 = vshrl.u32 %v3394, 7
        %v3396 = vsub.s32 %v3393, %v3395
        %v3397 = vrot.slane %v3375, %v3396
        %v3399 = vunpack.c.l.s4 1966171168
        %v3400 = vunpack.c.0.s8 %v3399
        %v3401 = vlaneseq
        %v3402 = vshrl.u32 %v3401, 7
        %v3403 = vsub.s32 %v3400, %v3402
        %v3404 = vrot.slane %v3376, %v3403
        %v3405 = vcombine.high %v3383, %v3383
        %v3406 = vcombine.high %v3390, %v3390
        %v3407 = vcombine.high %v3397, %v3397
        %v3408 = vcombine.high %v3404, %v3404
        %vm3473 = vcmask 24576
        %3474 = vst.msk [vmem:[#allocation5] sm:$0x1] %vm3473, %v3040
        %3475 = vst.msk [vmem:[#allocation5 + $0x10] sm:$0x1] %vm3473, %v3054
        %3476 = vst.msk [vmem:[#allocation5 + $0x20] sm:$0x1] %vm3473, %v3062
        %3477 = vst.msk [vmem:[#allocation5 + $0x30] sm:$0x1] %vm3473, %v3064
        %3478 = vst.msk [vmem:[#allocation5 + $0x40] sm:$0x1] %vm3473, %v3047
        %3479 = vst.msk [vmem:[#allocation5 + $0x50] sm:$0x1] %vm3473, %v3061
        %3480 = vst.msk [vmem:[#allocation5 + $0x60] sm:$0x1] %vm3473, %v3063
        %3481 = vst.msk [vmem:[#allocation5 + $0x70] sm:$0x1] %vm3473, %v3065
        %3482 = vst.msk [vmem:[#allocation5 + $0x80] sm:$0x1] %vm3473, %v3089
        %3483 = vst.msk [vmem:[#allocation5 + $0x90] sm:$0x1] %vm3473, %v3103
        %3484 = vst.msk [vmem:[#allocation5 + $0xa0] sm:$0x1] %vm3473, %v3111
        %3485 = vst.msk [vmem:[#allocation5 + $0xb0] sm:$0x1] %vm3473, %v3113
        %3486 = vst.msk [vmem:[#allocation5 + $0xc0] sm:$0x1] %vm3473, %v3096
        %3487 = vst.msk [vmem:[#allocation5 + $0xd0] sm:$0x1] %vm3473, %v3110
        %3488 = vst.msk [vmem:[#allocation5 + $0xe0] sm:$0x1] %vm3473, %v3112
        %3489 = vst.msk [vmem:[#allocation5 + $0xf0] sm:$0x1] %vm3473, %v3114
        %3490 = vst.msk [vmem:[#allocation5 + $0x100] sm:$0x1] %vm3473, %v3138
        %3491 = vst.msk [vmem:[#allocation5 + $0x110] sm:$0x1] %vm3473, %v3152
        %3492 = vst.msk [vmem:[#allocation5 + $0x120] sm:$0x1] %vm3473, %v3160
        %3493 = vst.msk [vmem:[#allocation5 + $0x130] sm:$0x1] %vm3473, %v3162
        %3494 = vst.msk [vmem:[#allocation5 + $0x140] sm:$0x1] %vm3473, %v3145
        %3495 = vst.msk [vmem:[#allocation5 + $0x150] sm:$0x1] %vm3473, %v3159
        %3496 = vst.msk [vmem:[#allocation5 + $0x160] sm:$0x1] %vm3473, %v3161
        %3497 = vst.msk [vmem:[#allocation5 + $0x170] sm:$0x1] %vm3473, %v3163
        %3498 = vst.msk [vmem:[#allocation5 + $0x180] sm:$0x1] %vm3473, %v3187
        %3499 = vst.msk [vmem:[#allocation5 + $0x190] sm:$0x1] %vm3473, %v3201
        %3500 = vst.msk [vmem:[#allocation5 + $0x1a0] sm:$0x1] %vm3473, %v3209
        %3501 = vst.msk [vmem:[#allocation5 + $0x1b0] sm:$0x1] %vm3473, %v3211
        %3502 = vst.msk [vmem:[#allocation5 + $0x1c0] sm:$0x1] %vm3473, %v3194
        %3503 = vst.msk [vmem:[#allocation5 + $0x1d0] sm:$0x1] %vm3473, %v3208
        %3504 = vst.msk [vmem:[#allocation5 + $0x1e0] sm:$0x1] %vm3473, %v3210
        %3505 = vst.msk [vmem:[#allocation5 + $0x1f0] sm:$0x1] %vm3473, %v3212
        %3506 = vst.msk [vmem:[#allocation5 + $0x200] sm:$0x1] %vm3473, %v3236
        %3507 = vst.msk [vmem:[#allocation5 + $0x210] sm:$0x1] %vm3473, %v3250
        %3508 = vst.msk [vmem:[#allocation5 + $0x220] sm:$0x1] %vm3473, %v3258
        %3509 = vst.msk [vmem:[#allocation5 + $0x230] sm:$0x1] %vm3473, %v3260
        %3510 = vst.msk [vmem:[#allocation5 + $0x240] sm:$0x1] %vm3473, %v3243
        %3511 = vst.msk [vmem:[#allocation5 + $0x250] sm:$0x1] %vm3473, %v3257
        %3512 = vst.msk [vmem:[#allocation5 + $0x260] sm:$0x1] %vm3473, %v3259
        %3513 = vst.msk [vmem:[#allocation5 + $0x270] sm:$0x1] %vm3473, %v3261
        %3514 = vst.msk [vmem:[#allocation5 + $0x280] sm:$0x1] %vm3473, %v3285
        %3515 = vst.msk [vmem:[#allocation5 + $0x290] sm:$0x1] %vm3473, %v3299
        %3516 = vst.msk [vmem:[#allocation5 + $0x2a0] sm:$0x1] %vm3473, %v3307
        %3517 = vst.msk [vmem:[#allocation5 + $0x2b0] sm:$0x1] %vm3473, %v3309
        %3518 = vst.msk [vmem:[#allocation5 + $0x2c0] sm:$0x1] %vm3473, %v3292
        %3519 = vst.msk [vmem:[#allocation5 + $0x2d0] sm:$0x1] %vm3473, %v3306
        %3520 = vst.msk [vmem:[#allocation5 + $0x2e0] sm:$0x1] %vm3473, %v3308
        %3521 = vst.msk [vmem:[#allocation5 + $0x2f0] sm:$0x1] %vm3473, %v3310
        %3522 = vst.msk [vmem:[#allocation5 + $0x300] sm:$0x1] %vm3473, %v3334
        %3523 = vst.msk [vmem:[#allocation5 + $0x310] sm:$0x1] %vm3473, %v3348
        %3524 = vst.msk [vmem:[#allocation5 + $0x320] sm:$0x1] %vm3473, %v3356
        %3525 = vst.msk [vmem:[#allocation5 + $0x330] sm:$0x1] %vm3473, %v3358
        %3526 = vst.msk [vmem:[#allocation5 + $0x340] sm:$0x1] %vm3473, %v3341
        %3527 = vst.msk [vmem:[#allocation5 + $0x350] sm:$0x1] %vm3473, %v3355
        %3528 = vst.msk [vmem:[#allocation5 + $0x360] sm:$0x1] %vm3473, %v3357
        %3529 = vst.msk [vmem:[#allocation5 + $0x370] sm:$0x1] %vm3473, %v3359
        %3530 = vst.msk [vmem:[#allocation5 + $0x380] sm:$0x1] %vm3473, %v3383
        %3531 = vst.msk [vmem:[#allocation5 + $0x390] sm:$0x1] %vm3473, %v3397
        %3532 = vst.msk [vmem:[#allocation5 + $0x3a0] sm:$0x1] %vm3473, %v3405
        %3533 = vst.msk [vmem:[#allocation5 + $0x3b0] sm:$0x1] %vm3473, %v3407
        %3534 = vst.msk [vmem:[#allocation5 + $0x3c0] sm:$0x1] %vm3473, %v3390
        %3535 = vst.msk [vmem:[#allocation5 + $0x3d0] sm:$0x1] %vm3473, %v3404
        %3536 = vst.msk [vmem:[#allocation5 + $0x3e0] sm:$0x1] %vm3473, %v3406
        %3537 = vst.msk [vmem:[#allocation5 + $0x3f0] sm:$0x1] %vm3473, %v3408
        %v3538 = vld [vmem:[#allocation4 + $0x1] sm:$0xff]
        %v3539 = vld [vmem:[#allocation4 + $0x11] sm:$0xff]
        %v3540 = vld [vmem:[#allocation4 + $0x21] sm:$0xff]
        %v3541 = vld [vmem:[#allocation4 + $0x31] sm:$0xff]
        %v3542 = vld [vmem:[#allocation4 + $0x41] sm:$0xff]
        %v3543 = vld [vmem:[#allocation4 + $0x51] sm:$0xff]
        %v3544 = vld [vmem:[#allocation4 + $0x61] sm:$0xff]
        %v3545 = vld [vmem:[#allocation4 + $0x71] sm:$0xff]
        %v3554 = vcombine.high %v3538, %v3538
        %v3556 = vunpack.c.l.s4 1966171168
        %v3557 = vunpack.c.0.s8 %v3556
        %v3558 = vlaneseq
        %v3559 = vshrl.u32 %v3558, 7
        %v3560 = vsub.s32 %v3557, %v3559
        %v3561 = vrot.slane %v3538, %v3560
        %v3563 = vunpack.c.l.s4 1966171168
        %v3564 = vunpack.c.0.s8 %v3563
        %v3565 = vlaneseq
        %v3566 = vshrl.u32 %v3565, 7
        %v3567 = vsub.s32 %v3564, %v3566
        %v3568 = vrot.slane %v3554, %v3567
        %v3569 = vcombine.high %v3561, %v3561
        %v3570 = vcombine.high %v3568, %v3568
        %v3572 = vunpack.c.l.s4 1966171168
        %v3573 = vunpack.c.0.s8 %v3572
        %v3574 = vlaneseq
        %v3575 = vshrl.u32 %v3574, 7
        %v3576 = vsub.s32 %v3573, %v3575
        %v3577 = vrot.slane %v3561, %v3576
        %v3579 = vunpack.c.l.s4 1966171168
        %v3580 = vunpack.c.0.s8 %v3579
        %v3581 = vlaneseq
        %v3582 = vshrl.u32 %v3581, 7
        %v3583 = vsub.s32 %v3580, %v3582
        %v3584 = vrot.slane %v3568, %v3583
        %v3586 = vunpack.c.l.s4 1966171168
        %v3587 = vunpack.c.0.s8 %v3586
        %v3588 = vlaneseq
        %v3589 = vshrl.u32 %v3588, 7
        %v3590 = vsub.s32 %v3587, %v3589
        %v3591 = vrot.slane %v3569, %v3590
        %v3593 = vunpack.c.l.s4 1966171168
        %v3594 = vunpack.c.0.s8 %v3593
        %v3595 = vlaneseq
        %v3596 = vshrl.u32 %v3595, 7
        %v3597 = vsub.s32 %v3594, %v3596
        %v3598 = vrot.slane %v3570, %v3597
        %v3599 = vcombine.high %v3577, %v3577
        %v3600 = vcombine.high %v3584, %v3584
        %v3601 = vcombine.high %v3591, %v3591
        %v3602 = vcombine.high %v3598, %v3598
        %v3603 = vcombine.high %v3539, %v3539
        %v3605 = vunpack.c.l.s4 1966171168
        %v3606 = vunpack.c.0.s8 %v3605
        %v3607 = vlaneseq
        %v3608 = vshrl.u32 %v3607, 7
        %v3609 = vsub.s32 %v3606, %v3608
        %v3610 = vrot.slane %v3539, %v3609
        %v3612 = vunpack.c.l.s4 1966171168
        %v3613 = vunpack.c.0.s8 %v3612
        %v3614 = vlaneseq
        %v3615 = vshrl.u32 %v3614, 7
        %v3616 = vsub.s32 %v3613, %v3615
        %v3617 = vrot.slane %v3603, %v3616
        %v3618 = vcombine.high %v3610, %v3610
        %v3619 = vcombine.high %v3617, %v3617
        %v3621 = vunpack.c.l.s4 1966171168
        %v3622 = vunpack.c.0.s8 %v3621
        %v3623 = vlaneseq
        %v3624 = vshrl.u32 %v3623, 7
        %v3625 = vsub.s32 %v3622, %v3624
        %v3626 = vrot.slane %v3610, %v3625
        %v3628 = vunpack.c.l.s4 1966171168
        %v3629 = vunpack.c.0.s8 %v3628
        %v3630 = vlaneseq
        %v3631 = vshrl.u32 %v3630, 7
        %v3632 = vsub.s32 %v3629, %v3631
        %v3633 = vrot.slane %v3617, %v3632
        %v3635 = vunpack.c.l.s4 1966171168
        %v3636 = vunpack.c.0.s8 %v3635
        %v3637 = vlaneseq
        %v3638 = vshrl.u32 %v3637, 7
        %v3639 = vsub.s32 %v3636, %v3638
        %v3640 = vrot.slane %v3618, %v3639
        %v3642 = vunpack.c.l.s4 1966171168
        %v3643 = vunpack.c.0.s8 %v3642
        %v3644 = vlaneseq
        %v3645 = vshrl.u32 %v3644, 7
        %v3646 = vsub.s32 %v3643, %v3645
        %v3647 = vrot.slane %v3619, %v3646
        %v3648 = vcombine.high %v3626, %v3626
        %v3649 = vcombine.high %v3633, %v3633
        %v3650 = vcombine.high %v3640, %v3640
        %v3651 = vcombine.high %v3647, %v3647
        %v3652 = vcombine.high %v3540, %v3540
        %v3654 = vunpack.c.l.s4 1966171168
        %v3655 = vunpack.c.0.s8 %v3654
        %v3656 = vlaneseq
        %v3657 = vshrl.u32 %v3656, 7
        %v3658 = vsub.s32 %v3655, %v3657
        %v3659 = vrot.slane %v3540, %v3658
        %v3661 = vunpack.c.l.s4 1966171168
        %v3662 = vunpack.c.0.s8 %v3661
        %v3663 = vlaneseq
        %v3664 = vshrl.u32 %v3663, 7
        %v3665 = vsub.s32 %v3662, %v3664
        %v3666 = vrot.slane %v3652, %v3665
        %v3667 = vcombine.high %v3659, %v3659
        %v3668 = vcombine.high %v3666, %v3666
        %v3670 = vunpack.c.l.s4 1966171168
        %v3671 = vunpack.c.0.s8 %v3670
        %v3672 = vlaneseq
        %v3673 = vshrl.u32 %v3672, 7
        %v3674 = vsub.s32 %v3671, %v3673
        %v3675 = vrot.slane %v3659, %v3674
        %v3677 = vunpack.c.l.s4 1966171168
        %v3678 = vunpack.c.0.s8 %v3677
        %v3679 = vlaneseq
        %v3680 = vshrl.u32 %v3679, 7
        %v3681 = vsub.s32 %v3678, %v3680
        %v3682 = vrot.slane %v3666, %v3681
        %v3684 = vunpack.c.l.s4 1966171168
        %v3685 = vunpack.c.0.s8 %v3684
        %v3686 = vlaneseq
        %v3687 = vshrl.u32 %v3686, 7
        %v3688 = vsub.s32 %v3685, %v3687
        %v3689 = vrot.slane %v3667, %v3688
        %v3691 = vunpack.c.l.s4 1966171168
        %v3692 = vunpack.c.0.s8 %v3691
        %v3693 = vlaneseq
        %v3694 = vshrl.u32 %v3693, 7
        %v3695 = vsub.s32 %v3692, %v3694
        %v3696 = vrot.slane %v3668, %v3695
        %v3697 = vcombine.high %v3675, %v3675
        %v3698 = vcombine.high %v3682, %v3682
        %v3699 = vcombine.high %v3689, %v3689
        %v3700 = vcombine.high %v3696, %v3696
        %v3701 = vcombine.high %v3541, %v3541
        %v3703 = vunpack.c.l.s4 1966171168
        %v3704 = vunpack.c.0.s8 %v3703
        %v3705 = vlaneseq
        %v3706 = vshrl.u32 %v3705, 7
        %v3707 = vsub.s32 %v3704, %v3706
        %v3708 = vrot.slane %v3541, %v3707
        %v3710 = vunpack.c.l.s4 1966171168
        %v3711 = vunpack.c.0.s8 %v3710
        %v3712 = vlaneseq
        %v3713 = vshrl.u32 %v3712, 7
        %v3714 = vsub.s32 %v3711, %v3713
        %v3715 = vrot.slane %v3701, %v3714
        %v3716 = vcombine.high %v3708, %v3708
        %v3717 = vcombine.high %v3715, %v3715
        %v3719 = vunpack.c.l.s4 1966171168
        %v3720 = vunpack.c.0.s8 %v3719
        %v3721 = vlaneseq
        %v3722 = vshrl.u32 %v3721, 7
        %v3723 = vsub.s32 %v3720, %v3722
        %v3724 = vrot.slane %v3708, %v3723
        %v3726 = vunpack.c.l.s4 1966171168
        %v3727 = vunpack.c.0.s8 %v3726
        %v3728 = vlaneseq
        %v3729 = vshrl.u32 %v3728, 7
        %v3730 = vsub.s32 %v3727, %v3729
        %v3731 = vrot.slane %v3715, %v3730
        %v3733 = vunpack.c.l.s4 1966171168
        %v3734 = vunpack.c.0.s8 %v3733
        %v3735 = vlaneseq
        %v3736 = vshrl.u32 %v3735, 7
        %v3737 = vsub.s32 %v3734, %v3736
        %v3738 = vrot.slane %v3716, %v3737
        %v3740 = vunpack.c.l.s4 1966171168
        %v3741 = vunpack.c.0.s8 %v3740
        %v3742 = vlaneseq
        %v3743 = vshrl.u32 %v3742, 7
        %v3744 = vsub.s32 %v3741, %v3743
        %v3745 = vrot.slane %v3717, %v3744
        %v3746 = vcombine.high %v3724, %v3724
        %v3747 = vcombine.high %v3731, %v3731
        %v3748 = vcombine.high %v3738, %v3738
        %v3749 = vcombine.high %v3745, %v3745
        %v3750 = vcombine.high %v3542, %v3542
        %v3752 = vunpack.c.l.s4 1966171168
        %v3753 = vunpack.c.0.s8 %v3752
        %v3754 = vlaneseq
        %v3755 = vshrl.u32 %v3754, 7
        %v3756 = vsub.s32 %v3753, %v3755
        %v3757 = vrot.slane %v3542, %v3756
        %v3759 = vunpack.c.l.s4 1966171168
        %v3760 = vunpack.c.0.s8 %v3759
        %v3761 = vlaneseq
        %v3762 = vshrl.u32 %v3761, 7
        %v3763 = vsub.s32 %v3760, %v3762
        %v3764 = vrot.slane %v3750, %v3763
        %v3765 = vcombine.high %v3757, %v3757
        %v3766 = vcombine.high %v3764, %v3764
        %v3768 = vunpack.c.l.s4 1966171168
        %v3769 = vunpack.c.0.s8 %v3768
        %v3770 = vlaneseq
        %v3771 = vshrl.u32 %v3770, 7
        %v3772 = vsub.s32 %v3769, %v3771
        %v3773 = vrot.slane %v3757, %v3772
        %v3775 = vunpack.c.l.s4 1966171168
        %v3776 = vunpack.c.0.s8 %v3775
        %v3777 = vlaneseq
        %v3778 = vshrl.u32 %v3777, 7
        %v3779 = vsub.s32 %v3776, %v3778
        %v3780 = vrot.slane %v3764, %v3779
        %v3782 = vunpack.c.l.s4 1966171168
        %v3783 = vunpack.c.0.s8 %v3782
        %v3784 = vlaneseq
        %v3785 = vshrl.u32 %v3784, 7
        %v3786 = vsub.s32 %v3783, %v3785
        %v3787 = vrot.slane %v3765, %v3786
        %v3789 = vunpack.c.l.s4 1966171168
        %v3790 = vunpack.c.0.s8 %v3789
        %v3791 = vlaneseq
        %v3792 = vshrl.u32 %v3791, 7
        %v3793 = vsub.s32 %v3790, %v3792
        %v3794 = vrot.slane %v3766, %v3793
        %v3795 = vcombine.high %v3773, %v3773
        %v3796 = vcombine.high %v3780, %v3780
        %v3797 = vcombine.high %v3787, %v3787
        %v3798 = vcombine.high %v3794, %v3794
        %v3799 = vcombine.high %v3543, %v3543
        %v3801 = vunpack.c.l.s4 1966171168
        %v3802 = vunpack.c.0.s8 %v3801
        %v3803 = vlaneseq
        %v3804 = vshrl.u32 %v3803, 7
        %v3805 = vsub.s32 %v3802, %v3804
        %v3806 = vrot.slane %v3543, %v3805
        %v3808 = vunpack.c.l.s4 1966171168
        %v3809 = vunpack.c.0.s8 %v3808
        %v3810 = vlaneseq
        %v3811 = vshrl.u32 %v3810, 7
        %v3812 = vsub.s32 %v3809, %v3811
        %v3813 = vrot.slane %v3799, %v3812
        %v3814 = vcombine.high %v3806, %v3806
        %v3815 = vcombine.high %v3813, %v3813
        %v3817 = vunpack.c.l.s4 1966171168
        %v3818 = vunpack.c.0.s8 %v3817
        %v3819 = vlaneseq
        %v3820 = vshrl.u32 %v3819, 7
        %v3821 = vsub.s32 %v3818, %v3820
        %v3822 = vrot.slane %v3806, %v3821
        %v3824 = vunpack.c.l.s4 1966171168
        %v3825 = vunpack.c.0.s8 %v3824
        %v3826 = vlaneseq
        %v3827 = vshrl.u32 %v3826, 7
        %v3828 = vsub.s32 %v3825, %v3827
        %v3829 = vrot.slane %v3813, %v3828
        %v3831 = vunpack.c.l.s4 1966171168
        %v3832 = vunpack.c.0.s8 %v3831
        %v3833 = vlaneseq
        %v3834 = vshrl.u32 %v3833, 7
        %v3835 = vsub.s32 %v3832, %v3834
        %v3836 = vrot.slane %v3814, %v3835
        %v3838 = vunpack.c.l.s4 1966171168
        %v3839 = vunpack.c.0.s8 %v3838
        %v3840 = vlaneseq
        %v3841 = vshrl.u32 %v3840, 7
        %v3842 = vsub.s32 %v3839, %v3841
        %v3843 = vrot.slane %v3815, %v3842
        %v3844 = vcombine.high %v3822, %v3822
        %v3845 = vcombine.high %v3829, %v3829
        %v3846 = vcombine.high %v3836, %v3836
        %v3847 = vcombine.high %v3843, %v3843
        %v3848 = vcombine.high %v3544, %v3544
        %v3850 = vunpack.c.l.s4 1966171168
        %v3851 = vunpack.c.0.s8 %v3850
        %v3852 = vlaneseq
        %v3853 = vshrl.u32 %v3852, 7
        %v3854 = vsub.s32 %v3851, %v3853
        %v3855 = vrot.slane %v3544, %v3854
        %v3857 = vunpack.c.l.s4 1966171168
        %v3858 = vunpack.c.0.s8 %v3857
        %v3859 = vlaneseq
        %v3860 = vshrl.u32 %v3859, 7
        %v3861 = vsub.s32 %v3858, %v3860
        %v3862 = vrot.slane %v3848, %v3861
        %v3863 = vcombine.high %v3855, %v3855
        %v3864 = vcombine.high %v3862, %v3862
        %v3866 = vunpack.c.l.s4 1966171168
        %v3867 = vunpack.c.0.s8 %v3866
        %v3868 = vlaneseq
        %v3869 = vshrl.u32 %v3868, 7
        %v3870 = vsub.s32 %v3867, %v3869
        %v3871 = vrot.slane %v3855, %v3870
        %v3873 = vunpack.c.l.s4 1966171168
        %v3874 = vunpack.c.0.s8 %v3873
        %v3875 = vlaneseq
        %v3876 = vshrl.u32 %v3875, 7
        %v3877 = vsub.s32 %v3874, %v3876
        %v3878 = vrot.slane %v3862, %v3877
        %v3880 = vunpack.c.l.s4 1966171168
        %v3881 = vunpack.c.0.s8 %v3880
        %v3882 = vlaneseq
        %v3883 = vshrl.u32 %v3882, 7
        %v3884 = vsub.s32 %v3881, %v3883
        %v3885 = vrot.slane %v3863, %v3884
        %v3887 = vunpack.c.l.s4 1966171168
        %v3888 = vunpack.c.0.s8 %v3887
        %v3889 = vlaneseq
        %v3890 = vshrl.u32 %v3889, 7
        %v3891 = vsub.s32 %v3888, %v3890
        %v3892 = vrot.slane %v3864, %v3891
        %v3893 = vcombine.high %v3871, %v3871
        %v3894 = vcombine.high %v3878, %v3878
        %v3895 = vcombine.high %v3885, %v3885
        %v3896 = vcombine.high %v3892, %v3892
        %v3897 = vcombine.high %v3545, %v3545
        %v3899 = vunpack.c.l.s4 1966171168
        %v3900 = vunpack.c.0.s8 %v3899
        %v3901 = vlaneseq
        %v3902 = vshrl.u32 %v3901, 7
        %v3903 = vsub.s32 %v3900, %v3902
        %v3904 = vrot.slane %v3545, %v3903
        %v3906 = vunpack.c.l.s4 1966171168
        %v3907 = vunpack.c.0.s8 %v3906
        %v3908 = vlaneseq
        %v3909 = vshrl.u32 %v3908, 7
        %v3910 = vsub.s32 %v3907, %v3909
        %v3911 = vrot.slane %v3897, %v3910
        %v3912 = vcombine.high %v3904, %v3904
        %v3913 = vcombine.high %v3911, %v3911
        %v3915 = vunpack.c.l.s4 1966171168
        %v3916 = vunpack.c.0.s8 %v3915
        %v3917 = vlaneseq
        %v3918 = vshrl.u32 %v3917, 7
        %v3919 = vsub.s32 %v3916, %v3918
        %v3920 = vrot.slane %v3904, %v3919
        %v3922 = vunpack.c.l.s4 1966171168
        %v3923 = vunpack.c.0.s8 %v3922
        %v3924 = vlaneseq
        %v3925 = vshrl.u32 %v3924, 7
        %v3926 = vsub.s32 %v3923, %v3925
        %v3927 = vrot.slane %v3911, %v3926
        %v3929 = vunpack.c.l.s4 1966171168
        %v3930 = vunpack.c.0.s8 %v3929
        %v3931 = vlaneseq
        %v3932 = vshrl.u32 %v3931, 7
        %v3933 = vsub.s32 %v3930, %v3932
        %v3934 = vrot.slane %v3912, %v3933
        %v3936 = vunpack.c.l.s4 1966171168
        %v3937 = vunpack.c.0.s8 %v3936
        %v3938 = vlaneseq
        %v3939 = vshrl.u32 %v3938, 7
        %v3940 = vsub.s32 %v3937, %v3939
        %v3941 = vrot.slane %v3913, %v3940
        %v3942 = vcombine.high %v3920, %v3920
        %v3943 = vcombine.high %v3927, %v3927
        %v3944 = vcombine.high %v3934, %v3934
        %v3945 = vcombine.high %v3941, %v3941
        %4010 = vst.msk [vmem:[#allocation5 + $0x1] sm:$0x1] %vm3473, %v3577
        %4011 = vst.msk [vmem:[#allocation5 + $0x11] sm:$0x1] %vm3473, %v3591
        %4012 = vst.msk [vmem:[#allocation5 + $0x21] sm:$0x1] %vm3473, %v3599
        %4013 = vst.msk [vmem:[#allocation5 + $0x31] sm:$0x1] %vm3473, %v3601
        %4014 = vst.msk [vmem:[#allocation5 + $0x41] sm:$0x1] %vm3473, %v3584
        %4015 = vst.msk [vmem:[#allocation5 + $0x51] sm:$0x1] %vm3473, %v3598
        %4016 = vst.msk [vmem:[#allocation5 + $0x61] sm:$0x1] %vm3473, %v3600
        %4017 = vst.msk [vmem:[#allocation5 + $0x71] sm:$0x1] %vm3473, %v3602
        %4018 = vst.msk [vmem:[#allocation5 + $0x81] sm:$0x1] %vm3473, %v3626
        %4019 = vst.msk [vmem:[#allocation5 + $0x91] sm:$0x1] %vm3473, %v3640
        %4020 = vst.msk [vmem:[#allocation5 + $0xa1] sm:$0x1] %vm3473, %v3648
        %4021 = vst.msk [vmem:[#allocation5 + $0xb1] sm:$0x1] %vm3473, %v3650
        %4022 = vst.msk [vmem:[#allocation5 + $0xc1] sm:$0x1] %vm3473, %v3633
        %4023 = vst.msk [vmem:[#allocation5 + $0xd1] sm:$0x1] %vm3473, %v3647
        %4024 = vst.msk [vmem:[#allocation5 + $0xe1] sm:$0x1] %vm3473, %v3649
        %4025 = vst.msk [vmem:[#allocation5 + $0xf1] sm:$0x1] %vm3473, %v3651
        %4026 = vst.msk [vmem:[#allocation5 + $0x101] sm:$0x1] %vm3473, %v3675
        %4027 = vst.msk [vmem:[#allocation5 + $0x111] sm:$0x1] %vm3473, %v3689
        %4028 = vst.msk [vmem:[#allocation5 + $0x121] sm:$0x1] %vm3473, %v3697
        %4029 = vst.msk [vmem:[#allocation5 + $0x131] sm:$0x1] %vm3473, %v3699
        %4030 = vst.msk [vmem:[#allocation5 + $0x141] sm:$0x1] %vm3473, %v3682
        %4031 = vst.msk [vmem:[#allocation5 + $0x151] sm:$0x1] %vm3473, %v3696
        %4032 = vst.msk [vmem:[#allocation5 + $0x161] sm:$0x1] %vm3473, %v3698
        %4033 = vst.msk [vmem:[#allocation5 + $0x171] sm:$0x1] %vm3473, %v3700
        %4034 = vst.msk [vmem:[#allocation5 + $0x181] sm:$0x1] %vm3473, %v3724
        %4035 = vst.msk [vmem:[#allocation5 + $0x191] sm:$0x1] %vm3473, %v3738
        %4036 = vst.msk [vmem:[#allocation5 + $0x1a1] sm:$0x1] %vm3473, %v3746
        %4037 = vst.msk [vmem:[#allocation5 + $0x1b1] sm:$0x1] %vm3473, %v3748
        %4038 = vst.msk [vmem:[#allocation5 + $0x1c1] sm:$0x1] %vm3473, %v3731
        %4039 = vst.msk [vmem:[#allocation5 + $0x1d1] sm:$0x1] %vm3473, %v3745
        %4040 = vst.msk [vmem:[#allocation5 + $0x1e1] sm:$0x1] %vm3473, %v3747
        %4041 = vst.msk [vmem:[#allocation5 + $0x1f1] sm:$0x1] %vm3473, %v3749
        %4042 = vst.msk [vmem:[#allocation5 + $0x201] sm:$0x1] %vm3473, %v3773
        %4043 = vst.msk [vmem:[#allocation5 + $0x211] sm:$0x1] %vm3473, %v3787
        %4044 = vst.msk [vmem:[#allocation5 + $0x221] sm:$0x1] %vm3473, %v3795
        %4045 = vst.msk [vmem:[#allocation5 + $0x231] sm:$0x1] %vm3473, %v3797
        %4046 = vst.msk [vmem:[#allocation5 + $0x241] sm:$0x1] %vm3473, %v3780
        %4047 = vst.msk [vmem:[#allocation5 + $0x251] sm:$0x1] %vm3473, %v3794
        %4048 = vst.msk [vmem:[#allocation5 + $0x261] sm:$0x1] %vm3473, %v3796
        %4049 = vst.msk [vmem:[#allocation5 + $0x271] sm:$0x1] %vm3473, %v3798
        %4050 = vst.msk [vmem:[#allocation5 + $0x281] sm:$0x1] %vm3473, %v3822
        %4051 = vst.msk [vmem:[#allocation5 + $0x291] sm:$0x1] %vm3473, %v3836
        %4052 = vst.msk [vmem:[#allocation5 + $0x2a1] sm:$0x1] %vm3473, %v3844
        %4053 = vst.msk [vmem:[#allocation5 + $0x2b1] sm:$0x1] %vm3473, %v3846
        %4054 = vst.msk [vmem:[#allocation5 + $0x2c1] sm:$0x1] %vm3473, %v3829
        %4055 = vst.msk [vmem:[#allocation5 + $0x2d1] sm:$0x1] %vm3473, %v3843
        %4056 = vst.msk [vmem:[#allocation5 + $0x2e1] sm:$0x1] %vm3473, %v3845
        %4057 = vst.msk [vmem:[#allocation5 + $0x2f1] sm:$0x1] %vm3473, %v3847
        %4058 = vst.msk [vmem:[#allocation5 + $0x301] sm:$0x1] %vm3473, %v3871
        %4059 = vst.msk [vmem:[#allocation5 + $0x311] sm:$0x1] %vm3473, %v3885
        %4060 = vst.msk [vmem:[#allocation5 + $0x321] sm:$0x1] %vm3473, %v3893
        %4061 = vst.msk [vmem:[#allocation5 + $0x331] sm:$0x1] %vm3473, %v3895
        %4062 = vst.msk [vmem:[#allocation5 + $0x341] sm:$0x1] %vm3473, %v3878
        %4063 = vst.msk [vmem:[#allocation5 + $0x351] sm:$0x1] %vm3473, %v3892
        %4064 = vst.msk [vmem:[#allocation5 + $0x361] sm:$0x1] %vm3473, %v3894
        %4065 = vst.msk [vmem:[#allocation5 + $0x371] sm:$0x1] %vm3473, %v3896
        %4066 = vst.msk [vmem:[#allocation5 + $0x381] sm:$0x1] %vm3473, %v3920
        %4067 = vst.msk [vmem:[#allocation5 + $0x391] sm:$0x1] %vm3473, %v3934
        %4068 = vst.msk [vmem:[#allocation5 + $0x3a1] sm:$0x1] %vm3473, %v3942
        %4069 = vst.msk [vmem:[#allocation5 + $0x3b1] sm:$0x1] %vm3473, %v3944
        %4070 = vst.msk [vmem:[#allocation5 + $0x3c1] sm:$0x1] %vm3473, %v3927
        %4071 = vst.msk [vmem:[#allocation5 + $0x3d1] sm:$0x1] %vm3473, %v3941
        %4072 = vst.msk [vmem:[#allocation5 + $0x3e1] sm:$0x1] %vm3473, %v3943
        %4073 = vst.msk [vmem:[#allocation5 + $0x3f1] sm:$0x1] %vm3473, %v3945
        %v4074 = vld [vmem:[#allocation4 + $0x2] sm:$0xff]
        %v4075 = vld [vmem:[#allocation4 + $0x12] sm:$0xff]
        %v4076 = vld [vmem:[#allocation4 + $0x22] sm:$0xff]
        %v4077 = vld [vmem:[#allocation4 + $0x32] sm:$0xff]
        %v4078 = vld [vmem:[#allocation4 + $0x42] sm:$0xff]
        %v4079 = vld [vmem:[#allocation4 + $0x52] sm:$0xff]
        %v4080 = vld [vmem:[#allocation4 + $0x62] sm:$0xff]
        %v4081 = vld [vmem:[#allocation4 + $0x72] sm:$0xff]
        %v4090 = vcombine.high %v4074, %v4074
        %v4092 = vunpack.c.l.s4 1966171168
        %v4093 = vunpack.c.0.s8 %v4092
        %v4094 = vlaneseq
        %v4095 = vshrl.u32 %v4094, 7
        %v4096 = vsub.s32 %v4093, %v4095
        %v4097 = vrot.slane %v4074, %v4096
        %v4099 = vunpack.c.l.s4 1966171168
        %v4100 = vunpack.c.0.s8 %v4099
        %v4101 = vlaneseq
        %v4102 = vshrl.u32 %v4101, 7
        %v4103 = vsub.s32 %v4100, %v4102
        %v4104 = vrot.slane %v4090, %v4103
        %v4105 = vcombine.high %v4097, %v4097
        %v4106 = vcombine.high %v4104, %v4104
        %v4108 = vunpack.c.l.s4 1966171168
        %v4109 = vunpack.c.0.s8 %v4108
        %v4110 = vlaneseq
        %v4111 = vshrl.u32 %v4110, 7
        %v4112 = vsub.s32 %v4109, %v4111
        %v4113 = vrot.slane %v4097, %v4112
        %v4115 = vunpack.c.l.s4 1966171168
        %v4116 = vunpack.c.0.s8 %v4115
        %v4117 = vlaneseq
        %v4118 = vshrl.u32 %v4117, 7
        %v4119 = vsub.s32 %v4116, %v4118
        %v4120 = vrot.slane %v4104, %v4119
        %v4122 = vunpack.c.l.s4 1966171168
        %v4123 = vunpack.c.0.s8 %v4122
        %v4124 = vlaneseq
        %v4125 = vshrl.u32 %v4124, 7
        %v4126 = vsub.s32 %v4123, %v4125
        %v4127 = vrot.slane %v4105, %v4126
        %v4129 = vunpack.c.l.s4 1966171168
        %v4130 = vunpack.c.0.s8 %v4129
        %v4131 = vlaneseq
        %v4132 = vshrl.u32 %v4131, 7
        %v4133 = vsub.s32 %v4130, %v4132
        %v4134 = vrot.slane %v4106, %v4133
        %v4135 = vcombine.high %v4113, %v4113
        %v4136 = vcombine.high %v4120, %v4120
        %v4137 = vcombine.high %v4127, %v4127
        %v4138 = vcombine.high %v4134, %v4134
        %v4139 = vcombine.high %v4075, %v4075
        %v4141 = vunpack.c.l.s4 1966171168
        %v4142 = vunpack.c.0.s8 %v4141
        %v4143 = vlaneseq
        %v4144 = vshrl.u32 %v4143, 7
        %v4145 = vsub.s32 %v4142, %v4144
        %v4146 = vrot.slane %v4075, %v4145
        %v4148 = vunpack.c.l.s4 1966171168
        %v4149 = vunpack.c.0.s8 %v4148
        %v4150 = vlaneseq
        %v4151 = vshrl.u32 %v4150, 7
        %v4152 = vsub.s32 %v4149, %v4151
        %v4153 = vrot.slane %v4139, %v4152
        %v4154 = vcombine.high %v4146, %v4146
        %v4155 = vcombine.high %v4153, %v4153
        %v4157 = vunpack.c.l.s4 1966171168
        %v4158 = vunpack.c.0.s8 %v4157
        %v4159 = vlaneseq
        %v4160 = vshrl.u32 %v4159, 7
        %v4161 = vsub.s32 %v4158, %v4160
        %v4162 = vrot.slane %v4146, %v4161
        %v4164 = vunpack.c.l.s4 1966171168
        %v4165 = vunpack.c.0.s8 %v4164
        %v4166 = vlaneseq
        %v4167 = vshrl.u32 %v4166, 7
        %v4168 = vsub.s32 %v4165, %v4167
        %v4169 = vrot.slane %v4153, %v4168
        %v4171 = vunpack.c.l.s4 1966171168
        %v4172 = vunpack.c.0.s8 %v4171
        %v4173 = vlaneseq
        %v4174 = vshrl.u32 %v4173, 7
        %v4175 = vsub.s32 %v4172, %v4174
        %v4176 = vrot.slane %v4154, %v4175
        %v4178 = vunpack.c.l.s4 1966171168
        %v4179 = vunpack.c.0.s8 %v4178
        %v4180 = vlaneseq
        %v4181 = vshrl.u32 %v4180, 7
        %v4182 = vsub.s32 %v4179, %v4181
        %v4183 = vrot.slane %v4155, %v4182
        %v4184 = vcombine.high %v4162, %v4162
        %v4185 = vcombine.high %v4169, %v4169
        %v4186 = vcombine.high %v4176, %v4176
        %v4187 = vcombine.high %v4183, %v4183
        %v4188 = vcombine.high %v4076, %v4076
        %v4190 = vunpack.c.l.s4 1966171168
        %v4191 = vunpack.c.0.s8 %v4190
        %v4192 = vlaneseq
        %v4193 = vshrl.u32 %v4192, 7
        %v4194 = vsub.s32 %v4191, %v4193
        %v4195 = vrot.slane %v4076, %v4194
        %v4197 = vunpack.c.l.s4 1966171168
        %v4198 = vunpack.c.0.s8 %v4197
        %v4199 = vlaneseq
        %v4200 = vshrl.u32 %v4199, 7
        %v4201 = vsub.s32 %v4198, %v4200
        %v4202 = vrot.slane %v4188, %v4201
        %v4203 = vcombine.high %v4195, %v4195
        %v4204 = vcombine.high %v4202, %v4202
        %v4206 = vunpack.c.l.s4 1966171168
        %v4207 = vunpack.c.0.s8 %v4206
        %v4208 = vlaneseq
        %v4209 = vshrl.u32 %v4208, 7
        %v4210 = vsub.s32 %v4207, %v4209
        %v4211 = vrot.slane %v4195, %v4210
        %v4213 = vunpack.c.l.s4 1966171168
        %v4214 = vunpack.c.0.s8 %v4213
        %v4215 = vlaneseq
        %v4216 = vshrl.u32 %v4215, 7
        %v4217 = vsub.s32 %v4214, %v4216
        %v4218 = vrot.slane %v4202, %v4217
        %v4220 = vunpack.c.l.s4 1966171168
        %v4221 = vunpack.c.0.s8 %v4220
        %v4222 = vlaneseq
        %v4223 = vshrl.u32 %v4222, 7
        %v4224 = vsub.s32 %v4221, %v4223
        %v4225 = vrot.slane %v4203, %v4224
        %v4227 = vunpack.c.l.s4 1966171168
        %v4228 = vunpack.c.0.s8 %v4227
        %v4229 = vlaneseq
        %v4230 = vshrl.u32 %v4229, 7
        %v4231 = vsub.s32 %v4228, %v4230
        %v4232 = vrot.slane %v4204, %v4231
        %v4233 = vcombine.high %v4211, %v4211
        %v4234 = vcombine.high %v4218, %v4218
        %v4235 = vcombine.high %v4225, %v4225
        %v4236 = vcombine.high %v4232, %v4232
        %v4237 = vcombine.high %v4077, %v4077
        %v4239 = vunpack.c.l.s4 1966171168
        %v4240 = vunpack.c.0.s8 %v4239
        %v4241 = vlaneseq
        %v4242 = vshrl.u32 %v4241, 7
        %v4243 = vsub.s32 %v4240, %v4242
        %v4244 = vrot.slane %v4077, %v4243
        %v4246 = vunpack.c.l.s4 1966171168
        %v4247 = vunpack.c.0.s8 %v4246
        %v4248 = vlaneseq
        %v4249 = vshrl.u32 %v4248, 7
        %v4250 = vsub.s32 %v4247, %v4249
        %v4251 = vrot.slane %v4237, %v4250
        %v4252 = vcombine.high %v4244, %v4244
        %v4253 = vcombine.high %v4251, %v4251
        %v4255 = vunpack.c.l.s4 1966171168
        %v4256 = vunpack.c.0.s8 %v4255
        %v4257 = vlaneseq
        %v4258 = vshrl.u32 %v4257, 7
        %v4259 = vsub.s32 %v4256, %v4258
        %v4260 = vrot.slane %v4244, %v4259
        %v4262 = vunpack.c.l.s4 1966171168
        %v4263 = vunpack.c.0.s8 %v4262
        %v4264 = vlaneseq
        %v4265 = vshrl.u32 %v4264, 7
        %v4266 = vsub.s32 %v4263, %v4265
        %v4267 = vrot.slane %v4251, %v4266
        %v4269 = vunpack.c.l.s4 1966171168
        %v4270 = vunpack.c.0.s8 %v4269
        %v4271 = vlaneseq
        %v4272 = vshrl.u32 %v4271, 7
        %v4273 = vsub.s32 %v4270, %v4272
        %v4274 = vrot.slane %v4252, %v4273
        %v4276 = vunpack.c.l.s4 1966171168
        %v4277 = vunpack.c.0.s8 %v4276
        %v4278 = vlaneseq
        %v4279 = vshrl.u32 %v4278, 7
        %v4280 = vsub.s32 %v4277, %v4279
        %v4281 = vrot.slane %v4253, %v4280
        %v4282 = vcombine.high %v4260, %v4260
        %v4283 = vcombine.high %v4267, %v4267
        %v4284 = vcombine.high %v4274, %v4274
        %v4285 = vcombine.high %v4281, %v4281
        %v4286 = vcombine.high %v4078, %v4078
        %v4288 = vunpack.c.l.s4 1966171168
        %v4289 = vunpack.c.0.s8 %v4288
        %v4290 = vlaneseq
        %v4291 = vshrl.u32 %v4290, 7
        %v4292 = vsub.s32 %v4289, %v4291
        %v4293 = vrot.slane %v4078, %v4292
        %v4295 = vunpack.c.l.s4 1966171168
        %v4296 = vunpack.c.0.s8 %v4295
        %v4297 = vlaneseq
        %v4298 = vshrl.u32 %v4297, 7
        %v4299 = vsub.s32 %v4296, %v4298
        %v4300 = vrot.slane %v4286, %v4299
        %v4301 = vcombine.high %v4293, %v4293
        %v4302 = vcombine.high %v4300, %v4300
        %v4304 = vunpack.c.l.s4 1966171168
        %v4305 = vunpack.c.0.s8 %v4304
        %v4306 = vlaneseq
        %v4307 = vshrl.u32 %v4306, 7
        %v4308 = vsub.s32 %v4305, %v4307
        %v4309 = vrot.slane %v4293, %v4308
        %v4311 = vunpack.c.l.s4 1966171168
        %v4312 = vunpack.c.0.s8 %v4311
        %v4313 = vlaneseq
        %v4314 = vshrl.u32 %v4313, 7
        %v4315 = vsub.s32 %v4312, %v4314
        %v4316 = vrot.slane %v4300, %v4315
        %v4318 = vunpack.c.l.s4 1966171168
        %v4319 = vunpack.c.0.s8 %v4318
        %v4320 = vlaneseq
        %v4321 = vshrl.u32 %v4320, 7
        %v4322 = vsub.s32 %v4319, %v4321
        %v4323 = vrot.slane %v4301, %v4322
        %v4325 = vunpack.c.l.s4 1966171168
        %v4326 = vunpack.c.0.s8 %v4325
        %v4327 = vlaneseq
        %v4328 = vshrl.u32 %v4327, 7
        %v4329 = vsub.s32 %v4326, %v4328
        %v4330 = vrot.slane %v4302, %v4329
        %v4331 = vcombine.high %v4309, %v4309
        %v4332 = vcombine.high %v4316, %v4316
        %v4333 = vcombine.high %v4323, %v4323
        %v4334 = vcombine.high %v4330, %v4330
        %v4335 = vcombine.high %v4079, %v4079
        %v4337 = vunpack.c.l.s4 1966171168
        %v4338 = vunpack.c.0.s8 %v4337
        %v4339 = vlaneseq
        %v4340 = vshrl.u32 %v4339, 7
        %v4341 = vsub.s32 %v4338, %v4340
        %v4342 = vrot.slane %v4079, %v4341
        %v4344 = vunpack.c.l.s4 1966171168
        %v4345 = vunpack.c.0.s8 %v4344
        %v4346 = vlaneseq
        %v4347 = vshrl.u32 %v4346, 7
        %v4348 = vsub.s32 %v4345, %v4347
        %v4349 = vrot.slane %v4335, %v4348
        %v4350 = vcombine.high %v4342, %v4342
        %v4351 = vcombine.high %v4349, %v4349
        %v4353 = vunpack.c.l.s4 1966171168
        %v4354 = vunpack.c.0.s8 %v4353
        %v4355 = vlaneseq
        %v4356 = vshrl.u32 %v4355, 7
        %v4357 = vsub.s32 %v4354, %v4356
        %v4358 = vrot.slane %v4342, %v4357
        %v4360 = vunpack.c.l.s4 1966171168
        %v4361 = vunpack.c.0.s8 %v4360
        %v4362 = vlaneseq
        %v4363 = vshrl.u32 %v4362, 7
        %v4364 = vsub.s32 %v4361, %v4363
        %v4365 = vrot.slane %v4349, %v4364
        %v4367 = vunpack.c.l.s4 1966171168
        %v4368 = vunpack.c.0.s8 %v4367
        %v4369 = vlaneseq
        %v4370 = vshrl.u32 %v4369, 7
        %v4371 = vsub.s32 %v4368, %v4370
        %v4372 = vrot.slane %v4350, %v4371
        %v4374 = vunpack.c.l.s4 1966171168
        %v4375 = vunpack.c.0.s8 %v4374
        %v4376 = vlaneseq
        %v4377 = vshrl.u32 %v4376, 7
        %v4378 = vsub.s32 %v4375, %v4377
        %v4379 = vrot.slane %v4351, %v4378
        %v4380 = vcombine.high %v4358, %v4358
        %v4381 = vcombine.high %v4365, %v4365
        %v4382 = vcombine.high %v4372, %v4372
        %v4383 = vcombine.high %v4379, %v4379
        %v4384 = vcombine.high %v4080, %v4080
        %v4386 = vunpack.c.l.s4 1966171168
        %v4387 = vunpack.c.0.s8 %v4386
        %v4388 = vlaneseq
        %v4389 = vshrl.u32 %v4388, 7
        %v4390 = vsub.s32 %v4387, %v4389
        %v4391 = vrot.slane %v4080, %v4390
        %v4393 = vunpack.c.l.s4 1966171168
        %v4394 = vunpack.c.0.s8 %v4393
        %v4395 = vlaneseq
        %v4396 = vshrl.u32 %v4395, 7
        %v4397 = vsub.s32 %v4394, %v4396
        %v4398 = vrot.slane %v4384, %v4397
        %v4399 = vcombine.high %v4391, %v4391
        %v4400 = vcombine.high %v4398, %v4398
        %v4402 = vunpack.c.l.s4 1966171168
        %v4403 = vunpack.c.0.s8 %v4402
        %v4404 = vlaneseq
        %v4405 = vshrl.u32 %v4404, 7
        %v4406 = vsub.s32 %v4403, %v4405
        %v4407 = vrot.slane %v4391, %v4406
        %v4409 = vunpack.c.l.s4 1966171168
        %v4410 = vunpack.c.0.s8 %v4409
        %v4411 = vlaneseq
        %v4412 = vshrl.u32 %v4411, 7
        %v4413 = vsub.s32 %v4410, %v4412
        %v4414 = vrot.slane %v4398, %v4413
        %v4416 = vunpack.c.l.s4 1966171168
        %v4417 = vunpack.c.0.s8 %v4416
        %v4418 = vlaneseq
        %v4419 = vshrl.u32 %v4418, 7
        %v4420 = vsub.s32 %v4417, %v4419
        %v4421 = vrot.slane %v4399, %v4420
        %v4423 = vunpack.c.l.s4 1966171168
        %v4424 = vunpack.c.0.s8 %v4423
        %v4425 = vlaneseq
        %v4426 = vshrl.u32 %v4425, 7
        %v4427 = vsub.s32 %v4424, %v4426
        %v4428 = vrot.slane %v4400, %v4427
        %v4429 = vcombine.high %v4407, %v4407
        %v4430 = vcombine.high %v4414, %v4414
        %v4431 = vcombine.high %v4421, %v4421
        %v4432 = vcombine.high %v4428, %v4428
        %v4433 = vcombine.high %v4081, %v4081
        %v4435 = vunpack.c.l.s4 1966171168
        %v4436 = vunpack.c.0.s8 %v4435
        %v4437 = vlaneseq
        %v4438 = vshrl.u32 %v4437, 7
        %v4439 = vsub.s32 %v4436, %v4438
        %v4440 = vrot.slane %v4081, %v4439
        %v4442 = vunpack.c.l.s4 1966171168
        %v4443 = vunpack.c.0.s8 %v4442
        %v4444 = vlaneseq
        %v4445 = vshrl.u32 %v4444, 7
        %v4446 = vsub.s32 %v4443, %v4445
        %v4447 = vrot.slane %v4433, %v4446
        %v4448 = vcombine.high %v4440, %v4440
        %v4449 = vcombine.high %v4447, %v4447
        %v4451 = vunpack.c.l.s4 1966171168
        %v4452 = vunpack.c.0.s8 %v4451
        %v4453 = vlaneseq
        %v4454 = vshrl.u32 %v4453, 7
        %v4455 = vsub.s32 %v4452, %v4454
        %v4456 = vrot.slane %v4440, %v4455
        %v4458 = vunpack.c.l.s4 1966171168
        %v4459 = vunpack.c.0.s8 %v4458
        %v4460 = vlaneseq
        %v4461 = vshrl.u32 %v4460, 7
        %v4462 = vsub.s32 %v4459, %v4461
        %v4463 = vrot.slane %v4447, %v4462
        %v4465 = vunpack.c.l.s4 1966171168
        %v4466 = vunpack.c.0.s8 %v4465
        %v4467 = vlaneseq
        %v4468 = vshrl.u32 %v4467, 7
        %v4469 = vsub.s32 %v4466, %v4468
        %v4470 = vrot.slane %v4448, %v4469
        %v4472 = vunpack.c.l.s4 1966171168
        %v4473 = vunpack.c.0.s8 %v4472
        %v4474 = vlaneseq
        %v4475 = vshrl.u32 %v4474, 7
        %v4476 = vsub.s32 %v4473, %v4475
        %v4477 = vrot.slane %v4449, %v4476
        %v4478 = vcombine.high %v4456, %v4456
        %v4479 = vcombine.high %v4463, %v4463
        %v4480 = vcombine.high %v4470, %v4470
        %v4481 = vcombine.high %v4477, %v4477
        %4546 = vst.msk [vmem:[#allocation5 + $0x2] sm:$0x1] %vm3473, %v4113
        %4547 = vst.msk [vmem:[#allocation5 + $0x12] sm:$0x1] %vm3473, %v4127
        %4548 = vst.msk [vmem:[#allocation5 + $0x22] sm:$0x1] %vm3473, %v4135
        %4549 = vst.msk [vmem:[#allocation5 + $0x32] sm:$0x1] %vm3473, %v4137
        %4550 = vst.msk [vmem:[#allocation5 + $0x42] sm:$0x1] %vm3473, %v4120
        %4551 = vst.msk [vmem:[#allocation5 + $0x52] sm:$0x1] %vm3473, %v4134
        %4552 = vst.msk [vmem:[#allocation5 + $0x62] sm:$0x1] %vm3473, %v4136
        %4553 = vst.msk [vmem:[#allocation5 + $0x72] sm:$0x1] %vm3473, %v4138
        %4554 = vst.msk [vmem:[#allocation5 + $0x82] sm:$0x1] %vm3473, %v4162
        %4555 = vst.msk [vmem:[#allocation5 + $0x92] sm:$0x1] %vm3473, %v4176
        %4556 = vst.msk [vmem:[#allocation5 + $0xa2] sm:$0x1] %vm3473, %v4184
        %4557 = vst.msk [vmem:[#allocation5 + $0xb2] sm:$0x1] %vm3473, %v4186
        %4558 = vst.msk [vmem:[#allocation5 + $0xc2] sm:$0x1] %vm3473, %v4169
        %4559 = vst.msk [vmem:[#allocation5 + $0xd2] sm:$0x1] %vm3473, %v4183
        %4560 = vst.msk [vmem:[#allocation5 + $0xe2] sm:$0x1] %vm3473, %v4185
        %4561 = vst.msk [vmem:[#allocation5 + $0xf2] sm:$0x1] %vm3473, %v4187
        %4562 = vst.msk [vmem:[#allocation5 + $0x102] sm:$0x1] %vm3473, %v4211
        %4563 = vst.msk [vmem:[#allocation5 + $0x112] sm:$0x1] %vm3473, %v4225
        %4564 = vst.msk [vmem:[#allocation5 + $0x122] sm:$0x1] %vm3473, %v4233
        %4565 = vst.msk [vmem:[#allocation5 + $0x132] sm:$0x1] %vm3473, %v4235
        %4566 = vst.msk [vmem:[#allocation5 + $0x142] sm:$0x1] %vm3473, %v4218
        %4567 = vst.msk [vmem:[#allocation5 + $0x152] sm:$0x1] %vm3473, %v4232
        %4568 = vst.msk [vmem:[#allocation5 + $0x162] sm:$0x1] %vm3473, %v4234
        %4569 = vst.msk [vmem:[#allocation5 + $0x172] sm:$0x1] %vm3473, %v4236
        %4570 = vst.msk [vmem:[#allocation5 + $0x182] sm:$0x1] %vm3473, %v4260
        %4571 = vst.msk [vmem:[#allocation5 + $0x192] sm:$0x1] %vm3473, %v4274
        %4572 = vst.msk [vmem:[#allocation5 + $0x1a2] sm:$0x1] %vm3473, %v4282
        %4573 = vst.msk [vmem:[#allocation5 + $0x1b2] sm:$0x1] %vm3473, %v4284
        %4574 = vst.msk [vmem:[#allocation5 + $0x1c2] sm:$0x1] %vm3473, %v4267
        %4575 = vst.msk [vmem:[#allocation5 + $0x1d2] sm:$0x1] %vm3473, %v4281
        %4576 = vst.msk [vmem:[#allocation5 + $0x1e2] sm:$0x1] %vm3473, %v4283
        %4577 = vst.msk [vmem:[#allocation5 + $0x1f2] sm:$0x1] %vm3473, %v4285
        %4578 = vst.msk [vmem:[#allocation5 + $0x202] sm:$0x1] %vm3473, %v4309
        %4579 = vst.msk [vmem:[#allocation5 + $0x212] sm:$0x1] %vm3473, %v4323
        %4580 = vst.msk [vmem:[#allocation5 + $0x222] sm:$0x1] %vm3473, %v4331
        %4581 = vst.msk [vmem:[#allocation5 + $0x232] sm:$0x1] %vm3473, %v4333
        %4582 = vst.msk [vmem:[#allocation5 + $0x242] sm:$0x1] %vm3473, %v4316
        %4583 = vst.msk [vmem:[#allocation5 + $0x252] sm:$0x1] %vm3473, %v4330
        %4584 = vst.msk [vmem:[#allocation5 + $0x262] sm:$0x1] %vm3473, %v4332
        %4585 = vst.msk [vmem:[#allocation5 + $0x272] sm:$0x1] %vm3473, %v4334
        %4586 = vst.msk [vmem:[#allocation5 + $0x282] sm:$0x1] %vm3473, %v4358
        %4587 = vst.msk [vmem:[#allocation5 + $0x292] sm:$0x1] %vm3473, %v4372
        %4588 = vst.msk [vmem:[#allocation5 + $0x2a2] sm:$0x1] %vm3473, %v4380
        %4589 = vst.msk [vmem:[#allocation5 + $0x2b2] sm:$0x1] %vm3473, %v4382
        %4590 = vst.msk [vmem:[#allocation5 + $0x2c2] sm:$0x1] %vm3473, %v4365
        %4591 = vst.msk [vmem:[#allocation5 + $0x2d2] sm:$0x1] %vm3473, %v4379
        %4592 = vst.msk [vmem:[#allocation5 + $0x2e2] sm:$0x1] %vm3473, %v4381
        %4593 = vst.msk [vmem:[#allocation5 + $0x2f2] sm:$0x1] %vm3473, %v4383
        %4594 = vst.msk [vmem:[#allocation5 + $0x302] sm:$0x1] %vm3473, %v4407
        %4595 = vst.msk [vmem:[#allocation5 + $0x312] sm:$0x1] %vm3473, %v4421
        %4596 = vst.msk [vmem:[#allocation5 + $0x322] sm:$0x1] %vm3473, %v4429
        %4597 = vst.msk [vmem:[#allocation5 + $0x332] sm:$0x1] %vm3473, %v4431
        %4598 = vst.msk [vmem:[#allocation5 + $0x342] sm:$0x1] %vm3473, %v4414
        %4599 = vst.msk [vmem:[#allocation5 + $0x352] sm:$0x1] %vm3473, %v4428
        %4600 = vst.msk [vmem:[#allocation5 + $0x362] sm:$0x1] %vm3473, %v4430
        %4601 = vst.msk [vmem:[#allocation5 + $0x372] sm:$0x1] %vm3473, %v4432
        %4602 = vst.msk [vmem:[#allocation5 + $0x382] sm:$0x1] %vm3473, %v4456
        %4603 = vst.msk [vmem:[#allocation5 + $0x392] sm:$0x1] %vm3473, %v4470
        %4604 = vst.msk [vmem:[#allocation5 + $0x3a2] sm:$0x1] %vm3473, %v4478
        %4605 = vst.msk [vmem:[#allocation5 + $0x3b2] sm:$0x1] %vm3473, %v4480
        %4606 = vst.msk [vmem:[#allocation5 + $0x3c2] sm:$0x1] %vm3473, %v4463
        %4607 = vst.msk [vmem:[#allocation5 + $0x3d2] sm:$0x1] %vm3473, %v4477
        %4608 = vst.msk [vmem:[#allocation5 + $0x3e2] sm:$0x1] %vm3473, %v4479
        %4609 = vst.msk [vmem:[#allocation5 + $0x3f2] sm:$0x1] %vm3473, %v4481
        %v4610 = vld [vmem:[%s2992] sm:$0xff]
        %v4611 = vld [vmem:[%s2992 + $0x10] sm:$0xff]
        %v4612 = vld [vmem:[%s2992 + $0x20] sm:$0xff]
        %v4613 = vld [vmem:[%s2992 + $0x30] sm:$0xff]
        %v4614 = vld [vmem:[%s2992 + $0x40] sm:$0xff]
        %v4615 = vld [vmem:[%s2992 + $0x50] sm:$0xff]
        %v4616 = vld [vmem:[%s2992 + $0x60] sm:$0xff]
        %v4617 = vld [vmem:[%s2992 + $0x70] sm:$0xff]
        %v4626 = vcombine.high %v4610, %v4610
        %v4628 = vunpack.c.l.s4 1966171168
        %v4629 = vunpack.c.0.s8 %v4628
        %v4630 = vlaneseq
        %v4631 = vshrl.u32 %v4630, 7
        %v4632 = vsub.s32 %v4629, %v4631
        %v4633 = vrot.slane %v4610, %v4632
        %v4635 = vunpack.c.l.s4 1966171168
        %v4636 = vunpack.c.0.s8 %v4635
        %v4637 = vlaneseq
        %v4638 = vshrl.u32 %v4637, 7
        %v4639 = vsub.s32 %v4636, %v4638
        %v4640 = vrot.slane %v4626, %v4639
        %v4641 = vcombine.high %v4633, %v4633
        %v4642 = vcombine.high %v4640, %v4640
        %v4644 = vunpack.c.l.s4 1966171168
        %v4645 = vunpack.c.0.s8 %v4644
        %v4646 = vlaneseq
        %v4647 = vshrl.u32 %v4646, 7
        %v4648 = vsub.s32 %v4645, %v4647
        %v4649 = vrot.slane %v4633, %v4648
        %v4651 = vunpack.c.l.s4 1966171168
        %v4652 = vunpack.c.0.s8 %v4651
        %v4653 = vlaneseq
        %v4654 = vshrl.u32 %v4653, 7
        %v4655 = vsub.s32 %v4652, %v4654
        %v4656 = vrot.slane %v4640, %v4655
        %v4658 = vunpack.c.l.s4 1966171168
        %v4659 = vunpack.c.0.s8 %v4658
        %v4660 = vlaneseq
        %v4661 = vshrl.u32 %v4660, 7
        %v4662 = vsub.s32 %v4659, %v4661
        %v4663 = vrot.slane %v4641, %v4662
        %v4665 = vunpack.c.l.s4 1966171168
        %v4666 = vunpack.c.0.s8 %v4665
        %v4667 = vlaneseq
        %v4668 = vshrl.u32 %v4667, 7
        %v4669 = vsub.s32 %v4666, %v4668
        %v4670 = vrot.slane %v4642, %v4669
        %v4671 = vcombine.high %v4649, %v4649
        %v4672 = vcombine.high %v4656, %v4656
        %v4673 = vcombine.high %v4663, %v4663
        %v4674 = vcombine.high %v4670, %v4670
        %v4675 = vcombine.high %v4611, %v4611
        %v4677 = vunpack.c.l.s4 1966171168
        %v4678 = vunpack.c.0.s8 %v4677
        %v4679 = vlaneseq
        %v4680 = vshrl.u32 %v4679, 7
        %v4681 = vsub.s32 %v4678, %v4680
        %v4682 = vrot.slane %v4611, %v4681
        %v4684 = vunpack.c.l.s4 1966171168
        %v4685 = vunpack.c.0.s8 %v4684
        %v4686 = vlaneseq
        %v4687 = vshrl.u32 %v4686, 7
        %v4688 = vsub.s32 %v4685, %v4687
        %v4689 = vrot.slane %v4675, %v4688
        %v4690 = vcombine.high %v4682, %v4682
        %v4691 = vcombine.high %v4689, %v4689
        %v4693 = vunpack.c.l.s4 1966171168
        %v4694 = vunpack.c.0.s8 %v4693
        %v4695 = vlaneseq
        %v4696 = vshrl.u32 %v4695, 7
        %v4697 = vsub.s32 %v4694, %v4696
        %v4698 = vrot.slane %v4682, %v4697
        %v4700 = vunpack.c.l.s4 1966171168
        %v4701 = vunpack.c.0.s8 %v4700
        %v4702 = vlaneseq
        %v4703 = vshrl.u32 %v4702, 7
        %v4704 = vsub.s32 %v4701, %v4703
        %v4705 = vrot.slane %v4689, %v4704
        %v4707 = vunpack.c.l.s4 1966171168
        %v4708 = vunpack.c.0.s8 %v4707
        %v4709 = vlaneseq
        %v4710 = vshrl.u32 %v4709, 7
        %v4711 = vsub.s32 %v4708, %v4710
        %v4712 = vrot.slane %v4690, %v4711
        %v4714 = vunpack.c.l.s4 1966171168
        %v4715 = vunpack.c.0.s8 %v4714
        %v4716 = vlaneseq
        %v4717 = vshrl.u32 %v4716, 7
        %v4718 = vsub.s32 %v4715, %v4717
        %v4719 = vrot.slane %v4691, %v4718
        %v4720 = vcombine.high %v4698, %v4698
        %v4721 = vcombine.high %v4705, %v4705
        %v4722 = vcombine.high %v4712, %v4712
        %v4723 = vcombine.high %v4719, %v4719
        %v4724 = vcombine.high %v4612, %v4612
        %v4726 = vunpack.c.l.s4 1966171168
        %v4727 = vunpack.c.0.s8 %v4726
        %v4728 = vlaneseq
        %v4729 = vshrl.u32 %v4728, 7
        %v4730 = vsub.s32 %v4727, %v4729
        %v4731 = vrot.slane %v4612, %v4730
        %v4733 = vunpack.c.l.s4 1966171168
        %v4734 = vunpack.c.0.s8 %v4733
        %v4735 = vlaneseq
        %v4736 = vshrl.u32 %v4735, 7
        %v4737 = vsub.s32 %v4734, %v4736
        %v4738 = vrot.slane %v4724, %v4737
        %v4739 = vcombine.high %v4731, %v4731
        %v4740 = vcombine.high %v4738, %v4738
        %v4742 = vunpack.c.l.s4 1966171168
        %v4743 = vunpack.c.0.s8 %v4742
        %v4744 = vlaneseq
        %v4745 = vshrl.u32 %v4744, 7
        %v4746 = vsub.s32 %v4743, %v4745
        %v4747 = vrot.slane %v4731, %v4746
        %v4749 = vunpack.c.l.s4 1966171168
        %v4750 = vunpack.c.0.s8 %v4749
        %v4751 = vlaneseq
        %v4752 = vshrl.u32 %v4751, 7
        %v4753 = vsub.s32 %v4750, %v4752
        %v4754 = vrot.slane %v4738, %v4753
        %v4756 = vunpack.c.l.s4 1966171168
        %v4757 = vunpack.c.0.s8 %v4756
        %v4758 = vlaneseq
        %v4759 = vshrl.u32 %v4758, 7
        %v4760 = vsub.s32 %v4757, %v4759
        %v4761 = vrot.slane %v4739, %v4760
        %v4763 = vunpack.c.l.s4 1966171168
        %v4764 = vunpack.c.0.s8 %v4763
        %v4765 = vlaneseq
        %v4766 = vshrl.u32 %v4765, 7
        %v4767 = vsub.s32 %v4764, %v4766
        %v4768 = vrot.slane %v4740, %v4767
        %v4769 = vcombine.high %v4747, %v4747
        %v4770 = vcombine.high %v4754, %v4754
        %v4771 = vcombine.high %v4761, %v4761
        %v4772 = vcombine.high %v4768, %v4768
        %v4773 = vcombine.high %v4613, %v4613
        %v4775 = vunpack.c.l.s4 1966171168
        %v4776 = vunpack.c.0.s8 %v4775
        %v4777 = vlaneseq
        %v4778 = vshrl.u32 %v4777, 7
        %v4779 = vsub.s32 %v4776, %v4778
        %v4780 = vrot.slane %v4613, %v4779
        %v4782 = vunpack.c.l.s4 1966171168
        %v4783 = vunpack.c.0.s8 %v4782
        %v4784 = vlaneseq
        %v4785 = vshrl.u32 %v4784, 7
        %v4786 = vsub.s32 %v4783, %v4785
        %v4787 = vrot.slane %v4773, %v4786
        %v4788 = vcombine.high %v4780, %v4780
        %v4789 = vcombine.high %v4787, %v4787
        %v4791 = vunpack.c.l.s4 1966171168
        %v4792 = vunpack.c.0.s8 %v4791
        %v4793 = vlaneseq
        %v4794 = vshrl.u32 %v4793, 7
        %v4795 = vsub.s32 %v4792, %v4794
        %v4796 = vrot.slane %v4780, %v4795
        %v4798 = vunpack.c.l.s4 1966171168
        %v4799 = vunpack.c.0.s8 %v4798
        %v4800 = vlaneseq
        %v4801 = vshrl.u32 %v4800, 7
        %v4802 = vsub.s32 %v4799, %v4801
        %v4803 = vrot.slane %v4787, %v4802
        %v4805 = vunpack.c.l.s4 1966171168
        %v4806 = vunpack.c.0.s8 %v4805
        %v4807 = vlaneseq
        %v4808 = vshrl.u32 %v4807, 7
        %v4809 = vsub.s32 %v4806, %v4808
        %v4810 = vrot.slane %v4788, %v4809
        %v4812 = vunpack.c.l.s4 1966171168
        %v4813 = vunpack.c.0.s8 %v4812
        %v4814 = vlaneseq
        %v4815 = vshrl.u32 %v4814, 7
        %v4816 = vsub.s32 %v4813, %v4815
        %v4817 = vrot.slane %v4789, %v4816
        %v4818 = vcombine.high %v4796, %v4796
        %v4819 = vcombine.high %v4803, %v4803
        %v4820 = vcombine.high %v4810, %v4810
        %v4821 = vcombine.high %v4817, %v4817
        %v4822 = vcombine.high %v4614, %v4614
        %v4824 = vunpack.c.l.s4 1966171168
        %v4825 = vunpack.c.0.s8 %v4824
        %v4826 = vlaneseq
        %v4827 = vshrl.u32 %v4826, 7
        %v4828 = vsub.s32 %v4825, %v4827
        %v4829 = vrot.slane %v4614, %v4828
        %v4831 = vunpack.c.l.s4 1966171168
        %v4832 = vunpack.c.0.s8 %v4831
        %v4833 = vlaneseq
        %v4834 = vshrl.u32 %v4833, 7
        %v4835 = vsub.s32 %v4832, %v4834
        %v4836 = vrot.slane %v4822, %v4835
        %v4837 = vcombine.high %v4829, %v4829
        %v4838 = vcombine.high %v4836, %v4836
        %v4840 = vunpack.c.l.s4 1966171168
        %v4841 = vunpack.c.0.s8 %v4840
        %v4842 = vlaneseq
        %v4843 = vshrl.u32 %v4842, 7
        %v4844 = vsub.s32 %v4841, %v4843
        %v4845 = vrot.slane %v4829, %v4844
        %v4847 = vunpack.c.l.s4 1966171168
        %v4848 = vunpack.c.0.s8 %v4847
        %v4849 = vlaneseq
        %v4850 = vshrl.u32 %v4849, 7
        %v4851 = vsub.s32 %v4848, %v4850
        %v4852 = vrot.slane %v4836, %v4851
        %v4854 = vunpack.c.l.s4 1966171168
        %v4855 = vunpack.c.0.s8 %v4854
        %v4856 = vlaneseq
        %v4857 = vshrl.u32 %v4856, 7
        %v4858 = vsub.s32 %v4855, %v4857
        %v4859 = vrot.slane %v4837, %v4858
        %v4861 = vunpack.c.l.s4 1966171168
        %v4862 = vunpack.c.0.s8 %v4861
        %v4863 = vlaneseq
        %v4864 = vshrl.u32 %v4863, 7
        %v4865 = vsub.s32 %v4862, %v4864
        %v4866 = vrot.slane %v4838, %v4865
        %v4867 = vcombine.high %v4845, %v4845
        %v4868 = vcombine.high %v4852, %v4852
        %v4869 = vcombine.high %v4859, %v4859
        %v4870 = vcombine.high %v4866, %v4866
        %v4871 = vcombine.high %v4615, %v4615
        %v4873 = vunpack.c.l.s4 1966171168
        %v4874 = vunpack.c.0.s8 %v4873
        %v4875 = vlaneseq
        %v4876 = vshrl.u32 %v4875, 7
        %v4877 = vsub.s32 %v4874, %v4876
        %v4878 = vrot.slane %v4615, %v4877
        %v4880 = vunpack.c.l.s4 1966171168
        %v4881 = vunpack.c.0.s8 %v4880
        %v4882 = vlaneseq
        %v4883 = vshrl.u32 %v4882, 7
        %v4884 = vsub.s32 %v4881, %v4883
        %v4885 = vrot.slane %v4871, %v4884
        %v4886 = vcombine.high %v4878, %v4878
        %v4887 = vcombine.high %v4885, %v4885
        %v4889 = vunpack.c.l.s4 1966171168
        %v4890 = vunpack.c.0.s8 %v4889
        %v4891 = vlaneseq
        %v4892 = vshrl.u32 %v4891, 7
        %v4893 = vsub.s32 %v4890, %v4892
        %v4894 = vrot.slane %v4878, %v4893
        %v4896 = vunpack.c.l.s4 1966171168
        %v4897 = vunpack.c.0.s8 %v4896
        %v4898 = vlaneseq
        %v4899 = vshrl.u32 %v4898, 7
        %v4900 = vsub.s32 %v4897, %v4899
        %v4901 = vrot.slane %v4885, %v4900
        %v4903 = vunpack.c.l.s4 1966171168
        %v4904 = vunpack.c.0.s8 %v4903
        %v4905 = vlaneseq
        %v4906 = vshrl.u32 %v4905, 7
        %v4907 = vsub.s32 %v4904, %v4906
        %v4908 = vrot.slane %v4886, %v4907
        %v4910 = vunpack.c.l.s4 1966171168
        %v4911 = vunpack.c.0.s8 %v4910
        %v4912 = vlaneseq
        %v4913 = vshrl.u32 %v4912, 7
        %v4914 = vsub.s32 %v4911, %v4913
        %v4915 = vrot.slane %v4887, %v4914
        %v4916 = vcombine.high %v4894, %v4894
        %v4917 = vcombine.high %v4901, %v4901
        %v4918 = vcombine.high %v4908, %v4908
        %v4919 = vcombine.high %v4915, %v4915
        %v4920 = vcombine.high %v4616, %v4616
        %v4922 = vunpack.c.l.s4 1966171168
        %v4923 = vunpack.c.0.s8 %v4922
        %v4924 = vlaneseq
        %v4925 = vshrl.u32 %v4924, 7
        %v4926 = vsub.s32 %v4923, %v4925
        %v4927 = vrot.slane %v4616, %v4926
        %v4929 = vunpack.c.l.s4 1966171168
        %v4930 = vunpack.c.0.s8 %v4929
        %v4931 = vlaneseq
        %v4932 = vshrl.u32 %v4931, 7
        %v4933 = vsub.s32 %v4930, %v4932
        %v4934 = vrot.slane %v4920, %v4933
        %v4935 = vcombine.high %v4927, %v4927
        %v4936 = vcombine.high %v4934, %v4934
        %v4938 = vunpack.c.l.s4 1966171168
        %v4939 = vunpack.c.0.s8 %v4938
        %v4940 = vlaneseq
        %v4941 = vshrl.u32 %v4940, 7
        %v4942 = vsub.s32 %v4939, %v4941
        %v4943 = vrot.slane %v4927, %v4942
        %v4945 = vunpack.c.l.s4 1966171168
        %v4946 = vunpack.c.0.s8 %v4945
        %v4947 = vlaneseq
        %v4948 = vshrl.u32 %v4947, 7
        %v4949 = vsub.s32 %v4946, %v4948
        %v4950 = vrot.slane %v4934, %v4949
        %v4952 = vunpack.c.l.s4 1966171168
        %v4953 = vunpack.c.0.s8 %v4952
        %v4954 = vlaneseq
        %v4955 = vshrl.u32 %v4954, 7
        %v4956 = vsub.s32 %v4953, %v4955
        %v4957 = vrot.slane %v4935, %v4956
        %v4959 = vunpack.c.l.s4 1966171168
        %v4960 = vunpack.c.0.s8 %v4959
        %v4961 = vlaneseq
        %v4962 = vshrl.u32 %v4961, 7
        %v4963 = vsub.s32 %v4960, %v4962
        %v4964 = vrot.slane %v4936, %v4963
        %v4965 = vcombine.high %v4943, %v4943
        %v4966 = vcombine.high %v4950, %v4950
        %v4967 = vcombine.high %v4957, %v4957
        %v4968 = vcombine.high %v4964, %v4964
        %v4969 = vcombine.high %v4617, %v4617
        %v4971 = vunpack.c.l.s4 1966171168
        %v4972 = vunpack.c.0.s8 %v4971
        %v4973 = vlaneseq
        %v4974 = vshrl.u32 %v4973, 7
        %v4975 = vsub.s32 %v4972, %v4974
        %v4976 = vrot.slane %v4617, %v4975
        %v4978 = vunpack.c.l.s4 1966171168
        %v4979 = vunpack.c.0.s8 %v4978
        %v4980 = vlaneseq
        %v4981 = vshrl.u32 %v4980, 7
        %v4982 = vsub.s32 %v4979, %v4981
        %v4983 = vrot.slane %v4969, %v4982
        %v4984 = vcombine.high %v4976, %v4976
        %v4985 = vcombine.high %v4983, %v4983
        %v4987 = vunpack.c.l.s4 1966171168
        %v4988 = vunpack.c.0.s8 %v4987
        %v4989 = vlaneseq
        %v4990 = vshrl.u32 %v4989, 7
        %v4991 = vsub.s32 %v4988, %v4990
        %v4992 = vrot.slane %v4976, %v4991
        %v4994 = vunpack.c.l.s4 1966171168
        %v4995 = vunpack.c.0.s8 %v4994
        %v4996 = vlaneseq
        %v4997 = vshrl.u32 %v4996, 7
        %v4998 = vsub.s32 %v4995, %v4997
        %v4999 = vrot.slane %v4983, %v4998
        %v5001 = vunpack.c.l.s4 1966171168
        %v5002 = vunpack.c.0.s8 %v5001
        %v5003 = vlaneseq
        %v5004 = vshrl.u32 %v5003, 7
        %v5005 = vsub.s32 %v5002, %v5004
        %v5006 = vrot.slane %v4984, %v5005
        %v5008 = vunpack.c.l.s4 1966171168
        %v5009 = vunpack.c.0.s8 %v5008
        %v5010 = vlaneseq
        %v5011 = vshrl.u32 %v5010, 7
        %v5012 = vsub.s32 %v5009, %v5011
        %v5013 = vrot.slane %v4985, %v5012
        %v5014 = vcombine.high %v4992, %v4992
        %v5015 = vcombine.high %v4999, %v4999
        %v5016 = vcombine.high %v5006, %v5006
        %v5017 = vcombine.high %v5013, %v5013
        %5082 = vst.msk [vmem:[#allocation5 + $0x3] sm:$0x1] %vm3473, %v4649
        %5083 = vst.msk [vmem:[#allocation5 + $0x13] sm:$0x1] %vm3473, %v4663
        %5084 = vst.msk [vmem:[#allocation5 + $0x23] sm:$0x1] %vm3473, %v4671
        %5085 = vst.msk [vmem:[#allocation5 + $0x33] sm:$0x1] %vm3473, %v4673
        %5086 = vst.msk [vmem:[#allocation5 + $0x43] sm:$0x1] %vm3473, %v4656
        %5087 = vst.msk [vmem:[#allocation5 + $0x53] sm:$0x1] %vm3473, %v4670
        %5088 = vst.msk [vmem:[#allocation5 + $0x63] sm:$0x1] %vm3473, %v4672
        %5089 = vst.msk [vmem:[#allocation5 + $0x73] sm:$0x1] %vm3473, %v4674
        %5090 = vst.msk [vmem:[#allocation5 + $0x83] sm:$0x1] %vm3473, %v4698
        %5091 = vst.msk [vmem:[#allocation5 + $0x93] sm:$0x1] %vm3473, %v4712
        %5092 = vst.msk [vmem:[#allocation5 + $0xa3] sm:$0x1] %vm3473, %v4720
        %5093 = vst.msk [vmem:[#allocation5 + $0xb3] sm:$0x1] %vm3473, %v4722
        %5094 = vst.msk [vmem:[#allocation5 + $0xc3] sm:$0x1] %vm3473, %v4705
        %5095 = vst.msk [vmem:[#allocation5 + $0xd3] sm:$0x1] %vm3473, %v4719
        %5096 = vst.msk [vmem:[#allocation5 + $0xe3] sm:$0x1] %vm3473, %v4721
        %5097 = vst.msk [vmem:[#allocation5 + $0xf3] sm:$0x1] %vm3473, %v4723
        %5098 = vst.msk [vmem:[#allocation5 + $0x103] sm:$0x1] %vm3473, %v4747
        %5099 = vst.msk [vmem:[#allocation5 + $0x113] sm:$0x1] %vm3473, %v4761
        %5100 = vst.msk [vmem:[#allocation5 + $0x123] sm:$0x1] %vm3473, %v4769
        %5101 = vst.msk [vmem:[#allocation5 + $0x133] sm:$0x1] %vm3473, %v4771
        %5102 = vst.msk [vmem:[#allocation5 + $0x143] sm:$0x1] %vm3473, %v4754
        %5103 = vst.msk [vmem:[#allocation5 + $0x153] sm:$0x1] %vm3473, %v4768
        %5104 = vst.msk [vmem:[#allocation5 + $0x163] sm:$0x1] %vm3473, %v4770
        %5105 = vst.msk [vmem:[#allocation5 + $0x173] sm:$0x1] %vm3473, %v4772
        %5106 = vst.msk [vmem:[#allocation5 + $0x183] sm:$0x1] %vm3473, %v4796
        %5107 = vst.msk [vmem:[#allocation5 + $0x193] sm:$0x1] %vm3473, %v4810
        %5108 = vst.msk [vmem:[#allocation5 + $0x1a3] sm:$0x1] %vm3473, %v4818
        %5109 = vst.msk [vmem:[#allocation5 + $0x1b3] sm:$0x1] %vm3473, %v4820
        %5110 = vst.msk [vmem:[#allocation5 + $0x1c3] sm:$0x1] %vm3473, %v4803
        %5111 = vst.msk [vmem:[#allocation5 + $0x1d3] sm:$0x1] %vm3473, %v4817
        %5112 = vst.msk [vmem:[#allocation5 + $0x1e3] sm:$0x1] %vm3473, %v4819
        %5113 = vst.msk [vmem:[#allocation5 + $0x1f3] sm:$0x1] %vm3473, %v4821
        %5114 = vst.msk [vmem:[#allocation5 + $0x203] sm:$0x1] %vm3473, %v4845
        %5115 = vst.msk [vmem:[#allocation5 + $0x213] sm:$0x1] %vm3473, %v4859
        %5116 = vst.msk [vmem:[#allocation5 + $0x223] sm:$0x1] %vm3473, %v4867
        %5117 = vst.msk [vmem:[#allocation5 + $0x233] sm:$0x1] %vm3473, %v4869
        %5118 = vst.msk [vmem:[#allocation5 + $0x243] sm:$0x1] %vm3473, %v4852
        %5119 = vst.msk [vmem:[#allocation5 + $0x253] sm:$0x1] %vm3473, %v4866
        %5120 = vst.msk [vmem:[#allocation5 + $0x263] sm:$0x1] %vm3473, %v4868
        %5121 = vst.msk [vmem:[#allocation5 + $0x273] sm:$0x1] %vm3473, %v4870
        %5122 = vst.msk [vmem:[#allocation5 + $0x283] sm:$0x1] %vm3473, %v4894
        %5123 = vst.msk [vmem:[#allocation5 + $0x293] sm:$0x1] %vm3473, %v4908
        %5124 = vst.msk [vmem:[#allocation5 + $0x2a3] sm:$0x1] %vm3473, %v4916
        %5125 = vst.msk [vmem:[#allocation5 + $0x2b3] sm:$0x1] %vm3473, %v4918
        %5126 = vst.msk [vmem:[#allocation5 + $0x2c3] sm:$0x1] %vm3473, %v4901
        %5127 = vst.msk [vmem:[#allocation5 + $0x2d3] sm:$0x1] %vm3473, %v4915
        %5128 = vst.msk [vmem:[#allocation5 + $0x2e3] sm:$0x1] %vm3473, %v4917
        %5129 = vst.msk [vmem:[#allocation5 + $0x2f3] sm:$0x1] %vm3473, %v4919
        %5130 = vst.msk [vmem:[#allocation5 + $0x303] sm:$0x1] %vm3473, %v4943
        %5131 = vst.msk [vmem:[#allocation5 + $0x313] sm:$0x1] %vm3473, %v4957
        %5132 = vst.msk [vmem:[#allocation5 + $0x323] sm:$0x1] %vm3473, %v4965
        %5133 = vst.msk [vmem:[#allocation5 + $0x333] sm:$0x1] %vm3473, %v4967
        %5134 = vst.msk [vmem:[#allocation5 + $0x343] sm:$0x1] %vm3473, %v4950
        %5135 = vst.msk [vmem:[#allocation5 + $0x353] sm:$0x1] %vm3473, %v4964
        %5136 = vst.msk [vmem:[#allocation5 + $0x363] sm:$0x1] %vm3473, %v4966
        %5137 = vst.msk [vmem:[#allocation5 + $0x373] sm:$0x1] %vm3473, %v4968
        %5138 = vst.msk [vmem:[#allocation5 + $0x383] sm:$0x1] %vm3473, %v4992
        %5139 = vst.msk [vmem:[#allocation5 + $0x393] sm:$0x1] %vm3473, %v5006
        %5140 = vst.msk [vmem:[#allocation5 + $0x3a3] sm:$0x1] %vm3473, %v5014
        %5141 = vst.msk [vmem:[#allocation5 + $0x3b3] sm:$0x1] %vm3473, %v5016
        %5142 = vst.msk [vmem:[#allocation5 + $0x3c3] sm:$0x1] %vm3473, %v4999
        %5143 = vst.msk [vmem:[#allocation5 + $0x3d3] sm:$0x1] %vm3473, %v5013
        %5144 = vst.msk [vmem:[#allocation5 + $0x3e3] sm:$0x1] %vm3473, %v5015
        %5145 = vst.msk [vmem:[#allocation5 + $0x3f3] sm:$0x1] %vm3473, %v5017
        %v5146 = vld [vmem:[%s2992 + $0x1] sm:$0xff]
        %v5147 = vld [vmem:[%s2992 + $0x11] sm:$0xff]
        %v5148 = vld [vmem:[%s2992 + $0x21] sm:$0xff]
        %v5149 = vld [vmem:[%s2992 + $0x31] sm:$0xff]
        %v5150 = vld [vmem:[%s2992 + $0x41] sm:$0xff]
        %v5151 = vld [vmem:[%s2992 + $0x51] sm:$0xff]
        %v5152 = vld [vmem:[%s2992 + $0x61] sm:$0xff]
        %v5153 = vld [vmem:[%s2992 + $0x71] sm:$0xff]
        %v5162 = vcombine.high %v5146, %v5146
        %v5164 = vunpack.c.l.s4 1966171168
        %v5165 = vunpack.c.0.s8 %v5164
        %v5166 = vlaneseq
        %v5167 = vshrl.u32 %v5166, 7
        %v5168 = vsub.s32 %v5165, %v5167
        %v5169 = vrot.slane %v5146, %v5168
        %v5171 = vunpack.c.l.s4 1966171168
        %v5172 = vunpack.c.0.s8 %v5171
        %v5173 = vlaneseq
        %v5174 = vshrl.u32 %v5173, 7
        %v5175 = vsub.s32 %v5172, %v5174
        %v5176 = vrot.slane %v5162, %v5175
        %v5177 = vcombine.high %v5169, %v5169
        %v5178 = vcombine.high %v5176, %v5176
        %v5180 = vunpack.c.l.s4 1966171168
        %v5181 = vunpack.c.0.s8 %v5180
        %v5182 = vlaneseq
        %v5183 = vshrl.u32 %v5182, 7
        %v5184 = vsub.s32 %v5181, %v5183
        %v5185 = vrot.slane %v5169, %v5184
        %v5187 = vunpack.c.l.s4 1966171168
        %v5188 = vunpack.c.0.s8 %v5187
        %v5189 = vlaneseq
        %v5190 = vshrl.u32 %v5189, 7
        %v5191 = vsub.s32 %v5188, %v5190
        %v5192 = vrot.slane %v5176, %v5191
        %v5194 = vunpack.c.l.s4 1966171168
        %v5195 = vunpack.c.0.s8 %v5194
        %v5196 = vlaneseq
        %v5197 = vshrl.u32 %v5196, 7
        %v5198 = vsub.s32 %v5195, %v5197
        %v5199 = vrot.slane %v5177, %v5198
        %v5201 = vunpack.c.l.s4 1966171168
        %v5202 = vunpack.c.0.s8 %v5201
        %v5203 = vlaneseq
        %v5204 = vshrl.u32 %v5203, 7
        %v5205 = vsub.s32 %v5202, %v5204
        %v5206 = vrot.slane %v5178, %v5205
        %v5207 = vcombine.high %v5185, %v5185
        %v5208 = vcombine.high %v5192, %v5192
        %v5209 = vcombine.high %v5199, %v5199
        %v5210 = vcombine.high %v5206, %v5206
        %v5211 = vcombine.high %v5147, %v5147
        %v5213 = vunpack.c.l.s4 1966171168
        %v5214 = vunpack.c.0.s8 %v5213
        %v5215 = vlaneseq
        %v5216 = vshrl.u32 %v5215, 7
        %v5217 = vsub.s32 %v5214, %v5216
        %v5218 = vrot.slane %v5147, %v5217
        %v5220 = vunpack.c.l.s4 1966171168
        %v5221 = vunpack.c.0.s8 %v5220
        %v5222 = vlaneseq
        %v5223 = vshrl.u32 %v5222, 7
        %v5224 = vsub.s32 %v5221, %v5223
        %v5225 = vrot.slane %v5211, %v5224
        %v5226 = vcombine.high %v5218, %v5218
        %v5227 = vcombine.high %v5225, %v5225
        %v5229 = vunpack.c.l.s4 1966171168
        %v5230 = vunpack.c.0.s8 %v5229
        %v5231 = vlaneseq
        %v5232 = vshrl.u32 %v5231, 7
        %v5233 = vsub.s32 %v5230, %v5232
        %v5234 = vrot.slane %v5218, %v5233
        %v5236 = vunpack.c.l.s4 1966171168
        %v5237 = vunpack.c.0.s8 %v5236
        %v5238 = vlaneseq
        %v5239 = vshrl.u32 %v5238, 7
        %v5240 = vsub.s32 %v5237, %v5239
        %v5241 = vrot.slane %v5225, %v5240
        %v5243 = vunpack.c.l.s4 1966171168
        %v5244 = vunpack.c.0.s8 %v5243
        %v5245 = vlaneseq
        %v5246 = vshrl.u32 %v5245, 7
        %v5247 = vsub.s32 %v5244, %v5246
        %v5248 = vrot.slane %v5226, %v5247
        %v5250 = vunpack.c.l.s4 1966171168
        %v5251 = vunpack.c.0.s8 %v5250
        %v5252 = vlaneseq
        %v5253 = vshrl.u32 %v5252, 7
        %v5254 = vsub.s32 %v5251, %v5253
        %v5255 = vrot.slane %v5227, %v5254
        %v5256 = vcombine.high %v5234, %v5234
        %v5257 = vcombine.high %v5241, %v5241
        %v5258 = vcombine.high %v5248, %v5248
        %v5259 = vcombine.high %v5255, %v5255
        %v5260 = vcombine.high %v5148, %v5148
        %v5262 = vunpack.c.l.s4 1966171168
        %v5263 = vunpack.c.0.s8 %v5262
        %v5264 = vlaneseq
        %v5265 = vshrl.u32 %v5264, 7
        %v5266 = vsub.s32 %v5263, %v5265
        %v5267 = vrot.slane %v5148, %v5266
        %v5269 = vunpack.c.l.s4 1966171168
        %v5270 = vunpack.c.0.s8 %v5269
        %v5271 = vlaneseq
        %v5272 = vshrl.u32 %v5271, 7
        %v5273 = vsub.s32 %v5270, %v5272
        %v5274 = vrot.slane %v5260, %v5273
        %v5275 = vcombine.high %v5267, %v5267
        %v5276 = vcombine.high %v5274, %v5274
        %v5278 = vunpack.c.l.s4 1966171168
        %v5279 = vunpack.c.0.s8 %v5278
        %v5280 = vlaneseq
        %v5281 = vshrl.u32 %v5280, 7
        %v5282 = vsub.s32 %v5279, %v5281
        %v5283 = vrot.slane %v5267, %v5282
        %v5285 = vunpack.c.l.s4 1966171168
        %v5286 = vunpack.c.0.s8 %v5285
        %v5287 = vlaneseq
        %v5288 = vshrl.u32 %v5287, 7
        %v5289 = vsub.s32 %v5286, %v5288
        %v5290 = vrot.slane %v5274, %v5289
        %v5292 = vunpack.c.l.s4 1966171168
        %v5293 = vunpack.c.0.s8 %v5292
        %v5294 = vlaneseq
        %v5295 = vshrl.u32 %v5294, 7
        %v5296 = vsub.s32 %v5293, %v5295
        %v5297 = vrot.slane %v5275, %v5296
        %v5299 = vunpack.c.l.s4 1966171168
        %v5300 = vunpack.c.0.s8 %v5299
        %v5301 = vlaneseq
        %v5302 = vshrl.u32 %v5301, 7
        %v5303 = vsub.s32 %v5300, %v5302
        %v5304 = vrot.slane %v5276, %v5303
        %v5305 = vcombine.high %v5283, %v5283
        %v5306 = vcombine.high %v5290, %v5290
        %v5307 = vcombine.high %v5297, %v5297
        %v5308 = vcombine.high %v5304, %v5304
        %v5309 = vcombine.high %v5149, %v5149
        %v5311 = vunpack.c.l.s4 1966171168
        %v5312 = vunpack.c.0.s8 %v5311
        %v5313 = vlaneseq
        %v5314 = vshrl.u32 %v5313, 7
        %v5315 = vsub.s32 %v5312, %v5314
        %v5316 = vrot.slane %v5149, %v5315
        %v5318 = vunpack.c.l.s4 1966171168
        %v5319 = vunpack.c.0.s8 %v5318
        %v5320 = vlaneseq
        %v5321 = vshrl.u32 %v5320, 7
        %v5322 = vsub.s32 %v5319, %v5321
        %v5323 = vrot.slane %v5309, %v5322
        %v5324 = vcombine.high %v5316, %v5316
        %v5325 = vcombine.high %v5323, %v5323
        %v5327 = vunpack.c.l.s4 1966171168
        %v5328 = vunpack.c.0.s8 %v5327
        %v5329 = vlaneseq
        %v5330 = vshrl.u32 %v5329, 7
        %v5331 = vsub.s32 %v5328, %v5330
        %v5332 = vrot.slane %v5316, %v5331
        %v5334 = vunpack.c.l.s4 1966171168
        %v5335 = vunpack.c.0.s8 %v5334
        %v5336 = vlaneseq
        %v5337 = vshrl.u32 %v5336, 7
        %v5338 = vsub.s32 %v5335, %v5337
        %v5339 = vrot.slane %v5323, %v5338
        %v5341 = vunpack.c.l.s4 1966171168
        %v5342 = vunpack.c.0.s8 %v5341
        %v5343 = vlaneseq
        %v5344 = vshrl.u32 %v5343, 7
        %v5345 = vsub.s32 %v5342, %v5344
        %v5346 = vrot.slane %v5324, %v5345
        %v5348 = vunpack.c.l.s4 1966171168
        %v5349 = vunpack.c.0.s8 %v5348
        %v5350 = vlaneseq
        %v5351 = vshrl.u32 %v5350, 7
        %v5352 = vsub.s32 %v5349, %v5351
        %v5353 = vrot.slane %v5325, %v5352
        %v5354 = vcombine.high %v5332, %v5332
        %v5355 = vcombine.high %v5339, %v5339
        %v5356 = vcombine.high %v5346, %v5346
        %v5357 = vcombine.high %v5353, %v5353
        %v5358 = vcombine.high %v5150, %v5150
        %v5360 = vunpack.c.l.s4 1966171168
        %v5361 = vunpack.c.0.s8 %v5360
        %v5362 = vlaneseq
        %v5363 = vshrl.u32 %v5362, 7
        %v5364 = vsub.s32 %v5361, %v5363
        %v5365 = vrot.slane %v5150, %v5364
        %v5367 = vunpack.c.l.s4 1966171168
        %v5368 = vunpack.c.0.s8 %v5367
        %v5369 = vlaneseq
        %v5370 = vshrl.u32 %v5369, 7
        %v5371 = vsub.s32 %v5368, %v5370
        %v5372 = vrot.slane %v5358, %v5371
        %v5373 = vcombine.high %v5365, %v5365
        %v5374 = vcombine.high %v5372, %v5372
        %v5376 = vunpack.c.l.s4 1966171168
        %v5377 = vunpack.c.0.s8 %v5376
        %v5378 = vlaneseq
        %v5379 = vshrl.u32 %v5378, 7
        %v5380 = vsub.s32 %v5377, %v5379
        %v5381 = vrot.slane %v5365, %v5380
        %v5383 = vunpack.c.l.s4 1966171168
        %v5384 = vunpack.c.0.s8 %v5383
        %v5385 = vlaneseq
        %v5386 = vshrl.u32 %v5385, 7
        %v5387 = vsub.s32 %v5384, %v5386
        %v5388 = vrot.slane %v5372, %v5387
        %v5390 = vunpack.c.l.s4 1966171168
        %v5391 = vunpack.c.0.s8 %v5390
        %v5392 = vlaneseq
        %v5393 = vshrl.u32 %v5392, 7
        %v5394 = vsub.s32 %v5391, %v5393
        %v5395 = vrot.slane %v5373, %v5394
        %v5397 = vunpack.c.l.s4 1966171168
        %v5398 = vunpack.c.0.s8 %v5397
        %v5399 = vlaneseq
        %v5400 = vshrl.u32 %v5399, 7
        %v5401 = vsub.s32 %v5398, %v5400
        %v5402 = vrot.slane %v5374, %v5401
        %v5403 = vcombine.high %v5381, %v5381
        %v5404 = vcombine.high %v5388, %v5388
        %v5405 = vcombine.high %v5395, %v5395
        %v5406 = vcombine.high %v5402, %v5402
        %v5407 = vcombine.high %v5151, %v5151
        %v5409 = vunpack.c.l.s4 1966171168
        %v5410 = vunpack.c.0.s8 %v5409
        %v5411 = vlaneseq
        %v5412 = vshrl.u32 %v5411, 7
        %v5413 = vsub.s32 %v5410, %v5412
        %v5414 = vrot.slane %v5151, %v5413
        %v5416 = vunpack.c.l.s4 1966171168
        %v5417 = vunpack.c.0.s8 %v5416
        %v5418 = vlaneseq
        %v5419 = vshrl.u32 %v5418, 7
        %v5420 = vsub.s32 %v5417, %v5419
        %v5421 = vrot.slane %v5407, %v5420
        %v5422 = vcombine.high %v5414, %v5414
        %v5423 = vcombine.high %v5421, %v5421
        %v5425 = vunpack.c.l.s4 1966171168
        %v5426 = vunpack.c.0.s8 %v5425
        %v5427 = vlaneseq
        %v5428 = vshrl.u32 %v5427, 7
        %v5429 = vsub.s32 %v5426, %v5428
        %v5430 = vrot.slane %v5414, %v5429
        %v5432 = vunpack.c.l.s4 1966171168
        %v5433 = vunpack.c.0.s8 %v5432
        %v5434 = vlaneseq
        %v5435 = vshrl.u32 %v5434, 7
        %v5436 = vsub.s32 %v5433, %v5435
        %v5437 = vrot.slane %v5421, %v5436
        %v5439 = vunpack.c.l.s4 1966171168
        %v5440 = vunpack.c.0.s8 %v5439
        %v5441 = vlaneseq
        %v5442 = vshrl.u32 %v5441, 7
        %v5443 = vsub.s32 %v5440, %v5442
        %v5444 = vrot.slane %v5422, %v5443
        %v5446 = vunpack.c.l.s4 1966171168
        %v5447 = vunpack.c.0.s8 %v5446
        %v5448 = vlaneseq
        %v5449 = vshrl.u32 %v5448, 7
        %v5450 = vsub.s32 %v5447, %v5449
        %v5451 = vrot.slane %v5423, %v5450
        %v5452 = vcombine.high %v5430, %v5430
        %v5453 = vcombine.high %v5437, %v5437
        %v5454 = vcombine.high %v5444, %v5444
        %v5455 = vcombine.high %v5451, %v5451
        %v5456 = vcombine.high %v5152, %v5152
        %v5458 = vunpack.c.l.s4 1966171168
        %v5459 = vunpack.c.0.s8 %v5458
        %v5460 = vlaneseq
        %v5461 = vshrl.u32 %v5460, 7
        %v5462 = vsub.s32 %v5459, %v5461
        %v5463 = vrot.slane %v5152, %v5462
        %v5465 = vunpack.c.l.s4 1966171168
        %v5466 = vunpack.c.0.s8 %v5465
        %v5467 = vlaneseq
        %v5468 = vshrl.u32 %v5467, 7
        %v5469 = vsub.s32 %v5466, %v5468
        %v5470 = vrot.slane %v5456, %v5469
        %v5471 = vcombine.high %v5463, %v5463
        %v5472 = vcombine.high %v5470, %v5470
        %v5474 = vunpack.c.l.s4 1966171168
        %v5475 = vunpack.c.0.s8 %v5474
        %v5476 = vlaneseq
        %v5477 = vshrl.u32 %v5476, 7
        %v5478 = vsub.s32 %v5475, %v5477
        %v5479 = vrot.slane %v5463, %v5478
        %v5481 = vunpack.c.l.s4 1966171168
        %v5482 = vunpack.c.0.s8 %v5481
        %v5483 = vlaneseq
        %v5484 = vshrl.u32 %v5483, 7
        %v5485 = vsub.s32 %v5482, %v5484
        %v5486 = vrot.slane %v5470, %v5485
        %v5488 = vunpack.c.l.s4 1966171168
        %v5489 = vunpack.c.0.s8 %v5488
        %v5490 = vlaneseq
        %v5491 = vshrl.u32 %v5490, 7
        %v5492 = vsub.s32 %v5489, %v5491
        %v5493 = vrot.slane %v5471, %v5492
        %v5495 = vunpack.c.l.s4 1966171168
        %v5496 = vunpack.c.0.s8 %v5495
        %v5497 = vlaneseq
        %v5498 = vshrl.u32 %v5497, 7
        %v5499 = vsub.s32 %v5496, %v5498
        %v5500 = vrot.slane %v5472, %v5499
        %v5501 = vcombine.high %v5479, %v5479
        %v5502 = vcombine.high %v5486, %v5486
        %v5503 = vcombine.high %v5493, %v5493
        %v5504 = vcombine.high %v5500, %v5500
        %v5505 = vcombine.high %v5153, %v5153
        %v5507 = vunpack.c.l.s4 1966171168
        %v5508 = vunpack.c.0.s8 %v5507
        %v5509 = vlaneseq
        %v5510 = vshrl.u32 %v5509, 7
        %v5511 = vsub.s32 %v5508, %v5510
        %v5512 = vrot.slane %v5153, %v5511
        %v5514 = vunpack.c.l.s4 1966171168
        %v5515 = vunpack.c.0.s8 %v5514
        %v5516 = vlaneseq
        %v5517 = vshrl.u32 %v5516, 7
        %v5518 = vsub.s32 %v5515, %v5517
        %v5519 = vrot.slane %v5505, %v5518
        %v5520 = vcombine.high %v5512, %v5512
        %v5521 = vcombine.high %v5519, %v5519
        %v5523 = vunpack.c.l.s4 1966171168
        %v5524 = vunpack.c.0.s8 %v5523
        %v5525 = vlaneseq
        %v5526 = vshrl.u32 %v5525, 7
        %v5527 = vsub.s32 %v5524, %v5526
        %v5528 = vrot.slane %v5512, %v5527
        %v5530 = vunpack.c.l.s4 1966171168
        %v5531 = vunpack.c.0.s8 %v5530
        %v5532 = vlaneseq
        %v5533 = vshrl.u32 %v5532, 7
        %v5534 = vsub.s32 %v5531, %v5533
        %v5535 = vrot.slane %v5519, %v5534
        %v5537 = vunpack.c.l.s4 1966171168
        %v5538 = vunpack.c.0.s8 %v5537
        %v5539 = vlaneseq
        %v5540 = vshrl.u32 %v5539, 7
        %v5541 = vsub.s32 %v5538, %v5540
        %v5542 = vrot.slane %v5520, %v5541
        %v5544 = vunpack.c.l.s4 1966171168
        %v5545 = vunpack.c.0.s8 %v5544
        %v5546 = vlaneseq
        %v5547 = vshrl.u32 %v5546, 7
        %v5548 = vsub.s32 %v5545, %v5547
        %v5549 = vrot.slane %v5521, %v5548
        %v5550 = vcombine.high %v5528, %v5528
        %v5551 = vcombine.high %v5535, %v5535
        %v5552 = vcombine.high %v5542, %v5542
        %v5553 = vcombine.high %v5549, %v5549
        %5618 = vst.msk [vmem:[#allocation5 + $0x4] sm:$0x1] %vm3473, %v5185
        %5619 = vst.msk [vmem:[#allocation5 + $0x14] sm:$0x1] %vm3473, %v5199
        %5620 = vst.msk [vmem:[#allocation5 + $0x24] sm:$0x1] %vm3473, %v5207
        %5621 = vst.msk [vmem:[#allocation5 + $0x34] sm:$0x1] %vm3473, %v5209
        %5622 = vst.msk [vmem:[#allocation5 + $0x44] sm:$0x1] %vm3473, %v5192
        %5623 = vst.msk [vmem:[#allocation5 + $0x54] sm:$0x1] %vm3473, %v5206
        %5624 = vst.msk [vmem:[#allocation5 + $0x64] sm:$0x1] %vm3473, %v5208
        %5625 = vst.msk [vmem:[#allocation5 + $0x74] sm:$0x1] %vm3473, %v5210
        %5626 = vst.msk [vmem:[#allocation5 + $0x84] sm:$0x1] %vm3473, %v5234
        %5627 = vst.msk [vmem:[#allocation5 + $0x94] sm:$0x1] %vm3473, %v5248
        %5628 = vst.msk [vmem:[#allocation5 + $0xa4] sm:$0x1] %vm3473, %v5256
        %5629 = vst.msk [vmem:[#allocation5 + $0xb4] sm:$0x1] %vm3473, %v5258
        %5630 = vst.msk [vmem:[#allocation5 + $0xc4] sm:$0x1] %vm3473, %v5241
        %5631 = vst.msk [vmem:[#allocation5 + $0xd4] sm:$0x1] %vm3473, %v5255
        %5632 = vst.msk [vmem:[#allocation5 + $0xe4] sm:$0x1] %vm3473, %v5257
        %5633 = vst.msk [vmem:[#allocation5 + $0xf4] sm:$0x1] %vm3473, %v5259
        %5634 = vst.msk [vmem:[#allocation5 + $0x104] sm:$0x1] %vm3473, %v5283
        %5635 = vst.msk [vmem:[#allocation5 + $0x114] sm:$0x1] %vm3473, %v5297
        %5636 = vst.msk [vmem:[#allocation5 + $0x124] sm:$0x1] %vm3473, %v5305
        %5637 = vst.msk [vmem:[#allocation5 + $0x134] sm:$0x1] %vm3473, %v5307
        %5638 = vst.msk [vmem:[#allocation5 + $0x144] sm:$0x1] %vm3473, %v5290
        %5639 = vst.msk [vmem:[#allocation5 + $0x154] sm:$0x1] %vm3473, %v5304
        %5640 = vst.msk [vmem:[#allocation5 + $0x164] sm:$0x1] %vm3473, %v5306
        %5641 = vst.msk [vmem:[#allocation5 + $0x174] sm:$0x1] %vm3473, %v5308
        %5642 = vst.msk [vmem:[#allocation5 + $0x184] sm:$0x1] %vm3473, %v5332
        %5643 = vst.msk [vmem:[#allocation5 + $0x194] sm:$0x1] %vm3473, %v5346
        %5644 = vst.msk [vmem:[#allocation5 + $0x1a4] sm:$0x1] %vm3473, %v5354
        %5645 = vst.msk [vmem:[#allocation5 + $0x1b4] sm:$0x1] %vm3473, %v5356
        %5646 = vst.msk [vmem:[#allocation5 + $0x1c4] sm:$0x1] %vm3473, %v5339
        %5647 = vst.msk [vmem:[#allocation5 + $0x1d4] sm:$0x1] %vm3473, %v5353
        %5648 = vst.msk [vmem:[#allocation5 + $0x1e4] sm:$0x1] %vm3473, %v5355
        %5649 = vst.msk [vmem:[#allocation5 + $0x1f4] sm:$0x1] %vm3473, %v5357
        %5650 = vst.msk [vmem:[#allocation5 + $0x204] sm:$0x1] %vm3473, %v5381
        %5651 = vst.msk [vmem:[#allocation5 + $0x214] sm:$0x1] %vm3473, %v5395
        %5652 = vst.msk [vmem:[#allocation5 + $0x224] sm:$0x1] %vm3473, %v5403
        %5653 = vst.msk [vmem:[#allocation5 + $0x234] sm:$0x1] %vm3473, %v5405
        %5654 = vst.msk [vmem:[#allocation5 + $0x244] sm:$0x1] %vm3473, %v5388
        %5655 = vst.msk [vmem:[#allocation5 + $0x254] sm:$0x1] %vm3473, %v5402
        %5656 = vst.msk [vmem:[#allocation5 + $0x264] sm:$0x1] %vm3473, %v5404
        %5657 = vst.msk [vmem:[#allocation5 + $0x274] sm:$0x1] %vm3473, %v5406
        %5658 = vst.msk [vmem:[#allocation5 + $0x284] sm:$0x1] %vm3473, %v5430
        %5659 = vst.msk [vmem:[#allocation5 + $0x294] sm:$0x1] %vm3473, %v5444
        %5660 = vst.msk [vmem:[#allocation5 + $0x2a4] sm:$0x1] %vm3473, %v5452
        %5661 = vst.msk [vmem:[#allocation5 + $0x2b4] sm:$0x1] %vm3473, %v5454
        %5662 = vst.msk [vmem:[#allocation5 + $0x2c4] sm:$0x1] %vm3473, %v5437
        %5663 = vst.msk [vmem:[#allocation5 + $0x2d4] sm:$0x1] %vm3473, %v5451
        %5664 = vst.msk [vmem:[#allocation5 + $0x2e4] sm:$0x1] %vm3473, %v5453
        %5665 = vst.msk [vmem:[#allocation5 + $0x2f4] sm:$0x1] %vm3473, %v5455
        %5666 = vst.msk [vmem:[#allocation5 + $0x304] sm:$0x1] %vm3473, %v5479
        %5667 = vst.msk [vmem:[#allocation5 + $0x314] sm:$0x1] %vm3473, %v5493
        %5668 = vst.msk [vmem:[#allocation5 + $0x324] sm:$0x1] %vm3473, %v5501
        %5669 = vst.msk [vmem:[#allocation5 + $0x334] sm:$0x1] %vm3473, %v5503
        %5670 = vst.msk [vmem:[#allocation5 + $0x344] sm:$0x1] %vm3473, %v5486
        %5671 = vst.msk [vmem:[#allocation5 + $0x354] sm:$0x1] %vm3473, %v5500
        %5672 = vst.msk [vmem:[#allocation5 + $0x364] sm:$0x1] %vm3473, %v5502
        %5673 = vst.msk [vmem:[#allocation5 + $0x374] sm:$0x1] %vm3473, %v5504
        %5674 = vst.msk [vmem:[#allocation5 + $0x384] sm:$0x1] %vm3473, %v5528
        %5675 = vst.msk [vmem:[#allocation5 + $0x394] sm:$0x1] %vm3473, %v5542
        %5676 = vst.msk [vmem:[#allocation5 + $0x3a4] sm:$0x1] %vm3473, %v5550
        %5677 = vst.msk [vmem:[#allocation5 + $0x3b4] sm:$0x1] %vm3473, %v5552
        %5678 = vst.msk [vmem:[#allocation5 + $0x3c4] sm:$0x1] %vm3473, %v5535
        %5679 = vst.msk [vmem:[#allocation5 + $0x3d4] sm:$0x1] %vm3473, %v5549
        %5680 = vst.msk [vmem:[#allocation5 + $0x3e4] sm:$0x1] %vm3473, %v5551
        %5681 = vst.msk [vmem:[#allocation5 + $0x3f4] sm:$0x1] %vm3473, %v5553
        %v5682 = vld [vmem:[%s2992 + $0x2] sm:$0xff]
        %v5683 = vld [vmem:[%s2992 + $0x12] sm:$0xff]
        %v5684 = vld [vmem:[%s2992 + $0x22] sm:$0xff]
        %v5685 = vld [vmem:[%s2992 + $0x32] sm:$0xff]
        %v5686 = vld [vmem:[%s2992 + $0x42] sm:$0xff]
        %v5687 = vld [vmem:[%s2992 + $0x52] sm:$0xff]
        %v5688 = vld [vmem:[%s2992 + $0x62] sm:$0xff]
        %v5689 = vld [vmem:[%s2992 + $0x72] sm:$0xff]
        %v5698 = vcombine.high %v5682, %v5682
        %v5700 = vunpack.c.l.s4 1966171168
        %v5701 = vunpack.c.0.s8 %v5700
        %v5702 = vlaneseq
        %v5703 = vshrl.u32 %v5702, 7
        %v5704 = vsub.s32 %v5701, %v5703
        %v5705 = vrot.slane %v5682, %v5704
        %v5707 = vunpack.c.l.s4 1966171168
        %v5708 = vunpack.c.0.s8 %v5707
        %v5709 = vlaneseq
        %v5710 = vshrl.u32 %v5709, 7
        %v5711 = vsub.s32 %v5708, %v5710
        %v5712 = vrot.slane %v5698, %v5711
        %v5713 = vcombine.high %v5705, %v5705
        %v5714 = vcombine.high %v5712, %v5712
        %v5716 = vunpack.c.l.s4 1966171168
        %v5717 = vunpack.c.0.s8 %v5716
        %v5718 = vlaneseq
        %v5719 = vshrl.u32 %v5718, 7
        %v5720 = vsub.s32 %v5717, %v5719
        %v5721 = vrot.slane %v5705, %v5720
        %v5723 = vunpack.c.l.s4 1966171168
        %v5724 = vunpack.c.0.s8 %v5723
        %v5725 = vlaneseq
        %v5726 = vshrl.u32 %v5725, 7
        %v5727 = vsub.s32 %v5724, %v5726
        %v5728 = vrot.slane %v5712, %v5727
        %v5730 = vunpack.c.l.s4 1966171168
        %v5731 = vunpack.c.0.s8 %v5730
        %v5732 = vlaneseq
        %v5733 = vshrl.u32 %v5732, 7
        %v5734 = vsub.s32 %v5731, %v5733
        %v5735 = vrot.slane %v5713, %v5734
        %v5737 = vunpack.c.l.s4 1966171168
        %v5738 = vunpack.c.0.s8 %v5737
        %v5739 = vlaneseq
        %v5740 = vshrl.u32 %v5739, 7
        %v5741 = vsub.s32 %v5738, %v5740
        %v5742 = vrot.slane %v5714, %v5741
        %v5743 = vcombine.high %v5721, %v5721
        %v5744 = vcombine.high %v5728, %v5728
        %v5745 = vcombine.high %v5735, %v5735
        %v5746 = vcombine.high %v5742, %v5742
        %v5747 = vcombine.high %v5683, %v5683
        %v5749 = vunpack.c.l.s4 1966171168
        %v5750 = vunpack.c.0.s8 %v5749
        %v5751 = vlaneseq
        %v5752 = vshrl.u32 %v5751, 7
        %v5753 = vsub.s32 %v5750, %v5752
        %v5754 = vrot.slane %v5683, %v5753
        %v5756 = vunpack.c.l.s4 1966171168
        %v5757 = vunpack.c.0.s8 %v5756
        %v5758 = vlaneseq
        %v5759 = vshrl.u32 %v5758, 7
        %v5760 = vsub.s32 %v5757, %v5759
        %v5761 = vrot.slane %v5747, %v5760
        %v5762 = vcombine.high %v5754, %v5754
        %v5763 = vcombine.high %v5761, %v5761
        %v5765 = vunpack.c.l.s4 1966171168
        %v5766 = vunpack.c.0.s8 %v5765
        %v5767 = vlaneseq
        %v5768 = vshrl.u32 %v5767, 7
        %v5769 = vsub.s32 %v5766, %v5768
        %v5770 = vrot.slane %v5754, %v5769
        %v5772 = vunpack.c.l.s4 1966171168
        %v5773 = vunpack.c.0.s8 %v5772
        %v5774 = vlaneseq
        %v5775 = vshrl.u32 %v5774, 7
        %v5776 = vsub.s32 %v5773, %v5775
        %v5777 = vrot.slane %v5761, %v5776
        %v5779 = vunpack.c.l.s4 1966171168
        %v5780 = vunpack.c.0.s8 %v5779
        %v5781 = vlaneseq
        %v5782 = vshrl.u32 %v5781, 7
        %v5783 = vsub.s32 %v5780, %v5782
        %v5784 = vrot.slane %v5762, %v5783
        %v5786 = vunpack.c.l.s4 1966171168
        %v5787 = vunpack.c.0.s8 %v5786
        %v5788 = vlaneseq
        %v5789 = vshrl.u32 %v5788, 7
        %v5790 = vsub.s32 %v5787, %v5789
        %v5791 = vrot.slane %v5763, %v5790
        %v5792 = vcombine.high %v5770, %v5770
        %v5793 = vcombine.high %v5777, %v5777
        %v5794 = vcombine.high %v5784, %v5784
        %v5795 = vcombine.high %v5791, %v5791
        %v5796 = vcombine.high %v5684, %v5684
        %v5798 = vunpack.c.l.s4 1966171168
        %v5799 = vunpack.c.0.s8 %v5798
        %v5800 = vlaneseq
        %v5801 = vshrl.u32 %v5800, 7
        %v5802 = vsub.s32 %v5799, %v5801
        %v5803 = vrot.slane %v5684, %v5802
        %v5805 = vunpack.c.l.s4 1966171168
        %v5806 = vunpack.c.0.s8 %v5805
        %v5807 = vlaneseq
        %v5808 = vshrl.u32 %v5807, 7
        %v5809 = vsub.s32 %v5806, %v5808
        %v5810 = vrot.slane %v5796, %v5809
        %v5811 = vcombine.high %v5803, %v5803
        %v5812 = vcombine.high %v5810, %v5810
        %v5814 = vunpack.c.l.s4 1966171168
        %v5815 = vunpack.c.0.s8 %v5814
        %v5816 = vlaneseq
        %v5817 = vshrl.u32 %v5816, 7
        %v5818 = vsub.s32 %v5815, %v5817
        %v5819 = vrot.slane %v5803, %v5818
        %v5821 = vunpack.c.l.s4 1966171168
        %v5822 = vunpack.c.0.s8 %v5821
        %v5823 = vlaneseq
        %v5824 = vshrl.u32 %v5823, 7
        %v5825 = vsub.s32 %v5822, %v5824
        %v5826 = vrot.slane %v5810, %v5825
        %v5828 = vunpack.c.l.s4 1966171168
        %v5829 = vunpack.c.0.s8 %v5828
        %v5830 = vlaneseq
        %v5831 = vshrl.u32 %v5830, 7
        %v5832 = vsub.s32 %v5829, %v5831
        %v5833 = vrot.slane %v5811, %v5832
        %v5835 = vunpack.c.l.s4 1966171168
        %v5836 = vunpack.c.0.s8 %v5835
        %v5837 = vlaneseq
        %v5838 = vshrl.u32 %v5837, 7
        %v5839 = vsub.s32 %v5836, %v5838
        %v5840 = vrot.slane %v5812, %v5839
        %v5841 = vcombine.high %v5819, %v5819
        %v5842 = vcombine.high %v5826, %v5826
        %v5843 = vcombine.high %v5833, %v5833
        %v5844 = vcombine.high %v5840, %v5840
        %v5845 = vcombine.high %v5685, %v5685
        %v5847 = vunpack.c.l.s4 1966171168
        %v5848 = vunpack.c.0.s8 %v5847
        %v5849 = vlaneseq
        %v5850 = vshrl.u32 %v5849, 7
        %v5851 = vsub.s32 %v5848, %v5850
        %v5852 = vrot.slane %v5685, %v5851
        %v5854 = vunpack.c.l.s4 1966171168
        %v5855 = vunpack.c.0.s8 %v5854
        %v5856 = vlaneseq
        %v5857 = vshrl.u32 %v5856, 7
        %v5858 = vsub.s32 %v5855, %v5857
        %v5859 = vrot.slane %v5845, %v5858
        %v5860 = vcombine.high %v5852, %v5852
        %v5861 = vcombine.high %v5859, %v5859
        %v5863 = vunpack.c.l.s4 1966171168
        %v5864 = vunpack.c.0.s8 %v5863
        %v5865 = vlaneseq
        %v5866 = vshrl.u32 %v5865, 7
        %v5867 = vsub.s32 %v5864, %v5866
        %v5868 = vrot.slane %v5852, %v5867
        %v5870 = vunpack.c.l.s4 1966171168
        %v5871 = vunpack.c.0.s8 %v5870
        %v5872 = vlaneseq
        %v5873 = vshrl.u32 %v5872, 7
        %v5874 = vsub.s32 %v5871, %v5873
        %v5875 = vrot.slane %v5859, %v5874
        %v5877 = vunpack.c.l.s4 1966171168
        %v5878 = vunpack.c.0.s8 %v5877
        %v5879 = vlaneseq
        %v5880 = vshrl.u32 %v5879, 7
        %v5881 = vsub.s32 %v5878, %v5880
        %v5882 = vrot.slane %v5860, %v5881
        %v5884 = vunpack.c.l.s4 1966171168
        %v5885 = vunpack.c.0.s8 %v5884
        %v5886 = vlaneseq
        %v5887 = vshrl.u32 %v5886, 7
        %v5888 = vsub.s32 %v5885, %v5887
        %v5889 = vrot.slane %v5861, %v5888
        %v5890 = vcombine.high %v5868, %v5868
        %v5891 = vcombine.high %v5875, %v5875
        %v5892 = vcombine.high %v5882, %v5882
        %v5893 = vcombine.high %v5889, %v5889
        %v5894 = vcombine.high %v5686, %v5686
        %v5896 = vunpack.c.l.s4 1966171168
        %v5897 = vunpack.c.0.s8 %v5896
        %v5898 = vlaneseq
        %v5899 = vshrl.u32 %v5898, 7
        %v5900 = vsub.s32 %v5897, %v5899
        %v5901 = vrot.slane %v5686, %v5900
        %v5903 = vunpack.c.l.s4 1966171168
        %v5904 = vunpack.c.0.s8 %v5903
        %v5905 = vlaneseq
        %v5906 = vshrl.u32 %v5905, 7
        %v5907 = vsub.s32 %v5904, %v5906
        %v5908 = vrot.slane %v5894, %v5907
        %v5909 = vcombine.high %v5901, %v5901
        %v5910 = vcombine.high %v5908, %v5908
        %v5912 = vunpack.c.l.s4 1966171168
        %v5913 = vunpack.c.0.s8 %v5912
        %v5914 = vlaneseq
        %v5915 = vshrl.u32 %v5914, 7
        %v5916 = vsub.s32 %v5913, %v5915
        %v5917 = vrot.slane %v5901, %v5916
        %v5919 = vunpack.c.l.s4 1966171168
        %v5920 = vunpack.c.0.s8 %v5919
        %v5921 = vlaneseq
        %v5922 = vshrl.u32 %v5921, 7
        %v5923 = vsub.s32 %v5920, %v5922
        %v5924 = vrot.slane %v5908, %v5923
        %v5926 = vunpack.c.l.s4 1966171168
        %v5927 = vunpack.c.0.s8 %v5926
        %v5928 = vlaneseq
        %v5929 = vshrl.u32 %v5928, 7
        %v5930 = vsub.s32 %v5927, %v5929
        %v5931 = vrot.slane %v5909, %v5930
        %v5933 = vunpack.c.l.s4 1966171168
        %v5934 = vunpack.c.0.s8 %v5933
        %v5935 = vlaneseq
        %v5936 = vshrl.u32 %v5935, 7
        %v5937 = vsub.s32 %v5934, %v5936
        %v5938 = vrot.slane %v5910, %v5937
        %v5939 = vcombine.high %v5917, %v5917
        %v5940 = vcombine.high %v5924, %v5924
        %v5941 = vcombine.high %v5931, %v5931
        %v5942 = vcombine.high %v5938, %v5938
        %v5943 = vcombine.high %v5687, %v5687
        %v5945 = vunpack.c.l.s4 1966171168
        %v5946 = vunpack.c.0.s8 %v5945
        %v5947 = vlaneseq
        %v5948 = vshrl.u32 %v5947, 7
        %v5949 = vsub.s32 %v5946, %v5948
        %v5950 = vrot.slane %v5687, %v5949
        %v5952 = vunpack.c.l.s4 1966171168
        %v5953 = vunpack.c.0.s8 %v5952
        %v5954 = vlaneseq
        %v5955 = vshrl.u32 %v5954, 7
        %v5956 = vsub.s32 %v5953, %v5955
        %v5957 = vrot.slane %v5943, %v5956
        %v5958 = vcombine.high %v5950, %v5950
        %v5959 = vcombine.high %v5957, %v5957
        %v5961 = vunpack.c.l.s4 1966171168
        %v5962 = vunpack.c.0.s8 %v5961
        %v5963 = vlaneseq
        %v5964 = vshrl.u32 %v5963, 7
        %v5965 = vsub.s32 %v5962, %v5964
        %v5966 = vrot.slane %v5950, %v5965
        %v5968 = vunpack.c.l.s4 1966171168
        %v5969 = vunpack.c.0.s8 %v5968
        %v5970 = vlaneseq
        %v5971 = vshrl.u32 %v5970, 7
        %v5972 = vsub.s32 %v5969, %v5971
        %v5973 = vrot.slane %v5957, %v5972
        %v5975 = vunpack.c.l.s4 1966171168
        %v5976 = vunpack.c.0.s8 %v5975
        %v5977 = vlaneseq
        %v5978 = vshrl.u32 %v5977, 7
        %v5979 = vsub.s32 %v5976, %v5978
        %v5980 = vrot.slane %v5958, %v5979
        %v5982 = vunpack.c.l.s4 1966171168
        %v5983 = vunpack.c.0.s8 %v5982
        %v5984 = vlaneseq
        %v5985 = vshrl.u32 %v5984, 7
        %v5986 = vsub.s32 %v5983, %v5985
        %v5987 = vrot.slane %v5959, %v5986
        %v5988 = vcombine.high %v5966, %v5966
        %v5989 = vcombine.high %v5973, %v5973
        %v5990 = vcombine.high %v5980, %v5980
        %v5991 = vcombine.high %v5987, %v5987
        %v5992 = vcombine.high %v5688, %v5688
        %v5994 = vunpack.c.l.s4 1966171168
        %v5995 = vunpack.c.0.s8 %v5994
        %v5996 = vlaneseq
        %v5997 = vshrl.u32 %v5996, 7
        %v5998 = vsub.s32 %v5995, %v5997
        %v5999 = vrot.slane %v5688, %v5998
        %v6001 = vunpack.c.l.s4 1966171168
        %v6002 = vunpack.c.0.s8 %v6001
        %v6003 = vlaneseq
        %v6004 = vshrl.u32 %v6003, 7
        %v6005 = vsub.s32 %v6002, %v6004
        %v6006 = vrot.slane %v5992, %v6005
        %v6007 = vcombine.high %v5999, %v5999
        %v6008 = vcombine.high %v6006, %v6006
        %v6010 = vunpack.c.l.s4 1966171168
        %v6011 = vunpack.c.0.s8 %v6010
        %v6012 = vlaneseq
        %v6013 = vshrl.u32 %v6012, 7
        %v6014 = vsub.s32 %v6011, %v6013
        %v6015 = vrot.slane %v5999, %v6014
        %v6017 = vunpack.c.l.s4 1966171168
        %v6018 = vunpack.c.0.s8 %v6017
        %v6019 = vlaneseq
        %v6020 = vshrl.u32 %v6019, 7
        %v6021 = vsub.s32 %v6018, %v6020
        %v6022 = vrot.slane %v6006, %v6021
        %v6024 = vunpack.c.l.s4 1966171168
        %v6025 = vunpack.c.0.s8 %v6024
        %v6026 = vlaneseq
        %v6027 = vshrl.u32 %v6026, 7
        %v6028 = vsub.s32 %v6025, %v6027
        %v6029 = vrot.slane %v6007, %v6028
        %v6031 = vunpack.c.l.s4 1966171168
        %v6032 = vunpack.c.0.s8 %v6031
        %v6033 = vlaneseq
        %v6034 = vshrl.u32 %v6033, 7
        %v6035 = vsub.s32 %v6032, %v6034
        %v6036 = vrot.slane %v6008, %v6035
        %v6037 = vcombine.high %v6015, %v6015
        %v6038 = vcombine.high %v6022, %v6022
        %v6039 = vcombine.high %v6029, %v6029
        %v6040 = vcombine.high %v6036, %v6036
        %v6041 = vcombine.high %v5689, %v5689
        %v6043 = vunpack.c.l.s4 1966171168
        %v6044 = vunpack.c.0.s8 %v6043
        %v6045 = vlaneseq
        %v6046 = vshrl.u32 %v6045, 7
        %v6047 = vsub.s32 %v6044, %v6046
        %v6048 = vrot.slane %v5689, %v6047
        %v6050 = vunpack.c.l.s4 1966171168
        %v6051 = vunpack.c.0.s8 %v6050
        %v6052 = vlaneseq
        %v6053 = vshrl.u32 %v6052, 7
        %v6054 = vsub.s32 %v6051, %v6053
        %v6055 = vrot.slane %v6041, %v6054
        %v6056 = vcombine.high %v6048, %v6048
        %v6057 = vcombine.high %v6055, %v6055
        %v6059 = vunpack.c.l.s4 1966171168
        %v6060 = vunpack.c.0.s8 %v6059
        %v6061 = vlaneseq
        %v6062 = vshrl.u32 %v6061, 7
        %v6063 = vsub.s32 %v6060, %v6062
        %v6064 = vrot.slane %v6048, %v6063
        %v6066 = vunpack.c.l.s4 1966171168
        %v6067 = vunpack.c.0.s8 %v6066
        %v6068 = vlaneseq
        %v6069 = vshrl.u32 %v6068, 7
        %v6070 = vsub.s32 %v6067, %v6069
        %v6071 = vrot.slane %v6055, %v6070
        %v6073 = vunpack.c.l.s4 1966171168
        %v6074 = vunpack.c.0.s8 %v6073
        %v6075 = vlaneseq
        %v6076 = vshrl.u32 %v6075, 7
        %v6077 = vsub.s32 %v6074, %v6076
        %v6078 = vrot.slane %v6056, %v6077
        %v6080 = vunpack.c.l.s4 1966171168
        %v6081 = vunpack.c.0.s8 %v6080
        %v6082 = vlaneseq
        %v6083 = vshrl.u32 %v6082, 7
        %v6084 = vsub.s32 %v6081, %v6083
        %v6085 = vrot.slane %v6057, %v6084
        %v6086 = vcombine.high %v6064, %v6064
        %v6087 = vcombine.high %v6071, %v6071
        %v6088 = vcombine.high %v6078, %v6078
        %v6089 = vcombine.high %v6085, %v6085
        %6154 = vst.msk [vmem:[#allocation5 + $0x5] sm:$0x1] %vm3473, %v5721
        %6155 = vst.msk [vmem:[#allocation5 + $0x15] sm:$0x1] %vm3473, %v5735
        %6156 = vst.msk [vmem:[#allocation5 + $0x25] sm:$0x1] %vm3473, %v5743
        %6157 = vst.msk [vmem:[#allocation5 + $0x35] sm:$0x1] %vm3473, %v5745
        %6158 = vst.msk [vmem:[#allocation5 + $0x45] sm:$0x1] %vm3473, %v5728
        %6159 = vst.msk [vmem:[#allocation5 + $0x55] sm:$0x1] %vm3473, %v5742
        %6160 = vst.msk [vmem:[#allocation5 + $0x65] sm:$0x1] %vm3473, %v5744
        %6161 = vst.msk [vmem:[#allocation5 + $0x75] sm:$0x1] %vm3473, %v5746
        %6162 = vst.msk [vmem:[#allocation5 + $0x85] sm:$0x1] %vm3473, %v5770
        %6163 = vst.msk [vmem:[#allocation5 + $0x95] sm:$0x1] %vm3473, %v5784
        %6164 = vst.msk [vmem:[#allocation5 + $0xa5] sm:$0x1] %vm3473, %v5792
        %6165 = vst.msk [vmem:[#allocation5 + $0xb5] sm:$0x1] %vm3473, %v5794
        %6166 = vst.msk [vmem:[#allocation5 + $0xc5] sm:$0x1] %vm3473, %v5777
        %6167 = vst.msk [vmem:[#allocation5 + $0xd5] sm:$0x1] %vm3473, %v5791
        %6168 = vst.msk [vmem:[#allocation5 + $0xe5] sm:$0x1] %vm3473, %v5793
        %6169 = vst.msk [vmem:[#allocation5 + $0xf5] sm:$0x1] %vm3473, %v5795
        %6170 = vst.msk [vmem:[#allocation5 + $0x105] sm:$0x1] %vm3473, %v5819
        %6171 = vst.msk [vmem:[#allocation5 + $0x115] sm:$0x1] %vm3473, %v5833
        %6172 = vst.msk [vmem:[#allocation5 + $0x125] sm:$0x1] %vm3473, %v5841
        %6173 = vst.msk [vmem:[#allocation5 + $0x135] sm:$0x1] %vm3473, %v5843
        %6174 = vst.msk [vmem:[#allocation5 + $0x145] sm:$0x1] %vm3473, %v5826
        %6175 = vst.msk [vmem:[#allocation5 + $0x155] sm:$0x1] %vm3473, %v5840
        %6176 = vst.msk [vmem:[#allocation5 + $0x165] sm:$0x1] %vm3473, %v5842
        %6177 = vst.msk [vmem:[#allocation5 + $0x175] sm:$0x1] %vm3473, %v5844
        %6178 = vst.msk [vmem:[#allocation5 + $0x185] sm:$0x1] %vm3473, %v5868
        %6179 = vst.msk [vmem:[#allocation5 + $0x195] sm:$0x1] %vm3473, %v5882
        %6180 = vst.msk [vmem:[#allocation5 + $0x1a5] sm:$0x1] %vm3473, %v5890
        %6181 = vst.msk [vmem:[#allocation5 + $0x1b5] sm:$0x1] %vm3473, %v5892
        %6182 = vst.msk [vmem:[#allocation5 + $0x1c5] sm:$0x1] %vm3473, %v5875
        %6183 = vst.msk [vmem:[#allocation5 + $0x1d5] sm:$0x1] %vm3473, %v5889
        %6184 = vst.msk [vmem:[#allocation5 + $0x1e5] sm:$0x1] %vm3473, %v5891
        %6185 = vst.msk [vmem:[#allocation5 + $0x1f5] sm:$0x1] %vm3473, %v5893
        %6186 = vst.msk [vmem:[#allocation5 + $0x205] sm:$0x1] %vm3473, %v5917
        %6187 = vst.msk [vmem:[#allocation5 + $0x215] sm:$0x1] %vm3473, %v5931
        %6188 = vst.msk [vmem:[#allocation5 + $0x225] sm:$0x1] %vm3473, %v5939
        %6189 = vst.msk [vmem:[#allocation5 + $0x235] sm:$0x1] %vm3473, %v5941
        %6190 = vst.msk [vmem:[#allocation5 + $0x245] sm:$0x1] %vm3473, %v5924
        %6191 = vst.msk [vmem:[#allocation5 + $0x255] sm:$0x1] %vm3473, %v5938
        %6192 = vst.msk [vmem:[#allocation5 + $0x265] sm:$0x1] %vm3473, %v5940
        %6193 = vst.msk [vmem:[#allocation5 + $0x275] sm:$0x1] %vm3473, %v5942
        %6194 = vst.msk [vmem:[#allocation5 + $0x285] sm:$0x1] %vm3473, %v5966
        %6195 = vst.msk [vmem:[#allocation5 + $0x295] sm:$0x1] %vm3473, %v5980
        %6196 = vst.msk [vmem:[#allocation5 + $0x2a5] sm:$0x1] %vm3473, %v5988
        %6197 = vst.msk [vmem:[#allocation5 + $0x2b5] sm:$0x1] %vm3473, %v5990
        %6198 = vst.msk [vmem:[#allocation5 + $0x2c5] sm:$0x1] %vm3473, %v5973
        %6199 = vst.msk [vmem:[#allocation5 + $0x2d5] sm:$0x1] %vm3473, %v5987
        %6200 = vst.msk [vmem:[#allocation5 + $0x2e5] sm:$0x1] %vm3473, %v5989
        %6201 = vst.msk [vmem:[#allocation5 + $0x2f5] sm:$0x1] %vm3473, %v5991
        %6202 = vst.msk [vmem:[#allocation5 + $0x305] sm:$0x1] %vm3473, %v6015
        %6203 = vst.msk [vmem:[#allocation5 + $0x315] sm:$0x1] %vm3473, %v6029
        %6204 = vst.msk [vmem:[#allocation5 + $0x325] sm:$0x1] %vm3473, %v6037
        %6205 = vst.msk [vmem:[#allocation5 + $0x335] sm:$0x1] %vm3473, %v6039
        %6206 = vst.msk [vmem:[#allocation5 + $0x345] sm:$0x1] %vm3473, %v6022
        %6207 = vst.msk [vmem:[#allocation5 + $0x355] sm:$0x1] %vm3473, %v6036
        %6208 = vst.msk [vmem:[#allocation5 + $0x365] sm:$0x1] %vm3473, %v6038
        %6209 = vst.msk [vmem:[#allocation5 + $0x375] sm:$0x1] %vm3473, %v6040
        %6210 = vst.msk [vmem:[#allocation5 + $0x385] sm:$0x1] %vm3473, %v6064
        %6211 = vst.msk [vmem:[#allocation5 + $0x395] sm:$0x1] %vm3473, %v6078
        %6212 = vst.msk [vmem:[#allocation5 + $0x3a5] sm:$0x1] %vm3473, %v6086
        %6213 = vst.msk [vmem:[#allocation5 + $0x3b5] sm:$0x1] %vm3473, %v6088
        %6214 = vst.msk [vmem:[#allocation5 + $0x3c5] sm:$0x1] %vm3473, %v6071
        %6215 = vst.msk [vmem:[#allocation5 + $0x3d5] sm:$0x1] %vm3473, %v6085
        %6216 = vst.msk [vmem:[#allocation5 + $0x3e5] sm:$0x1] %vm3473, %v6087
        %6217 = vst.msk [vmem:[#allocation5 + $0x3f5] sm:$0x1] %vm3473, %v6089
        %s6218 = scalar_lea.vmem [#allocation4], 32
        %v6219 = vld [vmem:[%s6218] sm:$0xff]
        %v6220 = vld [vmem:[%s6218 + $0x10] sm:$0xff]
        %v6221 = vld [vmem:[%s6218 + $0x20] sm:$0xff]
        %v6222 = vld [vmem:[%s6218 + $0x30] sm:$0xff]
        %v6223 = vld [vmem:[%s6218 + $0x40] sm:$0xff]
        %v6224 = vld [vmem:[%s6218 + $0x50] sm:$0xff]
        %v6225 = vld [vmem:[%s6218 + $0x60] sm:$0xff]
        %v6226 = vld [vmem:[%s6218 + $0x70] sm:$0xff]
        %v6235 = vcombine.high %v6219, %v6219
        %v6237 = vunpack.c.l.s4 1966171168
        %v6238 = vunpack.c.0.s8 %v6237
        %v6239 = vlaneseq
        %v6240 = vshrl.u32 %v6239, 7
        %v6241 = vsub.s32 %v6238, %v6240
        %v6242 = vrot.slane %v6219, %v6241
        %v6244 = vunpack.c.l.s4 1966171168
        %v6245 = vunpack.c.0.s8 %v6244
        %v6246 = vlaneseq
        %v6247 = vshrl.u32 %v6246, 7
        %v6248 = vsub.s32 %v6245, %v6247
        %v6249 = vrot.slane %v6235, %v6248
        %v6250 = vcombine.high %v6242, %v6242
        %v6251 = vcombine.high %v6249, %v6249
        %v6253 = vunpack.c.l.s4 1966171168
        %v6254 = vunpack.c.0.s8 %v6253
        %v6255 = vlaneseq
        %v6256 = vshrl.u32 %v6255, 7
        %v6257 = vsub.s32 %v6254, %v6256
        %v6258 = vrot.slane %v6242, %v6257
        %v6260 = vunpack.c.l.s4 1966171168
        %v6261 = vunpack.c.0.s8 %v6260
        %v6262 = vlaneseq
        %v6263 = vshrl.u32 %v6262, 7
        %v6264 = vsub.s32 %v6261, %v6263
        %v6265 = vrot.slane %v6249, %v6264
        %v6267 = vunpack.c.l.s4 1966171168
        %v6268 = vunpack.c.0.s8 %v6267
        %v6269 = vlaneseq
        %v6270 = vshrl.u32 %v6269, 7
        %v6271 = vsub.s32 %v6268, %v6270
        %v6272 = vrot.slane %v6250, %v6271
        %v6274 = vunpack.c.l.s4 1966171168
        %v6275 = vunpack.c.0.s8 %v6274
        %v6276 = vlaneseq
        %v6277 = vshrl.u32 %v6276, 7
        %v6278 = vsub.s32 %v6275, %v6277
        %v6279 = vrot.slane %v6251, %v6278
        %v6280 = vcombine.high %v6258, %v6258
        %v6281 = vcombine.high %v6265, %v6265
        %v6282 = vcombine.high %v6272, %v6272
        %v6283 = vcombine.high %v6279, %v6279
        %v6284 = vcombine.high %v6220, %v6220
        %v6286 = vunpack.c.l.s4 1966171168
        %v6287 = vunpack.c.0.s8 %v6286
        %v6288 = vlaneseq
        %v6289 = vshrl.u32 %v6288, 7
        %v6290 = vsub.s32 %v6287, %v6289
        %v6291 = vrot.slane %v6220, %v6290
        %v6293 = vunpack.c.l.s4 1966171168
        %v6294 = vunpack.c.0.s8 %v6293
        %v6295 = vlaneseq
        %v6296 = vshrl.u32 %v6295, 7
        %v6297 = vsub.s32 %v6294, %v6296
        %v6298 = vrot.slane %v6284, %v6297
        %v6299 = vcombine.high %v6291, %v6291
        %v6300 = vcombine.high %v6298, %v6298
        %v6302 = vunpack.c.l.s4 1966171168
        %v6303 = vunpack.c.0.s8 %v6302
        %v6304 = vlaneseq
        %v6305 = vshrl.u32 %v6304, 7
        %v6306 = vsub.s32 %v6303, %v6305
        %v6307 = vrot.slane %v6291, %v6306
        %v6309 = vunpack.c.l.s4 1966171168
        %v6310 = vunpack.c.0.s8 %v6309
        %v6311 = vlaneseq
        %v6312 = vshrl.u32 %v6311, 7
        %v6313 = vsub.s32 %v6310, %v6312
        %v6314 = vrot.slane %v6298, %v6313
        %v6316 = vunpack.c.l.s4 1966171168
        %v6317 = vunpack.c.0.s8 %v6316
        %v6318 = vlaneseq
        %v6319 = vshrl.u32 %v6318, 7
        %v6320 = vsub.s32 %v6317, %v6319
        %v6321 = vrot.slane %v6299, %v6320
        %v6323 = vunpack.c.l.s4 1966171168
        %v6324 = vunpack.c.0.s8 %v6323
        %v6325 = vlaneseq
        %v6326 = vshrl.u32 %v6325, 7
        %v6327 = vsub.s32 %v6324, %v6326
        %v6328 = vrot.slane %v6300, %v6327
        %v6329 = vcombine.high %v6307, %v6307
        %v6330 = vcombine.high %v6314, %v6314
        %v6331 = vcombine.high %v6321, %v6321
        %v6332 = vcombine.high %v6328, %v6328
        %v6333 = vcombine.high %v6221, %v6221
        %v6335 = vunpack.c.l.s4 1966171168
        %v6336 = vunpack.c.0.s8 %v6335
        %v6337 = vlaneseq
        %v6338 = vshrl.u32 %v6337, 7
        %v6339 = vsub.s32 %v6336, %v6338
        %v6340 = vrot.slane %v6221, %v6339
        %v6342 = vunpack.c.l.s4 1966171168
        %v6343 = vunpack.c.0.s8 %v6342
        %v6344 = vlaneseq
        %v6345 = vshrl.u32 %v6344, 7
        %v6346 = vsub.s32 %v6343, %v6345
        %v6347 = vrot.slane %v6333, %v6346
        %v6348 = vcombine.high %v6340, %v6340
        %v6349 = vcombine.high %v6347, %v6347
        %v6351 = vunpack.c.l.s4 1966171168
        %v6352 = vunpack.c.0.s8 %v6351
        %v6353 = vlaneseq
        %v6354 = vshrl.u32 %v6353, 7
        %v6355 = vsub.s32 %v6352, %v6354
        %v6356 = vrot.slane %v6340, %v6355
        %v6358 = vunpack.c.l.s4 1966171168
        %v6359 = vunpack.c.0.s8 %v6358
        %v6360 = vlaneseq
        %v6361 = vshrl.u32 %v6360, 7
        %v6362 = vsub.s32 %v6359, %v6361
        %v6363 = vrot.slane %v6347, %v6362
        %v6365 = vunpack.c.l.s4 1966171168
        %v6366 = vunpack.c.0.s8 %v6365
        %v6367 = vlaneseq
        %v6368 = vshrl.u32 %v6367, 7
        %v6369 = vsub.s32 %v6366, %v6368
        %v6370 = vrot.slane %v6348, %v6369
        %v6372 = vunpack.c.l.s4 1966171168
        %v6373 = vunpack.c.0.s8 %v6372
        %v6374 = vlaneseq
        %v6375 = vshrl.u32 %v6374, 7
        %v6376 = vsub.s32 %v6373, %v6375
        %v6377 = vrot.slane %v6349, %v6376
        %v6378 = vcombine.high %v6356, %v6356
        %v6379 = vcombine.high %v6363, %v6363
        %v6380 = vcombine.high %v6370, %v6370
        %v6381 = vcombine.high %v6377, %v6377
        %v6382 = vcombine.high %v6222, %v6222
        %v6384 = vunpack.c.l.s4 1966171168
        %v6385 = vunpack.c.0.s8 %v6384
        %v6386 = vlaneseq
        %v6387 = vshrl.u32 %v6386, 7
        %v6388 = vsub.s32 %v6385, %v6387
        %v6389 = vrot.slane %v6222, %v6388
        %v6391 = vunpack.c.l.s4 1966171168
        %v6392 = vunpack.c.0.s8 %v6391
        %v6393 = vlaneseq
        %v6394 = vshrl.u32 %v6393, 7
        %v6395 = vsub.s32 %v6392, %v6394
        %v6396 = vrot.slane %v6382, %v6395
        %v6397 = vcombine.high %v6389, %v6389
        %v6398 = vcombine.high %v6396, %v6396
        %v6400 = vunpack.c.l.s4 1966171168
        %v6401 = vunpack.c.0.s8 %v6400
        %v6402 = vlaneseq
        %v6403 = vshrl.u32 %v6402, 7
        %v6404 = vsub.s32 %v6401, %v6403
        %v6405 = vrot.slane %v6389, %v6404
        %v6407 = vunpack.c.l.s4 1966171168
        %v6408 = vunpack.c.0.s8 %v6407
        %v6409 = vlaneseq
        %v6410 = vshrl.u32 %v6409, 7
        %v6411 = vsub.s32 %v6408, %v6410
        %v6412 = vrot.slane %v6396, %v6411
        %v6414 = vunpack.c.l.s4 1966171168
        %v6415 = vunpack.c.0.s8 %v6414
        %v6416 = vlaneseq
        %v6417 = vshrl.u32 %v6416, 7
        %v6418 = vsub.s32 %v6415, %v6417
        %v6419 = vrot.slane %v6397, %v6418
        %v6421 = vunpack.c.l.s4 1966171168
        %v6422 = vunpack.c.0.s8 %v6421
        %v6423 = vlaneseq
        %v6424 = vshrl.u32 %v6423, 7
        %v6425 = vsub.s32 %v6422, %v6424
        %v6426 = vrot.slane %v6398, %v6425
        %v6427 = vcombine.high %v6405, %v6405
        %v6428 = vcombine.high %v6412, %v6412
        %v6429 = vcombine.high %v6419, %v6419
        %v6430 = vcombine.high %v6426, %v6426
        %v6431 = vcombine.high %v6223, %v6223
        %v6433 = vunpack.c.l.s4 1966171168
        %v6434 = vunpack.c.0.s8 %v6433
        %v6435 = vlaneseq
        %v6436 = vshrl.u32 %v6435, 7
        %v6437 = vsub.s32 %v6434, %v6436
        %v6438 = vrot.slane %v6223, %v6437
        %v6440 = vunpack.c.l.s4 1966171168
        %v6441 = vunpack.c.0.s8 %v6440
        %v6442 = vlaneseq
        %v6443 = vshrl.u32 %v6442, 7
        %v6444 = vsub.s32 %v6441, %v6443
        %v6445 = vrot.slane %v6431, %v6444
        %v6446 = vcombine.high %v6438, %v6438
        %v6447 = vcombine.high %v6445, %v6445
        %v6449 = vunpack.c.l.s4 1966171168
        %v6450 = vunpack.c.0.s8 %v6449
        %v6451 = vlaneseq
        %v6452 = vshrl.u32 %v6451, 7
        %v6453 = vsub.s32 %v6450, %v6452
        %v6454 = vrot.slane %v6438, %v6453
        %v6456 = vunpack.c.l.s4 1966171168
        %v6457 = vunpack.c.0.s8 %v6456
        %v6458 = vlaneseq
        %v6459 = vshrl.u32 %v6458, 7
        %v6460 = vsub.s32 %v6457, %v6459
        %v6461 = vrot.slane %v6445, %v6460
        %v6463 = vunpack.c.l.s4 1966171168
        %v6464 = vunpack.c.0.s8 %v6463
        %v6465 = vlaneseq
        %v6466 = vshrl.u32 %v6465, 7
        %v6467 = vsub.s32 %v6464, %v6466
        %v6468 = vrot.slane %v6446, %v6467
        %v6470 = vunpack.c.l.s4 1966171168
        %v6471 = vunpack.c.0.s8 %v6470
        %v6472 = vlaneseq
        %v6473 = vshrl.u32 %v6472, 7
        %v6474 = vsub.s32 %v6471, %v6473
        %v6475 = vrot.slane %v6447, %v6474
        %v6476 = vcombine.high %v6454, %v6454
        %v6477 = vcombine.high %v6461, %v6461
        %v6478 = vcombine.high %v6468, %v6468
        %v6479 = vcombine.high %v6475, %v6475
        %v6480 = vcombine.high %v6224, %v6224
        %v6482 = vunpack.c.l.s4 1966171168
        %v6483 = vunpack.c.0.s8 %v6482
        %v6484 = vlaneseq
        %v6485 = vshrl.u32 %v6484, 7
        %v6486 = vsub.s32 %v6483, %v6485
        %v6487 = vrot.slane %v6224, %v6486
        %v6489 = vunpack.c.l.s4 1966171168
        %v6490 = vunpack.c.0.s8 %v6489
        %v6491 = vlaneseq
        %v6492 = vshrl.u32 %v6491, 7
        %v6493 = vsub.s32 %v6490, %v6492
        %v6494 = vrot.slane %v6480, %v6493
        %v6495 = vcombine.high %v6487, %v6487
        %v6496 = vcombine.high %v6494, %v6494
        %v6498 = vunpack.c.l.s4 1966171168
        %v6499 = vunpack.c.0.s8 %v6498
        %v6500 = vlaneseq
        %v6501 = vshrl.u32 %v6500, 7
        %v6502 = vsub.s32 %v6499, %v6501
        %v6503 = vrot.slane %v6487, %v6502
        %v6505 = vunpack.c.l.s4 1966171168
        %v6506 = vunpack.c.0.s8 %v6505
        %v6507 = vlaneseq
        %v6508 = vshrl.u32 %v6507, 7
        %v6509 = vsub.s32 %v6506, %v6508
        %v6510 = vrot.slane %v6494, %v6509
        %v6512 = vunpack.c.l.s4 1966171168
        %v6513 = vunpack.c.0.s8 %v6512
        %v6514 = vlaneseq
        %v6515 = vshrl.u32 %v6514, 7
        %v6516 = vsub.s32 %v6513, %v6515
        %v6517 = vrot.slane %v6495, %v6516
        %v6519 = vunpack.c.l.s4 1966171168
        %v6520 = vunpack.c.0.s8 %v6519
        %v6521 = vlaneseq
        %v6522 = vshrl.u32 %v6521, 7
        %v6523 = vsub.s32 %v6520, %v6522
        %v6524 = vrot.slane %v6496, %v6523
        %v6525 = vcombine.high %v6503, %v6503
        %v6526 = vcombine.high %v6510, %v6510
        %v6527 = vcombine.high %v6517, %v6517
        %v6528 = vcombine.high %v6524, %v6524
        %v6529 = vcombine.high %v6225, %v6225
        %v6531 = vunpack.c.l.s4 1966171168
        %v6532 = vunpack.c.0.s8 %v6531
        %v6533 = vlaneseq
        %v6534 = vshrl.u32 %v6533, 7
        %v6535 = vsub.s32 %v6532, %v6534
        %v6536 = vrot.slane %v6225, %v6535
        %v6538 = vunpack.c.l.s4 1966171168
        %v6539 = vunpack.c.0.s8 %v6538
        %v6540 = vlaneseq
        %v6541 = vshrl.u32 %v6540, 7
        %v6542 = vsub.s32 %v6539, %v6541
        %v6543 = vrot.slane %v6529, %v6542
        %v6544 = vcombine.high %v6536, %v6536
        %v6545 = vcombine.high %v6543, %v6543
        %v6547 = vunpack.c.l.s4 1966171168
        %v6548 = vunpack.c.0.s8 %v6547
        %v6549 = vlaneseq
        %v6550 = vshrl.u32 %v6549, 7
        %v6551 = vsub.s32 %v6548, %v6550
        %v6552 = vrot.slane %v6536, %v6551
        %v6554 = vunpack.c.l.s4 1966171168
        %v6555 = vunpack.c.0.s8 %v6554
        %v6556 = vlaneseq
        %v6557 = vshrl.u32 %v6556, 7
        %v6558 = vsub.s32 %v6555, %v6557
        %v6559 = vrot.slane %v6543, %v6558
        %v6561 = vunpack.c.l.s4 1966171168
        %v6562 = vunpack.c.0.s8 %v6561
        %v6563 = vlaneseq
        %v6564 = vshrl.u32 %v6563, 7
        %v6565 = vsub.s32 %v6562, %v6564
        %v6566 = vrot.slane %v6544, %v6565
        %v6568 = vunpack.c.l.s4 1966171168
        %v6569 = vunpack.c.0.s8 %v6568
        %v6570 = vlaneseq
        %v6571 = vshrl.u32 %v6570, 7
        %v6572 = vsub.s32 %v6569, %v6571
        %v6573 = vrot.slane %v6545, %v6572
        %v6574 = vcombine.high %v6552, %v6552
        %v6575 = vcombine.high %v6559, %v6559
        %v6576 = vcombine.high %v6566, %v6566
        %v6577 = vcombine.high %v6573, %v6573
        %v6578 = vcombine.high %v6226, %v6226
        %v6580 = vunpack.c.l.s4 1966171168
        %v6581 = vunpack.c.0.s8 %v6580
        %v6582 = vlaneseq
        %v6583 = vshrl.u32 %v6582, 7
        %v6584 = vsub.s32 %v6581, %v6583
        %v6585 = vrot.slane %v6226, %v6584
        %v6587 = vunpack.c.l.s4 1966171168
        %v6588 = vunpack.c.0.s8 %v6587
        %v6589 = vlaneseq
        %v6590 = vshrl.u32 %v6589, 7
        %v6591 = vsub.s32 %v6588, %v6590
        %v6592 = vrot.slane %v6578, %v6591
        %v6593 = vcombine.high %v6585, %v6585
        %v6594 = vcombine.high %v6592, %v6592
        %v6596 = vunpack.c.l.s4 1966171168
        %v6597 = vunpack.c.0.s8 %v6596
        %v6598 = vlaneseq
        %v6599 = vshrl.u32 %v6598, 7
        %v6600 = vsub.s32 %v6597, %v6599
        %v6601 = vrot.slane %v6585, %v6600
        %v6603 = vunpack.c.l.s4 1966171168
        %v6604 = vunpack.c.0.s8 %v6603
        %v6605 = vlaneseq
        %v6606 = vshrl.u32 %v6605, 7
        %v6607 = vsub.s32 %v6604, %v6606
        %v6608 = vrot.slane %v6592, %v6607
        %v6610 = vunpack.c.l.s4 1966171168
        %v6611 = vunpack.c.0.s8 %v6610
        %v6612 = vlaneseq
        %v6613 = vshrl.u32 %v6612, 7
        %v6614 = vsub.s32 %v6611, %v6613
        %v6615 = vrot.slane %v6593, %v6614
        %v6617 = vunpack.c.l.s4 1966171168
        %v6618 = vunpack.c.0.s8 %v6617
        %v6619 = vlaneseq
        %v6620 = vshrl.u32 %v6619, 7
        %v6621 = vsub.s32 %v6618, %v6620
        %v6622 = vrot.slane %v6594, %v6621
        %v6623 = vcombine.high %v6601, %v6601
        %v6624 = vcombine.high %v6608, %v6608
        %v6625 = vcombine.high %v6615, %v6615
        %v6626 = vcombine.high %v6622, %v6622
        %6691 = vst.msk [vmem:[#allocation5 + $0x6] sm:$0x1] %vm3473, %v6258
        %6692 = vst.msk [vmem:[#allocation5 + $0x16] sm:$0x1] %vm3473, %v6272
        %6693 = vst.msk [vmem:[#allocation5 + $0x26] sm:$0x1] %vm3473, %v6280
        %6694 = vst.msk [vmem:[#allocation5 + $0x36] sm:$0x1] %vm3473, %v6282
        %6695 = vst.msk [vmem:[#allocation5 + $0x46] sm:$0x1] %vm3473, %v6265
        %6696 = vst.msk [vmem:[#allocation5 + $0x56] sm:$0x1] %vm3473, %v6279
        %6697 = vst.msk [vmem:[#allocation5 + $0x66] sm:$0x1] %vm3473, %v6281
        %6698 = vst.msk [vmem:[#allocation5 + $0x76] sm:$0x1] %vm3473, %v6283
        %6699 = vst.msk [vmem:[#allocation5 + $0x86] sm:$0x1] %vm3473, %v6307
        %6700 = vst.msk [vmem:[#allocation5 + $0x96] sm:$0x1] %vm3473, %v6321
        %6701 = vst.msk [vmem:[#allocation5 + $0xa6] sm:$0x1] %vm3473, %v6329
        %6702 = vst.msk [vmem:[#allocation5 + $0xb6] sm:$0x1] %vm3473, %v6331
        %6703 = vst.msk [vmem:[#allocation5 + $0xc6] sm:$0x1] %vm3473, %v6314
        %6704 = vst.msk [vmem:[#allocation5 + $0xd6] sm:$0x1] %vm3473, %v6328
        %6705 = vst.msk [vmem:[#allocation5 + $0xe6] sm:$0x1] %vm3473, %v6330
        %6706 = vst.msk [vmem:[#allocation5 + $0xf6] sm:$0x1] %vm3473, %v6332
        %6707 = vst.msk [vmem:[#allocation5 + $0x106] sm:$0x1] %vm3473, %v6356
        %6708 = vst.msk [vmem:[#allocation5 + $0x116] sm:$0x1] %vm3473, %v6370
        %6709 = vst.msk [vmem:[#allocation5 + $0x126] sm:$0x1] %vm3473, %v6378
        %6710 = vst.msk [vmem:[#allocation5 + $0x136] sm:$0x1] %vm3473, %v6380
        %6711 = vst.msk [vmem:[#allocation5 + $0x146] sm:$0x1] %vm3473, %v6363
        %6712 = vst.msk [vmem:[#allocation5 + $0x156] sm:$0x1] %vm3473, %v6377
        %6713 = vst.msk [vmem:[#allocation5 + $0x166] sm:$0x1] %vm3473, %v6379
        %6714 = vst.msk [vmem:[#allocation5 + $0x176] sm:$0x1] %vm3473, %v6381
        %6715 = vst.msk [vmem:[#allocation5 + $0x186] sm:$0x1] %vm3473, %v6405
        %6716 = vst.msk [vmem:[#allocation5 + $0x196] sm:$0x1] %vm3473, %v6419
        %6717 = vst.msk [vmem:[#allocation5 + $0x1a6] sm:$0x1] %vm3473, %v6427
        %6718 = vst.msk [vmem:[#allocation5 + $0x1b6] sm:$0x1] %vm3473, %v6429
        %6719 = vst.msk [vmem:[#allocation5 + $0x1c6] sm:$0x1] %vm3473, %v6412
        %6720 = vst.msk [vmem:[#allocation5 + $0x1d6] sm:$0x1] %vm3473, %v6426
        %6721 = vst.msk [vmem:[#allocation5 + $0x1e6] sm:$0x1] %vm3473, %v6428
        %6722 = vst.msk [vmem:[#allocation5 + $0x1f6] sm:$0x1] %vm3473, %v6430
        %6723 = vst.msk [vmem:[#allocation5 + $0x206] sm:$0x1] %vm3473, %v6454
        %6724 = vst.msk [vmem:[#allocation5 + $0x216] sm:$0x1] %vm3473, %v6468
        %6725 = vst.msk [vmem:[#allocation5 + $0x226] sm:$0x1] %vm3473, %v6476
        %6726 = vst.msk [vmem:[#allocation5 + $0x236] sm:$0x1] %vm3473, %v6478
        %6727 = vst.msk [vmem:[#allocation5 + $0x246] sm:$0x1] %vm3473, %v6461
        %6728 = vst.msk [vmem:[#allocation5 + $0x256] sm:$0x1] %vm3473, %v6475
        %6729 = vst.msk [vmem:[#allocation5 + $0x266] sm:$0x1] %vm3473, %v6477
        %6730 = vst.msk [vmem:[#allocation5 + $0x276] sm:$0x1] %vm3473, %v6479
        %6731 = vst.msk [vmem:[#allocation5 + $0x286] sm:$0x1] %vm3473, %v6503
        %6732 = vst.msk [vmem:[#allocation5 + $0x296] sm:$0x1] %vm3473, %v6517
        %6733 = vst.msk [vmem:[#allocation5 + $0x2a6] sm:$0x1] %vm3473, %v6525
        %6734 = vst.msk [vmem:[#allocation5 + $0x2b6] sm:$0x1] %vm3473, %v6527
        %6735 = vst.msk [vmem:[#allocation5 + $0x2c6] sm:$0x1] %vm3473, %v6510
        %6736 = vst.msk [vmem:[#allocation5 + $0x2d6] sm:$0x1] %vm3473, %v6524
        %6737 = vst.msk [vmem:[#allocation5 + $0x2e6] sm:$0x1] %vm3473, %v6526
        %6738 = vst.msk [vmem:[#allocation5 + $0x2f6] sm:$0x1] %vm3473, %v6528
        %6739 = vst.msk [vmem:[#allocation5 + $0x306] sm:$0x1] %vm3473, %v6552
        %6740 = vst.msk [vmem:[#allocation5 + $0x316] sm:$0x1] %vm3473, %v6566
        %6741 = vst.msk [vmem:[#allocation5 + $0x326] sm:$0x1] %vm3473, %v6574
        %6742 = vst.msk [vmem:[#allocation5 + $0x336] sm:$0x1] %vm3473, %v6576
        %6743 = vst.msk [vmem:[#allocation5 + $0x346] sm:$0x1] %vm3473, %v6559
        %6744 = vst.msk [vmem:[#allocation5 + $0x356] sm:$0x1] %vm3473, %v6573
        %6745 = vst.msk [vmem:[#allocation5 + $0x366] sm:$0x1] %vm3473, %v6575
        %6746 = vst.msk [vmem:[#allocation5 + $0x376] sm:$0x1] %vm3473, %v6577
        %6747 = vst.msk [vmem:[#allocation5 + $0x386] sm:$0x1] %vm3473, %v6601
        %6748 = vst.msk [vmem:[#allocation5 + $0x396] sm:$0x1] %vm3473, %v6615
        %6749 = vst.msk [vmem:[#allocation5 + $0x3a6] sm:$0x1] %vm3473, %v6623
        %6750 = vst.msk [vmem:[#allocation5 + $0x3b6] sm:$0x1] %vm3473, %v6625
        %6751 = vst.msk [vmem:[#allocation5 + $0x3c6] sm:$0x1] %vm3473, %v6608
        %6752 = vst.msk [vmem:[#allocation5 + $0x3d6] sm:$0x1] %vm3473, %v6622
        %6753 = vst.msk [vmem:[#allocation5 + $0x3e6] sm:$0x1] %vm3473, %v6624
        %6754 = vst.msk [vmem:[#allocation5 + $0x3f6] sm:$0x1] %vm3473, %v6626
        %v6755 = vld [vmem:[%s6218 + $0x1] sm:$0xff]
        %v6756 = vld [vmem:[%s6218 + $0x11] sm:$0xff]
        %v6757 = vld [vmem:[%s6218 + $0x21] sm:$0xff]
        %v6758 = vld [vmem:[%s6218 + $0x31] sm:$0xff]
        %v6759 = vld [vmem:[%s6218 + $0x41] sm:$0xff]
        %v6760 = vld [vmem:[%s6218 + $0x51] sm:$0xff]
        %v6761 = vld [vmem:[%s6218 + $0x61] sm:$0xff]
        %v6762 = vld [vmem:[%s6218 + $0x71] sm:$0xff]
        %v6771 = vcombine.high %v6755, %v6755
        %v6773 = vunpack.c.l.s4 1966171168
        %v6774 = vunpack.c.0.s8 %v6773
        %v6775 = vlaneseq
        %v6776 = vshrl.u32 %v6775, 7
        %v6777 = vsub.s32 %v6774, %v6776
        %v6778 = vrot.slane %v6755, %v6777
        %v6780 = vunpack.c.l.s4 1966171168
        %v6781 = vunpack.c.0.s8 %v6780
        %v6782 = vlaneseq
        %v6783 = vshrl.u32 %v6782, 7
        %v6784 = vsub.s32 %v6781, %v6783
        %v6785 = vrot.slane %v6771, %v6784
        %v6786 = vcombine.high %v6778, %v6778
        %v6787 = vcombine.high %v6785, %v6785
        %v6789 = vunpack.c.l.s4 1966171168
        %v6790 = vunpack.c.0.s8 %v6789
        %v6791 = vlaneseq
        %v6792 = vshrl.u32 %v6791, 7
        %v6793 = vsub.s32 %v6790, %v6792
        %v6794 = vrot.slane %v6778, %v6793
        %v6796 = vunpack.c.l.s4 1966171168
        %v6797 = vunpack.c.0.s8 %v6796
        %v6798 = vlaneseq
        %v6799 = vshrl.u32 %v6798, 7
        %v6800 = vsub.s32 %v6797, %v6799
        %v6801 = vrot.slane %v6785, %v6800
        %v6803 = vunpack.c.l.s4 1966171168
        %v6804 = vunpack.c.0.s8 %v6803
        %v6805 = vlaneseq
        %v6806 = vshrl.u32 %v6805, 7
        %v6807 = vsub.s32 %v6804, %v6806
        %v6808 = vrot.slane %v6786, %v6807
        %v6810 = vunpack.c.l.s4 1966171168
        %v6811 = vunpack.c.0.s8 %v6810
        %v6812 = vlaneseq
        %v6813 = vshrl.u32 %v6812, 7
        %v6814 = vsub.s32 %v6811, %v6813
        %v6815 = vrot.slane %v6787, %v6814
        %v6816 = vcombine.high %v6794, %v6794
        %v6817 = vcombine.high %v6801, %v6801
        %v6818 = vcombine.high %v6808, %v6808
        %v6819 = vcombine.high %v6815, %v6815
        %v6820 = vcombine.high %v6756, %v6756
        %v6822 = vunpack.c.l.s4 1966171168
        %v6823 = vunpack.c.0.s8 %v6822
        %v6824 = vlaneseq
        %v6825 = vshrl.u32 %v6824, 7
        %v6826 = vsub.s32 %v6823, %v6825
        %v6827 = vrot.slane %v6756, %v6826
        %v6829 = vunpack.c.l.s4 1966171168
        %v6830 = vunpack.c.0.s8 %v6829
        %v6831 = vlaneseq
        %v6832 = vshrl.u32 %v6831, 7
        %v6833 = vsub.s32 %v6830, %v6832
        %v6834 = vrot.slane %v6820, %v6833
        %v6835 = vcombine.high %v6827, %v6827
        %v6836 = vcombine.high %v6834, %v6834
        %v6838 = vunpack.c.l.s4 1966171168
        %v6839 = vunpack.c.0.s8 %v6838
        %v6840 = vlaneseq
        %v6841 = vshrl.u32 %v6840, 7
        %v6842 = vsub.s32 %v6839, %v6841
        %v6843 = vrot.slane %v6827, %v6842
        %v6845 = vunpack.c.l.s4 1966171168
        %v6846 = vunpack.c.0.s8 %v6845
        %v6847 = vlaneseq
        %v6848 = vshrl.u32 %v6847, 7
        %v6849 = vsub.s32 %v6846, %v6848
        %v6850 = vrot.slane %v6834, %v6849
        %v6852 = vunpack.c.l.s4 1966171168
        %v6853 = vunpack.c.0.s8 %v6852
        %v6854 = vlaneseq
        %v6855 = vshrl.u32 %v6854, 7
        %v6856 = vsub.s32 %v6853, %v6855
        %v6857 = vrot.slane %v6835, %v6856
        %v6859 = vunpack.c.l.s4 1966171168
        %v6860 = vunpack.c.0.s8 %v6859
        %v6861 = vlaneseq
        %v6862 = vshrl.u32 %v6861, 7
        %v6863 = vsub.s32 %v6860, %v6862
        %v6864 = vrot.slane %v6836, %v6863
        %v6865 = vcombine.high %v6843, %v6843
        %v6866 = vcombine.high %v6850, %v6850
        %v6867 = vcombine.high %v6857, %v6857
        %v6868 = vcombine.high %v6864, %v6864
        %v6869 = vcombine.high %v6757, %v6757
        %v6871 = vunpack.c.l.s4 1966171168
        %v6872 = vunpack.c.0.s8 %v6871
        %v6873 = vlaneseq
        %v6874 = vshrl.u32 %v6873, 7
        %v6875 = vsub.s32 %v6872, %v6874
        %v6876 = vrot.slane %v6757, %v6875
        %v6878 = vunpack.c.l.s4 1966171168
        %v6879 = vunpack.c.0.s8 %v6878
        %v6880 = vlaneseq
        %v6881 = vshrl.u32 %v6880, 7
        %v6882 = vsub.s32 %v6879, %v6881
        %v6883 = vrot.slane %v6869, %v6882
        %v6884 = vcombine.high %v6876, %v6876
        %v6885 = vcombine.high %v6883, %v6883
        %v6887 = vunpack.c.l.s4 1966171168
        %v6888 = vunpack.c.0.s8 %v6887
        %v6889 = vlaneseq
        %v6890 = vshrl.u32 %v6889, 7
        %v6891 = vsub.s32 %v6888, %v6890
        %v6892 = vrot.slane %v6876, %v6891
        %v6894 = vunpack.c.l.s4 1966171168
        %v6895 = vunpack.c.0.s8 %v6894
        %v6896 = vlaneseq
        %v6897 = vshrl.u32 %v6896, 7
        %v6898 = vsub.s32 %v6895, %v6897
        %v6899 = vrot.slane %v6883, %v6898
        %v6901 = vunpack.c.l.s4 1966171168
        %v6902 = vunpack.c.0.s8 %v6901
        %v6903 = vlaneseq
        %v6904 = vshrl.u32 %v6903, 7
        %v6905 = vsub.s32 %v6902, %v6904
        %v6906 = vrot.slane %v6884, %v6905
        %v6908 = vunpack.c.l.s4 1966171168
        %v6909 = vunpack.c.0.s8 %v6908
        %v6910 = vlaneseq
        %v6911 = vshrl.u32 %v6910, 7
        %v6912 = vsub.s32 %v6909, %v6911
        %v6913 = vrot.slane %v6885, %v6912
        %v6914 = vcombine.high %v6892, %v6892
        %v6915 = vcombine.high %v6899, %v6899
        %v6916 = vcombine.high %v6906, %v6906
        %v6917 = vcombine.high %v6913, %v6913
        %v6918 = vcombine.high %v6758, %v6758
        %v6920 = vunpack.c.l.s4 1966171168
        %v6921 = vunpack.c.0.s8 %v6920
        %v6922 = vlaneseq
        %v6923 = vshrl.u32 %v6922, 7
        %v6924 = vsub.s32 %v6921, %v6923
        %v6925 = vrot.slane %v6758, %v6924
        %v6927 = vunpack.c.l.s4 1966171168
        %v6928 = vunpack.c.0.s8 %v6927
        %v6929 = vlaneseq
        %v6930 = vshrl.u32 %v6929, 7
        %v6931 = vsub.s32 %v6928, %v6930
        %v6932 = vrot.slane %v6918, %v6931
        %v6933 = vcombine.high %v6925, %v6925
        %v6934 = vcombine.high %v6932, %v6932
        %v6936 = vunpack.c.l.s4 1966171168
        %v6937 = vunpack.c.0.s8 %v6936
        %v6938 = vlaneseq
        %v6939 = vshrl.u32 %v6938, 7
        %v6940 = vsub.s32 %v6937, %v6939
        %v6941 = vrot.slane %v6925, %v6940
        %v6943 = vunpack.c.l.s4 1966171168
        %v6944 = vunpack.c.0.s8 %v6943
        %v6945 = vlaneseq
        %v6946 = vshrl.u32 %v6945, 7
        %v6947 = vsub.s32 %v6944, %v6946
        %v6948 = vrot.slane %v6932, %v6947
        %v6950 = vunpack.c.l.s4 1966171168
        %v6951 = vunpack.c.0.s8 %v6950
        %v6952 = vlaneseq
        %v6953 = vshrl.u32 %v6952, 7
        %v6954 = vsub.s32 %v6951, %v6953
        %v6955 = vrot.slane %v6933, %v6954
        %v6957 = vunpack.c.l.s4 1966171168
        %v6958 = vunpack.c.0.s8 %v6957
        %v6959 = vlaneseq
        %v6960 = vshrl.u32 %v6959, 7
        %v6961 = vsub.s32 %v6958, %v6960
        %v6962 = vrot.slane %v6934, %v6961
        %v6963 = vcombine.high %v6941, %v6941
        %v6964 = vcombine.high %v6948, %v6948
        %v6965 = vcombine.high %v6955, %v6955
        %v6966 = vcombine.high %v6962, %v6962
        %v6967 = vcombine.high %v6759, %v6759
        %v6969 = vunpack.c.l.s4 1966171168
        %v6970 = vunpack.c.0.s8 %v6969
        %v6971 = vlaneseq
        %v6972 = vshrl.u32 %v6971, 7
        %v6973 = vsub.s32 %v6970, %v6972
        %v6974 = vrot.slane %v6759, %v6973
        %v6976 = vunpack.c.l.s4 1966171168
        %v6977 = vunpack.c.0.s8 %v6976
        %v6978 = vlaneseq
        %v6979 = vshrl.u32 %v6978, 7
        %v6980 = vsub.s32 %v6977, %v6979
        %v6981 = vrot.slane %v6967, %v6980
        %v6982 = vcombine.high %v6974, %v6974
        %v6983 = vcombine.high %v6981, %v6981
        %v6985 = vunpack.c.l.s4 1966171168
        %v6986 = vunpack.c.0.s8 %v6985
        %v6987 = vlaneseq
        %v6988 = vshrl.u32 %v6987, 7
        %v6989 = vsub.s32 %v6986, %v6988
        %v6990 = vrot.slane %v6974, %v6989
        %v6992 = vunpack.c.l.s4 1966171168
        %v6993 = vunpack.c.0.s8 %v6992
        %v6994 = vlaneseq
        %v6995 = vshrl.u32 %v6994, 7
        %v6996 = vsub.s32 %v6993, %v6995
        %v6997 = vrot.slane %v6981, %v6996
        %v6999 = vunpack.c.l.s4 1966171168
        %v7000 = vunpack.c.0.s8 %v6999
        %v7001 = vlaneseq
        %v7002 = vshrl.u32 %v7001, 7
        %v7003 = vsub.s32 %v7000, %v7002
        %v7004 = vrot.slane %v6982, %v7003
        %v7006 = vunpack.c.l.s4 1966171168
        %v7007 = vunpack.c.0.s8 %v7006
        %v7008 = vlaneseq
        %v7009 = vshrl.u32 %v7008, 7
        %v7010 = vsub.s32 %v7007, %v7009
        %v7011 = vrot.slane %v6983, %v7010
        %v7012 = vcombine.high %v6990, %v6990
        %v7013 = vcombine.high %v6997, %v6997
        %v7014 = vcombine.high %v7004, %v7004
        %v7015 = vcombine.high %v7011, %v7011
        %v7016 = vcombine.high %v6760, %v6760
        %v7018 = vunpack.c.l.s4 1966171168
        %v7019 = vunpack.c.0.s8 %v7018
        %v7020 = vlaneseq
        %v7021 = vshrl.u32 %v7020, 7
        %v7022 = vsub.s32 %v7019, %v7021
        %v7023 = vrot.slane %v6760, %v7022
        %v7025 = vunpack.c.l.s4 1966171168
        %v7026 = vunpack.c.0.s8 %v7025
        %v7027 = vlaneseq
        %v7028 = vshrl.u32 %v7027, 7
        %v7029 = vsub.s32 %v7026, %v7028
        %v7030 = vrot.slane %v7016, %v7029
        %v7031 = vcombine.high %v7023, %v7023
        %v7032 = vcombine.high %v7030, %v7030
        %v7034 = vunpack.c.l.s4 1966171168
        %v7035 = vunpack.c.0.s8 %v7034
        %v7036 = vlaneseq
        %v7037 = vshrl.u32 %v7036, 7
        %v7038 = vsub.s32 %v7035, %v7037
        %v7039 = vrot.slane %v7023, %v7038
        %v7041 = vunpack.c.l.s4 1966171168
        %v7042 = vunpack.c.0.s8 %v7041
        %v7043 = vlaneseq
        %v7044 = vshrl.u32 %v7043, 7
        %v7045 = vsub.s32 %v7042, %v7044
        %v7046 = vrot.slane %v7030, %v7045
        %v7048 = vunpack.c.l.s4 1966171168
        %v7049 = vunpack.c.0.s8 %v7048
        %v7050 = vlaneseq
        %v7051 = vshrl.u32 %v7050, 7
        %v7052 = vsub.s32 %v7049, %v7051
        %v7053 = vrot.slane %v7031, %v7052
        %v7055 = vunpack.c.l.s4 1966171168
        %v7056 = vunpack.c.0.s8 %v7055
        %v7057 = vlaneseq
        %v7058 = vshrl.u32 %v7057, 7
        %v7059 = vsub.s32 %v7056, %v7058
        %v7060 = vrot.slane %v7032, %v7059
        %v7061 = vcombine.high %v7039, %v7039
        %v7062 = vcombine.high %v7046, %v7046
        %v7063 = vcombine.high %v7053, %v7053
        %v7064 = vcombine.high %v7060, %v7060
        %v7065 = vcombine.high %v6761, %v6761
        %v7067 = vunpack.c.l.s4 1966171168
        %v7068 = vunpack.c.0.s8 %v7067
        %v7069 = vlaneseq
        %v7070 = vshrl.u32 %v7069, 7
        %v7071 = vsub.s32 %v7068, %v7070
        %v7072 = vrot.slane %v6761, %v7071
        %v7074 = vunpack.c.l.s4 1966171168
        %v7075 = vunpack.c.0.s8 %v7074
        %v7076 = vlaneseq
        %v7077 = vshrl.u32 %v7076, 7
        %v7078 = vsub.s32 %v7075, %v7077
        %v7079 = vrot.slane %v7065, %v7078
        %v7080 = vcombine.high %v7072, %v7072
        %v7081 = vcombine.high %v7079, %v7079
        %v7083 = vunpack.c.l.s4 1966171168
        %v7084 = vunpack.c.0.s8 %v7083
        %v7085 = vlaneseq
        %v7086 = vshrl.u32 %v7085, 7
        %v7087 = vsub.s32 %v7084, %v7086
        %v7088 = vrot.slane %v7072, %v7087
        %v7090 = vunpack.c.l.s4 1966171168
        %v7091 = vunpack.c.0.s8 %v7090
        %v7092 = vlaneseq
        %v7093 = vshrl.u32 %v7092, 7
        %v7094 = vsub.s32 %v7091, %v7093
        %v7095 = vrot.slane %v7079, %v7094
        %v7097 = vunpack.c.l.s4 1966171168
        %v7098 = vunpack.c.0.s8 %v7097
        %v7099 = vlaneseq
        %v7100 = vshrl.u32 %v7099, 7
        %v7101 = vsub.s32 %v7098, %v7100
        %v7102 = vrot.slane %v7080, %v7101
        %v7104 = vunpack.c.l.s4 1966171168
        %v7105 = vunpack.c.0.s8 %v7104
        %v7106 = vlaneseq
        %v7107 = vshrl.u32 %v7106, 7
        %v7108 = vsub.s32 %v7105, %v7107
        %v7109 = vrot.slane %v7081, %v7108
        %v7110 = vcombine.high %v7088, %v7088
        %v7111 = vcombine.high %v7095, %v7095
        %v7112 = vcombine.high %v7102, %v7102
        %v7113 = vcombine.high %v7109, %v7109
        %v7114 = vcombine.high %v6762, %v6762
        %v7116 = vunpack.c.l.s4 1966171168
        %v7117 = vunpack.c.0.s8 %v7116
        %v7118 = vlaneseq
        %v7119 = vshrl.u32 %v7118, 7
        %v7120 = vsub.s32 %v7117, %v7119
        %v7121 = vrot.slane %v6762, %v7120
        %v7123 = vunpack.c.l.s4 1966171168
        %v7124 = vunpack.c.0.s8 %v7123
        %v7125 = vlaneseq
        %v7126 = vshrl.u32 %v7125, 7
        %v7127 = vsub.s32 %v7124, %v7126
        %v7128 = vrot.slane %v7114, %v7127
        %v7129 = vcombine.high %v7121, %v7121
        %v7130 = vcombine.high %v7128, %v7128
        %v7132 = vunpack.c.l.s4 1966171168
        %v7133 = vunpack.c.0.s8 %v7132
        %v7134 = vlaneseq
        %v7135 = vshrl.u32 %v7134, 7
        %v7136 = vsub.s32 %v7133, %v7135
        %v7137 = vrot.slane %v7121, %v7136
        %v7139 = vunpack.c.l.s4 1966171168
        %v7140 = vunpack.c.0.s8 %v7139
        %v7141 = vlaneseq
        %v7142 = vshrl.u32 %v7141, 7
        %v7143 = vsub.s32 %v7140, %v7142
        %v7144 = vrot.slane %v7128, %v7143
        %v7146 = vunpack.c.l.s4 1966171168
        %v7147 = vunpack.c.0.s8 %v7146
        %v7148 = vlaneseq
        %v7149 = vshrl.u32 %v7148, 7
        %v7150 = vsub.s32 %v7147, %v7149
        %v7151 = vrot.slane %v7129, %v7150
        %v7153 = vunpack.c.l.s4 1966171168
        %v7154 = vunpack.c.0.s8 %v7153
        %v7155 = vlaneseq
        %v7156 = vshrl.u32 %v7155, 7
        %v7157 = vsub.s32 %v7154, %v7156
        %v7158 = vrot.slane %v7130, %v7157
        %v7159 = vcombine.high %v7137, %v7137
        %v7160 = vcombine.high %v7144, %v7144
        %v7161 = vcombine.high %v7151, %v7151
        %v7162 = vcombine.high %v7158, %v7158
        %7227 = vst.msk [vmem:[#allocation5 + $0x7] sm:$0x1] %vm3473, %v6794
        %7228 = vst.msk [vmem:[#allocation5 + $0x17] sm:$0x1] %vm3473, %v6808
        %7229 = vst.msk [vmem:[#allocation5 + $0x27] sm:$0x1] %vm3473, %v6816
        %7230 = vst.msk [vmem:[#allocation5 + $0x37] sm:$0x1] %vm3473, %v6818
        %7231 = vst.msk [vmem:[#allocation5 + $0x47] sm:$0x1] %vm3473, %v6801
        %7232 = vst.msk [vmem:[#allocation5 + $0x57] sm:$0x1] %vm3473, %v6815
        %7233 = vst.msk [vmem:[#allocation5 + $0x67] sm:$0x1] %vm3473, %v6817
        %7234 = vst.msk [vmem:[#allocation5 + $0x77] sm:$0x1] %vm3473, %v6819
        %7235 = vst.msk [vmem:[#allocation5 + $0x87] sm:$0x1] %vm3473, %v6843
        %7236 = vst.msk [vmem:[#allocation5 + $0x97] sm:$0x1] %vm3473, %v6857
        %7237 = vst.msk [vmem:[#allocation5 + $0xa7] sm:$0x1] %vm3473, %v6865
        %7238 = vst.msk [vmem:[#allocation5 + $0xb7] sm:$0x1] %vm3473, %v6867
        %7239 = vst.msk [vmem:[#allocation5 + $0xc7] sm:$0x1] %vm3473, %v6850
        %7240 = vst.msk [vmem:[#allocation5 + $0xd7] sm:$0x1] %vm3473, %v6864
        %7241 = vst.msk [vmem:[#allocation5 + $0xe7] sm:$0x1] %vm3473, %v6866
        %7242 = vst.msk [vmem:[#allocation5 + $0xf7] sm:$0x1] %vm3473, %v6868
        %7243 = vst.msk [vmem:[#allocation5 + $0x107] sm:$0x1] %vm3473, %v6892
        %7244 = vst.msk [vmem:[#allocation5 + $0x117] sm:$0x1] %vm3473, %v6906
        %7245 = vst.msk [vmem:[#allocation5 + $0x127] sm:$0x1] %vm3473, %v6914
        %7246 = vst.msk [vmem:[#allocation5 + $0x137] sm:$0x1] %vm3473, %v6916
        %7247 = vst.msk [vmem:[#allocation5 + $0x147] sm:$0x1] %vm3473, %v6899
        %7248 = vst.msk [vmem:[#allocation5 + $0x157] sm:$0x1] %vm3473, %v6913
        %7249 = vst.msk [vmem:[#allocation5 + $0x167] sm:$0x1] %vm3473, %v6915
        %7250 = vst.msk [vmem:[#allocation5 + $0x177] sm:$0x1] %vm3473, %v6917
        %7251 = vst.msk [vmem:[#allocation5 + $0x187] sm:$0x1] %vm3473, %v6941
        %7252 = vst.msk [vmem:[#allocation5 + $0x197] sm:$0x1] %vm3473, %v6955
        %7253 = vst.msk [vmem:[#allocation5 + $0x1a7] sm:$0x1] %vm3473, %v6963
        %7254 = vst.msk [vmem:[#allocation5 + $0x1b7] sm:$0x1] %vm3473, %v6965
        %7255 = vst.msk [vmem:[#allocation5 + $0x1c7] sm:$0x1] %vm3473, %v6948
        %7256 = vst.msk [vmem:[#allocation5 + $0x1d7] sm:$0x1] %vm3473, %v6962
        %7257 = vst.msk [vmem:[#allocation5 + $0x1e7] sm:$0x1] %vm3473, %v6964
        %7258 = vst.msk [vmem:[#allocation5 + $0x1f7] sm:$0x1] %vm3473, %v6966
        %7259 = vst.msk [vmem:[#allocation5 + $0x207] sm:$0x1] %vm3473, %v6990
        %7260 = vst.msk [vmem:[#allocation5 + $0x217] sm:$0x1] %vm3473, %v7004
        %7261 = vst.msk [vmem:[#allocation5 + $0x227] sm:$0x1] %vm3473, %v7012
        %7262 = vst.msk [vmem:[#allocation5 + $0x237] sm:$0x1] %vm3473, %v7014
        %7263 = vst.msk [vmem:[#allocation5 + $0x247] sm:$0x1] %vm3473, %v6997
        %7264 = vst.msk [vmem:[#allocation5 + $0x257] sm:$0x1] %vm3473, %v7011
        %7265 = vst.msk [vmem:[#allocation5 + $0x267] sm:$0x1] %vm3473, %v7013
        %7266 = vst.msk [vmem:[#allocation5 + $0x277] sm:$0x1] %vm3473, %v7015
        %7267 = vst.msk [vmem:[#allocation5 + $0x287] sm:$0x1] %vm3473, %v7039
        %7268 = vst.msk [vmem:[#allocation5 + $0x297] sm:$0x1] %vm3473, %v7053
        %7269 = vst.msk [vmem:[#allocation5 + $0x2a7] sm:$0x1] %vm3473, %v7061
        %7270 = vst.msk [vmem:[#allocation5 + $0x2b7] sm:$0x1] %vm3473, %v7063
        %7271 = vst.msk [vmem:[#allocation5 + $0x2c7] sm:$0x1] %vm3473, %v7046
        %7272 = vst.msk [vmem:[#allocation5 + $0x2d7] sm:$0x1] %vm3473, %v7060
        %7273 = vst.msk [vmem:[#allocation5 + $0x2e7] sm:$0x1] %vm3473, %v7062
        %7274 = vst.msk [vmem:[#allocation5 + $0x2f7] sm:$0x1] %vm3473, %v7064
        %7275 = vst.msk [vmem:[#allocation5 + $0x307] sm:$0x1] %vm3473, %v7088
        %7276 = vst.msk [vmem:[#allocation5 + $0x317] sm:$0x1] %vm3473, %v7102
        %7277 = vst.msk [vmem:[#allocation5 + $0x327] sm:$0x1] %vm3473, %v7110
        %7278 = vst.msk [vmem:[#allocation5 + $0x337] sm:$0x1] %vm3473, %v7112
        %7279 = vst.msk [vmem:[#allocation5 + $0x347] sm:$0x1] %vm3473, %v7095
        %7280 = vst.msk [vmem:[#allocation5 + $0x357] sm:$0x1] %vm3473, %v7109
        %7281 = vst.msk [vmem:[#allocation5 + $0x367] sm:$0x1] %vm3473, %v7111
        %7282 = vst.msk [vmem:[#allocation5 + $0x377] sm:$0x1] %vm3473, %v7113
        %7283 = vst.msk [vmem:[#allocation5 + $0x387] sm:$0x1] %vm3473, %v7137
        %7284 = vst.msk [vmem:[#allocation5 + $0x397] sm:$0x1] %vm3473, %v7151
        %7285 = vst.msk [vmem:[#allocation5 + $0x3a7] sm:$0x1] %vm3473, %v7159
        %7286 = vst.msk [vmem:[#allocation5 + $0x3b7] sm:$0x1] %vm3473, %v7161
        %7287 = vst.msk [vmem:[#allocation5 + $0x3c7] sm:$0x1] %vm3473, %v7144
        %7288 = vst.msk [vmem:[#allocation5 + $0x3d7] sm:$0x1] %vm3473, %v7158
        %7289 = vst.msk [vmem:[#allocation5 + $0x3e7] sm:$0x1] %vm3473, %v7160
        %7290 = vst.msk [vmem:[#allocation5 + $0x3f7] sm:$0x1] %vm3473, %v7162
        %v7291 = vld [vmem:[%s6218 + $0x2] sm:$0xff]
        %v7292 = vld [vmem:[%s6218 + $0x12] sm:$0xff]
        %v7293 = vld [vmem:[%s6218 + $0x22] sm:$0xff]
        %v7294 = vld [vmem:[%s6218 + $0x32] sm:$0xff]
        %v7295 = vld [vmem:[%s6218 + $0x42] sm:$0xff]
        %v7296 = vld [vmem:[%s6218 + $0x52] sm:$0xff]
        %v7297 = vld [vmem:[%s6218 + $0x62] sm:$0xff]
        %v7298 = vld [vmem:[%s6218 + $0x72] sm:$0xff]
        %v7307 = vcombine.high %v7291, %v7291
        %v7309 = vunpack.c.l.s4 1966171168
        %v7310 = vunpack.c.0.s8 %v7309
        %v7311 = vlaneseq
        %v7312 = vshrl.u32 %v7311, 7
        %v7313 = vsub.s32 %v7310, %v7312
        %v7314 = vrot.slane %v7291, %v7313
        %v7316 = vunpack.c.l.s4 1966171168
        %v7317 = vunpack.c.0.s8 %v7316
        %v7318 = vlaneseq
        %v7319 = vshrl.u32 %v7318, 7
        %v7320 = vsub.s32 %v7317, %v7319
        %v7321 = vrot.slane %v7307, %v7320
        %v7322 = vcombine.high %v7314, %v7314
        %v7323 = vcombine.high %v7321, %v7321
        %v7325 = vunpack.c.l.s4 1966171168
        %v7326 = vunpack.c.0.s8 %v7325
        %v7327 = vlaneseq
        %v7328 = vshrl.u32 %v7327, 7
        %v7329 = vsub.s32 %v7326, %v7328
        %v7330 = vrot.slane %v7314, %v7329
        %v7332 = vunpack.c.l.s4 1966171168
        %v7333 = vunpack.c.0.s8 %v7332
        %v7334 = vlaneseq
        %v7335 = vshrl.u32 %v7334, 7
        %v7336 = vsub.s32 %v7333, %v7335
        %v7337 = vrot.slane %v7321, %v7336
        %v7339 = vunpack.c.l.s4 1966171168
        %v7340 = vunpack.c.0.s8 %v7339
        %v7341 = vlaneseq
        %v7342 = vshrl.u32 %v7341, 7
        %v7343 = vsub.s32 %v7340, %v7342
        %v7344 = vrot.slane %v7322, %v7343
        %v7346 = vunpack.c.l.s4 1966171168
        %v7347 = vunpack.c.0.s8 %v7346
        %v7348 = vlaneseq
        %v7349 = vshrl.u32 %v7348, 7
        %v7350 = vsub.s32 %v7347, %v7349
        %v7351 = vrot.slane %v7323, %v7350
        %v7352 = vcombine.high %v7330, %v7330
        %v7353 = vcombine.high %v7337, %v7337
        %v7354 = vcombine.high %v7344, %v7344
        %v7355 = vcombine.high %v7351, %v7351
        %v7356 = vcombine.high %v7292, %v7292
        %v7358 = vunpack.c.l.s4 1966171168
        %v7359 = vunpack.c.0.s8 %v7358
        %v7360 = vlaneseq
        %v7361 = vshrl.u32 %v7360, 7
        %v7362 = vsub.s32 %v7359, %v7361
        %v7363 = vrot.slane %v7292, %v7362
        %v7365 = vunpack.c.l.s4 1966171168
        %v7366 = vunpack.c.0.s8 %v7365
        %v7367 = vlaneseq
        %v7368 = vshrl.u32 %v7367, 7
        %v7369 = vsub.s32 %v7366, %v7368
        %v7370 = vrot.slane %v7356, %v7369
        %v7371 = vcombine.high %v7363, %v7363
        %v7372 = vcombine.high %v7370, %v7370
        %v7374 = vunpack.c.l.s4 1966171168
        %v7375 = vunpack.c.0.s8 %v7374
        %v7376 = vlaneseq
        %v7377 = vshrl.u32 %v7376, 7
        %v7378 = vsub.s32 %v7375, %v7377
        %v7379 = vrot.slane %v7363, %v7378
        %v7381 = vunpack.c.l.s4 1966171168
        %v7382 = vunpack.c.0.s8 %v7381
        %v7383 = vlaneseq
        %v7384 = vshrl.u32 %v7383, 7
        %v7385 = vsub.s32 %v7382, %v7384
        %v7386 = vrot.slane %v7370, %v7385
        %v7388 = vunpack.c.l.s4 1966171168
        %v7389 = vunpack.c.0.s8 %v7388
        %v7390 = vlaneseq
        %v7391 = vshrl.u32 %v7390, 7
        %v7392 = vsub.s32 %v7389, %v7391
        %v7393 = vrot.slane %v7371, %v7392
        %v7395 = vunpack.c.l.s4 1966171168
        %v7396 = vunpack.c.0.s8 %v7395
        %v7397 = vlaneseq
        %v7398 = vshrl.u32 %v7397, 7
        %v7399 = vsub.s32 %v7396, %v7398
        %v7400 = vrot.slane %v7372, %v7399
        %v7401 = vcombine.high %v7379, %v7379
        %v7402 = vcombine.high %v7386, %v7386
        %v7403 = vcombine.high %v7393, %v7393
        %v7404 = vcombine.high %v7400, %v7400
        %v7405 = vcombine.high %v7293, %v7293
        %v7407 = vunpack.c.l.s4 1966171168
        %v7408 = vunpack.c.0.s8 %v7407
        %v7409 = vlaneseq
        %v7410 = vshrl.u32 %v7409, 7
        %v7411 = vsub.s32 %v7408, %v7410
        %v7412 = vrot.slane %v7293, %v7411
        %v7414 = vunpack.c.l.s4 1966171168
        %v7415 = vunpack.c.0.s8 %v7414
        %v7416 = vlaneseq
        %v7417 = vshrl.u32 %v7416, 7
        %v7418 = vsub.s32 %v7415, %v7417
        %v7419 = vrot.slane %v7405, %v7418
        %v7420 = vcombine.high %v7412, %v7412
        %v7421 = vcombine.high %v7419, %v7419
        %v7423 = vunpack.c.l.s4 1966171168
        %v7424 = vunpack.c.0.s8 %v7423
        %v7425 = vlaneseq
        %v7426 = vshrl.u32 %v7425, 7
        %v7427 = vsub.s32 %v7424, %v7426
        %v7428 = vrot.slane %v7412, %v7427
        %v7430 = vunpack.c.l.s4 1966171168
        %v7431 = vunpack.c.0.s8 %v7430
        %v7432 = vlaneseq
        %v7433 = vshrl.u32 %v7432, 7
        %v7434 = vsub.s32 %v7431, %v7433
        %v7435 = vrot.slane %v7419, %v7434
        %v7437 = vunpack.c.l.s4 1966171168
        %v7438 = vunpack.c.0.s8 %v7437
        %v7439 = vlaneseq
        %v7440 = vshrl.u32 %v7439, 7
        %v7441 = vsub.s32 %v7438, %v7440
        %v7442 = vrot.slane %v7420, %v7441
        %v7444 = vunpack.c.l.s4 1966171168
        %v7445 = vunpack.c.0.s8 %v7444
        %v7446 = vlaneseq
        %v7447 = vshrl.u32 %v7446, 7
        %v7448 = vsub.s32 %v7445, %v7447
        %v7449 = vrot.slane %v7421, %v7448
        %v7450 = vcombine.high %v7428, %v7428
        %v7451 = vcombine.high %v7435, %v7435
        %v7452 = vcombine.high %v7442, %v7442
        %v7453 = vcombine.high %v7449, %v7449
        %v7454 = vcombine.high %v7294, %v7294
        %v7456 = vunpack.c.l.s4 1966171168
        %v7457 = vunpack.c.0.s8 %v7456
        %v7458 = vlaneseq
        %v7459 = vshrl.u32 %v7458, 7
        %v7460 = vsub.s32 %v7457, %v7459
        %v7461 = vrot.slane %v7294, %v7460
        %v7463 = vunpack.c.l.s4 1966171168
        %v7464 = vunpack.c.0.s8 %v7463
        %v7465 = vlaneseq
        %v7466 = vshrl.u32 %v7465, 7
        %v7467 = vsub.s32 %v7464, %v7466
        %v7468 = vrot.slane %v7454, %v7467
        %v7469 = vcombine.high %v7461, %v7461
        %v7470 = vcombine.high %v7468, %v7468
        %v7472 = vunpack.c.l.s4 1966171168
        %v7473 = vunpack.c.0.s8 %v7472
        %v7474 = vlaneseq
        %v7475 = vshrl.u32 %v7474, 7
        %v7476 = vsub.s32 %v7473, %v7475
        %v7477 = vrot.slane %v7461, %v7476
        %v7479 = vunpack.c.l.s4 1966171168
        %v7480 = vunpack.c.0.s8 %v7479
        %v7481 = vlaneseq
        %v7482 = vshrl.u32 %v7481, 7
        %v7483 = vsub.s32 %v7480, %v7482
        %v7484 = vrot.slane %v7468, %v7483
        %v7486 = vunpack.c.l.s4 1966171168
        %v7487 = vunpack.c.0.s8 %v7486
        %v7488 = vlaneseq
        %v7489 = vshrl.u32 %v7488, 7
        %v7490 = vsub.s32 %v7487, %v7489
        %v7491 = vrot.slane %v7469, %v7490
        %v7493 = vunpack.c.l.s4 1966171168
        %v7494 = vunpack.c.0.s8 %v7493
        %v7495 = vlaneseq
        %v7496 = vshrl.u32 %v7495, 7
        %v7497 = vsub.s32 %v7494, %v7496
        %v7498 = vrot.slane %v7470, %v7497
        %v7499 = vcombine.high %v7477, %v7477
        %v7500 = vcombine.high %v7484, %v7484
        %v7501 = vcombine.high %v7491, %v7491
        %v7502 = vcombine.high %v7498, %v7498
        %v7503 = vcombine.high %v7295, %v7295
        %v7505 = vunpack.c.l.s4 1966171168
        %v7506 = vunpack.c.0.s8 %v7505
        %v7507 = vlaneseq
        %v7508 = vshrl.u32 %v7507, 7
        %v7509 = vsub.s32 %v7506, %v7508
        %v7510 = vrot.slane %v7295, %v7509
        %v7512 = vunpack.c.l.s4 1966171168
        %v7513 = vunpack.c.0.s8 %v7512
        %v7514 = vlaneseq
        %v7515 = vshrl.u32 %v7514, 7
        %v7516 = vsub.s32 %v7513, %v7515
        %v7517 = vrot.slane %v7503, %v7516
        %v7518 = vcombine.high %v7510, %v7510
        %v7519 = vcombine.high %v7517, %v7517
        %v7521 = vunpack.c.l.s4 1966171168
        %v7522 = vunpack.c.0.s8 %v7521
        %v7523 = vlaneseq
        %v7524 = vshrl.u32 %v7523, 7
        %v7525 = vsub.s32 %v7522, %v7524
        %v7526 = vrot.slane %v7510, %v7525
        %v7528 = vunpack.c.l.s4 1966171168
        %v7529 = vunpack.c.0.s8 %v7528
        %v7530 = vlaneseq
        %v7531 = vshrl.u32 %v7530, 7
        %v7532 = vsub.s32 %v7529, %v7531
        %v7533 = vrot.slane %v7517, %v7532
        %v7535 = vunpack.c.l.s4 1966171168
        %v7536 = vunpack.c.0.s8 %v7535
        %v7537 = vlaneseq
        %v7538 = vshrl.u32 %v7537, 7
        %v7539 = vsub.s32 %v7536, %v7538
        %v7540 = vrot.slane %v7518, %v7539
        %v7542 = vunpack.c.l.s4 1966171168
        %v7543 = vunpack.c.0.s8 %v7542
        %v7544 = vlaneseq
        %v7545 = vshrl.u32 %v7544, 7
        %v7546 = vsub.s32 %v7543, %v7545
        %v7547 = vrot.slane %v7519, %v7546
        %v7548 = vcombine.high %v7526, %v7526
        %v7549 = vcombine.high %v7533, %v7533
        %v7550 = vcombine.high %v7540, %v7540
        %v7551 = vcombine.high %v7547, %v7547
        %v7552 = vcombine.high %v7296, %v7296
        %v7554 = vunpack.c.l.s4 1966171168
        %v7555 = vunpack.c.0.s8 %v7554
        %v7556 = vlaneseq
        %v7557 = vshrl.u32 %v7556, 7
        %v7558 = vsub.s32 %v7555, %v7557
        %v7559 = vrot.slane %v7296, %v7558
        %v7561 = vunpack.c.l.s4 1966171168
        %v7562 = vunpack.c.0.s8 %v7561
        %v7563 = vlaneseq
        %v7564 = vshrl.u32 %v7563, 7
        %v7565 = vsub.s32 %v7562, %v7564
        %v7566 = vrot.slane %v7552, %v7565
        %v7567 = vcombine.high %v7559, %v7559
        %v7568 = vcombine.high %v7566, %v7566
        %v7570 = vunpack.c.l.s4 1966171168
        %v7571 = vunpack.c.0.s8 %v7570
        %v7572 = vlaneseq
        %v7573 = vshrl.u32 %v7572, 7
        %v7574 = vsub.s32 %v7571, %v7573
        %v7575 = vrot.slane %v7559, %v7574
        %v7577 = vunpack.c.l.s4 1966171168
        %v7578 = vunpack.c.0.s8 %v7577
        %v7579 = vlaneseq
        %v7580 = vshrl.u32 %v7579, 7
        %v7581 = vsub.s32 %v7578, %v7580
        %v7582 = vrot.slane %v7566, %v7581
        %v7584 = vunpack.c.l.s4 1966171168
        %v7585 = vunpack.c.0.s8 %v7584
        %v7586 = vlaneseq
        %v7587 = vshrl.u32 %v7586, 7
        %v7588 = vsub.s32 %v7585, %v7587
        %v7589 = vrot.slane %v7567, %v7588
        %v7591 = vunpack.c.l.s4 1966171168
        %v7592 = vunpack.c.0.s8 %v7591
        %v7593 = vlaneseq
        %v7594 = vshrl.u32 %v7593, 7
        %v7595 = vsub.s32 %v7592, %v7594
        %v7596 = vrot.slane %v7568, %v7595
        %v7597 = vcombine.high %v7575, %v7575
        %v7598 = vcombine.high %v7582, %v7582
        %v7599 = vcombine.high %v7589, %v7589
        %v7600 = vcombine.high %v7596, %v7596
        %v7601 = vcombine.high %v7297, %v7297
        %v7603 = vunpack.c.l.s4 1966171168
        %v7604 = vunpack.c.0.s8 %v7603
        %v7605 = vlaneseq
        %v7606 = vshrl.u32 %v7605, 7
        %v7607 = vsub.s32 %v7604, %v7606
        %v7608 = vrot.slane %v7297, %v7607
        %v7610 = vunpack.c.l.s4 1966171168
        %v7611 = vunpack.c.0.s8 %v7610
        %v7612 = vlaneseq
        %v7613 = vshrl.u32 %v7612, 7
        %v7614 = vsub.s32 %v7611, %v7613
        %v7615 = vrot.slane %v7601, %v7614
        %v7616 = vcombine.high %v7608, %v7608
        %v7617 = vcombine.high %v7615, %v7615
        %v7619 = vunpack.c.l.s4 1966171168
        %v7620 = vunpack.c.0.s8 %v7619
        %v7621 = vlaneseq
        %v7622 = vshrl.u32 %v7621, 7
        %v7623 = vsub.s32 %v7620, %v7622
        %v7624 = vrot.slane %v7608, %v7623
        %v7626 = vunpack.c.l.s4 1966171168
        %v7627 = vunpack.c.0.s8 %v7626
        %v7628 = vlaneseq
        %v7629 = vshrl.u32 %v7628, 7
        %v7630 = vsub.s32 %v7627, %v7629
        %v7631 = vrot.slane %v7615, %v7630
        %v7633 = vunpack.c.l.s4 1966171168
        %v7634 = vunpack.c.0.s8 %v7633
        %v7635 = vlaneseq
        %v7636 = vshrl.u32 %v7635, 7
        %v7637 = vsub.s32 %v7634, %v7636
        %v7638 = vrot.slane %v7616, %v7637
        %v7640 = vunpack.c.l.s4 1966171168
        %v7641 = vunpack.c.0.s8 %v7640
        %v7642 = vlaneseq
        %v7643 = vshrl.u32 %v7642, 7
        %v7644 = vsub.s32 %v7641, %v7643
        %v7645 = vrot.slane %v7617, %v7644
        %v7646 = vcombine.high %v7624, %v7624
        %v7647 = vcombine.high %v7631, %v7631
        %v7648 = vcombine.high %v7638, %v7638
        %v7649 = vcombine.high %v7645, %v7645
        %v7650 = vcombine.high %v7298, %v7298
        %v7652 = vunpack.c.l.s4 1966171168
        %v7653 = vunpack.c.0.s8 %v7652
        %v7654 = vlaneseq
        %v7655 = vshrl.u32 %v7654, 7
        %v7656 = vsub.s32 %v7653, %v7655
        %v7657 = vrot.slane %v7298, %v7656
        %v7659 = vunpack.c.l.s4 1966171168
        %v7660 = vunpack.c.0.s8 %v7659
        %v7661 = vlaneseq
        %v7662 = vshrl.u32 %v7661, 7
        %v7663 = vsub.s32 %v7660, %v7662
        %v7664 = vrot.slane %v7650, %v7663
        %v7665 = vcombine.high %v7657, %v7657
        %v7666 = vcombine.high %v7664, %v7664
        %v7668 = vunpack.c.l.s4 1966171168
        %v7669 = vunpack.c.0.s8 %v7668
        %v7670 = vlaneseq
        %v7671 = vshrl.u32 %v7670, 7
        %v7672 = vsub.s32 %v7669, %v7671
        %v7673 = vrot.slane %v7657, %v7672
        %v7675 = vunpack.c.l.s4 1966171168
        %v7676 = vunpack.c.0.s8 %v7675
        %v7677 = vlaneseq
        %v7678 = vshrl.u32 %v7677, 7
        %v7679 = vsub.s32 %v7676, %v7678
        %v7680 = vrot.slane %v7664, %v7679
        %v7682 = vunpack.c.l.s4 1966171168
        %v7683 = vunpack.c.0.s8 %v7682
        %v7684 = vlaneseq
        %v7685 = vshrl.u32 %v7684, 7
        %v7686 = vsub.s32 %v7683, %v7685
        %v7687 = vrot.slane %v7665, %v7686
        %v7689 = vunpack.c.l.s4 1966171168
        %v7690 = vunpack.c.0.s8 %v7689
        %v7691 = vlaneseq
        %v7692 = vshrl.u32 %v7691, 7
        %v7693 = vsub.s32 %v7690, %v7692
        %v7694 = vrot.slane %v7666, %v7693
        %v7695 = vcombine.high %v7673, %v7673
        %v7696 = vcombine.high %v7680, %v7680
        %v7697 = vcombine.high %v7687, %v7687
        %v7698 = vcombine.high %v7694, %v7694
        %7763 = vst.msk [vmem:[#allocation5 + $0x8] sm:$0x1] %vm3473, %v7330
        %7764 = vst.msk [vmem:[#allocation5 + $0x18] sm:$0x1] %vm3473, %v7344
        %7765 = vst.msk [vmem:[#allocation5 + $0x28] sm:$0x1] %vm3473, %v7352
        %7766 = vst.msk [vmem:[#allocation5 + $0x38] sm:$0x1] %vm3473, %v7354
        %7767 = vst.msk [vmem:[#allocation5 + $0x48] sm:$0x1] %vm3473, %v7337
        %7768 = vst.msk [vmem:[#allocation5 + $0x58] sm:$0x1] %vm3473, %v7351
        %7769 = vst.msk [vmem:[#allocation5 + $0x68] sm:$0x1] %vm3473, %v7353
        %7770 = vst.msk [vmem:[#allocation5 + $0x78] sm:$0x1] %vm3473, %v7355
        %7771 = vst.msk [vmem:[#allocation5 + $0x88] sm:$0x1] %vm3473, %v7379
        %7772 = vst.msk [vmem:[#allocation5 + $0x98] sm:$0x1] %vm3473, %v7393
        %7773 = vst.msk [vmem:[#allocation5 + $0xa8] sm:$0x1] %vm3473, %v7401
        %7774 = vst.msk [vmem:[#allocation5 + $0xb8] sm:$0x1] %vm3473, %v7403
        %7775 = vst.msk [vmem:[#allocation5 + $0xc8] sm:$0x1] %vm3473, %v7386
        %7776 = vst.msk [vmem:[#allocation5 + $0xd8] sm:$0x1] %vm3473, %v7400
        %7777 = vst.msk [vmem:[#allocation5 + $0xe8] sm:$0x1] %vm3473, %v7402
        %7778 = vst.msk [vmem:[#allocation5 + $0xf8] sm:$0x1] %vm3473, %v7404
        %7779 = vst.msk [vmem:[#allocation5 + $0x108] sm:$0x1] %vm3473, %v7428
        %7780 = vst.msk [vmem:[#allocation5 + $0x118] sm:$0x1] %vm3473, %v7442
        %7781 = vst.msk [vmem:[#allocation5 + $0x128] sm:$0x1] %vm3473, %v7450
        %7782 = vst.msk [vmem:[#allocation5 + $0x138] sm:$0x1] %vm3473, %v7452
        %7783 = vst.msk [vmem:[#allocation5 + $0x148] sm:$0x1] %vm3473, %v7435
        %7784 = vst.msk [vmem:[#allocation5 + $0x158] sm:$0x1] %vm3473, %v7449
        %7785 = vst.msk [vmem:[#allocation5 + $0x168] sm:$0x1] %vm3473, %v7451
        %7786 = vst.msk [vmem:[#allocation5 + $0x178] sm:$0x1] %vm3473, %v7453
        %7787 = vst.msk [vmem:[#allocation5 + $0x188] sm:$0x1] %vm3473, %v7477
        %7788 = vst.msk [vmem:[#allocation5 + $0x198] sm:$0x1] %vm3473, %v7491
        %7789 = vst.msk [vmem:[#allocation5 + $0x1a8] sm:$0x1] %vm3473, %v7499
        %7790 = vst.msk [vmem:[#allocation5 + $0x1b8] sm:$0x1] %vm3473, %v7501
        %7791 = vst.msk [vmem:[#allocation5 + $0x1c8] sm:$0x1] %vm3473, %v7484
        %7792 = vst.msk [vmem:[#allocation5 + $0x1d8] sm:$0x1] %vm3473, %v7498
        %7793 = vst.msk [vmem:[#allocation5 + $0x1e8] sm:$0x1] %vm3473, %v7500
        %7794 = vst.msk [vmem:[#allocation5 + $0x1f8] sm:$0x1] %vm3473, %v7502
        %7795 = vst.msk [vmem:[#allocation5 + $0x208] sm:$0x1] %vm3473, %v7526
        %7796 = vst.msk [vmem:[#allocation5 + $0x218] sm:$0x1] %vm3473, %v7540
        %7797 = vst.msk [vmem:[#allocation5 + $0x228] sm:$0x1] %vm3473, %v7548
        %7798 = vst.msk [vmem:[#allocation5 + $0x238] sm:$0x1] %vm3473, %v7550
        %7799 = vst.msk [vmem:[#allocation5 + $0x248] sm:$0x1] %vm3473, %v7533
        %7800 = vst.msk [vmem:[#allocation5 + $0x258] sm:$0x1] %vm3473, %v7547
        %7801 = vst.msk [vmem:[#allocation5 + $0x268] sm:$0x1] %vm3473, %v7549
        %7802 = vst.msk [vmem:[#allocation5 + $0x278] sm:$0x1] %vm3473, %v7551
        %7803 = vst.msk [vmem:[#allocation5 + $0x288] sm:$0x1] %vm3473, %v7575
        %7804 = vst.msk [vmem:[#allocation5 + $0x298] sm:$0x1] %vm3473, %v7589
        %7805 = vst.msk [vmem:[#allocation5 + $0x2a8] sm:$0x1] %vm3473, %v7597
        %7806 = vst.msk [vmem:[#allocation5 + $0x2b8] sm:$0x1] %vm3473, %v7599
        %7807 = vst.msk [vmem:[#allocation5 + $0x2c8] sm:$0x1] %vm3473, %v7582
        %7808 = vst.msk [vmem:[#allocation5 + $0x2d8] sm:$0x1] %vm3473, %v7596
        %7809 = vst.msk [vmem:[#allocation5 + $0x2e8] sm:$0x1] %vm3473, %v7598
        %7810 = vst.msk [vmem:[#allocation5 + $0x2f8] sm:$0x1] %vm3473, %v7600
        %7811 = vst.msk [vmem:[#allocation5 + $0x308] sm:$0x1] %vm3473, %v7624
        %7812 = vst.msk [vmem:[#allocation5 + $0x318] sm:$0x1] %vm3473, %v7638
        %7813 = vst.msk [vmem:[#allocation5 + $0x328] sm:$0x1] %vm3473, %v7646
        %7814 = vst.msk [vmem:[#allocation5 + $0x338] sm:$0x1] %vm3473, %v7648
        %7815 = vst.msk [vmem:[#allocation5 + $0x348] sm:$0x1] %vm3473, %v7631
        %7816 = vst.msk [vmem:[#allocation5 + $0x358] sm:$0x1] %vm3473, %v7645
        %7817 = vst.msk [vmem:[#allocation5 + $0x368] sm:$0x1] %vm3473, %v7647
        %7818 = vst.msk [vmem:[#allocation5 + $0x378] sm:$0x1] %vm3473, %v7649
        %7819 = vst.msk [vmem:[#allocation5 + $0x388] sm:$0x1] %vm3473, %v7673
        %7820 = vst.msk [vmem:[#allocation5 + $0x398] sm:$0x1] %vm3473, %v7687
        %7821 = vst.msk [vmem:[#allocation5 + $0x3a8] sm:$0x1] %vm3473, %v7695
        %7822 = vst.msk [vmem:[#allocation5 + $0x3b8] sm:$0x1] %vm3473, %v7697
        %7823 = vst.msk [vmem:[#allocation5 + $0x3c8] sm:$0x1] %vm3473, %v7680
        %7824 = vst.msk [vmem:[#allocation5 + $0x3d8] sm:$0x1] %vm3473, %v7694
        %7825 = vst.msk [vmem:[#allocation5 + $0x3e8] sm:$0x1] %vm3473, %v7696
        %7826 = vst.msk [vmem:[#allocation5 + $0x3f8] sm:$0x1] %vm3473, %v7698
        %v7827 = vld [vmem:[#allocation5] sm:$0xff]
        %v7828 = vld [vmem:[#allocation5 + $0x8] sm:$0x1]
        %v7829 = vld [vmem:[#allocation5 + $0x10] sm:$0xff]
        %v7830 = vld [vmem:[#allocation5 + $0x18] sm:$0x1]
        %v7831 = vld [vmem:[#allocation5 + $0x20] sm:$0xff]
        %v7832 = vld [vmem:[#allocation5 + $0x28] sm:$0x1]
        %v7833 = vld [vmem:[#allocation5 + $0x30] sm:$0xff]
        %v7834 = vld [vmem:[#allocation5 + $0x38] sm:$0x1]
        %v7835 = vld [vmem:[#allocation5 + $0x40] sm:$0xff]
        %v7836 = vld [vmem:[#allocation5 + $0x48] sm:$0x1]
        %v7837 = vld [vmem:[#allocation5 + $0x50] sm:$0xff]
        %v7838 = vld [vmem:[#allocation5 + $0x58] sm:$0x1]
        %v7839 = vld [vmem:[#allocation5 + $0x60] sm:$0xff]
        %v7840 = vld [vmem:[#allocation5 + $0x68] sm:$0x1]
        %v7841 = vld [vmem:[#allocation5 + $0x70] sm:$0xff]
        %v7842 = vld [vmem:[#allocation5 + $0x78] sm:$0x1]
        %v7843 = vld [vmem:[#allocation5 + $0x80] sm:$0xff]
        %v7844 = vld [vmem:[#allocation5 + $0x88] sm:$0x1]
        %v7845 = vld [vmem:[#allocation5 + $0x90] sm:$0xff]
        %v7846 = vld [vmem:[#allocation5 + $0x98] sm:$0x1]
        %v7847 = vld [vmem:[#allocation5 + $0xa0] sm:$0xff]
        %v7848 = vld [vmem:[#allocation5 + $0xa8] sm:$0x1]
        %v7849 = vld [vmem:[#allocation5 + $0xb0] sm:$0xff]
        %v7850 = vld [vmem:[#allocation5 + $0xb8] sm:$0x1]
        %v7851 = vld [vmem:[#allocation5 + $0xc0] sm:$0xff]
        %v7852 = vld [vmem:[#allocation5 + $0xc8] sm:$0x1]
        %v7853 = vld [vmem:[#allocation5 + $0xd0] sm:$0xff]
        %v7854 = vld [vmem:[#allocation5 + $0xd8] sm:$0x1]
        %v7855 = vld [vmem:[#allocation5 + $0xe0] sm:$0xff]
        %v7856 = vld [vmem:[#allocation5 + $0xe8] sm:$0x1]
        %v7857 = vld [vmem:[#allocation5 + $0xf0] sm:$0xff]
        %v7858 = vld [vmem:[#allocation5 + $0xf8] sm:$0x1]
        %v7859 = vld [vmem:[#allocation5 + $0x100] sm:$0xff]
        %v7860 = vld [vmem:[#allocation5 + $0x108] sm:$0x1]
        %v7861 = vld [vmem:[#allocation5 + $0x110] sm:$0xff]
        %v7862 = vld [vmem:[#allocation5 + $0x118] sm:$0x1]
        %v7863 = vld [vmem:[#allocation5 + $0x120] sm:$0xff]
        %v7864 = vld [vmem:[#allocation5 + $0x128] sm:$0x1]
        %v7865 = vld [vmem:[#allocation5 + $0x130] sm:$0xff]
        %v7866 = vld [vmem:[#allocation5 + $0x138] sm:$0x1]
        %v7867 = vld [vmem:[#allocation5 + $0x140] sm:$0xff]
        %v7868 = vld [vmem:[#allocation5 + $0x148] sm:$0x1]
        %v7869 = vld [vmem:[#allocation5 + $0x150] sm:$0xff]
        %v7870 = vld [vmem:[#allocation5 + $0x158] sm:$0x1]
        %v7871 = vld [vmem:[#allocation5 + $0x160] sm:$0xff]
        %v7872 = vld [vmem:[#allocation5 + $0x168] sm:$0x1]
        %v7873 = vld [vmem:[#allocation5 + $0x170] sm:$0xff]
        %v7874 = vld [vmem:[#allocation5 + $0x178] sm:$0x1]
        %v7875 = vld [vmem:[#allocation5 + $0x180] sm:$0xff]
        %v7876 = vld [vmem:[#allocation5 + $0x188] sm:$0x1]
        %v7877 = vld [vmem:[#allocation5 + $0x190] sm:$0xff]
        %v7878 = vld [vmem:[#allocation5 + $0x198] sm:$0x1]
        %v7879 = vld [vmem:[#allocation5 + $0x1a0] sm:$0xff]
        %v7880 = vld [vmem:[#allocation5 + $0x1a8] sm:$0x1]
        %v7881 = vld [vmem:[#allocation5 + $0x1b0] sm:$0xff]
        %v7882 = vld [vmem:[#allocation5 + $0x1b8] sm:$0x1]
        %v7883 = vld [vmem:[#allocation5 + $0x1c0] sm:$0xff]
        %v7884 = vld [vmem:[#allocation5 + $0x1c8] sm:$0x1]
        %v7885 = vld [vmem:[#allocation5 + $0x1d0] sm:$0xff]
        %v7886 = vld [vmem:[#allocation5 + $0x1d8] sm:$0x1]
        %v7887 = vld [vmem:[#allocation5 + $0x1e0] sm:$0xff]
        %v7888 = vld [vmem:[#allocation5 + $0x1e8] sm:$0x1]
        %v7889 = vld [vmem:[#allocation5 + $0x1f0] sm:$0xff]
        %v7890 = vld [vmem:[#allocation5 + $0x1f8] sm:$0x1]
        %v7891 = vld [vmem:[#allocation5 + $0x200] sm:$0xff]
        %v7892 = vld [vmem:[#allocation5 + $0x208] sm:$0x1]
        %v7893 = vld [vmem:[#allocation5 + $0x210] sm:$0xff]
        %v7894 = vld [vmem:[#allocation5 + $0x218] sm:$0x1]
        %v7895 = vld [vmem:[#allocation5 + $0x220] sm:$0xff]
        %v7896 = vld [vmem:[#allocation5 + $0x228] sm:$0x1]
        %v7897 = vld [vmem:[#allocation5 + $0x230] sm:$0xff]
        %v7898 = vld [vmem:[#allocation5 + $0x238] sm:$0x1]
        %v7899 = vld [vmem:[#allocation5 + $0x240] sm:$0xff]
        %v7900 = vld [vmem:[#allocation5 + $0x248] sm:$0x1]
        %v7901 = vld [vmem:[#allocation5 + $0x250] sm:$0xff]
        %v7902 = vld [vmem:[#allocation5 + $0x258] sm:$0x1]
        %v7903 = vld [vmem:[#allocation5 + $0x260] sm:$0xff]
        %v7904 = vld [vmem:[#allocation5 + $0x268] sm:$0x1]
        %v7905 = vld [vmem:[#allocation5 + $0x270] sm:$0xff]
        %v7906 = vld [vmem:[#allocation5 + $0x278] sm:$0x1]
        %v7907 = vld [vmem:[#allocation5 + $0x280] sm:$0xff]
        %v7908 = vld [vmem:[#allocation5 + $0x288] sm:$0x1]
        %v7909 = vld [vmem:[#allocation5 + $0x290] sm:$0xff]
        %v7910 = vld [vmem:[#allocation5 + $0x298] sm:$0x1]
        %v7911 = vld [vmem:[#allocation5 + $0x2a0] sm:$0xff]
        %v7912 = vld [vmem:[#allocation5 + $0x2a8] sm:$0x1]
        %v7913 = vld [vmem:[#allocation5 + $0x2b0] sm:$0xff]
        %v7914 = vld [vmem:[#allocation5 + $0x2b8] sm:$0x1]
        %v7915 = vld [vmem:[#allocation5 + $0x2c0] sm:$0xff]
        %v7916 = vld [vmem:[#allocation5 + $0x2c8] sm:$0x1]
        %v7917 = vld [vmem:[#allocation5 + $0x2d0] sm:$0xff]
        %v7918 = vld [vmem:[#allocation5 + $0x2d8] sm:$0x1]
        %v7919 = vld [vmem:[#allocation5 + $0x2e0] sm:$0xff]
        %v7920 = vld [vmem:[#allocation5 + $0x2e8] sm:$0x1]
        %v7921 = vld [vmem:[#allocation5 + $0x2f0] sm:$0xff]
        %v7922 = vld [vmem:[#allocation5 + $0x2f8] sm:$0x1]
        %v7923 = vld [vmem:[#allocation5 + $0x300] sm:$0xff]
        %v7924 = vld [vmem:[#allocation5 + $0x308] sm:$0x1]
        %v7925 = vld [vmem:[#allocation5 + $0x310] sm:$0xff]
        %v7926 = vld [vmem:[#allocation5 + $0x318] sm:$0x1]
        %v7927 = vld [vmem:[#allocation5 + $0x320] sm:$0xff]
        %v7928 = vld [vmem:[#allocation5 + $0x328] sm:$0x1]
        %v7929 = vld [vmem:[#allocation5 + $0x330] sm:$0xff]
        %v7930 = vld [vmem:[#allocation5 + $0x338] sm:$0x1]
        %v7931 = vld [vmem:[#allocation5 + $0x340] sm:$0xff]
        %v7932 = vld [vmem:[#allocation5 + $0x348] sm:$0x1]
        %v7933 = vld [vmem:[#allocation5 + $0x350] sm:$0xff]
        %v7934 = vld [vmem:[#allocation5 + $0x358] sm:$0x1]
        %v7935 = vld [vmem:[#allocation5 + $0x360] sm:$0xff]
        %v7936 = vld [vmem:[#allocation5 + $0x368] sm:$0x1]
        %v7937 = vld [vmem:[#allocation5 + $0x370] sm:$0xff]
        %v7938 = vld [vmem:[#allocation5 + $0x378] sm:$0x1]
        %v7939 = vld [vmem:[#allocation5 + $0x380] sm:$0xff]
        %v7940 = vld [vmem:[#allocation5 + $0x388] sm:$0x1]
        %v7941 = vld [vmem:[#allocation5 + $0x390] sm:$0xff]
        %v7942 = vld [vmem:[#allocation5 + $0x398] sm:$0x1]
        %v7943 = vld [vmem:[#allocation5 + $0x3a0] sm:$0xff]
        %v7944 = vld [vmem:[#allocation5 + $0x3a8] sm:$0x1]
        %v7945 = vld [vmem:[#allocation5 + $0x3b0] sm:$0xff]
        %v7946 = vld [vmem:[#allocation5 + $0x3b8] sm:$0x1]
        %v7947 = vld [vmem:[#allocation5 + $0x3c0] sm:$0xff]
        %v7948 = vld [vmem:[#allocation5 + $0x3c8] sm:$0x1]
        %v7949 = vld [vmem:[#allocation5 + $0x3d0] sm:$0xff]
        %v7950 = vld [vmem:[#allocation5 + $0x3d8] sm:$0x1]
        %v7951 = vld [vmem:[#allocation5 + $0x3e0] sm:$0xff]
        %v7952 = vld [vmem:[#allocation5 + $0x3e8] sm:$0x1]
        %v7953 = vld [vmem:[#allocation5 + $0x3f0] sm:$0xff]
        %v7954 = vld [vmem:[#allocation5 + $0x3f8] sm:$0x1]
        %v7955 = vcombine.low %v7827, %v7831
        %v7956 = vcombine.high %v7827, %v7831
        %v7958 = vunpack.c.l.s4 1983009808
        %v7959 = vunpack.c.0.s8 %v7958
        %v7960 = vlaneseq
        %v7961 = vshrl.u32 %v7960, 7
        %v7962 = vsub.s32 %v7959, %v7961
        %v7963 = vrot.slane %v7955, %v7962
        %v7965 = vunpack.c.l.s4 1983009808
        %v7966 = vunpack.c.0.s8 %v7965
        %v7967 = vlaneseq
        %v7968 = vshrl.u32 %v7967, 7
        %v7969 = vsub.s32 %v7966, %v7968
        %v7970 = vrot.slane %v7956, %v7969
        %v7971 = vcombine.low %v7829, %v7833
        %v7972 = vcombine.high %v7829, %v7833
        %v7974 = vunpack.c.l.s4 1983009808
        %v7975 = vunpack.c.0.s8 %v7974
        %v7976 = vlaneseq
        %v7977 = vshrl.u32 %v7976, 7
        %v7978 = vsub.s32 %v7975, %v7977
        %v7979 = vrot.slane %v7971, %v7978
        %v7981 = vunpack.c.l.s4 1983009808
        %v7982 = vunpack.c.0.s8 %v7981
        %v7983 = vlaneseq
        %v7984 = vshrl.u32 %v7983, 7
        %v7985 = vsub.s32 %v7982, %v7984
        %v7986 = vrot.slane %v7972, %v7985
        %v7987 = vcombine.low %v7835, %v7839
        %v7988 = vcombine.high %v7835, %v7839
        %v7990 = vunpack.c.l.s4 1983009808
        %v7991 = vunpack.c.0.s8 %v7990
        %v7992 = vlaneseq
        %v7993 = vshrl.u32 %v7992, 7
        %v7994 = vsub.s32 %v7991, %v7993
        %v7995 = vrot.slane %v7987, %v7994
        %v7997 = vunpack.c.l.s4 1983009808
        %v7998 = vunpack.c.0.s8 %v7997
        %v7999 = vlaneseq
        %v8000 = vshrl.u32 %v7999, 7
        %v8001 = vsub.s32 %v7998, %v8000
        %v8002 = vrot.slane %v7988, %v8001
        %v8003 = vcombine.low %v7837, %v7841
        %v8004 = vcombine.high %v7837, %v7841
        %v8006 = vunpack.c.l.s4 1983009808
        %v8007 = vunpack.c.0.s8 %v8006
        %v8008 = vlaneseq
        %v8009 = vshrl.u32 %v8008, 7
        %v8010 = vsub.s32 %v8007, %v8009
        %v8011 = vrot.slane %v8003, %v8010
        %v8013 = vunpack.c.l.s4 1983009808
        %v8014 = vunpack.c.0.s8 %v8013
        %v8015 = vlaneseq
        %v8016 = vshrl.u32 %v8015, 7
        %v8017 = vsub.s32 %v8014, %v8016
        %v8018 = vrot.slane %v8004, %v8017
        %v8019 = vcombine.low %v7963, %v7979
        %v8020 = vcombine.high %v7963, %v7979
        %v8022 = vunpack.c.l.s4 1934713408
        %v8023 = vunpack.c.0.s8 %v8022
        %v8024 = vlaneseq
        %v8025 = vshrl.u32 %v8024, 7
        %v8026 = vsub.s32 %v8023, %v8025
        %v8027 = vrot.slane %v8019, %v8026
        %v8029 = vunpack.c.l.s4 1934713408
        %v8030 = vunpack.c.0.s8 %v8029
        %v8031 = vlaneseq
        %v8032 = vshrl.u32 %v8031, 7
        %v8033 = vsub.s32 %v8030, %v8032
        %v8034 = vrot.slane %v8020, %v8033
        %v8035 = vcombine.low %v7970, %v7986
        %v8036 = vcombine.high %v7970, %v7986
        %v8038 = vunpack.c.l.s4 1934713408
        %v8039 = vunpack.c.0.s8 %v8038
        %v8040 = vlaneseq
        %v8041 = vshrl.u32 %v8040, 7
        %v8042 = vsub.s32 %v8039, %v8041
        %v8043 = vrot.slane %v8035, %v8042
        %v8045 = vunpack.c.l.s4 1934713408
        %v8046 = vunpack.c.0.s8 %v8045
        %v8047 = vlaneseq
        %v8048 = vshrl.u32 %v8047, 7
        %v8049 = vsub.s32 %v8046, %v8048
        %v8050 = vrot.slane %v8036, %v8049
        %v8051 = vcombine.low %v7995, %v8011
        %v8052 = vcombine.high %v7995, %v8011
        %v8054 = vunpack.c.l.s4 1934713408
        %v8055 = vunpack.c.0.s8 %v8054
        %v8056 = vlaneseq
        %v8057 = vshrl.u32 %v8056, 7
        %v8058 = vsub.s32 %v8055, %v8057
        %v8059 = vrot.slane %v8051, %v8058
        %v8061 = vunpack.c.l.s4 1934713408
        %v8062 = vunpack.c.0.s8 %v8061
        %v8063 = vlaneseq
        %v8064 = vshrl.u32 %v8063, 7
        %v8065 = vsub.s32 %v8062, %v8064
        %v8066 = vrot.slane %v8052, %v8065
        %v8067 = vcombine.low %v8002, %v8018
        %v8068 = vcombine.high %v8002, %v8018
        %v8070 = vunpack.c.l.s4 1934713408
        %v8071 = vunpack.c.0.s8 %v8070
        %v8072 = vlaneseq
        %v8073 = vshrl.u32 %v8072, 7
        %v8074 = vsub.s32 %v8071, %v8073
        %v8075 = vrot.slane %v8067, %v8074
        %v8077 = vunpack.c.l.s4 1934713408
        %v8078 = vunpack.c.0.s8 %v8077
        %v8079 = vlaneseq
        %v8080 = vshrl.u32 %v8079, 7
        %v8081 = vsub.s32 %v8078, %v8080
        %v8082 = vrot.slane %v8068, %v8081
        %v8083 = vcombine.low %v8027, %v8059
        %v8084 = vcombine.high %v8027, %v8059
        %v8085 = vcombine.low %v8034, %v8066
        %v8086 = vcombine.high %v8034, %v8066
        %v8087 = vcombine.low %v8043, %v8075
        %v8088 = vcombine.high %v8043, %v8075
        %v8089 = vcombine.low %v8050, %v8082
        %v8090 = vcombine.high %v8050, %v8082
        %v8091 = vcombine.low %v7843, %v7847
        %v8092 = vcombine.high %v7843, %v7847
        %v8094 = vunpack.c.l.s4 1983009808
        %v8095 = vunpack.c.0.s8 %v8094
        %v8096 = vlaneseq
        %v8097 = vshrl.u32 %v8096, 7
        %v8098 = vsub.s32 %v8095, %v8097
        %v8099 = vrot.slane %v8091, %v8098
        %v8101 = vunpack.c.l.s4 1983009808
        %v8102 = vunpack.c.0.s8 %v8101
        %v8103 = vlaneseq
        %v8104 = vshrl.u32 %v8103, 7
        %v8105 = vsub.s32 %v8102, %v8104
        %v8106 = vrot.slane %v8092, %v8105
        %v8107 = vcombine.low %v7845, %v7849
        %v8108 = vcombine.high %v7845, %v7849
        %v8110 = vunpack.c.l.s4 1983009808
        %v8111 = vunpack.c.0.s8 %v8110
        %v8112 = vlaneseq
        %v8113 = vshrl.u32 %v8112, 7
        %v8114 = vsub.s32 %v8111, %v8113
        %v8115 = vrot.slane %v8107, %v8114
        %v8117 = vunpack.c.l.s4 1983009808
        %v8118 = vunpack.c.0.s8 %v8117
        %v8119 = vlaneseq
        %v8120 = vshrl.u32 %v8119, 7
        %v8121 = vsub.s32 %v8118, %v8120
        %v8122 = vrot.slane %v8108, %v8121
        %v8123 = vcombine.low %v7851, %v7855
        %v8124 = vcombine.high %v7851, %v7855
        %v8126 = vunpack.c.l.s4 1983009808
        %v8127 = vunpack.c.0.s8 %v8126
        %v8128 = vlaneseq
        %v8129 = vshrl.u32 %v8128, 7
        %v8130 = vsub.s32 %v8127, %v8129
        %v8131 = vrot.slane %v8123, %v8130
        %v8133 = vunpack.c.l.s4 1983009808
        %v8134 = vunpack.c.0.s8 %v8133
        %v8135 = vlaneseq
        %v8136 = vshrl.u32 %v8135, 7
        %v8137 = vsub.s32 %v8134, %v8136
        %v8138 = vrot.slane %v8124, %v8137
        %v8139 = vcombine.low %v7853, %v7857
        %v8140 = vcombine.high %v7853, %v7857
        %v8142 = vunpack.c.l.s4 1983009808
        %v8143 = vunpack.c.0.s8 %v8142
        %v8144 = vlaneseq
        %v8145 = vshrl.u32 %v8144, 7
        %v8146 = vsub.s32 %v8143, %v8145
        %v8147 = vrot.slane %v8139, %v8146
        %v8149 = vunpack.c.l.s4 1983009808
        %v8150 = vunpack.c.0.s8 %v8149
        %v8151 = vlaneseq
        %v8152 = vshrl.u32 %v8151, 7
        %v8153 = vsub.s32 %v8150, %v8152
        %v8154 = vrot.slane %v8140, %v8153
        %v8155 = vcombine.low %v8099, %v8115
        %v8156 = vcombine.high %v8099, %v8115
        %v8158 = vunpack.c.l.s4 1934713408
        %v8159 = vunpack.c.0.s8 %v8158
        %v8160 = vlaneseq
        %v8161 = vshrl.u32 %v8160, 7
        %v8162 = vsub.s32 %v8159, %v8161
        %v8163 = vrot.slane %v8155, %v8162
        %v8165 = vunpack.c.l.s4 1934713408
        %v8166 = vunpack.c.0.s8 %v8165
        %v8167 = vlaneseq
        %v8168 = vshrl.u32 %v8167, 7
        %v8169 = vsub.s32 %v8166, %v8168
        %v8170 = vrot.slane %v8156, %v8169
        %v8171 = vcombine.low %v8106, %v8122
        %v8172 = vcombine.high %v8106, %v8122
        %v8174 = vunpack.c.l.s4 1934713408
        %v8175 = vunpack.c.0.s8 %v8174
        %v8176 = vlaneseq
        %v8177 = vshrl.u32 %v8176, 7
        %v8178 = vsub.s32 %v8175, %v8177
        %v8179 = vrot.slane %v8171, %v8178
        %v8181 = vunpack.c.l.s4 1934713408
        %v8182 = vunpack.c.0.s8 %v8181
        %v8183 = vlaneseq
        %v8184 = vshrl.u32 %v8183, 7
        %v8185 = vsub.s32 %v8182, %v8184
        %v8186 = vrot.slane %v8172, %v8185
        %v8187 = vcombine.low %v8131, %v8147
        %v8188 = vcombine.high %v8131, %v8147
        %v8190 = vunpack.c.l.s4 1934713408
        %v8191 = vunpack.c.0.s8 %v8190
        %v8192 = vlaneseq
        %v8193 = vshrl.u32 %v8192, 7
        %v8194 = vsub.s32 %v8191, %v8193
        %v8195 = vrot.slane %v8187, %v8194
        %v8197 = vunpack.c.l.s4 1934713408
        %v8198 = vunpack.c.0.s8 %v8197
        %v8199 = vlaneseq
        %v8200 = vshrl.u32 %v8199, 7
        %v8201 = vsub.s32 %v8198, %v8200
        %v8202 = vrot.slane %v8188, %v8201
        %v8203 = vcombine.low %v8138, %v8154
        %v8204 = vcombine.high %v8138, %v8154
        %v8206 = vunpack.c.l.s4 1934713408
        %v8207 = vunpack.c.0.s8 %v8206
        %v8208 = vlaneseq
        %v8209 = vshrl.u32 %v8208, 7
        %v8210 = vsub.s32 %v8207, %v8209
        %v8211 = vrot.slane %v8203, %v8210
        %v8213 = vunpack.c.l.s4 1934713408
        %v8214 = vunpack.c.0.s8 %v8213
        %v8215 = vlaneseq
        %v8216 = vshrl.u32 %v8215, 7
        %v8217 = vsub.s32 %v8214, %v8216
        %v8218 = vrot.slane %v8204, %v8217
        %v8219 = vcombine.low %v8163, %v8195
        %v8220 = vcombine.high %v8163, %v8195
        %v8221 = vcombine.low %v8170, %v8202
        %v8222 = vcombine.high %v8170, %v8202
        %v8223 = vcombine.low %v8179, %v8211
        %v8224 = vcombine.high %v8179, %v8211
        %v8225 = vcombine.low %v8186, %v8218
        %v8226 = vcombine.high %v8186, %v8218
        %v8227 = vcombine.low %v7859, %v7863
        %v8228 = vcombine.high %v7859, %v7863
        %v8230 = vunpack.c.l.s4 1983009808
        %v8231 = vunpack.c.0.s8 %v8230
        %v8232 = vlaneseq
        %v8233 = vshrl.u32 %v8232, 7
        %v8234 = vsub.s32 %v8231, %v8233
        %v8235 = vrot.slane %v8227, %v8234
        %v8237 = vunpack.c.l.s4 1983009808
        %v8238 = vunpack.c.0.s8 %v8237
        %v8239 = vlaneseq
        %v8240 = vshrl.u32 %v8239, 7
        %v8241 = vsub.s32 %v8238, %v8240
        %v8242 = vrot.slane %v8228, %v8241
        %v8243 = vcombine.low %v7861, %v7865
        %v8244 = vcombine.high %v7861, %v7865
        %v8246 = vunpack.c.l.s4 1983009808
        %v8247 = vunpack.c.0.s8 %v8246
        %v8248 = vlaneseq
        %v8249 = vshrl.u32 %v8248, 7
        %v8250 = vsub.s32 %v8247, %v8249
        %v8251 = vrot.slane %v8243, %v8250
        %v8253 = vunpack.c.l.s4 1983009808
        %v8254 = vunpack.c.0.s8 %v8253
        %v8255 = vlaneseq
        %v8256 = vshrl.u32 %v8255, 7
        %v8257 = vsub.s32 %v8254, %v8256
        %v8258 = vrot.slane %v8244, %v8257
        %v8259 = vcombine.low %v7867, %v7871
        %v8260 = vcombine.high %v7867, %v7871
        %v8262 = vunpack.c.l.s4 1983009808
        %v8263 = vunpack.c.0.s8 %v8262
        %v8264 = vlaneseq
        %v8265 = vshrl.u32 %v8264, 7
        %v8266 = vsub.s32 %v8263, %v8265
        %v8267 = vrot.slane %v8259, %v8266
        %v8269 = vunpack.c.l.s4 1983009808
        %v8270 = vunpack.c.0.s8 %v8269
        %v8271 = vlaneseq
        %v8272 = vshrl.u32 %v8271, 7
        %v8273 = vsub.s32 %v8270, %v8272
        %v8274 = vrot.slane %v8260, %v8273
        %v8275 = vcombine.low %v7869, %v7873
        %v8276 = vcombine.high %v7869, %v7873
        %v8278 = vunpack.c.l.s4 1983009808
        %v8279 = vunpack.c.0.s8 %v8278
        %v8280 = vlaneseq
        %v8281 = vshrl.u32 %v8280, 7
        %v8282 = vsub.s32 %v8279, %v8281
        %v8283 = vrot.slane %v8275, %v8282
        %v8285 = vunpack.c.l.s4 1983009808
        %v8286 = vunpack.c.0.s8 %v8285
        %v8287 = vlaneseq
        %v8288 = vshrl.u32 %v8287, 7
        %v8289 = vsub.s32 %v8286, %v8288
        %v8290 = vrot.slane %v8276, %v8289
        %v8291 = vcombine.low %v8235, %v8251
        %v8292 = vcombine.high %v8235, %v8251
        %v8294 = vunpack.c.l.s4 1934713408
        %v8295 = vunpack.c.0.s8 %v8294
        %v8296 = vlaneseq
        %v8297 = vshrl.u32 %v8296, 7
        %v8298 = vsub.s32 %v8295, %v8297
        %v8299 = vrot.slane %v8291, %v8298
        %v8301 = vunpack.c.l.s4 1934713408
        %v8302 = vunpack.c.0.s8 %v8301
        %v8303 = vlaneseq
        %v8304 = vshrl.u32 %v8303, 7
        %v8305 = vsub.s32 %v8302, %v8304
        %v8306 = vrot.slane %v8292, %v8305
        %v8307 = vcombine.low %v8242, %v8258
        %v8308 = vcombine.high %v8242, %v8258
        %v8310 = vunpack.c.l.s4 1934713408
        %v8311 = vunpack.c.0.s8 %v8310
        %v8312 = vlaneseq
        %v8313 = vshrl.u32 %v8312, 7
        %v8314 = vsub.s32 %v8311, %v8313
        %v8315 = vrot.slane %v8307, %v8314
        %v8317 = vunpack.c.l.s4 1934713408
        %v8318 = vunpack.c.0.s8 %v8317
        %v8319 = vlaneseq
        %v8320 = vshrl.u32 %v8319, 7
        %v8321 = vsub.s32 %v8318, %v8320
        %v8322 = vrot.slane %v8308, %v8321
        %v8323 = vcombine.low %v8267, %v8283
        %v8324 = vcombine.high %v8267, %v8283
        %v8326 = vunpack.c.l.s4 1934713408
        %v8327 = vunpack.c.0.s8 %v8326
        %v8328 = vlaneseq
        %v8329 = vshrl.u32 %v8328, 7
        %v8330 = vsub.s32 %v8327, %v8329
        %v8331 = vrot.slane %v8323, %v8330
        %v8333 = vunpack.c.l.s4 1934713408
        %v8334 = vunpack.c.0.s8 %v8333
        %v8335 = vlaneseq
        %v8336 = vshrl.u32 %v8335, 7
        %v8337 = vsub.s32 %v8334, %v8336
        %v8338 = vrot.slane %v8324, %v8337
        %v8339 = vcombine.low %v8274, %v8290
        %v8340 = vcombine.high %v8274, %v8290
        %v8342 = vunpack.c.l.s4 1934713408
        %v8343 = vunpack.c.0.s8 %v8342
        %v8344 = vlaneseq
        %v8345 = vshrl.u32 %v8344, 7
        %v8346 = vsub.s32 %v8343, %v8345
        %v8347 = vrot.slane %v8339, %v8346
        %v8349 = vunpack.c.l.s4 1934713408
        %v8350 = vunpack.c.0.s8 %v8349
        %v8351 = vlaneseq
        %v8352 = vshrl.u32 %v8351, 7
        %v8353 = vsub.s32 %v8350, %v8352
        %v8354 = vrot.slane %v8340, %v8353
        %v8355 = vcombine.low %v8299, %v8331
        %v8356 = vcombine.high %v8299, %v8331
        %v8357 = vcombine.low %v8306, %v8338
        %v8358 = vcombine.high %v8306, %v8338
        %v8359 = vcombine.low %v8315, %v8347
        %v8360 = vcombine.high %v8315, %v8347
        %v8361 = vcombine.low %v8322, %v8354
        %v8362 = vcombine.high %v8322, %v8354
        %v8363 = vcombine.low %v7875, %v7879
        %v8364 = vcombine.high %v7875, %v7879
        %v8366 = vunpack.c.l.s4 1983009808
        %v8367 = vunpack.c.0.s8 %v8366
        %v8368 = vlaneseq
        %v8369 = vshrl.u32 %v8368, 7
        %v8370 = vsub.s32 %v8367, %v8369
        %v8371 = vrot.slane %v8363, %v8370
        %v8373 = vunpack.c.l.s4 1983009808
        %v8374 = vunpack.c.0.s8 %v8373
        %v8375 = vlaneseq
        %v8376 = vshrl.u32 %v8375, 7
        %v8377 = vsub.s32 %v8374, %v8376
        %v8378 = vrot.slane %v8364, %v8377
        %v8379 = vcombine.low %v7877, %v7881
        %v8380 = vcombine.high %v7877, %v7881
        %v8382 = vunpack.c.l.s4 1983009808
        %v8383 = vunpack.c.0.s8 %v8382
        %v8384 = vlaneseq
        %v8385 = vshrl.u32 %v8384, 7
        %v8386 = vsub.s32 %v8383, %v8385
        %v8387 = vrot.slane %v8379, %v8386
        %v8389 = vunpack.c.l.s4 1983009808
        %v8390 = vunpack.c.0.s8 %v8389
        %v8391 = vlaneseq
        %v8392 = vshrl.u32 %v8391, 7
        %v8393 = vsub.s32 %v8390, %v8392
        %v8394 = vrot.slane %v8380, %v8393
        %v8395 = vcombine.low %v7883, %v7887
        %v8396 = vcombine.high %v7883, %v7887
        %v8398 = vunpack.c.l.s4 1983009808
        %v8399 = vunpack.c.0.s8 %v8398
        %v8400 = vlaneseq
        %v8401 = vshrl.u32 %v8400, 7
        %v8402 = vsub.s32 %v8399, %v8401
        %v8403 = vrot.slane %v8395, %v8402
        %v8405 = vunpack.c.l.s4 1983009808
        %v8406 = vunpack.c.0.s8 %v8405
        %v8407 = vlaneseq
        %v8408 = vshrl.u32 %v8407, 7
        %v8409 = vsub.s32 %v8406, %v8408
        %v8410 = vrot.slane %v8396, %v8409
        %v8411 = vcombine.low %v7885, %v7889
        %v8412 = vcombine.high %v7885, %v7889
        %v8414 = vunpack.c.l.s4 1983009808
        %v8415 = vunpack.c.0.s8 %v8414
        %v8416 = vlaneseq
        %v8417 = vshrl.u32 %v8416, 7
        %v8418 = vsub.s32 %v8415, %v8417
        %v8419 = vrot.slane %v8411, %v8418
        %v8421 = vunpack.c.l.s4 1983009808
        %v8422 = vunpack.c.0.s8 %v8421
        %v8423 = vlaneseq
        %v8424 = vshrl.u32 %v8423, 7
        %v8425 = vsub.s32 %v8422, %v8424
        %v8426 = vrot.slane %v8412, %v8425
        %v8427 = vcombine.low %v8371, %v8387
        %v8428 = vcombine.high %v8371, %v8387
        %v8430 = vunpack.c.l.s4 1934713408
        %v8431 = vunpack.c.0.s8 %v8430
        %v8432 = vlaneseq
        %v8433 = vshrl.u32 %v8432, 7
        %v8434 = vsub.s32 %v8431, %v8433
        %v8435 = vrot.slane %v8427, %v8434
        %v8437 = vunpack.c.l.s4 1934713408
        %v8438 = vunpack.c.0.s8 %v8437
        %v8439 = vlaneseq
        %v8440 = vshrl.u32 %v8439, 7
        %v8441 = vsub.s32 %v8438, %v8440
        %v8442 = vrot.slane %v8428, %v8441
        %v8443 = vcombine.low %v8378, %v8394
        %v8444 = vcombine.high %v8378, %v8394
        %v8446 = vunpack.c.l.s4 1934713408
        %v8447 = vunpack.c.0.s8 %v8446
        %v8448 = vlaneseq
        %v8449 = vshrl.u32 %v8448, 7
        %v8450 = vsub.s32 %v8447, %v8449
        %v8451 = vrot.slane %v8443, %v8450
        %v8453 = vunpack.c.l.s4 1934713408
        %v8454 = vunpack.c.0.s8 %v8453
        %v8455 = vlaneseq
        %v8456 = vshrl.u32 %v8455, 7
        %v8457 = vsub.s32 %v8454, %v8456
        %v8458 = vrot.slane %v8444, %v8457
        %v8459 = vcombine.low %v8403, %v8419
        %v8460 = vcombine.high %v8403, %v8419
        %v8462 = vunpack.c.l.s4 1934713408
        %v8463 = vunpack.c.0.s8 %v8462
        %v8464 = vlaneseq
        %v8465 = vshrl.u32 %v8464, 7
        %v8466 = vsub.s32 %v8463, %v8465
        %v8467 = vrot.slane %v8459, %v8466
        %v8469 = vunpack.c.l.s4 1934713408
        %v8470 = vunpack.c.0.s8 %v8469
        %v8471 = vlaneseq
        %v8472 = vshrl.u32 %v8471, 7
        %v8473 = vsub.s32 %v8470, %v8472
        %v8474 = vrot.slane %v8460, %v8473
        %v8475 = vcombine.low %v8410, %v8426
        %v8476 = vcombine.high %v8410, %v8426
        %v8478 = vunpack.c.l.s4 1934713408
        %v8479 = vunpack.c.0.s8 %v8478
        %v8480 = vlaneseq
        %v8481 = vshrl.u32 %v8480, 7
        %v8482 = vsub.s32 %v8479, %v8481
        %v8483 = vrot.slane %v8475, %v8482
        %v8485 = vunpack.c.l.s4 1934713408
        %v8486 = vunpack.c.0.s8 %v8485
        %v8487 = vlaneseq
        %v8488 = vshrl.u32 %v8487, 7
        %v8489 = vsub.s32 %v8486, %v8488
        %v8490 = vrot.slane %v8476, %v8489
        %v8491 = vcombine.low %v8435, %v8467
        %v8492 = vcombine.high %v8435, %v8467
        %v8493 = vcombine.low %v8442, %v8474
        %v8494 = vcombine.high %v8442, %v8474
        %v8495 = vcombine.low %v8451, %v8483
        %v8496 = vcombine.high %v8451, %v8483
        %v8497 = vcombine.low %v8458, %v8490
        %v8498 = vcombine.high %v8458, %v8490
        %v8499 = vcombine.low %v7891, %v7895
        %v8500 = vcombine.high %v7891, %v7895
        %v8502 = vunpack.c.l.s4 1983009808
        %v8503 = vunpack.c.0.s8 %v8502
        %v8504 = vlaneseq
        %v8505 = vshrl.u32 %v8504, 7
        %v8506 = vsub.s32 %v8503, %v8505
        %v8507 = vrot.slane %v8499, %v8506
        %v8509 = vunpack.c.l.s4 1983009808
        %v8510 = vunpack.c.0.s8 %v8509
        %v8511 = vlaneseq
        %v8512 = vshrl.u32 %v8511, 7
        %v8513 = vsub.s32 %v8510, %v8512
        %v8514 = vrot.slane %v8500, %v8513
        %v8515 = vcombine.low %v7893, %v7897
        %v8516 = vcombine.high %v7893, %v7897
        %v8518 = vunpack.c.l.s4 1983009808
        %v8519 = vunpack.c.0.s8 %v8518
        %v8520 = vlaneseq
        %v8521 = vshrl.u32 %v8520, 7
        %v8522 = vsub.s32 %v8519, %v8521
        %v8523 = vrot.slane %v8515, %v8522
        %v8525 = vunpack.c.l.s4 1983009808
        %v8526 = vunpack.c.0.s8 %v8525
        %v8527 = vlaneseq
        %v8528 = vshrl.u32 %v8527, 7
        %v8529 = vsub.s32 %v8526, %v8528
        %v8530 = vrot.slane %v8516, %v8529
        %v8531 = vcombine.low %v7899, %v7903
        %v8532 = vcombine.high %v7899, %v7903
        %v8534 = vunpack.c.l.s4 1983009808
        %v8535 = vunpack.c.0.s8 %v8534
        %v8536 = vlaneseq
        %v8537 = vshrl.u32 %v8536, 7
        %v8538 = vsub.s32 %v8535, %v8537
        %v8539 = vrot.slane %v8531, %v8538
        %v8541 = vunpack.c.l.s4 1983009808
        %v8542 = vunpack.c.0.s8 %v8541
        %v8543 = vlaneseq
        %v8544 = vshrl.u32 %v8543, 7
        %v8545 = vsub.s32 %v8542, %v8544
        %v8546 = vrot.slane %v8532, %v8545
        %v8547 = vcombine.low %v7901, %v7905
        %v8548 = vcombine.high %v7901, %v7905
        %v8550 = vunpack.c.l.s4 1983009808
        %v8551 = vunpack.c.0.s8 %v8550
        %v8552 = vlaneseq
        %v8553 = vshrl.u32 %v8552, 7
        %v8554 = vsub.s32 %v8551, %v8553
        %v8555 = vrot.slane %v8547, %v8554
        %v8557 = vunpack.c.l.s4 1983009808
        %v8558 = vunpack.c.0.s8 %v8557
        %v8559 = vlaneseq
        %v8560 = vshrl.u32 %v8559, 7
        %v8561 = vsub.s32 %v8558, %v8560
        %v8562 = vrot.slane %v8548, %v8561
        %v8563 = vcombine.low %v8507, %v8523
        %v8564 = vcombine.high %v8507, %v8523
        %v8566 = vunpack.c.l.s4 1934713408
        %v8567 = vunpack.c.0.s8 %v8566
        %v8568 = vlaneseq
        %v8569 = vshrl.u32 %v8568, 7
        %v8570 = vsub.s32 %v8567, %v8569
        %v8571 = vrot.slane %v8563, %v8570
        %v8573 = vunpack.c.l.s4 1934713408
        %v8574 = vunpack.c.0.s8 %v8573
        %v8575 = vlaneseq
        %v8576 = vshrl.u32 %v8575, 7
        %v8577 = vsub.s32 %v8574, %v8576
        %v8578 = vrot.slane %v8564, %v8577
        %v8579 = vcombine.low %v8514, %v8530
        %v8580 = vcombine.high %v8514, %v8530
        %v8582 = vunpack.c.l.s4 1934713408
        %v8583 = vunpack.c.0.s8 %v8582
        %v8584 = vlaneseq
        %v8585 = vshrl.u32 %v8584, 7
        %v8586 = vsub.s32 %v8583, %v8585
        %v8587 = vrot.slane %v8579, %v8586
        %v8589 = vunpack.c.l.s4 1934713408
        %v8590 = vunpack.c.0.s8 %v8589
        %v8591 = vlaneseq
        %v8592 = vshrl.u32 %v8591, 7
        %v8593 = vsub.s32 %v8590, %v8592
        %v8594 = vrot.slane %v8580, %v8593
        %v8595 = vcombine.low %v8539, %v8555
        %v8596 = vcombine.high %v8539, %v8555
        %v8598 = vunpack.c.l.s4 1934713408
        %v8599 = vunpack.c.0.s8 %v8598
        %v8600 = vlaneseq
        %v8601 = vshrl.u32 %v8600, 7
        %v8602 = vsub.s32 %v8599, %v8601
        %v8603 = vrot.slane %v8595, %v8602
        %v8605 = vunpack.c.l.s4 1934713408
        %v8606 = vunpack.c.0.s8 %v8605
        %v8607 = vlaneseq
        %v8608 = vshrl.u32 %v8607, 7
        %v8609 = vsub.s32 %v8606, %v8608
        %v8610 = vrot.slane %v8596, %v8609
        %v8611 = vcombine.low %v8546, %v8562
        %v8612 = vcombine.high %v8546, %v8562
        %v8614 = vunpack.c.l.s4 1934713408
        %v8615 = vunpack.c.0.s8 %v8614
        %v8616 = vlaneseq
        %v8617 = vshrl.u32 %v8616, 7
        %v8618 = vsub.s32 %v8615, %v8617
        %v8619 = vrot.slane %v8611, %v8618
        %v8621 = vunpack.c.l.s4 1934713408
        %v8622 = vunpack.c.0.s8 %v8621
        %v8623 = vlaneseq
        %v8624 = vshrl.u32 %v8623, 7
        %v8625 = vsub.s32 %v8622, %v8624
        %v8626 = vrot.slane %v8612, %v8625
        %v8627 = vcombine.low %v8571, %v8603
        %v8628 = vcombine.high %v8571, %v8603
        %v8629 = vcombine.low %v8578, %v8610
        %v8630 = vcombine.high %v8578, %v8610
        %v8631 = vcombine.low %v8587, %v8619
        %v8632 = vcombine.high %v8587, %v8619
        %v8633 = vcombine.low %v8594, %v8626
        %v8634 = vcombine.high %v8594, %v8626
        %v8635 = vcombine.low %v7907, %v7911
        %v8636 = vcombine.high %v7907, %v7911
        %v8638 = vunpack.c.l.s4 1983009808
        %v8639 = vunpack.c.0.s8 %v8638
        %v8640 = vlaneseq
        %v8641 = vshrl.u32 %v8640, 7
        %v8642 = vsub.s32 %v8639, %v8641
        %v8643 = vrot.slane %v8635, %v8642
        %v8645 = vunpack.c.l.s4 1983009808
        %v8646 = vunpack.c.0.s8 %v8645
        %v8647 = vlaneseq
        %v8648 = vshrl.u32 %v8647, 7
        %v8649 = vsub.s32 %v8646, %v8648
        %v8650 = vrot.slane %v8636, %v8649
        %v8651 = vcombine.low %v7909, %v7913
        %v8652 = vcombine.high %v7909, %v7913
        %v8654 = vunpack.c.l.s4 1983009808
        %v8655 = vunpack.c.0.s8 %v8654
        %v8656 = vlaneseq
        %v8657 = vshrl.u32 %v8656, 7
        %v8658 = vsub.s32 %v8655, %v8657
        %v8659 = vrot.slane %v8651, %v8658
        %v8661 = vunpack.c.l.s4 1983009808
        %v8662 = vunpack.c.0.s8 %v8661
        %v8663 = vlaneseq
        %v8664 = vshrl.u32 %v8663, 7
        %v8665 = vsub.s32 %v8662, %v8664
        %v8666 = vrot.slane %v8652, %v8665
        %v8667 = vcombine.low %v7915, %v7919
        %v8668 = vcombine.high %v7915, %v7919
        %v8670 = vunpack.c.l.s4 1983009808
        %v8671 = vunpack.c.0.s8 %v8670
        %v8672 = vlaneseq
        %v8673 = vshrl.u32 %v8672, 7
        %v8674 = vsub.s32 %v8671, %v8673
        %v8675 = vrot.slane %v8667, %v8674
        %v8677 = vunpack.c.l.s4 1983009808
        %v8678 = vunpack.c.0.s8 %v8677
        %v8679 = vlaneseq
        %v8680 = vshrl.u32 %v8679, 7
        %v8681 = vsub.s32 %v8678, %v8680
        %v8682 = vrot.slane %v8668, %v8681
        %v8683 = vcombine.low %v7917, %v7921
        %v8684 = vcombine.high %v7917, %v7921
        %v8686 = vunpack.c.l.s4 1983009808
        %v8687 = vunpack.c.0.s8 %v8686
        %v8688 = vlaneseq
        %v8689 = vshrl.u32 %v8688, 7
        %v8690 = vsub.s32 %v8687, %v8689
        %v8691 = vrot.slane %v8683, %v8690
        %v8693 = vunpack.c.l.s4 1983009808
        %v8694 = vunpack.c.0.s8 %v8693
        %v8695 = vlaneseq
        %v8696 = vshrl.u32 %v8695, 7
        %v8697 = vsub.s32 %v8694, %v8696
        %v8698 = vrot.slane %v8684, %v8697
        %v8699 = vcombine.low %v8643, %v8659
        %v8700 = vcombine.high %v8643, %v8659
        %v8702 = vunpack.c.l.s4 1934713408
        %v8703 = vunpack.c.0.s8 %v8702
        %v8704 = vlaneseq
        %v8705 = vshrl.u32 %v8704, 7
        %v8706 = vsub.s32 %v8703, %v8705
        %v8707 = vrot.slane %v8699, %v8706
        %v8709 = vunpack.c.l.s4 1934713408
        %v8710 = vunpack.c.0.s8 %v8709
        %v8711 = vlaneseq
        %v8712 = vshrl.u32 %v8711, 7
        %v8713 = vsub.s32 %v8710, %v8712
        %v8714 = vrot.slane %v8700, %v8713
        %v8715 = vcombine.low %v8650, %v8666
        %v8716 = vcombine.high %v8650, %v8666
        %v8718 = vunpack.c.l.s4 1934713408
        %v8719 = vunpack.c.0.s8 %v8718
        %v8720 = vlaneseq
        %v8721 = vshrl.u32 %v8720, 7
        %v8722 = vsub.s32 %v8719, %v8721
        %v8723 = vrot.slane %v8715, %v8722
        %v8725 = vunpack.c.l.s4 1934713408
        %v8726 = vunpack.c.0.s8 %v8725
        %v8727 = vlaneseq
        %v8728 = vshrl.u32 %v8727, 7
        %v8729 = vsub.s32 %v8726, %v8728
        %v8730 = vrot.slane %v8716, %v8729
        %v8731 = vcombine.low %v8675, %v8691
        %v8732 = vcombine.high %v8675, %v8691
        %v8734 = vunpack.c.l.s4 1934713408
        %v8735 = vunpack.c.0.s8 %v8734
        %v8736 = vlaneseq
        %v8737 = vshrl.u32 %v8736, 7
        %v8738 = vsub.s32 %v8735, %v8737
        %v8739 = vrot.slane %v8731, %v8738
        %v8741 = vunpack.c.l.s4 1934713408
        %v8742 = vunpack.c.0.s8 %v8741
        %v8743 = vlaneseq
        %v8744 = vshrl.u32 %v8743, 7
        %v8745 = vsub.s32 %v8742, %v8744
        %v8746 = vrot.slane %v8732, %v8745
        %v8747 = vcombine.low %v8682, %v8698
        %v8748 = vcombine.high %v8682, %v8698
        %v8750 = vunpack.c.l.s4 1934713408
        %v8751 = vunpack.c.0.s8 %v8750
        %v8752 = vlaneseq
        %v8753 = vshrl.u32 %v8752, 7
        %v8754 = vsub.s32 %v8751, %v8753
        %v8755 = vrot.slane %v8747, %v8754
        %v8757 = vunpack.c.l.s4 1934713408
        %v8758 = vunpack.c.0.s8 %v8757
        %v8759 = vlaneseq
        %v8760 = vshrl.u32 %v8759, 7
        %v8761 = vsub.s32 %v8758, %v8760
        %v8762 = vrot.slane %v8748, %v8761
        %v8763 = vcombine.low %v8707, %v8739
        %v8764 = vcombine.high %v8707, %v8739
        %v8765 = vcombine.low %v8714, %v8746
        %v8766 = vcombine.high %v8714, %v8746
        %v8767 = vcombine.low %v8723, %v8755
        %v8768 = vcombine.high %v8723, %v8755
        %v8769 = vcombine.low %v8730, %v8762
        %v8770 = vcombine.high %v8730, %v8762
        %v8771 = vcombine.low %v7923, %v7927
        %v8772 = vcombine.high %v7923, %v7927
        %v8774 = vunpack.c.l.s4 1983009808
        %v8775 = vunpack.c.0.s8 %v8774
        %v8776 = vlaneseq
        %v8777 = vshrl.u32 %v8776, 7
        %v8778 = vsub.s32 %v8775, %v8777
        %v8779 = vrot.slane %v8771, %v8778
        %v8781 = vunpack.c.l.s4 1983009808
        %v8782 = vunpack.c.0.s8 %v8781
        %v8783 = vlaneseq
        %v8784 = vshrl.u32 %v8783, 7
        %v8785 = vsub.s32 %v8782, %v8784
        %v8786 = vrot.slane %v8772, %v8785
        %v8787 = vcombine.low %v7925, %v7929
        %v8788 = vcombine.high %v7925, %v7929
        %v8790 = vunpack.c.l.s4 1983009808
        %v8791 = vunpack.c.0.s8 %v8790
        %v8792 = vlaneseq
        %v8793 = vshrl.u32 %v8792, 7
        %v8794 = vsub.s32 %v8791, %v8793
        %v8795 = vrot.slane %v8787, %v8794
        %v8797 = vunpack.c.l.s4 1983009808
        %v8798 = vunpack.c.0.s8 %v8797
        %v8799 = vlaneseq
        %v8800 = vshrl.u32 %v8799, 7
        %v8801 = vsub.s32 %v8798, %v8800
        %v8802 = vrot.slane %v8788, %v8801
        %v8803 = vcombine.low %v7931, %v7935
        %v8804 = vcombine.high %v7931, %v7935
        %v8806 = vunpack.c.l.s4 1983009808
        %v8807 = vunpack.c.0.s8 %v8806
        %v8808 = vlaneseq
        %v8809 = vshrl.u32 %v8808, 7
        %v8810 = vsub.s32 %v8807, %v8809
        %v8811 = vrot.slane %v8803, %v8810
        %v8813 = vunpack.c.l.s4 1983009808
        %v8814 = vunpack.c.0.s8 %v8813
        %v8815 = vlaneseq
        %v8816 = vshrl.u32 %v8815, 7
        %v8817 = vsub.s32 %v8814, %v8816
        %v8818 = vrot.slane %v8804, %v8817
        %v8819 = vcombine.low %v7933, %v7937
        %v8820 = vcombine.high %v7933, %v7937
        %v8822 = vunpack.c.l.s4 1983009808
        %v8823 = vunpack.c.0.s8 %v8822
        %v8824 = vlaneseq
        %v8825 = vshrl.u32 %v8824, 7
        %v8826 = vsub.s32 %v8823, %v8825
        %v8827 = vrot.slane %v8819, %v8826
        %v8829 = vunpack.c.l.s4 1983009808
        %v8830 = vunpack.c.0.s8 %v8829
        %v8831 = vlaneseq
        %v8832 = vshrl.u32 %v8831, 7
        %v8833 = vsub.s32 %v8830, %v8832
        %v8834 = vrot.slane %v8820, %v8833
        %v8835 = vcombine.low %v8779, %v8795
        %v8836 = vcombine.high %v8779, %v8795
        %v8838 = vunpack.c.l.s4 1934713408
        %v8839 = vunpack.c.0.s8 %v8838
        %v8840 = vlaneseq
        %v8841 = vshrl.u32 %v8840, 7
        %v8842 = vsub.s32 %v8839, %v8841
        %v8843 = vrot.slane %v8835, %v8842
        %v8845 = vunpack.c.l.s4 1934713408
        %v8846 = vunpack.c.0.s8 %v8845
        %v8847 = vlaneseq
        %v8848 = vshrl.u32 %v8847, 7
        %v8849 = vsub.s32 %v8846, %v8848
        %v8850 = vrot.slane %v8836, %v8849
        %v8851 = vcombine.low %v8786, %v8802
        %v8852 = vcombine.high %v8786, %v8802
        %v8854 = vunpack.c.l.s4 1934713408
        %v8855 = vunpack.c.0.s8 %v8854
        %v8856 = vlaneseq
        %v8857 = vshrl.u32 %v8856, 7
        %v8858 = vsub.s32 %v8855, %v8857
        %v8859 = vrot.slane %v8851, %v8858
        %v8861 = vunpack.c.l.s4 1934713408
        %v8862 = vunpack.c.0.s8 %v8861
        %v8863 = vlaneseq
        %v8864 = vshrl.u32 %v8863, 7
        %v8865 = vsub.s32 %v8862, %v8864
        %v8866 = vrot.slane %v8852, %v8865
        %v8867 = vcombine.low %v8811, %v8827
        %v8868 = vcombine.high %v8811, %v8827
        %v8870 = vunpack.c.l.s4 1934713408
        %v8871 = vunpack.c.0.s8 %v8870
        %v8872 = vlaneseq
        %v8873 = vshrl.u32 %v8872, 7
        %v8874 = vsub.s32 %v8871, %v8873
        %v8875 = vrot.slane %v8867, %v8874
        %v8877 = vunpack.c.l.s4 1934713408
        %v8878 = vunpack.c.0.s8 %v8877
        %v8879 = vlaneseq
        %v8880 = vshrl.u32 %v8879, 7
        %v8881 = vsub.s32 %v8878, %v8880
        %v8882 = vrot.slane %v8868, %v8881
        %v8883 = vcombine.low %v8818, %v8834
        %v8884 = vcombine.high %v8818, %v8834
        %v8886 = vunpack.c.l.s4 1934713408
        %v8887 = vunpack.c.0.s8 %v8886
        %v8888 = vlaneseq
        %v8889 = vshrl.u32 %v8888, 7
        %v8890 = vsub.s32 %v8887, %v8889
        %v8891 = vrot.slane %v8883, %v8890
        %v8893 = vunpack.c.l.s4 1934713408
        %v8894 = vunpack.c.0.s8 %v8893
        %v8895 = vlaneseq
        %v8896 = vshrl.u32 %v8895, 7
        %v8897 = vsub.s32 %v8894, %v8896
        %v8898 = vrot.slane %v8884, %v8897
        %v8899 = vcombine.low %v8843, %v8875
        %v8900 = vcombine.high %v8843, %v8875
        %v8901 = vcombine.low %v8850, %v8882
        %v8902 = vcombine.high %v8850, %v8882
        %v8903 = vcombine.low %v8859, %v8891
        %v8904 = vcombine.high %v8859, %v8891
        %v8905 = vcombine.low %v8866, %v8898
        %v8906 = vcombine.high %v8866, %v8898
        %v8907 = vcombine.low %v7939, %v7943
        %v8908 = vcombine.high %v7939, %v7943
        %v8910 = vunpack.c.l.s4 1983009808
        %v8911 = vunpack.c.0.s8 %v8910
        %v8912 = vlaneseq
        %v8913 = vshrl.u32 %v8912, 7
        %v8914 = vsub.s32 %v8911, %v8913
        %v8915 = vrot.slane %v8907, %v8914
        %v8917 = vunpack.c.l.s4 1983009808
        %v8918 = vunpack.c.0.s8 %v8917
        %v8919 = vlaneseq
        %v8920 = vshrl.u32 %v8919, 7
        %v8921 = vsub.s32 %v8918, %v8920
        %v8922 = vrot.slane %v8908, %v8921
        %v8923 = vcombine.low %v7941, %v7945
        %v8924 = vcombine.high %v7941, %v7945
        %v8926 = vunpack.c.l.s4 1983009808
        %v8927 = vunpack.c.0.s8 %v8926
        %v8928 = vlaneseq
        %v8929 = vshrl.u32 %v8928, 7
        %v8930 = vsub.s32 %v8927, %v8929
        %v8931 = vrot.slane %v8923, %v8930
        %v8933 = vunpack.c.l.s4 1983009808
        %v8934 = vunpack.c.0.s8 %v8933
        %v8935 = vlaneseq
        %v8936 = vshrl.u32 %v8935, 7
        %v8937 = vsub.s32 %v8934, %v8936
        %v8938 = vrot.slane %v8924, %v8937
        %v8939 = vcombine.low %v7947, %v7951
        %v8940 = vcombine.high %v7947, %v7951
        %v8942 = vunpack.c.l.s4 1983009808
        %v8943 = vunpack.c.0.s8 %v8942
        %v8944 = vlaneseq
        %v8945 = vshrl.u32 %v8944, 7
        %v8946 = vsub.s32 %v8943, %v8945
        %v8947 = vrot.slane %v8939, %v8946
        %v8949 = vunpack.c.l.s4 1983009808
        %v8950 = vunpack.c.0.s8 %v8949
        %v8951 = vlaneseq
        %v8952 = vshrl.u32 %v8951, 7
        %v8953 = vsub.s32 %v8950, %v8952
        %v8954 = vrot.slane %v8940, %v8953
        %v8955 = vcombine.low %v7949, %v7953
        %v8956 = vcombine.high %v7949, %v7953
        %v8958 = vunpack.c.l.s4 1983009808
        %v8959 = vunpack.c.0.s8 %v8958
        %v8960 = vlaneseq
        %v8961 = vshrl.u32 %v8960, 7
        %v8962 = vsub.s32 %v8959, %v8961
        %v8963 = vrot.slane %v8955, %v8962
        %v8965 = vunpack.c.l.s4 1983009808
        %v8966 = vunpack.c.0.s8 %v8965
        %v8967 = vlaneseq
        %v8968 = vshrl.u32 %v8967, 7
        %v8969 = vsub.s32 %v8966, %v8968
        %v8970 = vrot.slane %v8956, %v8969
        %v8971 = vcombine.low %v8915, %v8931
        %v8972 = vcombine.high %v8915, %v8931
        %v8974 = vunpack.c.l.s4 1934713408
        %v8975 = vunpack.c.0.s8 %v8974
        %v8976 = vlaneseq
        %v8977 = vshrl.u32 %v8976, 7
        %v8978 = vsub.s32 %v8975, %v8977
        %v8979 = vrot.slane %v8971, %v8978
        %v8981 = vunpack.c.l.s4 1934713408
        %v8982 = vunpack.c.0.s8 %v8981
        %v8983 = vlaneseq
        %v8984 = vshrl.u32 %v8983, 7
        %v8985 = vsub.s32 %v8982, %v8984
        %v8986 = vrot.slane %v8972, %v8985
        %v8987 = vcombine.low %v8922, %v8938
        %v8988 = vcombine.high %v8922, %v8938
        %v8990 = vunpack.c.l.s4 1934713408
        %v8991 = vunpack.c.0.s8 %v8990
        %v8992 = vlaneseq
        %v8993 = vshrl.u32 %v8992, 7
        %v8994 = vsub.s32 %v8991, %v8993
        %v8995 = vrot.slane %v8987, %v8994
        %v8997 = vunpack.c.l.s4 1934713408
        %v8998 = vunpack.c.0.s8 %v8997
        %v8999 = vlaneseq
        %v9000 = vshrl.u32 %v8999, 7
        %v9001 = vsub.s32 %v8998, %v9000
        %v9002 = vrot.slane %v8988, %v9001
        %v9003 = vcombine.low %v8947, %v8963
        %v9004 = vcombine.high %v8947, %v8963
        %v9006 = vunpack.c.l.s4 1934713408
        %v9007 = vunpack.c.0.s8 %v9006
        %v9008 = vlaneseq
        %v9009 = vshrl.u32 %v9008, 7
        %v9010 = vsub.s32 %v9007, %v9009
        %v9011 = vrot.slane %v9003, %v9010
        %v9013 = vunpack.c.l.s4 1934713408
        %v9014 = vunpack.c.0.s8 %v9013
        %v9015 = vlaneseq
        %v9016 = vshrl.u32 %v9015, 7
        %v9017 = vsub.s32 %v9014, %v9016
        %v9018 = vrot.slane %v9004, %v9017
        %v9019 = vcombine.low %v8954, %v8970
        %v9020 = vcombine.high %v8954, %v8970
        %v9022 = vunpack.c.l.s4 1934713408
        %v9023 = vunpack.c.0.s8 %v9022
        %v9024 = vlaneseq
        %v9025 = vshrl.u32 %v9024, 7
        %v9026 = vsub.s32 %v9023, %v9025
        %v9027 = vrot.slane %v9019, %v9026
        %v9029 = vunpack.c.l.s4 1934713408
        %v9030 = vunpack.c.0.s8 %v9029
        %v9031 = vlaneseq
        %v9032 = vshrl.u32 %v9031, 7
        %v9033 = vsub.s32 %v9030, %v9032
        %v9034 = vrot.slane %v9020, %v9033
        %v9035 = vcombine.low %v8979, %v9011
        %v9036 = vcombine.high %v8979, %v9011
        %v9037 = vcombine.low %v8986, %v9018
        %v9038 = vcombine.high %v8986, %v9018
        %v9039 = vcombine.low %v8995, %v9027
        %v9040 = vcombine.high %v8995, %v9027
        %v9041 = vcombine.low %v9002, %v9034
        %v9042 = vcombine.high %v9002, %v9034
        %v9043 = vcombine.low %v7828, %v7832
        %v9045 = vunpack.c.l.s4 1983009808
        %v9046 = vunpack.c.0.s8 %v9045
        %v9047 = vlaneseq
        %v9048 = vshrl.u32 %v9047, 7
        %v9049 = vsub.s32 %v9046, %v9048
        %v9050 = vrot.slane %v9043, %v9049
        %v9051 = vcombine.low %v7830, %v7834
        %v9053 = vunpack.c.l.s4 1983009808
        %v9054 = vunpack.c.0.s8 %v9053
        %v9055 = vlaneseq
        %v9056 = vshrl.u32 %v9055, 7
        %v9057 = vsub.s32 %v9054, %v9056
        %v9058 = vrot.slane %v9051, %v9057
        %v9059 = vcombine.low %v7836, %v7840
        %v9061 = vunpack.c.l.s4 1983009808
        %v9062 = vunpack.c.0.s8 %v9061
        %v9063 = vlaneseq
        %v9064 = vshrl.u32 %v9063, 7
        %v9065 = vsub.s32 %v9062, %v9064
        %v9066 = vrot.slane %v9059, %v9065
        %v9067 = vcombine.low %v7838, %v7842
        %v9069 = vunpack.c.l.s4 1983009808
        %v9070 = vunpack.c.0.s8 %v9069
        %v9071 = vlaneseq
        %v9072 = vshrl.u32 %v9071, 7
        %v9073 = vsub.s32 %v9070, %v9072
        %v9074 = vrot.slane %v9067, %v9073
        %v9075 = vcombine.low %v9050, %v9058
        %v9077 = vunpack.c.l.s4 1934713408
        %v9078 = vunpack.c.0.s8 %v9077
        %v9079 = vlaneseq
        %v9080 = vshrl.u32 %v9079, 7
        %v9081 = vsub.s32 %v9078, %v9080
        %v9082 = vrot.slane %v9075, %v9081
        %v9083 = vcombine.low %v9066, %v9074
        %v9085 = vunpack.c.l.s4 1934713408
        %v9086 = vunpack.c.0.s8 %v9085
        %v9087 = vlaneseq
        %v9088 = vshrl.u32 %v9087, 7
        %v9089 = vsub.s32 %v9086, %v9088
        %v9090 = vrot.slane %v9083, %v9089
        %v9091 = vcombine.low %v9082, %v9090
        %v9092 = vcombine.low %v7844, %v7848
        %v9094 = vunpack.c.l.s4 1983009808
        %v9095 = vunpack.c.0.s8 %v9094
        %v9096 = vlaneseq
        %v9097 = vshrl.u32 %v9096, 7
        %v9098 = vsub.s32 %v9095, %v9097
        %v9099 = vrot.slane %v9092, %v9098
        %v9100 = vcombine.low %v7846, %v7850
        %v9102 = vunpack.c.l.s4 1983009808
        %v9103 = vunpack.c.0.s8 %v9102
        %v9104 = vlaneseq
        %v9105 = vshrl.u32 %v9104, 7
        %v9106 = vsub.s32 %v9103, %v9105
        %v9107 = vrot.slane %v9100, %v9106
        %v9108 = vcombine.low %v7852, %v7856
        %v9110 = vunpack.c.l.s4 1983009808
        %v9111 = vunpack.c.0.s8 %v9110
        %v9112 = vlaneseq
        %v9113 = vshrl.u32 %v9112, 7
        %v9114 = vsub.s32 %v9111, %v9113
        %v9115 = vrot.slane %v9108, %v9114
        %v9116 = vcombine.low %v7854, %v7858
        %v9118 = vunpack.c.l.s4 1983009808
        %v9119 = vunpack.c.0.s8 %v9118
        %v9120 = vlaneseq
        %v9121 = vshrl.u32 %v9120, 7
        %v9122 = vsub.s32 %v9119, %v9121
        %v9123 = vrot.slane %v9116, %v9122
        %v9124 = vcombine.low %v9099, %v9107
        %v9126 = vunpack.c.l.s4 1934713408
        %v9127 = vunpack.c.0.s8 %v9126
        %v9128 = vlaneseq
        %v9129 = vshrl.u32 %v9128, 7
        %v9130 = vsub.s32 %v9127, %v9129
        %v9131 = vrot.slane %v9124, %v9130
        %v9132 = vcombine.low %v9115, %v9123
        %v9134 = vunpack.c.l.s4 1934713408
        %v9135 = vunpack.c.0.s8 %v9134
        %v9136 = vlaneseq
        %v9137 = vshrl.u32 %v9136, 7
        %v9138 = vsub.s32 %v9135, %v9137
        %v9139 = vrot.slane %v9132, %v9138
        %v9140 = vcombine.low %v9131, %v9139
        %v9141 = vcombine.low %v7860, %v7864
        %v9143 = vunpack.c.l.s4 1983009808
        %v9144 = vunpack.c.0.s8 %v9143
        %v9145 = vlaneseq
        %v9146 = vshrl.u32 %v9145, 7
        %v9147 = vsub.s32 %v9144, %v9146
        %v9148 = vrot.slane %v9141, %v9147
        %v9149 = vcombine.low %v7862, %v7866
        %v9151 = vunpack.c.l.s4 1983009808
        %v9152 = vunpack.c.0.s8 %v9151
        %v9153 = vlaneseq
        %v9154 = vshrl.u32 %v9153, 7
        %v9155 = vsub.s32 %v9152, %v9154
        %v9156 = vrot.slane %v9149, %v9155
        %v9157 = vcombine.low %v7868, %v7872
        %v9159 = vunpack.c.l.s4 1983009808
        %v9160 = vunpack.c.0.s8 %v9159
        %v9161 = vlaneseq
        %v9162 = vshrl.u32 %v9161, 7
        %v9163 = vsub.s32 %v9160, %v9162
        %v9164 = vrot.slane %v9157, %v9163
        %v9165 = vcombine.low %v7870, %v7874
        %v9167 = vunpack.c.l.s4 1983009808
        %v9168 = vunpack.c.0.s8 %v9167
        %v9169 = vlaneseq
        %v9170 = vshrl.u32 %v9169, 7
        %v9171 = vsub.s32 %v9168, %v9170
        %v9172 = vrot.slane %v9165, %v9171
        %v9173 = vcombine.low %v9148, %v9156
        %v9175 = vunpack.c.l.s4 1934713408
        %v9176 = vunpack.c.0.s8 %v9175
        %v9177 = vlaneseq
        %v9178 = vshrl.u32 %v9177, 7
        %v9179 = vsub.s32 %v9176, %v9178
        %v9180 = vrot.slane %v9173, %v9179
        %v9181 = vcombine.low %v9164, %v9172
        %v9183 = vunpack.c.l.s4 1934713408
        %v9184 = vunpack.c.0.s8 %v9183
        %v9185 = vlaneseq
        %v9186 = vshrl.u32 %v9185, 7
        %v9187 = vsub.s32 %v9184, %v9186
        %v9188 = vrot.slane %v9181, %v9187
        %v9189 = vcombine.low %v9180, %v9188
        %v9190 = vcombine.low %v7876, %v7880
        %v9192 = vunpack.c.l.s4 1983009808
        %v9193 = vunpack.c.0.s8 %v9192
        %v9194 = vlaneseq
        %v9195 = vshrl.u32 %v9194, 7
        %v9196 = vsub.s32 %v9193, %v9195
        %v9197 = vrot.slane %v9190, %v9196
        %v9198 = vcombine.low %v7878, %v7882
        %v9200 = vunpack.c.l.s4 1983009808
        %v9201 = vunpack.c.0.s8 %v9200
        %v9202 = vlaneseq
        %v9203 = vshrl.u32 %v9202, 7
        %v9204 = vsub.s32 %v9201, %v9203
        %v9205 = vrot.slane %v9198, %v9204
        %v9206 = vcombine.low %v7884, %v7888
        %v9208 = vunpack.c.l.s4 1983009808
        %v9209 = vunpack.c.0.s8 %v9208
        %v9210 = vlaneseq
        %v9211 = vshrl.u32 %v9210, 7
        %v9212 = vsub.s32 %v9209, %v9211
        %v9213 = vrot.slane %v9206, %v9212
        %v9214 = vcombine.low %v7886, %v7890
        %v9216 = vunpack.c.l.s4 1983009808
        %v9217 = vunpack.c.0.s8 %v9216
        %v9218 = vlaneseq
        %v9219 = vshrl.u32 %v9218, 7
        %v9220 = vsub.s32 %v9217, %v9219
        %v9221 = vrot.slane %v9214, %v9220
        %v9222 = vcombine.low %v9197, %v9205
        %v9224 = vunpack.c.l.s4 1934713408
        %v9225 = vunpack.c.0.s8 %v9224
        %v9226 = vlaneseq
        %v9227 = vshrl.u32 %v9226, 7
        %v9228 = vsub.s32 %v9225, %v9227
        %v9229 = vrot.slane %v9222, %v9228
        %v9230 = vcombine.low %v9213, %v9221
        %v9232 = vunpack.c.l.s4 1934713408
        %v9233 = vunpack.c.0.s8 %v9232
        %v9234 = vlaneseq
        %v9235 = vshrl.u32 %v9234, 7
        %v9236 = vsub.s32 %v9233, %v9235
        %v9237 = vrot.slane %v9230, %v9236
        %v9238 = vcombine.low %v9229, %v9237
        %v9239 = vcombine.low %v7892, %v7896
        %v9241 = vunpack.c.l.s4 1983009808
        %v9242 = vunpack.c.0.s8 %v9241
        %v9243 = vlaneseq
        %v9244 = vshrl.u32 %v9243, 7
        %v9245 = vsub.s32 %v9242, %v9244
        %v9246 = vrot.slane %v9239, %v9245
        %v9247 = vcombine.low %v7894, %v7898
        %v9249 = vunpack.c.l.s4 1983009808
        %v9250 = vunpack.c.0.s8 %v9249
        %v9251 = vlaneseq
        %v9252 = vshrl.u32 %v9251, 7
        %v9253 = vsub.s32 %v9250, %v9252
        %v9254 = vrot.slane %v9247, %v9253
        %v9255 = vcombine.low %v7900, %v7904
        %v9257 = vunpack.c.l.s4 1983009808
        %v9258 = vunpack.c.0.s8 %v9257
        %v9259 = vlaneseq
        %v9260 = vshrl.u32 %v9259, 7
        %v9261 = vsub.s32 %v9258, %v9260
        %v9262 = vrot.slane %v9255, %v9261
        %v9263 = vcombine.low %v7902, %v7906
        %v9265 = vunpack.c.l.s4 1983009808
        %v9266 = vunpack.c.0.s8 %v9265
        %v9267 = vlaneseq
        %v9268 = vshrl.u32 %v9267, 7
        %v9269 = vsub.s32 %v9266, %v9268
        %v9270 = vrot.slane %v9263, %v9269
        %v9271 = vcombine.low %v9246, %v9254
        %v9273 = vunpack.c.l.s4 1934713408
        %v9274 = vunpack.c.0.s8 %v9273
        %v9275 = vlaneseq
        %v9276 = vshrl.u32 %v9275, 7
        %v9277 = vsub.s32 %v9274, %v9276
        %v9278 = vrot.slane %v9271, %v9277
        %v9279 = vcombine.low %v9262, %v9270
        %v9281 = vunpack.c.l.s4 1934713408
        %v9282 = vunpack.c.0.s8 %v9281
        %v9283 = vlaneseq
        %v9284 = vshrl.u32 %v9283, 7
        %v9285 = vsub.s32 %v9282, %v9284
        %v9286 = vrot.slane %v9279, %v9285
        %v9287 = vcombine.low %v9278, %v9286
        %v9288 = vcombine.low %v7908, %v7912
        %v9290 = vunpack.c.l.s4 1983009808
        %v9291 = vunpack.c.0.s8 %v9290
        %v9292 = vlaneseq
        %v9293 = vshrl.u32 %v9292, 7
        %v9294 = vsub.s32 %v9291, %v9293
        %v9295 = vrot.slane %v9288, %v9294
        %v9296 = vcombine.low %v7910, %v7914
        %v9298 = vunpack.c.l.s4 1983009808
        %v9299 = vunpack.c.0.s8 %v9298
        %v9300 = vlaneseq
        %v9301 = vshrl.u32 %v9300, 7
        %v9302 = vsub.s32 %v9299, %v9301
        %v9303 = vrot.slane %v9296, %v9302
        %v9304 = vcombine.low %v7916, %v7920
        %v9306 = vunpack.c.l.s4 1983009808
        %v9307 = vunpack.c.0.s8 %v9306
        %v9308 = vlaneseq
        %v9309 = vshrl.u32 %v9308, 7
        %v9310 = vsub.s32 %v9307, %v9309
        %v9311 = vrot.slane %v9304, %v9310
        %v9312 = vcombine.low %v7918, %v7922
        %v9314 = vunpack.c.l.s4 1983009808
        %v9315 = vunpack.c.0.s8 %v9314
        %v9316 = vlaneseq
        %v9317 = vshrl.u32 %v9316, 7
        %v9318 = vsub.s32 %v9315, %v9317
        %v9319 = vrot.slane %v9312, %v9318
        %v9320 = vcombine.low %v9295, %v9303
        %v9322 = vunpack.c.l.s4 1934713408
        %v9323 = vunpack.c.0.s8 %v9322
        %v9324 = vlaneseq
        %v9325 = vshrl.u32 %v9324, 7
        %v9326 = vsub.s32 %v9323, %v9325
        %v9327 = vrot.slane %v9320, %v9326
        %v9328 = vcombine.low %v9311, %v9319
        %v9330 = vunpack.c.l.s4 1934713408
        %v9331 = vunpack.c.0.s8 %v9330
        %v9332 = vlaneseq
        %v9333 = vshrl.u32 %v9332, 7
        %v9334 = vsub.s32 %v9331, %v9333
        %v9335 = vrot.slane %v9328, %v9334
        %v9336 = vcombine.low %v9327, %v9335
        %v9337 = vcombine.low %v7924, %v7928
        %v9339 = vunpack.c.l.s4 1983009808
        %v9340 = vunpack.c.0.s8 %v9339
        %v9341 = vlaneseq
        %v9342 = vshrl.u32 %v9341, 7
        %v9343 = vsub.s32 %v9340, %v9342
        %v9344 = vrot.slane %v9337, %v9343
        %v9345 = vcombine.low %v7926, %v7930
        %v9347 = vunpack.c.l.s4 1983009808
        %v9348 = vunpack.c.0.s8 %v9347
        %v9349 = vlaneseq
        %v9350 = vshrl.u32 %v9349, 7
        %v9351 = vsub.s32 %v9348, %v9350
        %v9352 = vrot.slane %v9345, %v9351
        %v9353 = vcombine.low %v7932, %v7936
        %v9355 = vunpack.c.l.s4 1983009808
        %v9356 = vunpack.c.0.s8 %v9355
        %v9357 = vlaneseq
        %v9358 = vshrl.u32 %v9357, 7
        %v9359 = vsub.s32 %v9356, %v9358
        %v9360 = vrot.slane %v9353, %v9359
        %v9361 = vcombine.low %v7934, %v7938
        %v9363 = vunpack.c.l.s4 1983009808
        %v9364 = vunpack.c.0.s8 %v9363
        %v9365 = vlaneseq
        %v9366 = vshrl.u32 %v9365, 7
        %v9367 = vsub.s32 %v9364, %v9366
        %v9368 = vrot.slane %v9361, %v9367
        %v9369 = vcombine.low %v9344, %v9352
        %v9371 = vunpack.c.l.s4 1934713408
        %v9372 = vunpack.c.0.s8 %v9371
        %v9373 = vlaneseq
        %v9374 = vshrl.u32 %v9373, 7
        %v9375 = vsub.s32 %v9372, %v9374
        %v9376 = vrot.slane %v9369, %v9375
        %v9377 = vcombine.low %v9360, %v9368
        %v9379 = vunpack.c.l.s4 1934713408
        %v9380 = vunpack.c.0.s8 %v9379
        %v9381 = vlaneseq
        %v9382 = vshrl.u32 %v9381, 7
        %v9383 = vsub.s32 %v9380, %v9382
        %v9384 = vrot.slane %v9377, %v9383
        %v9385 = vcombine.low %v9376, %v9384
        %v9386 = vcombine.low %v7940, %v7944
        %v9388 = vunpack.c.l.s4 1983009808
        %v9389 = vunpack.c.0.s8 %v9388
        %v9390 = vlaneseq
        %v9391 = vshrl.u32 %v9390, 7
        %v9392 = vsub.s32 %v9389, %v9391
        %v9393 = vrot.slane %v9386, %v9392
        %v9394 = vcombine.low %v7942, %v7946
        %v9396 = vunpack.c.l.s4 1983009808
        %v9397 = vunpack.c.0.s8 %v9396
        %v9398 = vlaneseq
        %v9399 = vshrl.u32 %v9398, 7
        %v9400 = vsub.s32 %v9397, %v9399
        %v9401 = vrot.slane %v9394, %v9400
        %v9402 = vcombine.low %v7948, %v7952
        %v9404 = vunpack.c.l.s4 1983009808
        %v9405 = vunpack.c.0.s8 %v9404
        %v9406 = vlaneseq
        %v9407 = vshrl.u32 %v9406, 7
        %v9408 = vsub.s32 %v9405, %v9407
        %v9409 = vrot.slane %v9402, %v9408
        %v9410 = vcombine.low %v7950, %v7954
        %v9412 = vunpack.c.l.s4 1983009808
        %v9413 = vunpack.c.0.s8 %v9412
        %v9414 = vlaneseq
        %v9415 = vshrl.u32 %v9414, 7
        %v9416 = vsub.s32 %v9413, %v9415
        %v9417 = vrot.slane %v9410, %v9416
        %v9418 = vcombine.low %v9393, %v9401
        %v9420 = vunpack.c.l.s4 1934713408
        %v9421 = vunpack.c.0.s8 %v9420
        %v9422 = vlaneseq
        %v9423 = vshrl.u32 %v9422, 7
        %v9424 = vsub.s32 %v9421, %v9423
        %v9425 = vrot.slane %v9418, %v9424
        %v9426 = vcombine.low %v9409, %v9417
        %v9428 = vunpack.c.l.s4 1934713408
        %v9429 = vunpack.c.0.s8 %v9428
        %v9430 = vlaneseq
        %v9431 = vshrl.u32 %v9430, 7
        %v9432 = vsub.s32 %v9429, %v9431
        %v9433 = vrot.slane %v9426, %v9432
        %v9434 = vcombine.low %v9425, %v9433
        %9443 = vrot.lane.b32.xlu0 %v8084, 4
        %v9444 = vpop.permute.xlu0 %9443
        %9445 = vrot.lane.b32.xlu0 %v8220, 4
        %v9446 = vpop.permute.xlu0 %9445
        %9447 = vrot.lane.b32.xlu0 %v8356, 4
        %v9448 = vpop.permute.xlu0 %9447
        %9449 = vrot.lane.b32.xlu0 %v8492, 4
        %v9450 = vpop.permute.xlu0 %9449
        %9451 = vrot.lane.b32.xlu0 %v8628, 4
        %v9452 = vpop.permute.xlu0 %9451
        %9453 = vrot.lane.b32.xlu0 %v8764, 4
        %v9454 = vpop.permute.xlu0 %9453
        %9455 = vrot.lane.b32.xlu0 %v8900, 4
        %v9456 = vpop.permute.xlu0 %9455
        %9457 = vrot.lane.b32.xlu0 %v9036, 4
        %v9458 = vpop.permute.xlu0 %9457
        %9475 = vrot.lane.b32.xlu0 %v8085, 8
        %v9476 = vpop.permute.xlu0 %9475
        %9477 = vrot.lane.b32.xlu0 %v8221, 8
        %v9478 = vpop.permute.xlu0 %9477
        %9479 = vrot.lane.b32.xlu0 %v8357, 8
        %v9480 = vpop.permute.xlu0 %9479
        %9481 = vrot.lane.b32.xlu0 %v8493, 8
        %v9482 = vpop.permute.xlu0 %9481
        %9483 = vrot.lane.b32.xlu0 %v8629, 8
        %v9484 = vpop.permute.xlu0 %9483
        %9485 = vrot.lane.b32.xlu0 %v8765, 8
        %v9486 = vpop.permute.xlu0 %9485
        %9487 = vrot.lane.b32.xlu0 %v8901, 8
        %v9488 = vpop.permute.xlu0 %9487
        %9489 = vrot.lane.b32.xlu0 %v9037, 8
        %v9490 = vpop.permute.xlu0 %9489
        %9507 = vrot.lane.b32.xlu0 %v8086, 12
        %v9508 = vpop.permute.xlu0 %9507
        %9509 = vrot.lane.b32.xlu0 %v8222, 12
        %v9510 = vpop.permute.xlu0 %9509
        %9511 = vrot.lane.b32.xlu0 %v8358, 12
        %v9512 = vpop.permute.xlu0 %9511
        %9513 = vrot.lane.b32.xlu0 %v8494, 12
        %v9514 = vpop.permute.xlu0 %9513
        %9515 = vrot.lane.b32.xlu0 %v8630, 12
        %v9516 = vpop.permute.xlu0 %9515
        %9517 = vrot.lane.b32.xlu0 %v8766, 12
        %v9518 = vpop.permute.xlu0 %9517
        %9519 = vrot.lane.b32.xlu0 %v8902, 12
        %v9520 = vpop.permute.xlu0 %9519
        %9521 = vrot.lane.b32.xlu0 %v9038, 12
        %v9522 = vpop.permute.xlu0 %9521
        %9539 = vrot.lane.b32.xlu0 %v8087, 16
        %v9540 = vpop.permute.xlu0 %9539
        %9541 = vrot.lane.b32.xlu0 %v8223, 16
        %v9542 = vpop.permute.xlu0 %9541
        %9543 = vrot.lane.b32.xlu0 %v8359, 16
        %v9544 = vpop.permute.xlu0 %9543
        %9545 = vrot.lane.b32.xlu0 %v8495, 16
        %v9546 = vpop.permute.xlu0 %9545
        %9547 = vrot.lane.b32.xlu0 %v8631, 16
        %v9548 = vpop.permute.xlu0 %9547
        %9549 = vrot.lane.b32.xlu0 %v8767, 16
        %v9550 = vpop.permute.xlu0 %9549
        %9551 = vrot.lane.b32.xlu0 %v8903, 16
        %v9552 = vpop.permute.xlu0 %9551
        %9553 = vrot.lane.b32.xlu0 %v9039, 16
        %v9554 = vpop.permute.xlu0 %9553
        %9571 = vrot.lane.b32.xlu0 %v8088, 20
        %v9572 = vpop.permute.xlu0 %9571
        %9573 = vrot.lane.b32.xlu0 %v8224, 20
        %v9574 = vpop.permute.xlu0 %9573
        %9575 = vrot.lane.b32.xlu0 %v8360, 20
        %v9576 = vpop.permute.xlu0 %9575
        %9577 = vrot.lane.b32.xlu0 %v8496, 20
        %v9578 = vpop.permute.xlu0 %9577
        %9579 = vrot.lane.b32.xlu0 %v8632, 20
        %v9580 = vpop.permute.xlu0 %9579
        %9581 = vrot.lane.b32.xlu0 %v8768, 20
        %v9582 = vpop.permute.xlu0 %9581
        %9583 = vrot.lane.b32.xlu0 %v8904, 20
        %v9584 = vpop.permute.xlu0 %9583
        %9585 = vrot.lane.b32.xlu0 %v9040, 20
        %v9586 = vpop.permute.xlu0 %9585
        %9603 = vrot.lane.b32.xlu0 %v8089, 24
        %v9604 = vpop.permute.xlu0 %9603
        %9605 = vrot.lane.b32.xlu0 %v8225, 24
        %v9606 = vpop.permute.xlu0 %9605
        %9607 = vrot.lane.b32.xlu0 %v8361, 24
        %v9608 = vpop.permute.xlu0 %9607
        %9609 = vrot.lane.b32.xlu0 %v8497, 24
        %v9610 = vpop.permute.xlu0 %9609
        %9611 = vrot.lane.b32.xlu0 %v8633, 24
        %v9612 = vpop.permute.xlu0 %9611
        %9613 = vrot.lane.b32.xlu0 %v8769, 24
        %v9614 = vpop.permute.xlu0 %9613
        %9615 = vrot.lane.b32.xlu0 %v8905, 24
        %v9616 = vpop.permute.xlu0 %9615
        %9617 = vrot.lane.b32.xlu0 %v9041, 24
        %v9618 = vpop.permute.xlu0 %9617
        %9635 = vrot.lane.b32.xlu0 %v8090, 28
        %v9636 = vpop.permute.xlu0 %9635
        %9637 = vrot.lane.b32.xlu0 %v8226, 28
        %v9638 = vpop.permute.xlu0 %9637
        %9639 = vrot.lane.b32.xlu0 %v8362, 28
        %v9640 = vpop.permute.xlu0 %9639
        %9641 = vrot.lane.b32.xlu0 %v8498, 28
        %v9642 = vpop.permute.xlu0 %9641
        %9643 = vrot.lane.b32.xlu0 %v8634, 28
        %v9644 = vpop.permute.xlu0 %9643
        %9645 = vrot.lane.b32.xlu0 %v8770, 28
        %v9646 = vpop.permute.xlu0 %9645
        %9647 = vrot.lane.b32.xlu0 %v8906, 28
        %v9648 = vpop.permute.xlu0 %9647
        %9649 = vrot.lane.b32.xlu0 %v9042, 28
        %v9650 = vpop.permute.xlu0 %9649
        %9667 = vrot.lane.b32.xlu0 %v9091, 32
        %v9668 = vpop.permute.xlu0 %9667
        %9669 = vrot.lane.b32.xlu0 %v9140, 32
        %v9670 = vpop.permute.xlu0 %9669
        %9671 = vrot.lane.b32.xlu0 %v9189, 32
        %v9672 = vpop.permute.xlu0 %9671
        %9673 = vrot.lane.b32.xlu0 %v9238, 32
        %v9674 = vpop.permute.xlu0 %9673
        %9675 = vrot.lane.b32.xlu0 %v9287, 32
        %v9676 = vpop.permute.xlu0 %9675
        %9677 = vrot.lane.b32.xlu0 %v9336, 32
        %v9678 = vpop.permute.xlu0 %9677
        %9679 = vrot.lane.b32.xlu0 %v9385, 32
        %v9680 = vpop.permute.xlu0 %9679
        %9681 = vrot.lane.b32.xlu0 %v9434, 32
        %v9682 = vpop.permute.xlu0 %9681
        %v9691 = vsel %vm2335, %v8083, %v9444
        %v9692 = vsel %vm2335, %v8219, %v9446
        %v9693 = vsel %vm2335, %v8355, %v9448
        %v9694 = vsel %vm2335, %v8491, %v9450
        %v9695 = vsel %vm2335, %v8627, %v9452
        %v9696 = vsel %vm2335, %v8763, %v9454
        %v9697 = vsel %vm2335, %v8899, %v9456
        %v9698 = vsel %vm2335, %v9035, %v9458
        %v9699 = vsel %vm2207, %v9691, %v9476
        %v9700 = vsel %vm2207, %v9692, %v9478
        %v9701 = vsel %vm2207, %v9693, %v9480
        %v9702 = vsel %vm2207, %v9694, %v9482
        %v9703 = vsel %vm2207, %v9695, %v9484
        %v9704 = vsel %vm2207, %v9696, %v9486
        %v9705 = vsel %vm2207, %v9697, %v9488
        %v9706 = vsel %vm2207, %v9698, %v9490
        %v9707 = vsel %vm2727, %v9699, %v9508
        %v9708 = vsel %vm2727, %v9700, %v9510
        %v9709 = vsel %vm2727, %v9701, %v9512
        %v9710 = vsel %vm2727, %v9702, %v9514
        %v9711 = vsel %vm2727, %v9703, %v9516
        %v9712 = vsel %vm2727, %v9704, %v9518
        %v9713 = vsel %vm2727, %v9705, %v9520
        %v9714 = vsel %vm2727, %v9706, %v9522
        %v9715 = vsel %vm2210, %v9707, %v9540
        %v9716 = vsel %vm2210, %v9708, %v9542
        %v9717 = vsel %vm2210, %v9709, %v9544
        %v9718 = vsel %vm2210, %v9710, %v9546
        %v9719 = vsel %vm2210, %v9711, %v9548
        %v9720 = vsel %vm2210, %v9712, %v9550
        %v9721 = vsel %vm2210, %v9713, %v9552
        %v9722 = vsel %vm2210, %v9714, %v9554
        %v9723 = vsel %vm2730, %v9715, %v9572
        %v9724 = vsel %vm2730, %v9716, %v9574
        %v9725 = vsel %vm2730, %v9717, %v9576
        %v9726 = vsel %vm2730, %v9718, %v9578
        %v9727 = vsel %vm2730, %v9719, %v9580
        %v9728 = vsel %vm2730, %v9720, %v9582
        %v9729 = vsel %vm2730, %v9721, %v9584
        %v9730 = vsel %vm2730, %v9722, %v9586
        %v9731 = vsel %vm2213, %v9723, %v9604
        %v9732 = vsel %vm2213, %v9724, %v9606
        %v9733 = vsel %vm2213, %v9725, %v9608
        %v9734 = vsel %vm2213, %v9726, %v9610
        %v9735 = vsel %vm2213, %v9727, %v9612
        %v9736 = vsel %vm2213, %v9728, %v9614
        %v9737 = vsel %vm2213, %v9729, %v9616
        %v9738 = vsel %vm2213, %v9730, %v9618
        %v9739 = vsel %vm2733, %v9731, %v9636
        %v9740 = vsel %vm2733, %v9732, %v9638
        %v9741 = vsel %vm2733, %v9733, %v9640
        %v9742 = vsel %vm2733, %v9734, %v9642
        %v9743 = vsel %vm2733, %v9735, %v9644
        %v9744 = vsel %vm2733, %v9736, %v9646
        %v9745 = vsel %vm2733, %v9737, %v9648
        %v9746 = vsel %vm2733, %v9738, %v9650
        %v9747 = vsel %vm2216, %v9739, %v9668
        %v9748 = vsel %vm2216, %v9740, %v9670
        %v9749 = vsel %vm2216, %v9741, %v9672
        %v9750 = vsel %vm2216, %v9742, %v9674
        %v9751 = vsel %vm2216, %v9743, %v9676
        %v9752 = vsel %vm2216, %v9744, %v9678
        %v9753 = vsel %vm2216, %v9745, %v9680
        %v9754 = vsel %vm2216, %v9746, %v9682
        %v9755 = vld [vmem:[%s5] sm:$0xff]
        %v9756 = vld [vmem:[%s5 + $0x8] sm:$0xff]
        %v9757 = vld [vmem:[%s5 + $0x10] sm:$0xff]
        %v9758 = vld [vmem:[%s5 + $0x18] sm:$0xff]
        %v9759 = vld [vmem:[%s5 + $0x20] sm:$0xf]
        %v9760 = vld [vmem:[%s6] sm:$0x1]
        %v9762 = vlaneseq
        %v9763 = vshrl.u32 %v9762, 7
        %v9764 = vsub.s32 0, %v9763
        %v9765 = vrot.slane %v9760, %v9764
        %vm9767 = vcmask 293888
        %v9769 = vsel %vm9767, %v9747, 0
        %v9772 = vsel %vm9767, %v9748, 0
        %v9775 = vsel %vm9767, %v9749, 0
        %v9778 = vsel %vm9767, %v9750, 0
        %v9781 = vsel %vm9767, %v9751, 0
        %v9784 = vsel %vm9767, %v9752, 0
        %v9787 = vsel %vm9767, %v9753, 0
        %v9790 = vsel %vm9767, %v9754, 0
        %v9793 = vsel %vm2339, %v9759, 0
        %9795 = vmatprep.subr.mxu0 0.0
        %9796 = vmatpush1.msra.mxu0 0.0
        %9797 = vmatprep.subr.mxu0 0.0
        %9798 = vmatpush1.msra.mxu0 0.0
        %9799 = vmatprep.subr.mxu0 0.0
        %9800 = vmatpush1.msra.mxu0 0.0
        %9801 = vmatprep.subr.mxu0 0.0
        %9802 = vmatpush1.msra.mxu0 0.0
        %9803 = vmatprep.subr.mxu0 0.0
        %9804 = vmatpush1.msra.mxu0 0.0
        %9805 = vmatprep.subr.mxu0 0.0
        %9806 = vmatpush1.msra.mxu0 0.0
        %9807 = vmatprep.subr.mxu0 0.0
        %9808 = vmatpush1.msra.mxu0 0.0
        %9809 = vmatprep.subr.mxu0 0.0
        %9810 = vmatpush1.msra.mxu0 0.0
        %9811 = vmatprep.subr.mxu0 0.0
        %9812 = vmatpush1.msra.mxu0 0.0
        %9813 = vmatprep.subr.mxu0 0.0
        %9814 = vmatpush1.msra.mxu0 0.0
        %9815 = vmatprep.subr.mxu0 0.0
        %9816 = vmatpush1.msra.mxu0 0.0
        %9817 = vmatprep.subr.mxu0 0.0
        %9818 = vmatpush1.msra.mxu0 %v9793
        %9819 = vmatprep.subr.mxu0 0.0
        %9820 = vmatpush1.msra.mxu0 %v9758
        %9821 = vmatprep.subr.mxu0 0.0
        %9822 = vmatpush1.msra.mxu0 %v9757
        %9823 = vmatprep.subr.mxu0 0.0
        %9824 = vmatpush1.msra.mxu0 %v9756
        %9825 = vmatprep.subr.mxu0 0.0
        %9826 = vmatpush1.msra.mxu0 %v9755
        %9827 = vmatprep.subr.mxu0 0.0
        %9828 = vmatpush2.msra.mxu0 0.0
        %9829 = vmatprep.subr.mxu0 0.0
        %9830 = vmatpush2.msra.mxu0 0.0
        %9831 = vmatprep.subr.mxu0 0.0
        %9832 = vmatpush2.msra.mxu0 0.0
        %9833 = vmatprep.subr.mxu0 0.0
        %9834 = vmatpush2.msra.mxu0 0.0
        %9835 = vmatprep.subr.mxu0 0.0
        %9836 = vmatpush2.msra.mxu0 0.0
        %9837 = vmatprep.subr.mxu0 0.0
        %9838 = vmatpush2.msra.mxu0 0.0
        %9839 = vmatprep.subr.mxu0 0.0
        %9840 = vmatpush2.msra.mxu0 0.0
        %9841 = vmatprep.subr.mxu0 0.0
        %9842 = vmatpush2.msra.mxu0 0.0
        %9843 = vmatprep.subr.mxu0 0.0
        %9844 = vmatpush2.msra.mxu0 0.0
        %9845 = vmatprep.subr.mxu0 0.0
        %9846 = vmatpush2.msra.mxu0 0.0
        %9847 = vmatprep.subr.mxu0 0.0
        %9848 = vmatpush2.msra.mxu0 0.0
        %9849 = vmatprep.subr.mxu0 0.0
        %9850 = vmatpush2.msra.mxu0 0.0
        %9851 = vmatprep.subr.mxu0 0.0
        %9852 = vmatpush2.msra.mxu0 0.0
        %9853 = vmatprep.subr.mxu0 0.0
        %9854 = vmatpush2.msra.mxu0 0.0
        %9855 = vmatprep.subr.mxu0 0.0
        %9856 = vmatpush2.msra.mxu0 0.0
        %9857 = vmatprep.subr.mxu0 0.0
        %9858 = vmatpush2.msra.mxu0 0.0
        %9859 = vmatprep.mubr.f32.mxu0 0.0
        %9860 = vmatmul.mubr.f32.gmra.mxu0 %v9769
        %v9861 = vpop.f32.mrf.mxu0
        %v9862 = vadd.f32 %v9765, %v9861
        %v9863 = vpop.f32.mrf.mxu0
        %9864 = vmatprep.mubr.f32.mxu0 0.0
        %9865 = vmatmul.mubr.f32.gmra.mxu0 %v9772
        %v9866 = vpop.f32.mrf.mxu0
        %v9867 = vadd.f32 %v9765, %v9866
        %v9868 = vpop.f32.mrf.mxu0
        %9869 = vmatprep.mubr.f32.mxu0 0.0
        %9870 = vmatmul.mubr.f32.gmra.mxu0 %v9775
        %v9871 = vpop.f32.mrf.mxu0
        %v9872 = vadd.f32 %v9765, %v9871
        %v9873 = vpop.f32.mrf.mxu0
        %9874 = vmatprep.mubr.f32.mxu0 0.0
        %9875 = vmatmul.mubr.f32.gmra.mxu0 %v9778
        %v9876 = vpop.f32.mrf.mxu0
        %v9877 = vadd.f32 %v9765, %v9876
        %v9878 = vpop.f32.mrf.mxu0
        %9879 = vmatprep.mubr.f32.mxu0 0.0
        %9880 = vmatmul.mubr.f32.gmra.mxu0 %v9781
        %v9881 = vpop.f32.mrf.mxu0
        %v9882 = vadd.f32 %v9765, %v9881
        %v9883 = vpop.f32.mrf.mxu0
        %9884 = vmatprep.mubr.f32.mxu0 0.0
        %9885 = vmatmul.mubr.f32.gmra.mxu0 %v9784
        %v9886 = vpop.f32.mrf.mxu0
        %v9887 = vadd.f32 %v9765, %v9886
        %v9888 = vpop.f32.mrf.mxu0
        %9889 = vmatprep.mubr.f32.mxu0 0.0
        %9890 = vmatmul.mubr.f32.gmra.mxu0 %v9787
        %v9891 = vpop.f32.mrf.mxu0
        %v9892 = vadd.f32 %v9765, %v9891
        %v9893 = vpop.f32.mrf.mxu0
        %9894 = vmatprep.mubr.f32.mxu0 0.0
        %9895 = vmatmul.mubr.f32.gmra.mxu0 %v9790
        %v9896 = vpop.f32.mrf.mxu0
        %v9897 = vadd.f32 %v9765, %v9896
        %v9898 = vpop.f32.mrf.mxu0
        %9899 = vdwg.mxu0
        %v9900 = vld [vmem:[%s456] sm:$0xff]
        %v9901 = vld [vmem:[%s456 + $0x8] sm:$0xff]
        %v9902 = vld [vmem:[%s10] sm:$0xff]
        %v9903 = vld [vmem:[%s10 + $0x8] sm:$0xff]
        %v9905 = vsel %vm2207, %v9902, 0
        %v9908 = vsel %vm2207, %v9903, 0
        %9910 = vmatprep.subr.mxu0 0.0
        %9911 = vmatpush1.msra.mxu0 0.0
        %9912 = vmatprep.subr.mxu0 0.0
        %9913 = vmatpush1.msra.mxu0 0.0
        %9914 = vmatprep.subr.mxu0 0.0
        %9915 = vmatpush1.msra.mxu0 0.0
        %9916 = vmatprep.subr.mxu0 0.0
        %9917 = vmatpush1.msra.mxu0 0.0
        %9918 = vmatprep.subr.mxu0 0.0
        %9919 = vmatpush1.msra.mxu0 0.0
        %9920 = vmatprep.subr.mxu0 0.0
        %9921 = vmatpush1.msra.mxu0 0.0
        %9922 = vmatprep.subr.mxu0 0.0
        %9923 = vmatpush1.msra.mxu0 0.0
        %9924 = vmatprep.subr.mxu0 0.0
        %9925 = vmatpush1.msra.mxu0 0.0
        %9926 = vmatprep.subr.mxu0 0.0
        %9927 = vmatpush1.msra.mxu0 0.0
        %9928 = vmatprep.subr.mxu0 0.0
        %9929 = vmatpush1.msra.mxu0 0.0
        %9930 = vmatprep.subr.mxu0 0.0
        %9931 = vmatpush1.msra.mxu0 0.0
        %9932 = vmatprep.subr.mxu0 0.0
        %9933 = vmatpush1.msra.mxu0 0.0
        %9934 = vmatprep.subr.mxu0 0.0
        %9935 = vmatpush1.msra.mxu0 0.0
        %9936 = vmatprep.subr.mxu0 0.0
        %9937 = vmatpush1.msra.mxu0 0.0
        %9938 = vmatprep.subr.mxu0 0.0
        %9939 = vmatpush1.msra.mxu0 0.0
        %9940 = vmatprep.subr.mxu0 0.0
        %9941 = vmatpush1.msra.mxu0 %v9862
        %9942 = vmatprep.subr.mxu0 0.0
        %9943 = vmatpush2.msra.mxu0 0.0
        %9944 = vmatprep.subr.mxu0 0.0
        %9945 = vmatpush2.msra.mxu0 0.0
        %9946 = vmatprep.subr.mxu0 0.0
        %9947 = vmatpush2.msra.mxu0 0.0
        %9948 = vmatprep.subr.mxu0 0.0
        %9949 = vmatpush2.msra.mxu0 0.0
        %9950 = vmatprep.subr.mxu0 0.0
        %9951 = vmatpush2.msra.mxu0 0.0
        %9952 = vmatprep.subr.mxu0 0.0
        %9953 = vmatpush2.msra.mxu0 0.0
        %9954 = vmatprep.subr.mxu0 0.0
        %9955 = vmatpush2.msra.mxu0 0.0
        %9956 = vmatprep.subr.mxu0 0.0
        %9957 = vmatpush2.msra.mxu0 0.0
        %9958 = vmatprep.subr.mxu0 0.0
        %9959 = vmatpush2.msra.mxu0 0.0
        %9960 = vmatprep.subr.mxu0 0.0
        %9961 = vmatpush2.msra.mxu0 0.0
        %9962 = vmatprep.subr.mxu0 0.0
        %9963 = vmatpush2.msra.mxu0 0.0
        %9964 = vmatprep.subr.mxu0 0.0
        %9965 = vmatpush2.msra.mxu0 0.0
        %9966 = vmatprep.subr.mxu0 0.0
        %9967 = vmatpush2.msra.mxu0 0.0
        %9968 = vmatprep.subr.mxu0 0.0
        %9969 = vmatpush2.msra.mxu0 0.0
        %9970 = vmatprep.subr.mxu0 0.0
        %9971 = vmatpush2.msra.mxu0 0.0
        %9972 = vmatprep.subr.mxu0 0.0
        %9973 = vmatpush2.msra.mxu0 0.0
        %9974 = vmatprep.mubr.f32.mxu0 0.0
        %9975 = vmatmul.mubr.f32.gmra.mxu0 %v9905
        %v9976 = vpop.f32.mrf.mxu0
        %v9977 = vadd.f32 0.0, %v9976
        %v9978 = vpop.f32.mrf.mxu0
        %9979 = vmatprep.mubr.f32.mxu0 0.0
        %9980 = vmatmul.mubr.f32.gmra.mxu0 %v9908
        %v9981 = vpop.f32.mrf.mxu0
        %v9982 = vadd.f32 0.0, %v9981
        %v9983 = vpop.f32.mrf.mxu0
        %9984 = vdwg.mxu0
        %9985 = vmatprep.subr.mxu0 0.0
        %9986 = vmatpush1.msra.mxu0 0.0
        %9987 = vmatprep.subr.mxu0 0.0
        %9988 = vmatpush1.msra.mxu0 0.0
        %9989 = vmatprep.subr.mxu0 0.0
        %9990 = vmatpush1.msra.mxu0 0.0
        %9991 = vmatprep.subr.mxu0 0.0
        %9992 = vmatpush1.msra.mxu0 0.0
        %9993 = vmatprep.subr.mxu0 0.0
        %9994 = vmatpush1.msra.mxu0 0.0
        %9995 = vmatprep.subr.mxu0 0.0
        %9996 = vmatpush1.msra.mxu0 0.0
        %9997 = vmatprep.subr.mxu0 0.0
        %9998 = vmatpush1.msra.mxu0 0.0
        %9999 = vmatprep.subr.mxu0 0.0
        %10000 = vmatpush1.msra.mxu0 0.0
        %10001 = vmatprep.subr.mxu0 0.0
        %10002 = vmatpush1.msra.mxu0 0.0
        %10003 = vmatprep.subr.mxu0 0.0
        %10004 = vmatpush1.msra.mxu0 0.0
        %10005 = vmatprep.subr.mxu0 0.0
        %10006 = vmatpush1.msra.mxu0 0.0
        %10007 = vmatprep.subr.mxu0 0.0
        %10008 = vmatpush1.msra.mxu0 0.0
        %10009 = vmatprep.subr.mxu0 0.0
        %10010 = vmatpush1.msra.mxu0 0.0
        %10011 = vmatprep.subr.mxu0 0.0
        %10012 = vmatpush1.msra.mxu0 0.0
        %10013 = vmatprep.subr.mxu0 0.0
        %10014 = vmatpush1.msra.mxu0 0.0
        %10015 = vmatprep.subr.mxu0 0.0
        %10016 = vmatpush1.msra.mxu0 %v9867
        %10017 = vmatprep.subr.mxu0 0.0
        %10018 = vmatpush2.msra.mxu0 0.0
        %10019 = vmatprep.subr.mxu0 0.0
        %10020 = vmatpush2.msra.mxu0 0.0
        %10021 = vmatprep.subr.mxu0 0.0
        %10022 = vmatpush2.msra.mxu0 0.0
        %10023 = vmatprep.subr.mxu0 0.0
        %10024 = vmatpush2.msra.mxu0 0.0
        %10025 = vmatprep.subr.mxu0 0.0
        %10026 = vmatpush2.msra.mxu0 0.0
        %10027 = vmatprep.subr.mxu0 0.0
        %10028 = vmatpush2.msra.mxu0 0.0
        %10029 = vmatprep.subr.mxu0 0.0
        %10030 = vmatpush2.msra.mxu0 0.0
        %10031 = vmatprep.subr.mxu0 0.0
        %10032 = vmatpush2.msra.mxu0 0.0
        %10033 = vmatprep.subr.mxu0 0.0
        %10034 = vmatpush2.msra.mxu0 0.0
        %10035 = vmatprep.subr.mxu0 0.0
        %10036 = vmatpush2.msra.mxu0 0.0
        %10037 = vmatprep.subr.mxu0 0.0
        %10038 = vmatpush2.msra.mxu0 0.0
        %10039 = vmatprep.subr.mxu0 0.0
        %10040 = vmatpush2.msra.mxu0 0.0
        %10041 = vmatprep.subr.mxu0 0.0
        %10042 = vmatpush2.msra.mxu0 0.0
        %10043 = vmatprep.subr.mxu0 0.0
        %10044 = vmatpush2.msra.mxu0 0.0
        %10045 = vmatprep.subr.mxu0 0.0
        %10046 = vmatpush2.msra.mxu0 0.0
        %10047 = vmatprep.subr.mxu0 0.0
        %10048 = vmatpush2.msra.mxu0 0.0
        %10049 = vmatprep.mubr.f32.mxu0 0.0
        %10050 = vmatmul.mubr.f32.gmra.mxu0 %v9905
        %v10051 = vpop.f32.mrf.mxu0
        %v10052 = vadd.f32 0.0, %v10051
        %v10053 = vpop.f32.mrf.mxu0
        %10054 = vmatprep.mubr.f32.mxu0 0.0
        %10055 = vmatmul.mubr.f32.gmra.mxu0 %v9908
        %v10056 = vpop.f32.mrf.mxu0
        %v10057 = vadd.f32 0.0, %v10056
        %v10058 = vpop.f32.mrf.mxu0
        %10059 = vdwg.mxu0
        %10060 = vmatprep.subr.mxu0 0.0
        %10061 = vmatpush1.msra.mxu0 0.0
        %10062 = vmatprep.subr.mxu0 0.0
        %10063 = vmatpush1.msra.mxu0 0.0
        %10064 = vmatprep.subr.mxu0 0.0
        %10065 = vmatpush1.msra.mxu0 0.0
        %10066 = vmatprep.subr.mxu0 0.0
        %10067 = vmatpush1.msra.mxu0 0.0
        %10068 = vmatprep.subr.mxu0 0.0
        %10069 = vmatpush1.msra.mxu0 0.0
        %10070 = vmatprep.subr.mxu0 0.0
        %10071 = vmatpush1.msra.mxu0 0.0
        %10072 = vmatprep.subr.mxu0 0.0
        %10073 = vmatpush1.msra.mxu0 0.0
        %10074 = vmatprep.subr.mxu0 0.0
        %10075 = vmatpush1.msra.mxu0 0.0
        %10076 = vmatprep.subr.mxu0 0.0
        %10077 = vmatpush1.msra.mxu0 0.0
        %10078 = vmatprep.subr.mxu0 0.0
        %10079 = vmatpush1.msra.mxu0 0.0
        %10080 = vmatprep.subr.mxu0 0.0
        %10081 = vmatpush1.msra.mxu0 0.0
        %10082 = vmatprep.subr.mxu0 0.0
        %10083 = vmatpush1.msra.mxu0 0.0
        %10084 = vmatprep.subr.mxu0 0.0
        %10085 = vmatpush1.msra.mxu0 0.0
        %10086 = vmatprep.subr.mxu0 0.0
        %10087 = vmatpush1.msra.mxu0 0.0
        %10088 = vmatprep.subr.mxu0 0.0
        %10089 = vmatpush1.msra.mxu0 0.0
        %10090 = vmatprep.subr.mxu0 0.0
        %10091 = vmatpush1.msra.mxu0 %v9872
        %10092 = vmatprep.subr.mxu0 0.0
        %10093 = vmatpush2.msra.mxu0 0.0
        %10094 = vmatprep.subr.mxu0 0.0
        %10095 = vmatpush2.msra.mxu0 0.0
        %10096 = vmatprep.subr.mxu0 0.0
        %10097 = vmatpush2.msra.mxu0 0.0
        %10098 = vmatprep.subr.mxu0 0.0
        %10099 = vmatpush2.msra.mxu0 0.0
        %10100 = vmatprep.subr.mxu0 0.0
        %10101 = vmatpush2.msra.mxu0 0.0
        %10102 = vmatprep.subr.mxu0 0.0
        %10103 = vmatpush2.msra.mxu0 0.0
        %10104 = vmatprep.subr.mxu0 0.0
        %10105 = vmatpush2.msra.mxu0 0.0
        %10106 = vmatprep.subr.mxu0 0.0
        %10107 = vmatpush2.msra.mxu0 0.0
        %10108 = vmatprep.subr.mxu0 0.0
        %10109 = vmatpush2.msra.mxu0 0.0
        %10110 = vmatprep.subr.mxu0 0.0
        %10111 = vmatpush2.msra.mxu0 0.0
        %10112 = vmatprep.subr.mxu0 0.0
        %10113 = vmatpush2.msra.mxu0 0.0
        %10114 = vmatprep.subr.mxu0 0.0
        %10115 = vmatpush2.msra.mxu0 0.0
        %10116 = vmatprep.subr.mxu0 0.0
        %10117 = vmatpush2.msra.mxu0 0.0
        %10118 = vmatprep.subr.mxu0 0.0
        %10119 = vmatpush2.msra.mxu0 0.0
        %10120 = vmatprep.subr.mxu0 0.0
        %10121 = vmatpush2.msra.mxu0 0.0
        %10122 = vmatprep.subr.mxu0 0.0
        %10123 = vmatpush2.msra.mxu0 0.0
        %10124 = vmatprep.mubr.f32.mxu0 0.0
        %10125 = vmatmul.mubr.f32.gmra.mxu0 %v9905
        %v10126 = vpop.f32.mrf.mxu0
        %v10127 = vadd.f32 0.0, %v10126
        %v10128 = vpop.f32.mrf.mxu0
        %10129 = vmatprep.mubr.f32.mxu0 0.0
        %10130 = vmatmul.mubr.f32.gmra.mxu0 %v9908
        %v10131 = vpop.f32.mrf.mxu0
        %v10132 = vadd.f32 0.0, %v10131
        %v10133 = vpop.f32.mrf.mxu0
        %10134 = vdwg.mxu0
        %10135 = vmatprep.subr.mxu0 0.0
        %10136 = vmatpush1.msra.mxu0 0.0
        %10137 = vmatprep.subr.mxu0 0.0
        %10138 = vmatpush1.msra.mxu0 0.0
        %10139 = vmatprep.subr.mxu0 0.0
        %10140 = vmatpush1.msra.mxu0 0.0
        %10141 = vmatprep.subr.mxu0 0.0
        %10142 = vmatpush1.msra.mxu0 0.0
        %10143 = vmatprep.subr.mxu0 0.0
        %10144 = vmatpush1.msra.mxu0 0.0
        %10145 = vmatprep.subr.mxu0 0.0
        %10146 = vmatpush1.msra.mxu0 0.0
        %10147 = vmatprep.subr.mxu0 0.0
        %10148 = vmatpush1.msra.mxu0 0.0
        %10149 = vmatprep.subr.mxu0 0.0
        %10150 = vmatpush1.msra.mxu0 0.0
        %10151 = vmatprep.subr.mxu0 0.0
        %10152 = vmatpush1.msra.mxu0 0.0
        %10153 = vmatprep.subr.mxu0 0.0
        %10154 = vmatpush1.msra.mxu0 0.0
        %10155 = vmatprep.subr.mxu0 0.0
        %10156 = vmatpush1.msra.mxu0 0.0
        %10157 = vmatprep.subr.mxu0 0.0
        %10158 = vmatpush1.msra.mxu0 0.0
        %10159 = vmatprep.subr.mxu0 0.0
        %10160 = vmatpush1.msra.mxu0 0.0
        %10161 = vmatprep.subr.mxu0 0.0
        %10162 = vmatpush1.msra.mxu0 0.0
        %10163 = vmatprep.subr.mxu0 0.0
        %10164 = vmatpush1.msra.mxu0 0.0
        %10165 = vmatprep.subr.mxu0 0.0
        %10166 = vmatpush1.msra.mxu0 %v9877
        %10167 = vmatprep.subr.mxu0 0.0
        %10168 = vmatpush2.msra.mxu0 0.0
        %10169 = vmatprep.subr.mxu0 0.0
        %10170 = vmatpush2.msra.mxu0 0.0
        %10171 = vmatprep.subr.mxu0 0.0
        %10172 = vmatpush2.msra.mxu0 0.0
        %10173 = vmatprep.subr.mxu0 0.0
        %10174 = vmatpush2.msra.mxu0 0.0
        %10175 = vmatprep.subr.mxu0 0.0
        %10176 = vmatpush2.msra.mxu0 0.0
        %10177 = vmatprep.subr.mxu0 0.0
        %10178 = vmatpush2.msra.mxu0 0.0
        %10179 = vmatprep.subr.mxu0 0.0
        %10180 = vmatpush2.msra.mxu0 0.0
        %10181 = vmatprep.subr.mxu0 0.0
        %10182 = vmatpush2.msra.mxu0 0.0
        %10183 = vmatprep.subr.mxu0 0.0
        %10184 = vmatpush2.msra.mxu0 0.0
        %10185 = vmatprep.subr.mxu0 0.0
        %10186 = vmatpush2.msra.mxu0 0.0
        %10187 = vmatprep.subr.mxu0 0.0
        %10188 = vmatpush2.msra.mxu0 0.0
        %10189 = vmatprep.subr.mxu0 0.0
        %10190 = vmatpush2.msra.mxu0 0.0
        %10191 = vmatprep.subr.mxu0 0.0
        %10192 = vmatpush2.msra.mxu0 0.0
        %10193 = vmatprep.subr.mxu0 0.0
        %10194 = vmatpush2.msra.mxu0 0.0
        %10195 = vmatprep.subr.mxu0 0.0
        %10196 = vmatpush2.msra.mxu0 0.0
        %10197 = vmatprep.subr.mxu0 0.0
        %10198 = vmatpush2.msra.mxu0 0.0
        %10199 = vmatprep.mubr.f32.mxu0 0.0
        %10200 = vmatmul.mubr.f32.gmra.mxu0 %v9905
        %v10201 = vpop.f32.mrf.mxu0
        %v10202 = vadd.f32 0.0, %v10201
        %v10203 = vpop.f32.mrf.mxu0
        %10204 = vmatprep.mubr.f32.mxu0 0.0
        %10205 = vmatmul.mubr.f32.gmra.mxu0 %v9908
        %v10206 = vpop.f32.mrf.mxu0
        %v10207 = vadd.f32 0.0, %v10206
        %v10208 = vpop.f32.mrf.mxu0
        %10209 = vdwg.mxu0
        %10210 = vmatprep.subr.mxu0 0.0
        %10211 = vmatpush1.msra.mxu0 0.0
        %10212 = vmatprep.subr.mxu0 0.0
        %10213 = vmatpush1.msra.mxu0 0.0
        %10214 = vmatprep.subr.mxu0 0.0
        %10215 = vmatpush1.msra.mxu0 0.0
        %10216 = vmatprep.subr.mxu0 0.0
        %10217 = vmatpush1.msra.mxu0 0.0
        %10218 = vmatprep.subr.mxu0 0.0
        %10219 = vmatpush1.msra.mxu0 0.0
        %10220 = vmatprep.subr.mxu0 0.0
        %10221 = vmatpush1.msra.mxu0 0.0
        %10222 = vmatprep.subr.mxu0 0.0
        %10223 = vmatpush1.msra.mxu0 0.0
        %10224 = vmatprep.subr.mxu0 0.0
        %10225 = vmatpush1.msra.mxu0 0.0
        %10226 = vmatprep.subr.mxu0 0.0
        %10227 = vmatpush1.msra.mxu0 0.0
        %10228 = vmatprep.subr.mxu0 0.0
        %10229 = vmatpush1.msra.mxu0 0.0
        %10230 = vmatprep.subr.mxu0 0.0
        %10231 = vmatpush1.msra.mxu0 0.0
        %10232 = vmatprep.subr.mxu0 0.0
        %10233 = vmatpush1.msra.mxu0 0.0
        %10234 = vmatprep.subr.mxu0 0.0
        %10235 = vmatpush1.msra.mxu0 0.0
        %10236 = vmatprep.subr.mxu0 0.0
        %10237 = vmatpush1.msra.mxu0 0.0
        %10238 = vmatprep.subr.mxu0 0.0
        %10239 = vmatpush1.msra.mxu0 0.0
        %10240 = vmatprep.subr.mxu0 0.0
        %10241 = vmatpush1.msra.mxu0 %v9882
        %10242 = vmatprep.subr.mxu0 0.0
        %10243 = vmatpush2.msra.mxu0 0.0
        %10244 = vmatprep.subr.mxu0 0.0
        %10245 = vmatpush2.msra.mxu0 0.0
        %10246 = vmatprep.subr.mxu0 0.0
        %10247 = vmatpush2.msra.mxu0 0.0
        %10248 = vmatprep.subr.mxu0 0.0
        %10249 = vmatpush2.msra.mxu0 0.0
        %10250 = vmatprep.subr.mxu0 0.0
        %10251 = vmatpush2.msra.mxu0 0.0
        %10252 = vmatprep.subr.mxu0 0.0
        %10253 = vmatpush2.msra.mxu0 0.0
        %10254 = vmatprep.subr.mxu0 0.0
        %10255 = vmatpush2.msra.mxu0 0.0
        %10256 = vmatprep.subr.mxu0 0.0
        %10257 = vmatpush2.msra.mxu0 0.0
        %10258 = vmatprep.subr.mxu0 0.0
        %10259 = vmatpush2.msra.mxu0 0.0
        %10260 = vmatprep.subr.mxu0 0.0
        %10261 = vmatpush2.msra.mxu0 0.0
        %10262 = vmatprep.subr.mxu0 0.0
        %10263 = vmatpush2.msra.mxu0 0.0
        %10264 = vmatprep.subr.mxu0 0.0
        %10265 = vmatpush2.msra.mxu0 0.0
        %10266 = vmatprep.subr.mxu0 0.0
        %10267 = vmatpush2.msra.mxu0 0.0
        %10268 = vmatprep.subr.mxu0 0.0
        %10269 = vmatpush2.msra.mxu0 0.0
        %10270 = vmatprep.subr.mxu0 0.0
        %10271 = vmatpush2.msra.mxu0 0.0
        %10272 = vmatprep.subr.mxu0 0.0
        %10273 = vmatpush2.msra.mxu0 0.0
        %10274 = vmatprep.mubr.f32.mxu0 0.0
        %10275 = vmatmul.mubr.f32.gmra.mxu0 %v9905
        %v10276 = vpop.f32.mrf.mxu0
        %v10277 = vadd.f32 0.0, %v10276
        %v10278 = vpop.f32.mrf.mxu0
        %10279 = vmatprep.mubr.f32.mxu0 0.0
        %10280 = vmatmul.mubr.f32.gmra.mxu0 %v9908
        %v10281 = vpop.f32.mrf.mxu0
        %v10282 = vadd.f32 0.0, %v10281
        %v10283 = vpop.f32.mrf.mxu0
        %10284 = vdwg.mxu0
        %10285 = vmatprep.subr.mxu0 0.0
        %10286 = vmatpush1.msra.mxu0 0.0
        %10287 = vmatprep.subr.mxu0 0.0
        %10288 = vmatpush1.msra.mxu0 0.0
        %10289 = vmatprep.subr.mxu0 0.0
        %10290 = vmatpush1.msra.mxu0 0.0
        %10291 = vmatprep.subr.mxu0 0.0
        %10292 = vmatpush1.msra.mxu0 0.0
        %10293 = vmatprep.subr.mxu0 0.0
        %10294 = vmatpush1.msra.mxu0 0.0
        %10295 = vmatprep.subr.mxu0 0.0
        %10296 = vmatpush1.msra.mxu0 0.0
        %10297 = vmatprep.subr.mxu0 0.0
        %10298 = vmatpush1.msra.mxu0 0.0
        %10299 = vmatprep.subr.mxu0 0.0
        %10300 = vmatpush1.msra.mxu0 0.0
        %10301 = vmatprep.subr.mxu0 0.0
        %10302 = vmatpush1.msra.mxu0 0.0
        %10303 = vmatprep.subr.mxu0 0.0
        %10304 = vmatpush1.msra.mxu0 0.0
        %10305 = vmatprep.subr.mxu0 0.0
        %10306 = vmatpush1.msra.mxu0 0.0
        %10307 = vmatprep.subr.mxu0 0.0
        %10308 = vmatpush1.msra.mxu0 0.0
        %10309 = vmatprep.subr.mxu0 0.0
        %10310 = vmatpush1.msra.mxu0 0.0
        %10311 = vmatprep.subr.mxu0 0.0
        %10312 = vmatpush1.msra.mxu0 0.0
        %10313 = vmatprep.subr.mxu0 0.0
        %10314 = vmatpush1.msra.mxu0 0.0
        %10315 = vmatprep.subr.mxu0 0.0
        %10316 = vmatpush1.msra.mxu0 %v9887
        %10317 = vmatprep.subr.mxu0 0.0
        %10318 = vmatpush2.msra.mxu0 0.0
        %10319 = vmatprep.subr.mxu0 0.0
        %10320 = vmatpush2.msra.mxu0 0.0
        %10321 = vmatprep.subr.mxu0 0.0
        %10322 = vmatpush2.msra.mxu0 0.0
        %10323 = vmatprep.subr.mxu0 0.0
        %10324 = vmatpush2.msra.mxu0 0.0
        %10325 = vmatprep.subr.mxu0 0.0
        %10326 = vmatpush2.msra.mxu0 0.0
        %10327 = vmatprep.subr.mxu0 0.0
        %10328 = vmatpush2.msra.mxu0 0.0
        %10329 = vmatprep.subr.mxu0 0.0
        %10330 = vmatpush2.msra.mxu0 0.0
        %10331 = vmatprep.subr.mxu0 0.0
        %10332 = vmatpush2.msra.mxu0 0.0
        %10333 = vmatprep.subr.mxu0 0.0
        %10334 = vmatpush2.msra.mxu0 0.0
        %10335 = vmatprep.subr.mxu0 0.0
        %10336 = vmatpush2.msra.mxu0 0.0
        %10337 = vmatprep.subr.mxu0 0.0
        %10338 = vmatpush2.msra.mxu0 0.0
        %10339 = vmatprep.subr.mxu0 0.0
        %10340 = vmatpush2.msra.mxu0 0.0
        %10341 = vmatprep.subr.mxu0 0.0
        %10342 = vmatpush2.msra.mxu0 0.0
        %10343 = vmatprep.subr.mxu0 0.0
        %10344 = vmatpush2.msra.mxu0 0.0
        %10345 = vmatprep.subr.mxu0 0.0
        %10346 = vmatpush2.msra.mxu0 0.0
        %10347 = vmatprep.subr.mxu0 0.0
        %10348 = vmatpush2.msra.mxu0 0.0
        %10349 = vmatprep.mubr.f32.mxu0 0.0
        %10350 = vmatmul.mubr.f32.gmra.mxu0 %v9905
        %v10351 = vpop.f32.mrf.mxu0
        %v10352 = vadd.f32 0.0, %v10351
        %v10353 = vpop.f32.mrf.mxu0
        %10354 = vmatprep.mubr.f32.mxu0 0.0
        %10355 = vmatmul.mubr.f32.gmra.mxu0 %v9908
        %v10356 = vpop.f32.mrf.mxu0
        %v10357 = vadd.f32 0.0, %v10356
        %v10358 = vpop.f32.mrf.mxu0
        %10359 = vdwg.mxu0
        %10360 = vmatprep.subr.mxu0 0.0
        %10361 = vmatpush1.msra.mxu0 0.0
        %10362 = vmatprep.subr.mxu0 0.0
        %10363 = vmatpush1.msra.mxu0 0.0
        %10364 = vmatprep.subr.mxu0 0.0
        %10365 = vmatpush1.msra.mxu0 0.0
        %10366 = vmatprep.subr.mxu0 0.0
        %10367 = vmatpush1.msra.mxu0 0.0
        %10368 = vmatprep.subr.mxu0 0.0
        %10369 = vmatpush1.msra.mxu0 0.0
        %10370 = vmatprep.subr.mxu0 0.0
        %10371 = vmatpush1.msra.mxu0 0.0
        %10372 = vmatprep.subr.mxu0 0.0
        %10373 = vmatpush1.msra.mxu0 0.0
        %10374 = vmatprep.subr.mxu0 0.0
        %10375 = vmatpush1.msra.mxu0 0.0
        %10376 = vmatprep.subr.mxu0 0.0
        %10377 = vmatpush1.msra.mxu0 0.0
        %10378 = vmatprep.subr.mxu0 0.0
        %10379 = vmatpush1.msra.mxu0 0.0
        %10380 = vmatprep.subr.mxu0 0.0
        %10381 = vmatpush1.msra.mxu0 0.0
        %10382 = vmatprep.subr.mxu0 0.0
        %10383 = vmatpush1.msra.mxu0 0.0
        %10384 = vmatprep.subr.mxu0 0.0
        %10385 = vmatpush1.msra.mxu0 0.0
        %10386 = vmatprep.subr.mxu0 0.0
        %10387 = vmatpush1.msra.mxu0 0.0
        %10388 = vmatprep.subr.mxu0 0.0
        %10389 = vmatpush1.msra.mxu0 0.0
        %10390 = vmatprep.subr.mxu0 0.0
        %10391 = vmatpush1.msra.mxu0 %v9892
        %10392 = vmatprep.subr.mxu0 0.0
        %10393 = vmatpush2.msra.mxu0 0.0
        %10394 = vmatprep.subr.mxu0 0.0
        %10395 = vmatpush2.msra.mxu0 0.0
        %10396 = vmatprep.subr.mxu0 0.0
        %10397 = vmatpush2.msra.mxu0 0.0
        %10398 = vmatprep.subr.mxu0 0.0
        %10399 = vmatpush2.msra.mxu0 0.0
        %10400 = vmatprep.subr.mxu0 0.0
        %10401 = vmatpush2.msra.mxu0 0.0
        %10402 = vmatprep.subr.mxu0 0.0
        %10403 = vmatpush2.msra.mxu0 0.0
        %10404 = vmatprep.subr.mxu0 0.0
        %10405 = vmatpush2.msra.mxu0 0.0
        %10406 = vmatprep.subr.mxu0 0.0
        %10407 = vmatpush2.msra.mxu0 0.0
        %10408 = vmatprep.subr.mxu0 0.0
        %10409 = vmatpush2.msra.mxu0 0.0
        %10410 = vmatprep.subr.mxu0 0.0
        %10411 = vmatpush2.msra.mxu0 0.0
        %10412 = vmatprep.subr.mxu0 0.0
        %10413 = vmatpush2.msra.mxu0 0.0
        %10414 = vmatprep.subr.mxu0 0.0
        %10415 = vmatpush2.msra.mxu0 0.0
        %10416 = vmatprep.subr.mxu0 0.0
        %10417 = vmatpush2.msra.mxu0 0.0
        %10418 = vmatprep.subr.mxu0 0.0
        %10419 = vmatpush2.msra.mxu0 0.0
        %10420 = vmatprep.subr.mxu0 0.0
        %10421 = vmatpush2.msra.mxu0 0.0
        %10422 = vmatprep.subr.mxu0 0.0
        %10423 = vmatpush2.msra.mxu0 0.0
        %10424 = vmatprep.mubr.f32.mxu0 0.0
        %10425 = vmatmul.mubr.f32.gmra.mxu0 %v9905
        %v10426 = vpop.f32.mrf.mxu0
        %v10427 = vadd.f32 0.0, %v10426
        %v10428 = vpop.f32.mrf.mxu0
        %10429 = vmatprep.mubr.f32.mxu0 0.0
        %10430 = vmatmul.mubr.f32.gmra.mxu0 %v9908
        %v10431 = vpop.f32.mrf.mxu0
        %v10432 = vadd.f32 0.0, %v10431
        %v10433 = vpop.f32.mrf.mxu0
        %10434 = vdwg.mxu0
        %10435 = vmatprep.subr.mxu0 0.0
        %10436 = vmatpush1.msra.mxu0 0.0
        %10437 = vmatprep.subr.mxu0 0.0
        %10438 = vmatpush1.msra.mxu0 0.0
        %10439 = vmatprep.subr.mxu0 0.0
        %10440 = vmatpush1.msra.mxu0 0.0
        %10441 = vmatprep.subr.mxu0 0.0
        %10442 = vmatpush1.msra.mxu0 0.0
        %10443 = vmatprep.subr.mxu0 0.0
        %10444 = vmatpush1.msra.mxu0 0.0
        %10445 = vmatprep.subr.mxu0 0.0
        %10446 = vmatpush1.msra.mxu0 0.0
        %10447 = vmatprep.subr.mxu0 0.0
        %10448 = vmatpush1.msra.mxu0 0.0
        %10449 = vmatprep.subr.mxu0 0.0
        %10450 = vmatpush1.msra.mxu0 0.0
        %10451 = vmatprep.subr.mxu0 0.0
        %10452 = vmatpush1.msra.mxu0 0.0
        %10453 = vmatprep.subr.mxu0 0.0
        %10454 = vmatpush1.msra.mxu0 0.0
        %10455 = vmatprep.subr.mxu0 0.0
        %10456 = vmatpush1.msra.mxu0 0.0
        %10457 = vmatprep.subr.mxu0 0.0
        %10458 = vmatpush1.msra.mxu0 0.0
        %10459 = vmatprep.subr.mxu0 0.0
        %10460 = vmatpush1.msra.mxu0 0.0
        %10461 = vmatprep.subr.mxu0 0.0
        %10462 = vmatpush1.msra.mxu0 0.0
        %10463 = vmatprep.subr.mxu0 0.0
        %10464 = vmatpush1.msra.mxu0 0.0
        %10465 = vmatprep.subr.mxu0 0.0
        %10466 = vmatpush1.msra.mxu0 %v9897
        %10467 = vmatprep.subr.mxu0 0.0
        %10468 = vmatpush2.msra.mxu0 0.0
        %10469 = vmatprep.subr.mxu0 0.0
        %10470 = vmatpush2.msra.mxu0 0.0
        %10471 = vmatprep.subr.mxu0 0.0
        %10472 = vmatpush2.msra.mxu0 0.0
        %10473 = vmatprep.subr.mxu0 0.0
        %10474 = vmatpush2.msra.mxu0 0.0
        %10475 = vmatprep.subr.mxu0 0.0
        %10476 = vmatpush2.msra.mxu0 0.0
        %10477 = vmatprep.subr.mxu0 0.0
        %10478 = vmatpush2.msra.mxu0 0.0
        %10479 = vmatprep.subr.mxu0 0.0
        %10480 = vmatpush2.msra.mxu0 0.0
        %10481 = vmatprep.subr.mxu0 0.0
        %10482 = vmatpush2.msra.mxu0 0.0
        %10483 = vmatprep.subr.mxu0 0.0
        %10484 = vmatpush2.msra.mxu0 0.0
        %10485 = vmatprep.subr.mxu0 0.0
        %10486 = vmatpush2.msra.mxu0 0.0
        %10487 = vmatprep.subr.mxu0 0.0
        %10488 = vmatpush2.msra.mxu0 0.0
        %10489 = vmatprep.subr.mxu0 0.0
        %10490 = vmatpush2.msra.mxu0 0.0
        %10491 = vmatprep.subr.mxu0 0.0
        %10492 = vmatpush2.msra.mxu0 0.0
        %10493 = vmatprep.subr.mxu0 0.0
        %10494 = vmatpush2.msra.mxu0 0.0
        %10495 = vmatprep.subr.mxu0 0.0
        %10496 = vmatpush2.msra.mxu0 0.0
        %10497 = vmatprep.subr.mxu0 0.0
        %10498 = vmatpush2.msra.mxu0 0.0
        %10499 = vmatprep.mubr.f32.mxu0 0.0
        %10500 = vmatmul.mubr.f32.gmra.mxu0 %v9905
        %v10501 = vpop.f32.mrf.mxu0
        %v10502 = vadd.f32 0.0, %v10501
        %v10503 = vpop.f32.mrf.mxu0
        %10504 = vmatprep.mubr.f32.mxu0 0.0
        %10505 = vmatmul.mubr.f32.gmra.mxu0 %v9908
        %v10506 = vpop.f32.mrf.mxu0
        %v10507 = vadd.f32 0.0, %v10506
        %v10508 = vpop.f32.mrf.mxu0
        %10509 = vdwg.mxu0
        %v10510 = vld [vmem:[%s9] sm:$0xff]
        %v10511 = vld [vmem:[%s9 + $0x8] sm:$0xff]
        %v10512 = vcombine.low %v9977, %v10127
        %v10513 = vcombine.high %v9977, %v10127
        %v10515 = vunpack.c.l.s4 1983009808
        %v10516 = vunpack.c.0.s8 %v10515
        %v10517 = vlaneseq
        %v10518 = vshrl.u32 %v10517, 7
        %v10519 = vsub.s32 %v10516, %v10518
        %v10520 = vrot.slane %v10512, %v10519
        %v10522 = vunpack.c.l.s4 1983009808
        %v10523 = vunpack.c.0.s8 %v10522
        %v10524 = vlaneseq
        %v10525 = vshrl.u32 %v10524, 7
        %v10526 = vsub.s32 %v10523, %v10525
        %v10527 = vrot.slane %v10513, %v10526
        %v10528 = vcombine.low %v10052, %v10202
        %v10529 = vcombine.high %v10052, %v10202
        %v10531 = vunpack.c.l.s4 1983009808
        %v10532 = vunpack.c.0.s8 %v10531
        %v10533 = vlaneseq
        %v10534 = vshrl.u32 %v10533, 7
        %v10535 = vsub.s32 %v10532, %v10534
        %v10536 = vrot.slane %v10528, %v10535
        %v10538 = vunpack.c.l.s4 1983009808
        %v10539 = vunpack.c.0.s8 %v10538
        %v10540 = vlaneseq
        %v10541 = vshrl.u32 %v10540, 7
        %v10542 = vsub.s32 %v10539, %v10541
        %v10543 = vrot.slane %v10529, %v10542
        %v10544 = vcombine.low %v10277, %v10427
        %v10545 = vcombine.high %v10277, %v10427
        %v10547 = vunpack.c.l.s4 1983009808
        %v10548 = vunpack.c.0.s8 %v10547
        %v10549 = vlaneseq
        %v10550 = vshrl.u32 %v10549, 7
        %v10551 = vsub.s32 %v10548, %v10550
        %v10552 = vrot.slane %v10544, %v10551
        %v10554 = vunpack.c.l.s4 1983009808
        %v10555 = vunpack.c.0.s8 %v10554
        %v10556 = vlaneseq
        %v10557 = vshrl.u32 %v10556, 7
        %v10558 = vsub.s32 %v10555, %v10557
        %v10559 = vrot.slane %v10545, %v10558
        %v10560 = vcombine.low %v10352, %v10502
        %v10561 = vcombine.high %v10352, %v10502
        %v10563 = vunpack.c.l.s4 1983009808
        %v10564 = vunpack.c.0.s8 %v10563
        %v10565 = vlaneseq
        %v10566 = vshrl.u32 %v10565, 7
        %v10567 = vsub.s32 %v10564, %v10566
        %v10568 = vrot.slane %v10560, %v10567
        %v10570 = vunpack.c.l.s4 1983009808
        %v10571 = vunpack.c.0.s8 %v10570
        %v10572 = vlaneseq
        %v10573 = vshrl.u32 %v10572, 7
        %v10574 = vsub.s32 %v10571, %v10573
        %v10575 = vrot.slane %v10561, %v10574
        %v10576 = vcombine.low %v10520, %v10536
        %v10577 = vcombine.high %v10520, %v10536
        %v10579 = vunpack.c.l.s4 1934713408
        %v10580 = vunpack.c.0.s8 %v10579
        %v10581 = vlaneseq
        %v10582 = vshrl.u32 %v10581, 7
        %v10583 = vsub.s32 %v10580, %v10582
        %v10584 = vrot.slane %v10576, %v10583
        %v10586 = vunpack.c.l.s4 1934713408
        %v10587 = vunpack.c.0.s8 %v10586
        %v10588 = vlaneseq
        %v10589 = vshrl.u32 %v10588, 7
        %v10590 = vsub.s32 %v10587, %v10589
        %v10591 = vrot.slane %v10577, %v10590
        %v10592 = vcombine.low %v10527, %v10543
        %v10593 = vcombine.high %v10527, %v10543
        %v10595 = vunpack.c.l.s4 1934713408
        %v10596 = vunpack.c.0.s8 %v10595
        %v10597 = vlaneseq
        %v10598 = vshrl.u32 %v10597, 7
        %v10599 = vsub.s32 %v10596, %v10598
        %v10600 = vrot.slane %v10592, %v10599
        %v10602 = vunpack.c.l.s4 1934713408
        %v10603 = vunpack.c.0.s8 %v10602
        %v10604 = vlaneseq
        %v10605 = vshrl.u32 %v10604, 7
        %v10606 = vsub.s32 %v10603, %v10605
        %v10607 = vrot.slane %v10593, %v10606
        %v10608 = vcombine.low %v10552, %v10568
        %v10609 = vcombine.high %v10552, %v10568
        %v10611 = vunpack.c.l.s4 1934713408
        %v10612 = vunpack.c.0.s8 %v10611
        %v10613 = vlaneseq
        %v10614 = vshrl.u32 %v10613, 7
        %v10615 = vsub.s32 %v10612, %v10614
        %v10616 = vrot.slane %v10608, %v10615
        %v10618 = vunpack.c.l.s4 1934713408
        %v10619 = vunpack.c.0.s8 %v10618
        %v10620 = vlaneseq
        %v10621 = vshrl.u32 %v10620, 7
        %v10622 = vsub.s32 %v10619, %v10621
        %v10623 = vrot.slane %v10609, %v10622
        %v10624 = vcombine.low %v10559, %v10575
        %v10625 = vcombine.high %v10559, %v10575
        %v10627 = vunpack.c.l.s4 1934713408
        %v10628 = vunpack.c.0.s8 %v10627
        %v10629 = vlaneseq
        %v10630 = vshrl.u32 %v10629, 7
        %v10631 = vsub.s32 %v10628, %v10630
        %v10632 = vrot.slane %v10624, %v10631
        %v10634 = vunpack.c.l.s4 1934713408
        %v10635 = vunpack.c.0.s8 %v10634
        %v10636 = vlaneseq
        %v10637 = vshrl.u32 %v10636, 7
        %v10638 = vsub.s32 %v10635, %v10637
        %v10639 = vrot.slane %v10625, %v10638
        %v10640 = vcombine.low %v10584, %v10616
        %v10641 = vcombine.high %v10584, %v10616
        %v10642 = vcombine.low %v10591, %v10623
        %v10643 = vcombine.high %v10591, %v10623
        %v10644 = vcombine.low %v10600, %v10632
        %v10645 = vcombine.high %v10600, %v10632
        %v10646 = vcombine.low %v10607, %v10639
        %v10647 = vcombine.high %v10607, %v10639
        %v10648 = vcombine.low %v9982, %v10132
        %v10649 = vcombine.high %v9982, %v10132
        %v10651 = vunpack.c.l.s4 1983009808
        %v10652 = vunpack.c.0.s8 %v10651
        %v10653 = vlaneseq
        %v10654 = vshrl.u32 %v10653, 7
        %v10655 = vsub.s32 %v10652, %v10654
        %v10656 = vrot.slane %v10648, %v10655
        %v10658 = vunpack.c.l.s4 1983009808
        %v10659 = vunpack.c.0.s8 %v10658
        %v10660 = vlaneseq
        %v10661 = vshrl.u32 %v10660, 7
        %v10662 = vsub.s32 %v10659, %v10661
        %v10663 = vrot.slane %v10649, %v10662
        %v10664 = vcombine.low %v10057, %v10207
        %v10665 = vcombine.high %v10057, %v10207
        %v10667 = vunpack.c.l.s4 1983009808
        %v10668 = vunpack.c.0.s8 %v10667
        %v10669 = vlaneseq
        %v10670 = vshrl.u32 %v10669, 7
        %v10671 = vsub.s32 %v10668, %v10670
        %v10672 = vrot.slane %v10664, %v10671
        %v10674 = vunpack.c.l.s4 1983009808
        %v10675 = vunpack.c.0.s8 %v10674
        %v10676 = vlaneseq
        %v10677 = vshrl.u32 %v10676, 7
        %v10678 = vsub.s32 %v10675, %v10677
        %v10679 = vrot.slane %v10665, %v10678
        %v10680 = vcombine.low %v10282, %v10432
        %v10681 = vcombine.high %v10282, %v10432
        %v10683 = vunpack.c.l.s4 1983009808
        %v10684 = vunpack.c.0.s8 %v10683
        %v10685 = vlaneseq
        %v10686 = vshrl.u32 %v10685, 7
        %v10687 = vsub.s32 %v10684, %v10686
        %v10688 = vrot.slane %v10680, %v10687
        %v10690 = vunpack.c.l.s4 1983009808
        %v10691 = vunpack.c.0.s8 %v10690
        %v10692 = vlaneseq
        %v10693 = vshrl.u32 %v10692, 7
        %v10694 = vsub.s32 %v10691, %v10693
        %v10695 = vrot.slane %v10681, %v10694
        %v10696 = vcombine.low %v10357, %v10507
        %v10697 = vcombine.high %v10357, %v10507
        %v10699 = vunpack.c.l.s4 1983009808
        %v10700 = vunpack.c.0.s8 %v10699
        %v10701 = vlaneseq
        %v10702 = vshrl.u32 %v10701, 7
        %v10703 = vsub.s32 %v10700, %v10702
        %v10704 = vrot.slane %v10696, %v10703
        %v10706 = vunpack.c.l.s4 1983009808
        %v10707 = vunpack.c.0.s8 %v10706
        %v10708 = vlaneseq
        %v10709 = vshrl.u32 %v10708, 7
        %v10710 = vsub.s32 %v10707, %v10709
        %v10711 = vrot.slane %v10697, %v10710
        %v10712 = vcombine.low %v10656, %v10672
        %v10713 = vcombine.high %v10656, %v10672
        %v10715 = vunpack.c.l.s4 1934713408
        %v10716 = vunpack.c.0.s8 %v10715
        %v10717 = vlaneseq
        %v10718 = vshrl.u32 %v10717, 7
        %v10719 = vsub.s32 %v10716, %v10718
        %v10720 = vrot.slane %v10712, %v10719
        %v10722 = vunpack.c.l.s4 1934713408
        %v10723 = vunpack.c.0.s8 %v10722
        %v10724 = vlaneseq
        %v10725 = vshrl.u32 %v10724, 7
        %v10726 = vsub.s32 %v10723, %v10725
        %v10727 = vrot.slane %v10713, %v10726
        %v10728 = vcombine.low %v10663, %v10679
        %v10729 = vcombine.high %v10663, %v10679
        %v10731 = vunpack.c.l.s4 1934713408
        %v10732 = vunpack.c.0.s8 %v10731
        %v10733 = vlaneseq
        %v10734 = vshrl.u32 %v10733, 7
        %v10735 = vsub.s32 %v10732, %v10734
        %v10736 = vrot.slane %v10728, %v10735
        %v10738 = vunpack.c.l.s4 1934713408
        %v10739 = vunpack.c.0.s8 %v10738
        %v10740 = vlaneseq
        %v10741 = vshrl.u32 %v10740, 7
        %v10742 = vsub.s32 %v10739, %v10741
        %v10743 = vrot.slane %v10729, %v10742
        %v10744 = vcombine.low %v10688, %v10704
        %v10745 = vcombine.high %v10688, %v10704
        %v10747 = vunpack.c.l.s4 1934713408
        %v10748 = vunpack.c.0.s8 %v10747
        %v10749 = vlaneseq
        %v10750 = vshrl.u32 %v10749, 7
        %v10751 = vsub.s32 %v10748, %v10750
        %v10752 = vrot.slane %v10744, %v10751
        %v10754 = vunpack.c.l.s4 1934713408
        %v10755 = vunpack.c.0.s8 %v10754
        %v10756 = vlaneseq
        %v10757 = vshrl.u32 %v10756, 7
        %v10758 = vsub.s32 %v10755, %v10757
        %v10759 = vrot.slane %v10745, %v10758
        %v10760 = vcombine.low %v10695, %v10711
        %v10761 = vcombine.high %v10695, %v10711
        %v10763 = vunpack.c.l.s4 1934713408
        %v10764 = vunpack.c.0.s8 %v10763
        %v10765 = vlaneseq
        %v10766 = vshrl.u32 %v10765, 7
        %v10767 = vsub.s32 %v10764, %v10766
        %v10768 = vrot.slane %v10760, %v10767
        %v10770 = vunpack.c.l.s4 1934713408
        %v10771 = vunpack.c.0.s8 %v10770
        %v10772 = vlaneseq
        %v10773 = vshrl.u32 %v10772, 7
        %v10774 = vsub.s32 %v10771, %v10773
        %v10775 = vrot.slane %v10761, %v10774
        %v10776 = vcombine.low %v10720, %v10752
        %v10777 = vcombine.high %v10720, %v10752
        %v10778 = vcombine.low %v10727, %v10759
        %v10779 = vcombine.high %v10727, %v10759
        %v10780 = vcombine.low %v10736, %v10768
        %v10781 = vcombine.high %v10736, %v10768
        %v10782 = vcombine.low %v10743, %v10775
        %v10783 = vcombine.high %v10743, %v10775
        %10785 = vrot.lane.b32.xlu0 %v10641, 2
        %v10786 = vpop.permute.xlu0 %10785
        %10789 = vrot.lane.b32.xlu0 %v10642, 4
        %v10790 = vpop.permute.xlu0 %10789
        %10793 = vrot.lane.b32.xlu0 %v10643, 6
        %v10794 = vpop.permute.xlu0 %10793
        %10797 = vrot.lane.b32.xlu0 %v10644, 8
        %v10798 = vpop.permute.xlu0 %10797
        %10801 = vrot.lane.b32.xlu0 %v10645, 10
        %v10802 = vpop.permute.xlu0 %10801
        %10805 = vrot.lane.b32.xlu0 %v10646, 12
        %v10806 = vpop.permute.xlu0 %10805
        %10809 = vrot.lane.b32.xlu0 %v10647, 14
        %v10810 = vpop.permute.xlu0 %10809
        %10813 = vrot.lane.b32.xlu0 %v10776, 16
        %v10814 = vpop.permute.xlu0 %10813
        %10817 = vrot.lane.b32.xlu0 %v10777, 18
        %v10818 = vpop.permute.xlu0 %10817
        %10821 = vrot.lane.b32.xlu0 %v10778, 20
        %v10822 = vpop.permute.xlu0 %10821
        %10825 = vrot.lane.b32.xlu0 %v10779, 22
        %v10826 = vpop.permute.xlu0 %10825
        %10829 = vrot.lane.b32.xlu0 %v10780, 24
        %v10830 = vpop.permute.xlu0 %10829
        %10833 = vrot.lane.b32.xlu0 %v10781, 26
        %v10834 = vpop.permute.xlu0 %10833
        %10837 = vrot.lane.b32.xlu0 %v10782, 28
        %v10838 = vpop.permute.xlu0 %10837
        %10841 = vrot.lane.b32.xlu0 %v10783, 30
        %v10842 = vpop.permute.xlu0 %10841
        %vm10844 = vcmask 15360
        %v10845 = vsel %vm10844, %v10640, %v10786
        %v10846 = vsel %vm2335, %v10845, %v10790
        %vm10847 = vcmask 48128
        %v10848 = vsel %vm10847, %v10846, %v10794
        %v10849 = vsel %vm2207, %v10848, %v10798
        %vm10850 = vcmask 80896
        %v10851 = vsel %vm10850, %v10849, %v10802
        %v10852 = vsel %vm2727, %v10851, %v10806
        %vm10853 = vcmask 113664
        %v10854 = vsel %vm10853, %v10852, %v10810
        %v10855 = vsel %vm2210, %v10854, %v10814
        %vm10856 = vcmask 146432
        %v10857 = vsel %vm10856, %v10855, %v10818
        %v10858 = vsel %vm2730, %v10857, %v10822
        %vm10859 = vcmask 179200
        %v10860 = vsel %vm10859, %v10858, %v10826
        %v10861 = vsel %vm2213, %v10860, %v10830
        %vm10862 = vcmask 211968
        %v10863 = vsel %vm10862, %v10861, %v10834
        %v10864 = vsel %vm2733, %v10863, %v10838
        %vm10865 = vcmask 244736
        %v10866 = vsel %vm10865, %v10864, %v10842
        %v10868 = vsel %vm2207, %v10510, 0
        %v10871 = vsel %vm2207, %v10511, 0
        %10873 = vmatprep.subr.mxu0 0.0
        %10874 = vmatpush1.msra.mxu0 0.0
        %10875 = vmatprep.subr.mxu0 0.0
        %10876 = vmatpush1.msra.mxu0 0.0
        %10877 = vmatprep.subr.mxu0 0.0
        %10878 = vmatpush1.msra.mxu0 0.0
        %10879 = vmatprep.subr.mxu0 0.0
        %10880 = vmatpush1.msra.mxu0 0.0
        %10881 = vmatprep.subr.mxu0 0.0
        %10882 = vmatpush1.msra.mxu0 0.0
        %10883 = vmatprep.subr.mxu0 0.0
        %10884 = vmatpush1.msra.mxu0 0.0
        %10885 = vmatprep.subr.mxu0 0.0
        %10886 = vmatpush1.msra.mxu0 0.0
        %10887 = vmatprep.subr.mxu0 0.0
        %10888 = vmatpush1.msra.mxu0 0.0
        %10889 = vmatprep.subr.mxu0 0.0
        %10890 = vmatpush1.msra.mxu0 0.0
        %10891 = vmatprep.subr.mxu0 0.0
        %10892 = vmatpush1.msra.mxu0 0.0
        %10893 = vmatprep.subr.mxu0 0.0
        %10894 = vmatpush1.msra.mxu0 0.0
        %10895 = vmatprep.subr.mxu0 0.0
        %10896 = vmatpush1.msra.mxu0 0.0
        %10897 = vmatprep.subr.mxu0 0.0
        %10898 = vmatpush1.msra.mxu0 0.0
        %10899 = vmatprep.subr.mxu0 0.0
        %10900 = vmatpush1.msra.mxu0 0.0
        %10901 = vmatprep.subr.mxu0 0.0
        %10902 = vmatpush1.msra.mxu0 0.0
        %10903 = vmatprep.subr.mxu0 0.0
        %10904 = vmatpush1.msra.mxu0 %v10866
        %10905 = vmatprep.subr.mxu0 0.0
        %10906 = vmatpush2.msra.mxu0 0.0
        %10907 = vmatprep.subr.mxu0 0.0
        %10908 = vmatpush2.msra.mxu0 0.0
        %10909 = vmatprep.subr.mxu0 0.0
        %10910 = vmatpush2.msra.mxu0 0.0
        %10911 = vmatprep.subr.mxu0 0.0
        %10912 = vmatpush2.msra.mxu0 0.0
        %10913 = vmatprep.subr.mxu0 0.0
        %10914 = vmatpush2.msra.mxu0 0.0
        %10915 = vmatprep.subr.mxu0 0.0
        %10916 = vmatpush2.msra.mxu0 0.0
        %10917 = vmatprep.subr.mxu0 0.0
        %10918 = vmatpush2.msra.mxu0 0.0
        %10919 = vmatprep.subr.mxu0 0.0
        %10920 = vmatpush2.msra.mxu0 0.0
        %10921 = vmatprep.subr.mxu0 0.0
        %10922 = vmatpush2.msra.mxu0 0.0
        %10923 = vmatprep.subr.mxu0 0.0
        %10924 = vmatpush2.msra.mxu0 0.0
        %10925 = vmatprep.subr.mxu0 0.0
        %10926 = vmatpush2.msra.mxu0 0.0
        %10927 = vmatprep.subr.mxu0 0.0
        %10928 = vmatpush2.msra.mxu0 0.0
        %10929 = vmatprep.subr.mxu0 0.0
        %10930 = vmatpush2.msra.mxu0 0.0
        %10931 = vmatprep.subr.mxu0 0.0
        %10932 = vmatpush2.msra.mxu0 0.0
        %10933 = vmatprep.subr.mxu0 0.0
        %10934 = vmatpush2.msra.mxu0 0.0
        %10935 = vmatprep.subr.mxu0 0.0
        %10936 = vmatpush2.msra.mxu0 0.0
        %10937 = vmatprep.mubr.f32.mxu0 0.0
        %10938 = vmatmul.mubr.f32.gmra.mxu0 %v10868
        %v10939 = vpop.f32.mrf.mxu0
        %v10940 = vadd.f32 0.0, %v10939
        %v10941 = vpop.f32.mrf.mxu0
        %10942 = vmatprep.mubr.f32.mxu0 0.0
        %10943 = vmatmul.mubr.f32.gmra.mxu0 %v10871
        %v10944 = vpop.f32.mrf.mxu0
        %v10945 = vadd.f32 0.0, %v10944
        %v10946 = vpop.f32.mrf.mxu0
        %10947 = vdwg.mxu0
        %v10948 = vadd.f32 %v9900, %v10940
        %v10949 = vadd.f32 %v9901, %v10945
        %10950 = vst.msk [vmem:[%s443] sm:$0xff] %vm2216, %v10948
        %10951 = vst.msk [vmem:[%s443 + $0x8] sm:$0xff] %vm2216, %v10949
        %s10952 = sand.u32 %s284, 1
        %s10953 = scalar_lea.sflag [#allocation7], %s10952
        %s10954 = sand.u32 %s284, 1
        %s10955 = smul.addr %s10954, 8
        %s10956 = scalar_lea.vmem [#allocation6], %s10955
        %s10957 = sand.u32 %s310, 1
        %s10958 = scalar_lea.sflag [#allocation9], %s10957
        %s10959 = sand.u32 %s310, 1
        %s10960 = smul.addr %s10959, 16
        %s10961 = scalar_lea.vmem [#allocation8], %s10960
        // Predicated region
        $region65: #{tpu_custom_call.1} parent=63 // pred_check
          %p10962 = pneg %p294
        $region66: #{tpu_custom_call.1} parent=63 // pred_check_branch
          %10964 = sbr.rel (%p10962) target = $region68
        $region67: #{tpu_custom_call.1} parent=63 // pred_region
          %s10966 = ssub.s32 128, 128
          %10967 = vsyncadd %s10953, %s10966
          %s10968 = smul.addr %s30, 128
          %s10969 = scalar_lea.hbm %s11, %s10968
          %s10971 = sshll.u32 %s10956, 4
          %s10972 = int_to_ptr.vmem [resolvable:$true] %s10971
          %10974 = dma.vmem_to_hbm [thread:$0]  %s10972, 128, %s10969, %s10953
        $region68: #{tpu_custom_call.1} parent=63 // pred_fallthru
          _
        // Predicated region
        $region69: #{tpu_custom_call.1} parent=63 // pred_check
          %p10975 = pneg %p320
        $region70: #{tpu_custom_call.1} parent=63 // pred_check_branch
          %10977 = sbr.rel (%p10975) target = $region72
        $region71: #{tpu_custom_call.1} parent=63 // pred_region
          %s10979 = ssub.s32 256, 256
          %10980 = vsyncadd %s10958, %s10979
          %s10981 = smul.addr %s30, 2
          %s10982 = smul.addr %s10981, 128
          %s10983 = scalar_lea.hbm %s12, %s10982
          %s10984 = sshll.u32 %s10961, 4
          %s10985 = int_to_ptr.vmem [resolvable:$true] %s10984
          %10990 = dma.vmem_to_hbm [thread:$0]  %s10985, 256, %s10983, %s10958, 128, 128, 8
        $region72: #{tpu_custom_call.1} parent=63 // pred_fallthru
          _
      $region64: #{tpu_custom_call.1} parent=5 // pred_fallthru
        _
      %p10991 = scmp.le.s32.totalorder 2, %s25
      // Predicated region
      $region73: #{tpu_custom_call.1} parent=5 // pred_check
        %p10992 = pneg %p10991
      $region74: #{tpu_custom_call.1} parent=5 // pred_check_branch
        %10994 = sbr.rel (%p10992) target = $region76
      $region75: #{tpu_custom_call.1} parent=5 // pred_region
        %s10995 = ssub.s32 %s25, 2
        // Predicated region
        $region77: #{tpu_custom_call.1} parent=75 // pred_check
          %p10996 = pneg %p300
        $region78: #{tpu_custom_call.1} parent=75 // pred_check_branch
          %10998 = sbr.rel (%p10996) target = $region80
        $region79: #{tpu_custom_call.1} parent=75 // pred_region
          %s10999 = sand.u32 %s285, 1
          %s11000 = scalar_lea.sflag [#allocation7], %s10999
          %s11001 = sand.u32 %s285, 1
          %s11002 = smul.addr %s11001, 8
          %s11003 = scalar_lea.vmem [#allocation6], %s11002
          %11004 = dma.done %s11000, 128
        $region80: #{tpu_custom_call.1} parent=75 // pred_fallthru
          _
        // Predicated region
        $region81: #{tpu_custom_call.1} parent=75 // pred_check
          %p11005 = pneg %p326
        $region82: #{tpu_custom_call.1} parent=75 // pred_check_branch
          %11007 = sbr.rel (%p11005) target = $region84
        $region83: #{tpu_custom_call.1} parent=75 // pred_region
          %s11008 = sand.u32 %s311, 1
          %s11009 = scalar_lea.sflag [#allocation9], %s11008
          %s11010 = sand.u32 %s311, 1
          %s11011 = smul.addr %s11010, 16
          %s11012 = scalar_lea.vmem [#allocation8], %s11011
          %11013 = dma.done %s11009, 256
        $region84: #{tpu_custom_call.1} parent=75 // pred_fallthru
          _
      $region76: #{tpu_custom_call.1} parent=5 // pred_fallthru
        _
    $region6: #{tpu_custom_call.1} parent=1 // loop_footer
      %s29 = sadd.s32 1, %s25
    $region7: #{tpu_custom_call.1} parent=1 // loop_footer_branch
      %24 = sbr.rel target = $region3
    $region8: #{tpu_custom_call.1} parent=1 // loop_exit
      _
    %11014 = vsyncpa [#allocation7], 1
    %s11015 = scalar_lea.sflag [#allocation7], 1
    %11016 = vsyncpa %s11015, 1
    %11017 = vsyncpa [#allocation9], 1
    %s11018 = scalar_lea.sflag [#allocation9], 1
    %11019 = vsyncpa %s11018, 1

</llo_original>
